<compile_context>
chip_gen: v7x
topology: tpu7x:2x2x1
jax: 0.10.0
libtpu: 0.0.40
codegen_flags: <defaults>
</compile_context>

<pallas_src>
import jax
import jax.numpy as jnp
from jax.experimental import pallas as pl
from jax.experimental.pallas import tpu as pltpu


# ------------------------------ hyper-params ------------------------------
class Param:
    vocab_size_a = 50
    vocab_size_b = 60
    d_model = 32
    d_ff = 64
    d_k = 8
    d_v = 8
    num_heads = 4
    num_blocks = 1
    enc_maxlen = 8
    pad_index = 0
    dropout_rate = 0.0      # eval: dropout == identity
    decoder_neg = False
    n_negs = 5
    fixed_enc = False


P = Param()
VOCAB_PAD = 128             # lane-dense padded width of the vocab projection
NEG_INF = -1e9


# ------------------------------ shared math -------------------------------
# These helpers are traced both inside the Pallas kernel (approx=True path)
# and in the pure-JAX reference used for validation (approx=False path).
def _layer_norm(x, g, b, eps=1e-5):
    mu = jnp.mean(x, axis=-1, keepdims=True)
    var = jnp.mean(jnp.square(x - mu), axis=-1, keepdims=True)
    return (x - mu) * jax.lax.rsqrt(var + eps) * g + b


def _softmax_lastdim(s, approx):
    s = s - jnp.max(s, axis=-1, keepdims=True)
    e = jnp.exp(s)
    denom = jnp.sum(e, axis=-1, keepdims=True)
    if approx:
        return e * pl.reciprocal(denom, approx=True)   # EUP slot, ~free
    return e / denom


def _attention_block(x_flat, kv_flat, mask_add, p, *, B, S, cross, approx):
    """Multi-head attention + output proj + residual + layer-norm.

    x_flat / kv_flat: (B*S, D) activations; mask_add: (B, S, S) additive mask
    (-1e9 on masked positions, 0 elsewhere)."""
    H, dk, dv, D = P.num_heads, P.d_k, P.d_v, P.d_model
    hdk, hdv = H * dk, H * dv
    BS = B * S
    if cross:
        q = jnp.dot(x_flat, p['wq'], preferred_element_type=jnp.float32) + p['bq']
        kv = jnp.dot(kv_flat, p['wkv'], preferred_element_type=jnp.float32) + p['bkv']
        k, v = kv[:, :hdk], kv[:, hdk:hdk + hdv]
    else:
        qkv = jnp.dot(x_flat, p['wqkv'], preferred_element_type=jnp.float32) + p['bqkv']
        q, k, v = qkv[:, :hdk], qkv[:, hdk:2 * hdk], qkv[:, 2 * hdk:2 * hdk + hdv]
    q3 = q.reshape(B, S, hdk)
    k3 = k.reshape(B, S, hdk)
    v3 = v.reshape(B, S, hdv)
    scale = 1.0 / (float(dk) ** 0.5)
    acc = jnp.zeros((BS, D), jnp.float32)
    # Per-head attention; accumulating ctx_h @ wo_h is mathematically identical
    # to concat(ctx_h) @ wo but avoids a lane-concatenate inside the kernel.
    for h in range(H):
        qh = q3[:, :, h * dk:(h + 1) * dk]
        kh = k3[:, :, h * dk:(h + 1) * dk]
        vh = v3[:, :, h * dv:(h + 1) * dv]
        s = jnp.einsum('bqd,bkd->bqk', qh, kh,
                       preferred_element_type=jnp.float32) * scale + mask_add
        attn = _softmax_lastdim(s, approx)
        ctx = jnp.einsum('bqk,bkd->bqd', attn, vh,
                         preferred_element_type=jnp.float32)
        acc = acc + jnp.dot(ctx.reshape(BS, dv), p['wo'][h * dv:(h + 1) * dv, :],
                            preferred_element_type=jnp.float32)
    out = acc + p['bo'] + x_flat                 # output proj bias + residual
    return _layer_norm(out, p['ln_g'], p['ln_b'])


def _ffn_block(x_flat, p):
    h = jnp.maximum(
        jnp.dot(x_flat, p['w1'], preferred_element_type=jnp.float32) + p['b1'], 0.0)
    o = jnp.dot(h, p['w2'], preferred_element_type=jnp.float32) + p['b2'] + x_flat
    return _layer_norm(o, p['ln_g'], p['ln_b'])


def _transformer_math(w, enc_emb, dec_emb, pe, pm_enc, pm_dec,
                      m_enc, m_dself, m_denc, *, B, S, approx):
    """Full encoder -> decoder -> projection math on (B*S, D) activations.
    Returns (B*S, VOCAB_PAD) padded logits."""
    D = P.d_model
    # ---- encoder (EncoderM; enc_share=True -> single shared stack) ----
    # TODO(synk): all_module.PositionalEncoding mask semantics assumed:
    # add sinusoidal PE then zero padded positions; dropout identity (eval).
    x = (enc_emb + pe) * pm_enc
    for lyr in w['enc']:
        x = _attention_block(x, x, m_enc, lyr['self'], B=B, S=S,
                             cross=False, approx=approx)
        x = _ffn_block(x, lyr['ffn'])
    # TODO(synk): EncoderM's optional pad_mask output re-masking not replicated.
    # take the last position and repeat over the sequence axis
    enc3 = x.reshape(B, S, D)
    enc_rep = jnp.broadcast_to(enc3[:, S - 1:S, :], (B, S, D)).reshape(B * S, D)
    # ---- decoder_a (DecoderM) ----
    # TODO(synk): DecoderM's pad_m post-multiplication not replicated exactly.
    y = (dec_emb + pe) * pm_dec
    for lyr in w['dec']:
        y = _attention_block(y, y, m_dself, lyr['self'], B=B, S=S,
                             cross=False, approx=approx)
        y = _attention_block(y, enc_rep, m_denc, lyr['cross'], B=B, S=S,
                             cross=True, approx=approx)
        y = _ffn_block(y, lyr['ffn'])
    # ---- projection_a: Linear(d_model, vocab, bias=False), padded to 128 ----
    return jnp.dot(y, w['proj'], preferred_element_type=jnp.float32)


# ------------------------------ fused Pallas kernel ------------------------
def fused_forward_call(kw, dyn_inputs, *, B, S):
    """One pallas_call running the whole forward with weights resident in VMEM."""
    flat_w, treedef = jax.tree_util.tree_flatten(kw)
    n_dyn = len(dyn_inputs)
    n_in = n_dyn + len(flat_w)

    def kernel(*refs):
        vals = [r[...] for r in refs[:n_in]]          # everything already in VMEM
        dyn = vals[:n_dyn]
        w = jax.tree_util.tree_unflatten(treedef, vals[n_dyn:])
        out_ref = refs[n_in]
        out_ref[...] = _transformer_math(w, *dyn, B=B, S=S, approx=True)

    return pl.pallas_call(
        kernel,
        out_shape=jax.ShapeDtypeStruct((B * S, VOCAB_PAD), jnp.float32),
        in_specs=[pl.BlockSpec(memory_space=pltpu.MemorySpace.VMEM)] * n_in,
        out_specs=pl.BlockSpec(memory_space=pltpu.MemorySpace.VMEM),
    )(*dyn_inputs, *flat_w)


# ------------------------------ JAX glue ------------------------------
def get_attn_pad_mask(seq_q, seq_k, pad_index):
    B, Lq = seq_q.shape
    Lk = seq_k.shape[1]
    m = (seq_k == pad_index).astype(jnp.float32)[:, None, :]
    return jnp.broadcast_to(m, (B, Lq, Lk))


def get_attn_subsequent_mask(B, L):
    m = jnp.triu(jnp.ones((L, L), jnp.float32), k=1)
    return jnp.broadcast_to(m[None], (B, L, L))


def make_pos_table(max_len, d_model):
    pos = jnp.arange(max_len, dtype=jnp.float32)[:, None]
    i = jnp.arange(d_model)[None, :]
    angle = pos / jnp.power(10000.0, (2 * (i // 2)).astype(jnp.float32) / d_model)
    return jnp.where(i % 2 == 0, jnp.sin(angle), jnp.cos(angle)).astype(jnp.float32)


def _build_kernel_inputs(model, enc_inputs, dec_inputs, mask):
    B, S = enc_inputs.shape
    D = P.d_model
    emb = model['emb']
    enc_emb = emb[enc_inputs].reshape(B * S, D)
    dec_emb = emb[dec_inputs].reshape(B * S, D)
    pe = jnp.broadcast_to(model['pe'][:S][None], (B, S, D)).reshape(B * S, D)
    pm_enc = mask.astype(jnp.float32).reshape(B * S, 1)
    d_mask = 1.0 - (enc_inputs == P.pad_index).astype(jnp.float32)
    pm_dec = d_mask.reshape(B * S, 1)
    # Additive (-1e9) attention masks.  NB: the encoder self-attn pad mask uses
    # pad_index == vocab_size_a, faithfully reproducing get_seq_embed().
    m_enc = NEG_INF * get_attn_pad_mask(enc_inputs, enc_inputs, P.vocab_size_a)
    dec_self = (get_attn_pad_mask(dec_inputs, dec_inputs, P.pad_index)
                + get_attn_subsequent_mask(B, S)) > 0
    m_dself = NEG_INF * dec_self.astype(jnp.float32)
    m_denc = NEG_INF * get_attn_pad_mask(dec_inputs, enc_inputs, P.pad_index)
    return (enc_emb, dec_emb, pe, pm_enc, pm_dec, m_enc, m_dself, m_denc)


# ------------------------------ parameters ------------------------------
def _normal(key, shape, scale=0.02):
    return scale * jax.random.normal(key, shape, dtype=jnp.float32)


def init_attn_params(key, d_model, h, dk, dv):
    ks = jax.random.split(key, 4)
    return dict(
        wq=_normal(ks[0], (d_model, h * dk)), bq=jnp.zeros((h * dk,), jnp.float32),
        wk=_normal(ks[1], (d_model, h * dk)), bk=jnp.zeros((h * dk,), jnp.float32),
        wv=_normal(ks[2], (d_model, h * dv)), bv=jnp.zeros((h * dv,), jnp.float32),
        wo=_normal(ks[3], (h * dv, d_model)), bo=jnp.zeros((d_model,), jnp.float32),
        ln_g=jnp.ones((d_model,), jnp.float32), ln_b=jnp.zeros((d_model,), jnp.float32))


def init_ffn_params(key, d_model, d_ff):
    k1, k2 = jax.random.split(key)
    return dict(
        w1=_normal(k1, (d_model, d_ff)), b1=jnp.zeros((d_ff,), jnp.float32),
        w2=_normal(k2, (d_ff, d_model)), b2=jnp.zeros((d_model,), jnp.float32),
        ln_g=jnp.ones((d_model,), jnp.float32), ln_b=jnp.zeros((d_model,), jnp.float32))


def init_params(key):
    keys = jax.random.split(key, 4)
    enc_layers = []
    for i in range(P.num_blocks):
        ka, kf = jax.random.split(jax.random.fold_in(keys[1], i))
        enc_layers.append(dict(self=init_attn_params(ka, P.d_model, P.num_heads, P.d_k, P.d_v),
                               ffn=init_ffn_params(kf, P.d_model, P.d_ff)))
    dec_layers = []
    for i in range(P.num_blocks):
        ka, kc, kf = jax.random.split(jax.random.fold_in(keys[2], i), 3)
        dec_layers.append(dict(self=init_attn_params(ka, P.d_model, P.num_heads, P.d_k, P.d_v),
                               cross=init_attn_params(kc, P.d_model, P.num_heads, P.d_k, P.d_v),
                               ffn=init_ffn_params(kf, P.d_model, P.d_ff)))
    return dict(
        src_emb_a=_normal(keys[0], (P.vocab_size_a + 1, P.d_model)),
        encoder=enc_layers,            # enc_share=True -> single shared encoder
        decoder_a=dec_layers,          # dec_share=False, domain 'a'
        projection_a=_normal(keys[3], (P.d_model, P.vocab_size_a)),  # bias=False
        pe_table=make_pos_table(P.enc_maxlen, P.d_model))


def prepare_model(params):
    """Pack PyTorch-style per-module params into fused, kernel-friendly slabs."""
    def row(v):
        return v.reshape(1, -1)

    def self_attn(p):
        return dict(wqkv=jnp.concatenate([p['wq'], p['wk'], p['wv']], axis=1),
                    bqkv=row(jnp.concatenate([p['bq'], p['bk'], p['bv']])),
                    wo=p['wo'], bo=row(p['bo']),
                    ln_g=row(p['ln_g']), ln_b=row(p['ln_b']))

    def cross_attn(p):
        return dict(wq=p['wq'], bq=row(p['bq']),
                    wkv=jnp.concatenate([p['wk'], p['wv']], axis=1),
                    bkv=row(jnp.concatenate([p['bk'], p['bv']])),
                    wo=p['wo'], bo=row(p['bo']),
                    ln_g=row(p['ln_g']), ln_b=row(p['ln_b']))

    def ffn(p):
        return dict(w1=p['w1'], b1=row(p['b1']), w2=p['w2'], b2=row(p['b2']),
                    ln_g=row(p['ln_g']), ln_b=row(p['ln_b']))

    enc = [dict(self=self_attn(l['self']), ffn=ffn(l['ffn'])) for l in params['encoder']]
    dec = [dict(self=self_attn(l['self']), cross=cross_attn(l['cross']), ffn=ffn(l['ffn']))
           for l in params['decoder_a']]
    # pad the (bias-free) vocab projection to 128 lanes for lane-dense stores
    proj = jnp.zeros((P.d_model, VOCAB_PAD), jnp.float32)
    proj = proj.at[:, :P.vocab_size_a].set(params['projection_a'])
    return dict(emb=params['src_emb_a'], pe=params['pe_table'],
                kw=dict(enc=enc, dec=dec, proj=proj))


# ------------------------------ model forward ------------------------------
@jax.jit
def forward(model, enc_inputs, dec_inputs, dec_outputs, n_items, mask):
    del dec_outputs, n_items                 # only used when decoder_neg=True
    B, S = enc_inputs.shape
    dyn = _build_kernel_inputs(model, enc_inputs, dec_inputs, mask)
    logits_pad = fused_forward_call(model['kw'], dyn, B=B, S=S)
    return logits_pad[:, :P.vocab_size_a].reshape(B, S, P.vocab_size_a)


def reference_forward(model, enc_inputs, dec_inputs, mask):
    """Pure-JAX (no Pallas) reference of the identical math, for validation."""
    B, S = enc_inputs.shape
    dyn = _build_kernel_inputs(model, enc_inputs, dec_inputs, mask)
    logits_pad = _transformer_math(model['kw'], *dyn, B=B, S=S, approx=False)
    return logits_pad[:, :P.vocab_size_a].reshape(B, S, P.vocab_size_a)


# ------------------------------ driver ------------------------------
if __name__ == "__main__":
    key = jax.random.PRNGKey(0)
    k1, k2, k3, k4, kp = jax.random.split(key, 5)
    B, S = 2, P.enc_maxlen

    enc_inputs = jax.random.randint(k1, (B, S), 1, P.vocab_size_a, dtype=jnp.int32)
    dec_inputs = jax.random.randint(k2, (B, S), 1, P.vocab_size_a, dtype=jnp.int32)
    # introduce a couple of pad tokens to exercise the masks
    enc_inputs = enc_inputs.at[0, -2:].set(P.pad_index)
    dec_inputs = dec_inputs.at[0, -2:].set(P.pad_index)
    dec_outputs = jax.random.randint(k3, (B, S), 1, P.vocab_size_a, dtype=jnp.int32)
    n_items = jax.random.randint(k4, (B, S * P.n_negs), 1, P.vocab_size_a, dtype=jnp.int32)
    mask = (enc_inputs != P.pad_index).astype(jnp.float32)

    model = prepare_model(init_params(kp))
    logits = forward(model, enc_inputs, dec_inputs, dec_outputs, n_items, mask)
    logits = jax.block_until_ready(logits)

    assert logits.shape == (B, S, P.vocab_size_a)
    assert bool(jnp.all(jnp.isfinite(logits)))

    # validate fused kernel against the pure-JAX reference of the same math
    ref = reference_forward(model, enc_inputs, dec_inputs, mask)
    assert bool(jnp.allclose(logits, ref, rtol=1e-2, atol=1e-2)), \
        float(jnp.max(jnp.abs(logits - ref)))

    print("KERNEL_OK")
</pallas_src>

<mosaic_0001>
module attributes {stable_mosaic.version = 11 : i64} {
  func.func @kernel(%arg0: memref<16x32xf32, #tpu.memory_space<vmem>>, %arg1: memref<16x32xf32, #tpu.memory_space<vmem>>, %arg2: memref<16x32xf32, #tpu.memory_space<vmem>>, %arg3: memref<16x1xf32, #tpu.memory_space<vmem>>, %arg4: memref<16x1xf32, #tpu.memory_space<vmem>>, %arg5: memref<2x8x8xf32, #tpu.memory_space<vmem>>, %arg6: memref<2x8x8xf32, #tpu.memory_space<vmem>>, %arg7: memref<2x8x8xf32, #tpu.memory_space<vmem>>, %arg8: memref<1x64xf32, #tpu.memory_space<vmem>>, %arg9: memref<1x32xf32, #tpu.memory_space<vmem>>, %arg10: memref<1x32xf32, #tpu.memory_space<vmem>>, %arg11: memref<1x32xf32, #tpu.memory_space<vmem>>, %arg12: memref<1x32xf32, #tpu.memory_space<vmem>>, %arg13: memref<32x64xf32, #tpu.memory_space<vmem>>, %arg14: memref<32x32xf32, #tpu.memory_space<vmem>>, %arg15: memref<32x32xf32, #tpu.memory_space<vmem>>, %arg16: memref<1x64xf32, #tpu.memory_space<vmem>>, %arg17: memref<1x32xf32, #tpu.memory_space<vmem>>, %arg18: memref<1x32xf32, #tpu.memory_space<vmem>>, %arg19: memref<1x32xf32, #tpu.memory_space<vmem>>, %arg20: memref<32x64xf32, #tpu.memory_space<vmem>>, %arg21: memref<64x32xf32, #tpu.memory_space<vmem>>, %arg22: memref<1x32xf32, #tpu.memory_space<vmem>>, %arg23: memref<1x96xf32, #tpu.memory_space<vmem>>, %arg24: memref<1x32xf32, #tpu.memory_space<vmem>>, %arg25: memref<1x32xf32, #tpu.memory_space<vmem>>, %arg26: memref<32x32xf32, #tpu.memory_space<vmem>>, %arg27: memref<32x96xf32, #tpu.memory_space<vmem>>, %arg28: memref<1x64xf32, #tpu.memory_space<vmem>>, %arg29: memref<1x32xf32, #tpu.memory_space<vmem>>, %arg30: memref<1x32xf32, #tpu.memory_space<vmem>>, %arg31: memref<1x32xf32, #tpu.memory_space<vmem>>, %arg32: memref<32x64xf32, #tpu.memory_space<vmem>>, %arg33: memref<64x32xf32, #tpu.memory_space<vmem>>, %arg34: memref<1x32xf32, #tpu.memory_space<vmem>>, %arg35: memref<1x96xf32, #tpu.memory_space<vmem>>, %arg36: memref<1x32xf32, #tpu.memory_space<vmem>>, %arg37: memref<1x32xf32, #tpu.memory_space<vmem>>, %arg38: memref<32x32xf32, #tpu.memory_space<vmem>>, %arg39: memref<32x96xf32, #tpu.memory_space<vmem>>, %arg40: memref<32x128xf32, #tpu.memory_space<vmem>>, %arg41: memref<16x128xf32, #tpu.memory_space<vmem>>) attributes {dimension_semantics = [], scalar_prefetch = 0 : i64, scratch_operands = 0 : i64, tpu.core_type = #tpu.core_type<tc>} {
    %c0 = arith.constant 0 : index
    %c0_0 = arith.constant 0 : index
    %0 = vector.load %arg0[%c0, %c0_0] : memref<16x32xf32, #tpu.memory_space<vmem>>, vector<16x32xf32>
    %c0_1 = arith.constant 0 : index
    %c0_2 = arith.constant 0 : index
    %1 = vector.load %arg1[%c0_1, %c0_2] : memref<16x32xf32, #tpu.memory_space<vmem>>, vector<16x32xf32>
    %c0_3 = arith.constant 0 : index
    %c0_4 = arith.constant 0 : index
    %2 = vector.load %arg2[%c0_3, %c0_4] : memref<16x32xf32, #tpu.memory_space<vmem>>, vector<16x32xf32>
    %c0_5 = arith.constant 0 : index
    %c0_6 = arith.constant 0 : index
    %3 = vector.load %arg3[%c0_5, %c0_6] : memref<16x1xf32, #tpu.memory_space<vmem>>, vector<16x1xf32>
    %c0_7 = arith.constant 0 : index
    %c0_8 = arith.constant 0 : index
    %4 = vector.load %arg4[%c0_7, %c0_8] : memref<16x1xf32, #tpu.memory_space<vmem>>, vector<16x1xf32>
    %c0_9 = arith.constant 0 : index
    %c0_10 = arith.constant 0 : index
    %c0_11 = arith.constant 0 : index
    %5 = vector.load %arg5[%c0_9, %c0_10, %c0_11] : memref<2x8x8xf32, #tpu.memory_space<vmem>>, vector<2x8x8xf32>
    %c0_12 = arith.constant 0 : index
    %c0_13 = arith.constant 0 : index
    %c0_14 = arith.constant 0 : index
    %6 = vector.load %arg6[%c0_12, %c0_13, %c0_14] : memref<2x8x8xf32, #tpu.memory_space<vmem>>, vector<2x8x8xf32>
    %c0_15 = arith.constant 0 : index
    %c0_16 = arith.constant 0 : index
    %c0_17 = arith.constant 0 : index
    %7 = vector.load %arg7[%c0_15, %c0_16, %c0_17] : memref<2x8x8xf32, #tpu.memory_space<vmem>>, vector<2x8x8xf32>
    %c0_18 = arith.constant 0 : index
    %c0_19 = arith.constant 0 : index
    %8 = vector.load %arg8[%c0_18, %c0_19] : memref<1x64xf32, #tpu.memory_space<vmem>>, vector<1x64xf32>
    %c0_20 = arith.constant 0 : index
    %c0_21 = arith.constant 0 : index
    %9 = vector.load %arg9[%c0_20, %c0_21] : memref<1x32xf32, #tpu.memory_space<vmem>>, vector<1x32xf32>
    %c0_22 = arith.constant 0 : index
    %c0_23 = arith.constant 0 : index
    %10 = vector.load %arg10[%c0_22, %c0_23] : memref<1x32xf32, #tpu.memory_space<vmem>>, vector<1x32xf32>
    %c0_24 = arith.constant 0 : index
    %c0_25 = arith.constant 0 : index
    %11 = vector.load %arg11[%c0_24, %c0_25] : memref<1x32xf32, #tpu.memory_space<vmem>>, vector<1x32xf32>
    %c0_26 = arith.constant 0 : index
    %c0_27 = arith.constant 0 : index
    %12 = vector.load %arg12[%c0_26, %c0_27] : memref<1x32xf32, #tpu.memory_space<vmem>>, vector<1x32xf32>
    %c0_28 = arith.constant 0 : index
    %c0_29 = arith.constant 0 : index
    %13 = vector.load %arg13[%c0_28, %c0_29] : memref<32x64xf32, #tpu.memory_space<vmem>>, vector<32x64xf32>
    %c0_30 = arith.constant 0 : index
    %c0_31 = arith.constant 0 : index
    %14 = vector.load %arg14[%c0_30, %c0_31] : memref<32x32xf32, #tpu.memory_space<vmem>>, vector<32x32xf32>
    %c0_32 = arith.constant 0 : index
    %c0_33 = arith.constant 0 : index
    %15 = vector.load %arg15[%c0_32, %c0_33] : memref<32x32xf32, #tpu.memory_space<vmem>>, vector<32x32xf32>
    %c0_34 = arith.constant 0 : index
    %c0_35 = arith.constant 0 : index
    %16 = vector.load %arg16[%c0_34, %c0_35] : memref<1x64xf32, #tpu.memory_space<vmem>>, vector<1x64xf32>
    %c0_36 = arith.constant 0 : index
    %c0_37 = arith.constant 0 : index
    %17 = vector.load %arg17[%c0_36, %c0_37] : memref<1x32xf32, #tpu.memory_space<vmem>>, vector<1x32xf32>
    %c0_38 = arith.constant 0 : index
    %c0_39 = arith.constant 0 : index
    %18 = vector.load %arg18[%c0_38, %c0_39] : memref<1x32xf32, #tpu.memory_space<vmem>>, vector<1x32xf32>
    %c0_40 = arith.constant 0 : index
    %c0_41 = arith.constant 0 : index
    %19 = vector.load %arg19[%c0_40, %c0_41] : memref<1x32xf32, #tpu.memory_space<vmem>>, vector<1x32xf32>
    %c0_42 = arith.constant 0 : index
    %c0_43 = arith.constant 0 : index
    %20 = vector.load %arg20[%c0_42, %c0_43] : memref<32x64xf32, #tpu.memory_space<vmem>>, vector<32x64xf32>
    %c0_44 = arith.constant 0 : index
    %c0_45 = arith.constant 0 : index
    %21 = vector.load %arg21[%c0_44, %c0_45] : memref<64x32xf32, #tpu.memory_space<vmem>>, vector<64x32xf32>
    %c0_46 = arith.constant 0 : index
    %c0_47 = arith.constant 0 : index
    %22 = vector.load %arg22[%c0_46, %c0_47] : memref<1x32xf32, #tpu.memory_space<vmem>>, vector<1x32xf32>
    %c0_48 = arith.constant 0 : index
    %c0_49 = arith.constant 0 : index
    %23 = vector.load %arg23[%c0_48, %c0_49] : memref<1x96xf32, #tpu.memory_space<vmem>>, vector<1x96xf32>
    %c0_50 = arith.constant 0 : index
    %c0_51 = arith.constant 0 : index
    %24 = vector.load %arg24[%c0_50, %c0_51] : memref<1x32xf32, #tpu.memory_space<vmem>>, vector<1x32xf32>
    %c0_52 = arith.constant 0 : index
    %c0_53 = arith.constant 0 : index
    %25 = vector.load %arg25[%c0_52, %c0_53] : memref<1x32xf32, #tpu.memory_space<vmem>>, vector<1x32xf32>
    %c0_54 = arith.constant 0 : index
    %c0_55 = arith.constant 0 : index
    %26 = vector.load %arg26[%c0_54, %c0_55] : memref<32x32xf32, #tpu.memory_space<vmem>>, vector<32x32xf32>
    %c0_56 = arith.constant 0 : index
    %c0_57 = arith.constant 0 : index
    %27 = vector.load %arg27[%c0_56, %c0_57] : memref<32x96xf32, #tpu.memory_space<vmem>>, vector<32x96xf32>
    %c0_58 = arith.constant 0 : index
    %c0_59 = arith.constant 0 : index
    %28 = vector.load %arg28[%c0_58, %c0_59] : memref<1x64xf32, #tpu.memory_space<vmem>>, vector<1x64xf32>
    %c0_60 = arith.constant 0 : index
    %c0_61 = arith.constant 0 : index
    %29 = vector.load %arg29[%c0_60, %c0_61] : memref<1x32xf32, #tpu.memory_space<vmem>>, vector<1x32xf32>
    %c0_62 = arith.constant 0 : index
    %c0_63 = arith.constant 0 : index
    %30 = vector.load %arg30[%c0_62, %c0_63] : memref<1x32xf32, #tpu.memory_space<vmem>>, vector<1x32xf32>
    %c0_64 = arith.constant 0 : index
    %c0_65 = arith.constant 0 : index
    %31 = vector.load %arg31[%c0_64, %c0_65] : memref<1x32xf32, #tpu.memory_space<vmem>>, vector<1x32xf32>
    %c0_66 = arith.constant 0 : index
    %c0_67 = arith.constant 0 : index
    %32 = vector.load %arg32[%c0_66, %c0_67] : memref<32x64xf32, #tpu.memory_space<vmem>>, vector<32x64xf32>
    %c0_68 = arith.constant 0 : index
    %c0_69 = arith.constant 0 : index
    %33 = vector.load %arg33[%c0_68, %c0_69] : memref<64x32xf32, #tpu.memory_space<vmem>>, vector<64x32xf32>
    %c0_70 = arith.constant 0 : index
    %c0_71 = arith.constant 0 : index
    %34 = vector.load %arg34[%c0_70, %c0_71] : memref<1x32xf32, #tpu.memory_space<vmem>>, vector<1x32xf32>
    %c0_72 = arith.constant 0 : index
    %c0_73 = arith.constant 0 : index
    %35 = vector.load %arg35[%c0_72, %c0_73] : memref<1x96xf32, #tpu.memory_space<vmem>>, vector<1x96xf32>
    %c0_74 = arith.constant 0 : index
    %c0_75 = arith.constant 0 : index
    %36 = vector.load %arg36[%c0_74, %c0_75] : memref<1x32xf32, #tpu.memory_space<vmem>>, vector<1x32xf32>
    %c0_76 = arith.constant 0 : index
    %c0_77 = arith.constant 0 : index
    %37 = vector.load %arg37[%c0_76, %c0_77] : memref<1x32xf32, #tpu.memory_space<vmem>>, vector<1x32xf32>
    %c0_78 = arith.constant 0 : index
    %c0_79 = arith.constant 0 : index
    %38 = vector.load %arg38[%c0_78, %c0_79] : memref<32x32xf32, #tpu.memory_space<vmem>>, vector<32x32xf32>
    %c0_80 = arith.constant 0 : index
    %c0_81 = arith.constant 0 : index
    %39 = vector.load %arg39[%c0_80, %c0_81] : memref<32x96xf32, #tpu.memory_space<vmem>>, vector<32x96xf32>
    %c0_82 = arith.constant 0 : index
    %c0_83 = arith.constant 0 : index
    %40 = vector.load %arg40[%c0_82, %c0_83] : memref<32x128xf32, #tpu.memory_space<vmem>>, vector<32x128xf32>
    %41 = arith.addf %0, %2 : vector<16x32xf32>
    %42 = vector.broadcast %3 : vector<16x1xf32> to vector<16x32xf32>
    %43 = arith.mulf %41, %42 : vector<16x32xf32>
    %cst = arith.constant dense<0.000000e+00> : vector<16x96xf32>
    %44 = tpu.matmul %43, %39, %cst {dimension_numbers = #tpu.dot_dimension_numbers<[1], [0], [0], [1], [0, 0, 1, 1], [], []>} : vector<16x32xf32>, vector<32x96xf32>, vector<16x96xf32> -> vector<16x96xf32>
    %45 = vector.broadcast %35 : vector<1x96xf32> to vector<16x96xf32>
    %46 = arith.addf %44, %45 : vector<16x96xf32>
    %47 = vector.extract_strided_slice %46 {offsets = [0, 0], sizes = [16, 32], strides = [1, 1]} : vector<16x96xf32> to vector<16x32xf32>
    %48 = vector.extract_strided_slice %46 {offsets = [0, 32], sizes = [16, 32], strides = [1, 1]} : vector<16x96xf32> to vector<16x32xf32>
    %49 = vector.extract_strided_slice %46 {offsets = [0, 64], sizes = [16, 32], strides = [1, 1]} : vector<16x96xf32> to vector<16x32xf32>
    %50 = vector.shape_cast %47 : vector<16x32xf32> to vector<2x8x32xf32>
    %51 = vector.shape_cast %48 : vector<16x32xf32> to vector<2x8x32xf32>
    %52 = vector.shape_cast %49 : vector<16x32xf32> to vector<2x8x32xf32>
    %cst_84 = arith.constant 0.000000e+00 : f32
    %53 = vector.broadcast %cst_84 : f32 to vector<16x32xf32>
    %54 = vector.extract_strided_slice %50 {offsets = [0, 0, 0], sizes = [2, 8, 8], strides = [1, 1, 1]} : vector<2x8x32xf32> to vector<2x8x8xf32>
    %55 = vector.extract_strided_slice %51 {offsets = [0, 0, 0], sizes = [2, 8, 8], strides = [1, 1, 1]} : vector<2x8x32xf32> to vector<2x8x8xf32>
    %56 = vector.extract_strided_slice %52 {offsets = [0, 0, 0], sizes = [2, 8, 8], strides = [1, 1, 1]} : vector<2x8x32xf32> to vector<2x8x8xf32>
    "tpu.trace_start"() <{level = 10 : i32, message = "bqd,bkd->bqk"}> : () -> ()
    %cst_85 = arith.constant dense<0.000000e+00> : vector<2x8x8xf32>
    %57 = tpu.matmul %54, %55, %cst_85 {dimension_numbers = #tpu.dot_dimension_numbers<[2], [2], [1], [1], [0, 0, 0, 1, 1, 1], [0], [0]>} : vector<2x8x8xf32>, vector<2x8x8xf32>, vector<2x8x8xf32> -> vector<2x8x8xf32>
    "tpu.trace_stop"() : () -> ()
    %cst_86 = arith.constant 0.353553385 : f32
    %58 = vector.broadcast %cst_86 : f32 to vector<2x8x8xf32>
    %59 = arith.mulf %57, %58 : vector<2x8x8xf32>
    %60 = arith.addf %59, %5 : vector<2x8x8xf32>
    %cst_87 = arith.constant dense<0xFF800000> : vector<2x8xf32>
    %61 = vector.multi_reduction <maximumf>, %60, %cst_87 [2] : vector<2x8x8xf32> to vector<2x8xf32>
    %62 = vector.shape_cast %61 : vector<2x8xf32> to vector<2x8x1xf32>
    %63 = vector.broadcast %62 : vector<2x8x1xf32> to vector<2x8x8xf32>
    %64 = arith.subf %60, %63 : vector<2x8x8xf32>
    %65 = math.exp %64 : vector<2x8x8xf32>
    %cst_88 = arith.constant dense<0.000000e+00> : vector<2x8xf32>
    %66 = vector.multi_reduction <add>, %65, %cst_88 [2] : vector<2x8x8xf32> to vector<2x8xf32>
    %67 = vector.shape_cast %66 : vector<2x8xf32> to vector<2x8x1xf32>
    %68 = tpu.reciprocal %67 {approx = true} : vector<2x8x1xf32> -> vector<2x8x1xf32>
    %69 = vector.broadcast %68 : vector<2x8x1xf32> to vector<2x8x8xf32>
    %70 = arith.mulf %65, %69 : vector<2x8x8xf32>
    "tpu.trace_start"() <{level = 10 : i32, message = "bqk,bkd->bqd"}> : () -> ()
    %cst_89 = arith.constant dense<0.000000e+00> : vector<2x8x8xf32>
    %71 = tpu.matmul %70, %56, %cst_89 {dimension_numbers = #tpu.dot_dimension_numbers<[2], [1], [1], [2], [0, 0, 0, 1, 1, 2], [0], [0]>} : vector<2x8x8xf32>, vector<2x8x8xf32>, vector<2x8x8xf32> -> vector<2x8x8xf32>
    "tpu.trace_stop"() : () -> ()
    %72 = vector.shape_cast %71 : vector<2x8x8xf32> to vector<16x8xf32>
    %73 = vector.extract_strided_slice %38 {offsets = [0, 0], sizes = [8, 32], strides = [1, 1]} : vector<32x32xf32> to vector<8x32xf32>
    %cst_90 = arith.constant dense<0.000000e+00> : vector<16x32xf32>
    %74 = tpu.matmul %72, %73, %cst_90 {dimension_numbers = #tpu.dot_dimension_numbers<[1], [0], [0], [1], [0, 0, 1, 1], [], []>} : vector<16x8xf32>, vector<8x32xf32>, vector<16x32xf32> -> vector<16x32xf32>
    %75 = arith.addf %53, %74 : vector<16x32xf32>
    %76 = vector.extract_strided_slice %50 {offsets = [0, 0, 8], sizes = [2, 8, 8], strides = [1, 1, 1]} : vector<2x8x32xf32> to vector<2x8x8xf32>
    %77 = vector.extract_strided_slice %51 {offsets = [0, 0, 8], sizes = [2, 8, 8], strides = [1, 1, 1]} : vector<2x8x32xf32> to vector<2x8x8xf32>
    %78 = vector.extract_strided_slice %52 {offsets = [0, 0, 8], sizes = [2, 8, 8], strides = [1, 1, 1]} : vector<2x8x32xf32> to vector<2x8x8xf32>
    "tpu.trace_start"() <{level = 10 : i32, message = "bqd,bkd->bqk"}> : () -> ()
    %cst_91 = arith.constant dense<0.000000e+00> : vector<2x8x8xf32>
    %79 = tpu.matmul %76, %77, %cst_91 {dimension_numbers = #tpu.dot_dimension_numbers<[2], [2], [1], [1], [0, 0, 0, 1, 1, 1], [0], [0]>} : vector<2x8x8xf32>, vector<2x8x8xf32>, vector<2x8x8xf32> -> vector<2x8x8xf32>
    "tpu.trace_stop"() : () -> ()
    %cst_92 = arith.constant 0.353553385 : f32
    %80 = vector.broadcast %cst_92 : f32 to vector<2x8x8xf32>
    %81 = arith.mulf %79, %80 : vector<2x8x8xf32>
    %82 = arith.addf %81, %5 : vector<2x8x8xf32>
    %cst_93 = arith.constant dense<0xFF800000> : vector<2x8xf32>
    %83 = vector.multi_reduction <maximumf>, %82, %cst_93 [2] : vector<2x8x8xf32> to vector<2x8xf32>
    %84 = vector.shape_cast %83 : vector<2x8xf32> to vector<2x8x1xf32>
    %85 = vector.broadcast %84 : vector<2x8x1xf32> to vector<2x8x8xf32>
    %86 = arith.subf %82, %85 : vector<2x8x8xf32>
    %87 = math.exp %86 : vector<2x8x8xf32>
    %cst_94 = arith.constant dense<0.000000e+00> : vector<2x8xf32>
    %88 = vector.multi_reduction <add>, %87, %cst_94 [2] : vector<2x8x8xf32> to vector<2x8xf32>
    %89 = vector.shape_cast %88 : vector<2x8xf32> to vector<2x8x1xf32>
    %90 = tpu.reciprocal %89 {approx = true} : vector<2x8x1xf32> -> vector<2x8x1xf32>
    %91 = vector.broadcast %90 : vector<2x8x1xf32> to vector<2x8x8xf32>
    %92 = arith.mulf %87, %91 : vector<2x8x8xf32>
    "tpu.trace_start"() <{level = 10 : i32, message = "bqk,bkd->bqd"}> : () -> ()
    %cst_95 = arith.constant dense<0.000000e+00> : vector<2x8x8xf32>
    %93 = tpu.matmul %92, %78, %cst_95 {dimension_numbers = #tpu.dot_dimension_numbers<[2], [1], [1], [2], [0, 0, 0, 1, 1, 2], [0], [0]>} : vector<2x8x8xf32>, vector<2x8x8xf32>, vector<2x8x8xf32> -> vector<2x8x8xf32>
    "tpu.trace_stop"() : () -> ()
    %94 = vector.shape_cast %93 : vector<2x8x8xf32> to vector<16x8xf32>
    %95 = vector.extract_strided_slice %38 {offsets = [8, 0], sizes = [8, 32], strides = [1, 1]} : vector<32x32xf32> to vector<8x32xf32>
    %cst_96 = arith.constant dense<0.000000e+00> : vector<16x32xf32>
    %96 = tpu.matmul %94, %95, %cst_96 {dimension_numbers = #tpu.dot_dimension_numbers<[1], [0], [0], [1], [0, 0, 1, 1], [], []>} : vector<16x8xf32>, vector<8x32xf32>, vector<16x32xf32> -> vector<16x32xf32>
    %97 = arith.addf %75, %96 : vector<16x32xf32>
    %98 = vector.extract_strided_slice %50 {offsets = [0, 0, 16], sizes = [2, 8, 8], strides = [1, 1, 1]} : vector<2x8x32xf32> to vector<2x8x8xf32>
    %99 = vector.extract_strided_slice %51 {offsets = [0, 0, 16], sizes = [2, 8, 8], strides = [1, 1, 1]} : vector<2x8x32xf32> to vector<2x8x8xf32>
    %100 = vector.extract_strided_slice %52 {offsets = [0, 0, 16], sizes = [2, 8, 8], strides = [1, 1, 1]} : vector<2x8x32xf32> to vector<2x8x8xf32>
    "tpu.trace_start"() <{level = 10 : i32, message = "bqd,bkd->bqk"}> : () -> ()
    %cst_97 = arith.constant dense<0.000000e+00> : vector<2x8x8xf32>
    %101 = tpu.matmul %98, %99, %cst_97 {dimension_numbers = #tpu.dot_dimension_numbers<[2], [2], [1], [1], [0, 0, 0, 1, 1, 1], [0], [0]>} : vector<2x8x8xf32>, vector<2x8x8xf32>, vector<2x8x8xf32> -> vector<2x8x8xf32>
    "tpu.trace_stop"() : () -> ()
    %cst_98 = arith.constant 0.353553385 : f32
    %102 = vector.broadcast %cst_98 : f32 to vector<2x8x8xf32>
    %103 = arith.mulf %101, %102 : vector<2x8x8xf32>
    %104 = arith.addf %103, %5 : vector<2x8x8xf32>
    %cst_99 = arith.constant dense<0xFF800000> : vector<2x8xf32>
    %105 = vector.multi_reduction <maximumf>, %104, %cst_99 [2] : vector<2x8x8xf32> to vector<2x8xf32>
    %106 = vector.shape_cast %105 : vector<2x8xf32> to vector<2x8x1xf32>
    %107 = vector.broadcast %106 : vector<2x8x1xf32> to vector<2x8x8xf32>
    %108 = arith.subf %104, %107 : vector<2x8x8xf32>
    %109 = math.exp %108 : vector<2x8x8xf32>
    %cst_100 = arith.constant dense<0.000000e+00> : vector<2x8xf32>
    %110 = vector.multi_reduction <add>, %109, %cst_100 [2] : vector<2x8x8xf32> to vector<2x8xf32>
    %111 = vector.shape_cast %110 : vector<2x8xf32> to vector<2x8x1xf32>
    %112 = tpu.reciprocal %111 {approx = true} : vector<2x8x1xf32> -> vector<2x8x1xf32>
    %113 = vector.broadcast %112 : vector<2x8x1xf32> to vector<2x8x8xf32>
    %114 = arith.mulf %109, %113 : vector<2x8x8xf32>
    "tpu.trace_start"() <{level = 10 : i32, message = "bqk,bkd->bqd"}> : () -> ()
    %cst_101 = arith.constant dense<0.000000e+00> : vector<2x8x8xf32>
    %115 = tpu.matmul %114, %100, %cst_101 {dimension_numbers = #tpu.dot_dimension_numbers<[2], [1], [1], [2], [0, 0, 0, 1, 1, 2], [0], [0]>} : vector<2x8x8xf32>, vector<2x8x8xf32>, vector<2x8x8xf32> -> vector<2x8x8xf32>
    "tpu.trace_stop"() : () -> ()
    %116 = vector.shape_cast %115 : vector<2x8x8xf32> to vector<16x8xf32>
    %117 = vector.extract_strided_slice %38 {offsets = [16, 0], sizes = [8, 32], strides = [1, 1]} : vector<32x32xf32> to vector<8x32xf32>
    %cst_102 = arith.constant dense<0.000000e+00> : vector<16x32xf32>
    %118 = tpu.matmul %116, %117, %cst_102 {dimension_numbers = #tpu.dot_dimension_numbers<[1], [0], [0], [1], [0, 0, 1, 1], [], []>} : vector<16x8xf32>, vector<8x32xf32>, vector<16x32xf32> -> vector<16x32xf32>
    %119 = arith.addf %97, %118 : vector<16x32xf32>
    %120 = vector.extract_strided_slice %50 {offsets = [0, 0, 24], sizes = [2, 8, 8], strides = [1, 1, 1]} : vector<2x8x32xf32> to vector<2x8x8xf32>
    %121 = vector.extract_strided_slice %51 {offsets = [0, 0, 24], sizes = [2, 8, 8], strides = [1, 1, 1]} : vector<2x8x32xf32> to vector<2x8x8xf32>
    %122 = vector.extract_strided_slice %52 {offsets = [0, 0, 24], sizes = [2, 8, 8], strides = [1, 1, 1]} : vector<2x8x32xf32> to vector<2x8x8xf32>
    "tpu.trace_start"() <{level = 10 : i32, message = "bqd,bkd->bqk"}> : () -> ()
    %cst_103 = arith.constant dense<0.000000e+00> : vector<2x8x8xf32>
    %123 = tpu.matmul %120, %121, %cst_103 {dimension_numbers = #tpu.dot_dimension_numbers<[2], [2], [1], [1], [0, 0, 0, 1, 1, 1], [0], [0]>} : vector<2x8x8xf32>, vector<2x8x8xf32>, vector<2x8x8xf32> -> vector<2x8x8xf32>
    "tpu.trace_stop"() : () -> ()
    %cst_104 = arith.constant 0.353553385 : f32
    %124 = vector.broadcast %cst_104 : f32 to vector<2x8x8xf32>
    %125 = arith.mulf %123, %124 : vector<2x8x8xf32>
    %126 = arith.addf %125, %5 : vector<2x8x8xf32>
    %cst_105 = arith.constant dense<0xFF800000> : vector<2x8xf32>
    %127 = vector.multi_reduction <maximumf>, %126, %cst_105 [2] : vector<2x8x8xf32> to vector<2x8xf32>
    %128 = vector.shape_cast %127 : vector<2x8xf32> to vector<2x8x1xf32>
    %129 = vector.broadcast %128 : vector<2x8x1xf32> to vector<2x8x8xf32>
    %130 = arith.subf %126, %129 : vector<2x8x8xf32>
    %131 = math.exp %130 : vector<2x8x8xf32>
    %cst_106 = arith.constant dense<0.000000e+00> : vector<2x8xf32>
    %132 = vector.multi_reduction <add>, %131, %cst_106 [2] : vector<2x8x8xf32> to vector<2x8xf32>
    %133 = vector.shape_cast %132 : vector<2x8xf32> to vector<2x8x1xf32>
    %134 = tpu.reciprocal %133 {approx = true} : vector<2x8x1xf32> -> vector<2x8x1xf32>
    %135 = vector.broadcast %134 : vector<2x8x1xf32> to vector<2x8x8xf32>
    %136 = arith.mulf %131, %135 : vector<2x8x8xf32>
    "tpu.trace_start"() <{level = 10 : i32, message = "bqk,bkd->bqd"}> : () -> ()
    %cst_107 = arith.constant dense<0.000000e+00> : vector<2x8x8xf32>
    %137 = tpu.matmul %136, %122, %cst_107 {dimension_numbers = #tpu.dot_dimension_numbers<[2], [1], [1], [2], [0, 0, 0, 1, 1, 2], [0], [0]>} : vector<2x8x8xf32>, vector<2x8x8xf32>, vector<2x8x8xf32> -> vector<2x8x8xf32>
    "tpu.trace_stop"() : () -> ()
    %138 = vector.shape_cast %137 : vector<2x8x8xf32> to vector<16x8xf32>
    %139 = vector.extract_strided_slice %38 {offsets = [24, 0], sizes = [8, 32], strides = [1, 1]} : vector<32x32xf32> to vector<8x32xf32>
    %cst_108 = arith.constant dense<0.000000e+00> : vector<16x32xf32>
    %140 = tpu.matmul %138, %139, %cst_108 {dimension_numbers = #tpu.dot_dimension_numbers<[1], [0], [0], [1], [0, 0, 1, 1], [], []>} : vector<16x8xf32>, vector<8x32xf32>, vector<16x32xf32> -> vector<16x32xf32>
    %141 = arith.addf %119, %140 : vector<16x32xf32>
    %142 = vector.broadcast %34 : vector<1x32xf32> to vector<16x32xf32>
    %143 = arith.addf %141, %142 : vector<16x32xf32>
    %144 = arith.addf %143, %43 : vector<16x32xf32>
    %cst_109 = arith.constant dense<0.000000e+00> : vector<16xf32>
    %145 = vector.multi_reduction <add>, %144, %cst_109 [1] : vector<16x32xf32> to vector<16xf32>
    %146 = vector.shape_cast %145 : vector<16xf32> to vector<16x1xf32>
    %cst_110 = arith.constant 3.200000e+01 : f32
    %147 = vector.broadcast %cst_110 : f32 to vector<16x1xf32>
    %148 = arith.divf %146, %147 : vector<16x1xf32>
    %149 = vector.broadcast %148 : vector<16x1xf32> to vector<16x32xf32>
    %150 = arith.subf %144, %149 : vector<16x32xf32>
    %151 = arith.mulf %150, %150 : vector<16x32xf32>
    %cst_111 = arith.constant dense<0.000000e+00> : vector<16xf32>
    %152 = vector.multi_reduction <add>, %151, %cst_111 [1] : vector<16x32xf32> to vector<16xf32>
    %153 = vector.shape_cast %152 : vector<16xf32> to vector<16x1xf32>
    %cst_112 = arith.constant 3.200000e+01 : f32
    %154 = vector.broadcast %cst_112 : f32 to vector<16x1xf32>
    %155 = arith.divf %153, %154 : vector<16x1xf32>
    %156 = vector.broadcast %148 : vector<16x1xf32> to vector<16x32xf32>
    %157 = arith.subf %144, %156 : vector<16x32xf32>
    %cst_113 = arith.constant 9.99999974E-6 : f32
    %158 = vector.broadcast %cst_113 : f32 to vector<16x1xf32>
    %159 = arith.addf %155, %158 : vector<16x1xf32>
    %160 = math.rsqrt %159 : vector<16x1xf32>
    %161 = vector.broadcast %160 : vector<16x1xf32> to vector<16x32xf32>
    %162 = arith.mulf %157, %161 : vector<16x32xf32>
    %163 = vector.broadcast %37 : vector<1x32xf32> to vector<16x32xf32>
    %164 = arith.mulf %162, %163 : vector<16x32xf32>
    %165 = vector.broadcast %36 : vector<1x32xf32> to vector<16x32xf32>
    %166 = arith.addf %164, %165 : vector<16x32xf32>
    %cst_114 = arith.constant dense<0.000000e+00> : vector<16x64xf32>
    %167 = tpu.matmul %166, %32, %cst_114 {dimension_numbers = #tpu.dot_dimension_numbers<[1], [0], [0], [1], [0, 0, 1, 1], [], []>} : vector<16x32xf32>, vector<32x64xf32>, vector<16x64xf32> -> vector<16x64xf32>
    %168 = vector.broadcast %28 : vector<1x64xf32> to vector<16x64xf32>
    %169 = arith.addf %167, %168 : vector<16x64xf32>
    %cst_115 = arith.constant 0.000000e+00 : f32
    %170 = vector.broadcast %cst_115 : f32 to vector<16x64xf32>
    %171 = arith.maximumf %169, %170 : vector<16x64xf32>
    %cst_116 = arith.constant dense<0.000000e+00> : vector<16x32xf32>
    %172 = tpu.matmul %171, %33, %cst_116 {dimension_numbers = #tpu.dot_dimension_numbers<[1], [0], [0], [1], [0, 0, 1, 1], [], []>} : vector<16x64xf32>, vector<64x32xf32>, vector<16x32xf32> -> vector<16x32xf32>
    %173 = vector.broadcast %29 : vector<1x32xf32> to vector<16x32xf32>
    %174 = arith.addf %172, %173 : vector<16x32xf32>
    %175 = arith.addf %174, %166 : vector<16x32xf32>
    %cst_117 = arith.constant dense<0.000000e+00> : vector<16xf32>
    %176 = vector.multi_reduction <add>, %175, %cst_117 [1] : vector<16x32xf32> to vector<16xf32>
    %177 = vector.shape_cast %176 : vector<16xf32> to vector<16x1xf32>
    %cst_118 = arith.constant 3.200000e+01 : f32
    %178 = vector.broadcast %cst_118 : f32 to vector<16x1xf32>
    %179 = arith.divf %177, %178 : vector<16x1xf32>
    %180 = vector.broadcast %179 : vector<16x1xf32> to vector<16x32xf32>
    %181 = arith.subf %175, %180 : vector<16x32xf32>
    %182 = arith.mulf %181, %181 : vector<16x32xf32>
    %cst_119 = arith.constant dense<0.000000e+00> : vector<16xf32>
    %183 = vector.multi_reduction <add>, %182, %cst_119 [1] : vector<16x32xf32> to vector<16xf32>
    %184 = vector.shape_cast %183 : vector<16xf32> to vector<16x1xf32>
    %cst_120 = arith.constant 3.200000e+01 : f32
    %185 = vector.broadcast %cst_120 : f32 to vector<16x1xf32>
    %186 = arith.divf %184, %185 : vector<16x1xf32>
    %187 = vector.broadcast %179 : vector<16x1xf32> to vector<16x32xf32>
    %188 = arith.subf %175, %187 : vector<16x32xf32>
    %cst_121 = arith.constant 9.99999974E-6 : f32
    %189 = vector.broadcast %cst_121 : f32 to vector<16x1xf32>
    %190 = arith.addf %186, %189 : vector<16x1xf32>
    %191 = math.rsqrt %190 : vector<16x1xf32>
    %192 = vector.broadcast %191 : vector<16x1xf32> to vector<16x32xf32>
    %193 = arith.mulf %188, %192 : vector<16x32xf32>
    %194 = vector.broadcast %31 : vector<1x32xf32> to vector<16x32xf32>
    %195 = arith.mulf %193, %194 : vector<16x32xf32>
    %196 = vector.broadcast %30 : vector<1x32xf32> to vector<16x32xf32>
    %197 = arith.addf %195, %196 : vector<16x32xf32>
    %198 = vector.shape_cast %197 : vector<16x32xf32> to vector<2x8x32xf32>
    %199 = vector.extract_strided_slice %198 {offsets = [0, 7, 0], sizes = [2, 1, 32], strides = [1, 1, 1]} : vector<2x8x32xf32> to vector<2x1x32xf32>
    %200 = vector.shape_cast %199 : vector<2x1x32xf32> to vector<2x1x32xf32>
    %201 = vector.broadcast %200 : vector<2x1x32xf32> to vector<2x8x32xf32>
    %202 = vector.shape_cast %201 : vector<2x8x32xf32> to vector<16x32xf32>
    %203 = arith.addf %1, %2 : vector<16x32xf32>
    %204 = vector.broadcast %4 : vector<16x1xf32> to vector<16x32xf32>
    %205 = arith.mulf %203, %204 : vector<16x32xf32>
    %cst_122 = arith.constant dense<0.000000e+00> : vector<16x96xf32>
    %206 = tpu.matmul %205, %27, %cst_122 {dimension_numbers = #tpu.dot_dimension_numbers<[1], [0], [0], [1], [0, 0, 1, 1], [], []>} : vector<16x32xf32>, vector<32x96xf32>, vector<16x96xf32> -> vector<16x96xf32>
    %207 = vector.broadcast %23 : vector<1x96xf32> to vector<16x96xf32>
    %208 = arith.addf %206, %207 : vector<16x96xf32>
    %209 = vector.extract_strided_slice %208 {offsets = [0, 0], sizes = [16, 32], strides = [1, 1]} : vector<16x96xf32> to vector<16x32xf32>
    %210 = vector.extract_strided_slice %208 {offsets = [0, 32], sizes = [16, 32], strides = [1, 1]} : vector<16x96xf32> to vector<16x32xf32>
    %211 = vector.extract_strided_slice %208 {offsets = [0, 64], sizes = [16, 32], strides = [1, 1]} : vector<16x96xf32> to vector<16x32xf32>
    %212 = vector.shape_cast %209 : vector<16x32xf32> to vector<2x8x32xf32>
    %213 = vector.shape_cast %210 : vector<16x32xf32> to vector<2x8x32xf32>
    %214 = vector.shape_cast %211 : vector<16x32xf32> to vector<2x8x32xf32>
    %cst_123 = arith.constant 0.000000e+00 : f32
    %215 = vector.broadcast %cst_123 : f32 to vector<16x32xf32>
    %216 = vector.extract_strided_slice %212 {offsets = [0, 0, 0], sizes = [2, 8, 8], strides = [1, 1, 1]} : vector<2x8x32xf32> to vector<2x8x8xf32>
    %217 = vector.extract_strided_slice %213 {offsets = [0, 0, 0], sizes = [2, 8, 8], strides = [1, 1, 1]} : vector<2x8x32xf32> to vector<2x8x8xf32>
    %218 = vector.extract_strided_slice %214 {offsets = [0, 0, 0], sizes = [2, 8, 8], strides = [1, 1, 1]} : vector<2x8x32xf32> to vector<2x8x8xf32>
    "tpu.trace_start"() <{level = 10 : i32, message = "bqd,bkd->bqk"}> : () -> ()
    %cst_124 = arith.constant dense<0.000000e+00> : vector<2x8x8xf32>
    %219 = tpu.matmul %216, %217, %cst_124 {dimension_numbers = #tpu.dot_dimension_numbers<[2], [2], [1], [1], [0, 0, 0, 1, 1, 1], [0], [0]>} : vector<2x8x8xf32>, vector<2x8x8xf32>, vector<2x8x8xf32> -> vector<2x8x8xf32>
    "tpu.trace_stop"() : () -> ()
    %cst_125 = arith.constant 0.353553385 : f32
    %220 = vector.broadcast %cst_125 : f32 to vector<2x8x8xf32>
    %221 = arith.mulf %219, %220 : vector<2x8x8xf32>
    %222 = arith.addf %221, %6 : vector<2x8x8xf32>
    %cst_126 = arith.constant dense<0xFF800000> : vector<2x8xf32>
    %223 = vector.multi_reduction <maximumf>, %222, %cst_126 [2] : vector<2x8x8xf32> to vector<2x8xf32>
    %224 = vector.shape_cast %223 : vector<2x8xf32> to vector<2x8x1xf32>
    %225 = vector.broadcast %224 : vector<2x8x1xf32> to vector<2x8x8xf32>
    %226 = arith.subf %222, %225 : vector<2x8x8xf32>
    %227 = math.exp %226 : vector<2x8x8xf32>
    %cst_127 = arith.constant dense<0.000000e+00> : vector<2x8xf32>
    %228 = vector.multi_reduction <add>, %227, %cst_127 [2] : vector<2x8x8xf32> to vector<2x8xf32>
    %229 = vector.shape_cast %228 : vector<2x8xf32> to vector<2x8x1xf32>
    %230 = tpu.reciprocal %229 {approx = true} : vector<2x8x1xf32> -> vector<2x8x1xf32>
    %231 = vector.broadcast %230 : vector<2x8x1xf32> to vector<2x8x8xf32>
    %232 = arith.mulf %227, %231 : vector<2x8x8xf32>
    "tpu.trace_start"() <{level = 10 : i32, message = "bqk,bkd->bqd"}> : () -> ()
    %cst_128 = arith.constant dense<0.000000e+00> : vector<2x8x8xf32>
    %233 = tpu.matmul %232, %218, %cst_128 {dimension_numbers = #tpu.dot_dimension_numbers<[2], [1], [1], [2], [0, 0, 0, 1, 1, 2], [0], [0]>} : vector<2x8x8xf32>, vector<2x8x8xf32>, vector<2x8x8xf32> -> vector<2x8x8xf32>
    "tpu.trace_stop"() : () -> ()
    %234 = vector.shape_cast %233 : vector<2x8x8xf32> to vector<16x8xf32>
    %235 = vector.extract_strided_slice %26 {offsets = [0, 0], sizes = [8, 32], strides = [1, 1]} : vector<32x32xf32> to vector<8x32xf32>
    %cst_129 = arith.constant dense<0.000000e+00> : vector<16x32xf32>
    %236 = tpu.matmul %234, %235, %cst_129 {dimension_numbers = #tpu.dot_dimension_numbers<[1], [0], [0], [1], [0, 0, 1, 1], [], []>} : vector<16x8xf32>, vector<8x32xf32>, vector<16x32xf32> -> vector<16x32xf32>
    %237 = arith.addf %215, %236 : vector<16x32xf32>
    %238 = vector.extract_strided_slice %212 {offsets = [0, 0, 8], sizes = [2, 8, 8], strides = [1, 1, 1]} : vector<2x8x32xf32> to vector<2x8x8xf32>
    %239 = vector.extract_strided_slice %213 {offsets = [0, 0, 8], sizes = [2, 8, 8], strides = [1, 1, 1]} : vector<2x8x32xf32> to vector<2x8x8xf32>
    %240 = vector.extract_strided_slice %214 {offsets = [0, 0, 8], sizes = [2, 8, 8], strides = [1, 1, 1]} : vector<2x8x32xf32> to vector<2x8x8xf32>
    "tpu.trace_start"() <{level = 10 : i32, message = "bqd,bkd->bqk"}> : () -> ()
    %cst_130 = arith.constant dense<0.000000e+00> : vector<2x8x8xf32>
    %241 = tpu.matmul %238, %239, %cst_130 {dimension_numbers = #tpu.dot_dimension_numbers<[2], [2], [1], [1], [0, 0, 0, 1, 1, 1], [0], [0]>} : vector<2x8x8xf32>, vector<2x8x8xf32>, vector<2x8x8xf32> -> vector<2x8x8xf32>
    "tpu.trace_stop"() : () -> ()
    %cst_131 = arith.constant 0.353553385 : f32
    %242 = vector.broadcast %cst_131 : f32 to vector<2x8x8xf32>
    %243 = arith.mulf %241, %242 : vector<2x8x8xf32>
    %244 = arith.addf %243, %6 : vector<2x8x8xf32>
    %cst_132 = arith.constant dense<0xFF800000> : vector<2x8xf32>
    %245 = vector.multi_reduction <maximumf>, %244, %cst_132 [2] : vector<2x8x8xf32> to vector<2x8xf32>
    %246 = vector.shape_cast %245 : vector<2x8xf32> to vector<2x8x1xf32>
    %247 = vector.broadcast %246 : vector<2x8x1xf32> to vector<2x8x8xf32>
    %248 = arith.subf %244, %247 : vector<2x8x8xf32>
    %249 = math.exp %248 : vector<2x8x8xf32>
    %cst_133 = arith.constant dense<0.000000e+00> : vector<2x8xf32>
    %250 = vector.multi_reduction <add>, %249, %cst_133 [2] : vector<2x8x8xf32> to vector<2x8xf32>
    %251 = vector.shape_cast %250 : vector<2x8xf32> to vector<2x8x1xf32>
    %252 = tpu.reciprocal %251 {approx = true} : vector<2x8x1xf32> -> vector<2x8x1xf32>
    %253 = vector.broadcast %252 : vector<2x8x1xf32> to vector<2x8x8xf32>
    %254 = arith.mulf %249, %253 : vector<2x8x8xf32>
    "tpu.trace_start"() <{level = 10 : i32, message = "bqk,bkd->bqd"}> : () -> ()
    %cst_134 = arith.constant dense<0.000000e+00> : vector<2x8x8xf32>
    %255 = tpu.matmul %254, %240, %cst_134 {dimension_numbers = #tpu.dot_dimension_numbers<[2], [1], [1], [2], [0, 0, 0, 1, 1, 2], [0], [0]>} : vector<2x8x8xf32>, vector<2x8x8xf32>, vector<2x8x8xf32> -> vector<2x8x8xf32>
    "tpu.trace_stop"() : () -> ()
    %256 = vector.shape_cast %255 : vector<2x8x8xf32> to vector<16x8xf32>
    %257 = vector.extract_strided_slice %26 {offsets = [8, 0], sizes = [8, 32], strides = [1, 1]} : vector<32x32xf32> to vector<8x32xf32>
    %cst_135 = arith.constant dense<0.000000e+00> : vector<16x32xf32>
    %258 = tpu.matmul %256, %257, %cst_135 {dimension_numbers = #tpu.dot_dimension_numbers<[1], [0], [0], [1], [0, 0, 1, 1], [], []>} : vector<16x8xf32>, vector<8x32xf32>, vector<16x32xf32> -> vector<16x32xf32>
    %259 = arith.addf %237, %258 : vector<16x32xf32>
    %260 = vector.extract_strided_slice %212 {offsets = [0, 0, 16], sizes = [2, 8, 8], strides = [1, 1, 1]} : vector<2x8x32xf32> to vector<2x8x8xf32>
    %261 = vector.extract_strided_slice %213 {offsets = [0, 0, 16], sizes = [2, 8, 8], strides = [1, 1, 1]} : vector<2x8x32xf32> to vector<2x8x8xf32>
    %262 = vector.extract_strided_slice %214 {offsets = [0, 0, 16], sizes = [2, 8, 8], strides = [1, 1, 1]} : vector<2x8x32xf32> to vector<2x8x8xf32>
    "tpu.trace_start"() <{level = 10 : i32, message = "bqd,bkd->bqk"}> : () -> ()
    %cst_136 = arith.constant dense<0.000000e+00> : vector<2x8x8xf32>
    %263 = tpu.matmul %260, %261, %cst_136 {dimension_numbers = #tpu.dot_dimension_numbers<[2], [2], [1], [1], [0, 0, 0, 1, 1, 1], [0], [0]>} : vector<2x8x8xf32>, vector<2x8x8xf32>, vector<2x8x8xf32> -> vector<2x8x8xf32>
    "tpu.trace_stop"() : () -> ()
    %cst_137 = arith.constant 0.353553385 : f32
    %264 = vector.broadcast %cst_137 : f32 to vector<2x8x8xf32>
    %265 = arith.mulf %263, %264 : vector<2x8x8xf32>
    %266 = arith.addf %265, %6 : vector<2x8x8xf32>
    %cst_138 = arith.constant dense<0xFF800000> : vector<2x8xf32>
    %267 = vector.multi_reduction <maximumf>, %266, %cst_138 [2] : vector<2x8x8xf32> to vector<2x8xf32>
    %268 = vector.shape_cast %267 : vector<2x8xf32> to vector<2x8x1xf32>
    %269 = vector.broadcast %268 : vector<2x8x1xf32> to vector<2x8x8xf32>
    %270 = arith.subf %266, %269 : vector<2x8x8xf32>
    %271 = math.exp %270 : vector<2x8x8xf32>
    %cst_139 = arith.constant dense<0.000000e+00> : vector<2x8xf32>
    %272 = vector.multi_reduction <add>, %271, %cst_139 [2] : vector<2x8x8xf32> to vector<2x8xf32>
    %273 = vector.shape_cast %272 : vector<2x8xf32> to vector<2x8x1xf32>
    %274 = tpu.reciprocal %273 {approx = true} : vector<2x8x1xf32> -> vector<2x8x1xf32>
    %275 = vector.broadcast %274 : vector<2x8x1xf32> to vector<2x8x8xf32>
    %276 = arith.mulf %271, %275 : vector<2x8x8xf32>
    "tpu.trace_start"() <{level = 10 : i32, message = "bqk,bkd->bqd"}> : () -> ()
    %cst_140 = arith.constant dense<0.000000e+00> : vector<2x8x8xf32>
    %277 = tpu.matmul %276, %262, %cst_140 {dimension_numbers = #tpu.dot_dimension_numbers<[2], [1], [1], [2], [0, 0, 0, 1, 1, 2], [0], [0]>} : vector<2x8x8xf32>, vector<2x8x8xf32>, vector<2x8x8xf32> -> vector<2x8x8xf32>
    "tpu.trace_stop"() : () -> ()
    %278 = vector.shape_cast %277 : vector<2x8x8xf32> to vector<16x8xf32>
    %279 = vector.extract_strided_slice %26 {offsets = [16, 0], sizes = [8, 32], strides = [1, 1]} : vector<32x32xf32> to vector<8x32xf32>
    %cst_141 = arith.constant dense<0.000000e+00> : vector<16x32xf32>
    %280 = tpu.matmul %278, %279, %cst_141 {dimension_numbers = #tpu.dot_dimension_numbers<[1], [0], [0], [1], [0, 0, 1, 1], [], []>} : vector<16x8xf32>, vector<8x32xf32>, vector<16x32xf32> -> vector<16x32xf32>
    %281 = arith.addf %259, %280 : vector<16x32xf32>
    %282 = vector.extract_strided_slice %212 {offsets = [0, 0, 24], sizes = [2, 8, 8], strides = [1, 1, 1]} : vector<2x8x32xf32> to vector<2x8x8xf32>
    %283 = vector.extract_strided_slice %213 {offsets = [0, 0, 24], sizes = [2, 8, 8], strides = [1, 1, 1]} : vector<2x8x32xf32> to vector<2x8x8xf32>
    %284 = vector.extract_strided_slice %214 {offsets = [0, 0, 24], sizes = [2, 8, 8], strides = [1, 1, 1]} : vector<2x8x32xf32> to vector<2x8x8xf32>
    "tpu.trace_start"() <{level = 10 : i32, message = "bqd,bkd->bqk"}> : () -> ()
    %cst_142 = arith.constant dense<0.000000e+00> : vector<2x8x8xf32>
    %285 = tpu.matmul %282, %283, %cst_142 {dimension_numbers = #tpu.dot_dimension_numbers<[2], [2], [1], [1], [0, 0, 0, 1, 1, 1], [0], [0]>} : vector<2x8x8xf32>, vector<2x8x8xf32>, vector<2x8x8xf32> -> vector<2x8x8xf32>
    "tpu.trace_stop"() : () -> ()
    %cst_143 = arith.constant 0.353553385 : f32
    %286 = vector.broadcast %cst_143 : f32 to vector<2x8x8xf32>
    %287 = arith.mulf %285, %286 : vector<2x8x8xf32>
    %288 = arith.addf %287, %6 : vector<2x8x8xf32>
    %cst_144 = arith.constant dense<0xFF800000> : vector<2x8xf32>
    %289 = vector.multi_reduction <maximumf>, %288, %cst_144 [2] : vector<2x8x8xf32> to vector<2x8xf32>
    %290 = vector.shape_cast %289 : vector<2x8xf32> to vector<2x8x1xf32>
    %291 = vector.broadcast %290 : vector<2x8x1xf32> to vector<2x8x8xf32>
    %292 = arith.subf %288, %291 : vector<2x8x8xf32>
    %293 = math.exp %292 : vector<2x8x8xf32>
    %cst_145 = arith.constant dense<0.000000e+00> : vector<2x8xf32>
    %294 = vector.multi_reduction <add>, %293, %cst_145 [2] : vector<2x8x8xf32> to vector<2x8xf32>
    %295 = vector.shape_cast %294 : vector<2x8xf32> to vector<2x8x1xf32>
    %296 = tpu.reciprocal %295 {approx = true} : vector<2x8x1xf32> -> vector<2x8x1xf32>
    %297 = vector.broadcast %296 : vector<2x8x1xf32> to vector<2x8x8xf32>
    %298 = arith.mulf %293, %297 : vector<2x8x8xf32>
    "tpu.trace_start"() <{level = 10 : i32, message = "bqk,bkd->bqd"}> : () -> ()
    %cst_146 = arith.constant dense<0.000000e+00> : vector<2x8x8xf32>
    %299 = tpu.matmul %298, %284, %cst_146 {dimension_numbers = #tpu.dot_dimension_numbers<[2], [1], [1], [2], [0, 0, 0, 1, 1, 2], [0], [0]>} : vector<2x8x8xf32>, vector<2x8x8xf32>, vector<2x8x8xf32> -> vector<2x8x8xf32>
    "tpu.trace_stop"() : () -> ()
    %300 = vector.shape_cast %299 : vector<2x8x8xf32> to vector<16x8xf32>
    %301 = vector.extract_strided_slice %26 {offsets = [24, 0], sizes = [8, 32], strides = [1, 1]} : vector<32x32xf32> to vector<8x32xf32>
    %cst_147 = arith.constant dense<0.000000e+00> : vector<16x32xf32>
    %302 = tpu.matmul %300, %301, %cst_147 {dimension_numbers = #tpu.dot_dimension_numbers<[1], [0], [0], [1], [0, 0, 1, 1], [], []>} : vector<16x8xf32>, vector<8x32xf32>, vector<16x32xf32> -> vector<16x32xf32>
    %303 = arith.addf %281, %302 : vector<16x32xf32>
    %304 = vector.broadcast %22 : vector<1x32xf32> to vector<16x32xf32>
    %305 = arith.addf %303, %304 : vector<16x32xf32>
    %306 = arith.addf %305, %205 : vector<16x32xf32>
    %cst_148 = arith.constant dense<0.000000e+00> : vector<16xf32>
    %307 = vector.multi_reduction <add>, %306, %cst_148 [1] : vector<16x32xf32> to vector<16xf32>
    %308 = vector.shape_cast %307 : vector<16xf32> to vector<16x1xf32>
    %cst_149 = arith.constant 3.200000e+01 : f32
    %309 = vector.broadcast %cst_149 : f32 to vector<16x1xf32>
    %310 = arith.divf %308, %309 : vector<16x1xf32>
    %311 = vector.broadcast %310 : vector<16x1xf32> to vector<16x32xf32>
    %312 = arith.subf %306, %311 : vector<16x32xf32>
    %313 = arith.mulf %312, %312 : vector<16x32xf32>
    %cst_150 = arith.constant dense<0.000000e+00> : vector<16xf32>
    %314 = vector.multi_reduction <add>, %313, %cst_150 [1] : vector<16x32xf32> to vector<16xf32>
    %315 = vector.shape_cast %314 : vector<16xf32> to vector<16x1xf32>
    %cst_151 = arith.constant 3.200000e+01 : f32
    %316 = vector.broadcast %cst_151 : f32 to vector<16x1xf32>
    %317 = arith.divf %315, %316 : vector<16x1xf32>
    %318 = vector.broadcast %310 : vector<16x1xf32> to vector<16x32xf32>
    %319 = arith.subf %306, %318 : vector<16x32xf32>
    %cst_152 = arith.constant 9.99999974E-6 : f32
    %320 = vector.broadcast %cst_152 : f32 to vector<16x1xf32>
    %321 = arith.addf %317, %320 : vector<16x1xf32>
    %322 = math.rsqrt %321 : vector<16x1xf32>
    %323 = vector.broadcast %322 : vector<16x1xf32> to vector<16x32xf32>
    %324 = arith.mulf %319, %323 : vector<16x32xf32>
    %325 = vector.broadcast %25 : vector<1x32xf32> to vector<16x32xf32>
    %326 = arith.mulf %324, %325 : vector<16x32xf32>
    %327 = vector.broadcast %24 : vector<1x32xf32> to vector<16x32xf32>
    %328 = arith.addf %326, %327 : vector<16x32xf32>
    %cst_153 = arith.constant dense<0.000000e+00> : vector<16x32xf32>
    %329 = tpu.matmul %328, %15, %cst_153 {dimension_numbers = #tpu.dot_dimension_numbers<[1], [0], [0], [1], [0, 0, 1, 1], [], []>} : vector<16x32xf32>, vector<32x32xf32>, vector<16x32xf32> -> vector<16x32xf32>
    %330 = vector.broadcast %10 : vector<1x32xf32> to vector<16x32xf32>
    %331 = arith.addf %329, %330 : vector<16x32xf32>
    %cst_154 = arith.constant dense<0.000000e+00> : vector<16x64xf32>
    %332 = tpu.matmul %202, %13, %cst_154 {dimension_numbers = #tpu.dot_dimension_numbers<[1], [0], [0], [1], [0, 0, 1, 1], [], []>} : vector<16x32xf32>, vector<32x64xf32>, vector<16x64xf32> -> vector<16x64xf32>
    %333 = vector.broadcast %8 : vector<1x64xf32> to vector<16x64xf32>
    %334 = arith.addf %332, %333 : vector<16x64xf32>
    %335 = vector.extract_strided_slice %334 {offsets = [0, 0], sizes = [16, 32], strides = [1, 1]} : vector<16x64xf32> to vector<16x32xf32>
    %336 = vector.extract_strided_slice %334 {offsets = [0, 32], sizes = [16, 32], strides = [1, 1]} : vector<16x64xf32> to vector<16x32xf32>
    %337 = vector.shape_cast %331 : vector<16x32xf32> to vector<2x8x32xf32>
    %338 = vector.shape_cast %335 : vector<16x32xf32> to vector<2x8x32xf32>
    %339 = vector.shape_cast %336 : vector<16x32xf32> to vector<2x8x32xf32>
    %cst_155 = arith.constant 0.000000e+00 : f32
    %340 = vector.broadcast %cst_155 : f32 to vector<16x32xf32>
    %341 = vector.extract_strided_slice %337 {offsets = [0, 0, 0], sizes = [2, 8, 8], strides = [1, 1, 1]} : vector<2x8x32xf32> to vector<2x8x8xf32>
    %342 = vector.extract_strided_slice %338 {offsets = [0, 0, 0], sizes = [2, 8, 8], strides = [1, 1, 1]} : vector<2x8x32xf32> to vector<2x8x8xf32>
    %343 = vector.extract_strided_slice %339 {offsets = [0, 0, 0], sizes = [2, 8, 8], strides = [1, 1, 1]} : vector<2x8x32xf32> to vector<2x8x8xf32>
    "tpu.trace_start"() <{level = 10 : i32, message = "bqd,bkd->bqk"}> : () -> ()
    %cst_156 = arith.constant dense<0.000000e+00> : vector<2x8x8xf32>
    %344 = tpu.matmul %341, %342, %cst_156 {dimension_numbers = #tpu.dot_dimension_numbers<[2], [2], [1], [1], [0, 0, 0, 1, 1, 1], [0], [0]>} : vector<2x8x8xf32>, vector<2x8x8xf32>, vector<2x8x8xf32> -> vector<2x8x8xf32>
    "tpu.trace_stop"() : () -> ()
    %cst_157 = arith.constant 0.353553385 : f32
    %345 = vector.broadcast %cst_157 : f32 to vector<2x8x8xf32>
    %346 = arith.mulf %344, %345 : vector<2x8x8xf32>
    %347 = arith.addf %346, %7 : vector<2x8x8xf32>
    %cst_158 = arith.constant dense<0xFF800000> : vector<2x8xf32>
    %348 = vector.multi_reduction <maximumf>, %347, %cst_158 [2] : vector<2x8x8xf32> to vector<2x8xf32>
    %349 = vector.shape_cast %348 : vector<2x8xf32> to vector<2x8x1xf32>
    %350 = vector.broadcast %349 : vector<2x8x1xf32> to vector<2x8x8xf32>
    %351 = arith.subf %347, %350 : vector<2x8x8xf32>
    %352 = math.exp %351 : vector<2x8x8xf32>
    %cst_159 = arith.constant dense<0.000000e+00> : vector<2x8xf32>
    %353 = vector.multi_reduction <add>, %352, %cst_159 [2] : vector<2x8x8xf32> to vector<2x8xf32>
    %354 = vector.shape_cast %353 : vector<2x8xf32> to vector<2x8x1xf32>
    %355 = tpu.reciprocal %354 {approx = true} : vector<2x8x1xf32> -> vector<2x8x1xf32>
    %356 = vector.broadcast %355 : vector<2x8x1xf32> to vector<2x8x8xf32>
    %357 = arith.mulf %352, %356 : vector<2x8x8xf32>
    "tpu.trace_start"() <{level = 10 : i32, message = "bqk,bkd->bqd"}> : () -> ()
    %cst_160 = arith.constant dense<0.000000e+00> : vector<2x8x8xf32>
    %358 = tpu.matmul %357, %343, %cst_160 {dimension_numbers = #tpu.dot_dimension_numbers<[2], [1], [1], [2], [0, 0, 0, 1, 1, 2], [0], [0]>} : vector<2x8x8xf32>, vector<2x8x8xf32>, vector<2x8x8xf32> -> vector<2x8x8xf32>
    "tpu.trace_stop"() : () -> ()
    %359 = vector.shape_cast %358 : vector<2x8x8xf32> to vector<16x8xf32>
    %360 = vector.extract_strided_slice %14 {offsets = [0, 0], sizes = [8, 32], strides = [1, 1]} : vector<32x32xf32> to vector<8x32xf32>
    %cst_161 = arith.constant dense<0.000000e+00> : vector<16x32xf32>
    %361 = tpu.matmul %359, %360, %cst_161 {dimension_numbers = #tpu.dot_dimension_numbers<[1], [0], [0], [1], [0, 0, 1, 1], [], []>} : vector<16x8xf32>, vector<8x32xf32>, vector<16x32xf32> -> vector<16x32xf32>
    %362 = arith.addf %340, %361 : vector<16x32xf32>
    %363 = vector.extract_strided_slice %337 {offsets = [0, 0, 8], sizes = [2, 8, 8], strides = [1, 1, 1]} : vector<2x8x32xf32> to vector<2x8x8xf32>
    %364 = vector.extract_strided_slice %338 {offsets = [0, 0, 8], sizes = [2, 8, 8], strides = [1, 1, 1]} : vector<2x8x32xf32> to vector<2x8x8xf32>
    %365 = vector.extract_strided_slice %339 {offsets = [0, 0, 8], sizes = [2, 8, 8], strides = [1, 1, 1]} : vector<2x8x32xf32> to vector<2x8x8xf32>
    "tpu.trace_start"() <{level = 10 : i32, message = "bqd,bkd->bqk"}> : () -> ()
    %cst_162 = arith.constant dense<0.000000e+00> : vector<2x8x8xf32>
    %366 = tpu.matmul %363, %364, %cst_162 {dimension_numbers = #tpu.dot_dimension_numbers<[2], [2], [1], [1], [0, 0, 0, 1, 1, 1], [0], [0]>} : vector<2x8x8xf32>, vector<2x8x8xf32>, vector<2x8x8xf32> -> vector<2x8x8xf32>
    "tpu.trace_stop"() : () -> ()
    %cst_163 = arith.constant 0.353553385 : f32
    %367 = vector.broadcast %cst_163 : f32 to vector<2x8x8xf32>
    %368 = arith.mulf %366, %367 : vector<2x8x8xf32>
    %369 = arith.addf %368, %7 : vector<2x8x8xf32>
    %cst_164 = arith.constant dense<0xFF800000> : vector<2x8xf32>
    %370 = vector.multi_reduction <maximumf>, %369, %cst_164 [2] : vector<2x8x8xf32> to vector<2x8xf32>
    %371 = vector.shape_cast %370 : vector<2x8xf32> to vector<2x8x1xf32>
    %372 = vector.broadcast %371 : vector<2x8x1xf32> to vector<2x8x8xf32>
    %373 = arith.subf %369, %372 : vector<2x8x8xf32>
    %374 = math.exp %373 : vector<2x8x8xf32>
    %cst_165 = arith.constant dense<0.000000e+00> : vector<2x8xf32>
    %375 = vector.multi_reduction <add>, %374, %cst_165 [2] : vector<2x8x8xf32> to vector<2x8xf32>
    %376 = vector.shape_cast %375 : vector<2x8xf32> to vector<2x8x1xf32>
    %377 = tpu.reciprocal %376 {approx = true} : vector<2x8x1xf32> -> vector<2x8x1xf32>
    %378 = vector.broadcast %377 : vector<2x8x1xf32> to vector<2x8x8xf32>
    %379 = arith.mulf %374, %378 : vector<2x8x8xf32>
    "tpu.trace_start"() <{level = 10 : i32, message = "bqk,bkd->bqd"}> : () -> ()
    %cst_166 = arith.constant dense<0.000000e+00> : vector<2x8x8xf32>
    %380 = tpu.matmul %379, %365, %cst_166 {dimension_numbers = #tpu.dot_dimension_numbers<[2], [1], [1], [2], [0, 0, 0, 1, 1, 2], [0], [0]>} : vector<2x8x8xf32>, vector<2x8x8xf32>, vector<2x8x8xf32> -> vector<2x8x8xf32>
    "tpu.trace_stop"() : () -> ()
    %381 = vector.shape_cast %380 : vector<2x8x8xf32> to vector<16x8xf32>
    %382 = vector.extract_strided_slice %14 {offsets = [8, 0], sizes = [8, 32], strides = [1, 1]} : vector<32x32xf32> to vector<8x32xf32>
    %cst_167 = arith.constant dense<0.000000e+00> : vector<16x32xf32>
    %383 = tpu.matmul %381, %382, %cst_167 {dimension_numbers = #tpu.dot_dimension_numbers<[1], [0], [0], [1], [0, 0, 1, 1], [], []>} : vector<16x8xf32>, vector<8x32xf32>, vector<16x32xf32> -> vector<16x32xf32>
    %384 = arith.addf %362, %383 : vector<16x32xf32>
    %385 = vector.extract_strided_slice %337 {offsets = [0, 0, 16], sizes = [2, 8, 8], strides = [1, 1, 1]} : vector<2x8x32xf32> to vector<2x8x8xf32>
    %386 = vector.extract_strided_slice %338 {offsets = [0, 0, 16], sizes = [2, 8, 8], strides = [1, 1, 1]} : vector<2x8x32xf32> to vector<2x8x8xf32>
    %387 = vector.extract_strided_slice %339 {offsets = [0, 0, 16], sizes = [2, 8, 8], strides = [1, 1, 1]} : vector<2x8x32xf32> to vector<2x8x8xf32>
    "tpu.trace_start"() <{level = 10 : i32, message = "bqd,bkd->bqk"}> : () -> ()
    %cst_168 = arith.constant dense<0.000000e+00> : vector<2x8x8xf32>
    %388 = tpu.matmul %385, %386, %cst_168 {dimension_numbers = #tpu.dot_dimension_numbers<[2], [2], [1], [1], [0, 0, 0, 1, 1, 1], [0], [0]>} : vector<2x8x8xf32>, vector<2x8x8xf32>, vector<2x8x8xf32> -> vector<2x8x8xf32>
    "tpu.trace_stop"() : () -> ()
    %cst_169 = arith.constant 0.353553385 : f32
    %389 = vector.broadcast %cst_169 : f32 to vector<2x8x8xf32>
    %390 = arith.mulf %388, %389 : vector<2x8x8xf32>
    %391 = arith.addf %390, %7 : vector<2x8x8xf32>
    %cst_170 = arith.constant dense<0xFF800000> : vector<2x8xf32>
    %392 = vector.multi_reduction <maximumf>, %391, %cst_170 [2] : vector<2x8x8xf32> to vector<2x8xf32>
    %393 = vector.shape_cast %392 : vector<2x8xf32> to vector<2x8x1xf32>
    %394 = vector.broadcast %393 : vector<2x8x1xf32> to vector<2x8x8xf32>
    %395 = arith.subf %391, %394 : vector<2x8x8xf32>
    %396 = math.exp %395 : vector<2x8x8xf32>
    %cst_171 = arith.constant dense<0.000000e+00> : vector<2x8xf32>
    %397 = vector.multi_reduction <add>, %396, %cst_171 [2] : vector<2x8x8xf32> to vector<2x8xf32>
    %398 = vector.shape_cast %397 : vector<2x8xf32> to vector<2x8x1xf32>
    %399 = tpu.reciprocal %398 {approx = true} : vector<2x8x1xf32> -> vector<2x8x1xf32>
    %400 = vector.broadcast %399 : vector<2x8x1xf32> to vector<2x8x8xf32>
    %401 = arith.mulf %396, %400 : vector<2x8x8xf32>
    "tpu.trace_start"() <{level = 10 : i32, message = "bqk,bkd->bqd"}> : () -> ()
    %cst_172 = arith.constant dense<0.000000e+00> : vector<2x8x8xf32>
    %402 = tpu.matmul %401, %387, %cst_172 {dimension_numbers = #tpu.dot_dimension_numbers<[2], [1], [1], [2], [0, 0, 0, 1, 1, 2], [0], [0]>} : vector<2x8x8xf32>, vector<2x8x8xf32>, vector<2x8x8xf32> -> vector<2x8x8xf32>
    "tpu.trace_stop"() : () -> ()
    %403 = vector.shape_cast %402 : vector<2x8x8xf32> to vector<16x8xf32>
    %404 = vector.extract_strided_slice %14 {offsets = [16, 0], sizes = [8, 32], strides = [1, 1]} : vector<32x32xf32> to vector<8x32xf32>
    %cst_173 = arith.constant dense<0.000000e+00> : vector<16x32xf32>
    %405 = tpu.matmul %403, %404, %cst_173 {dimension_numbers = #tpu.dot_dimension_numbers<[1], [0], [0], [1], [0, 0, 1, 1], [], []>} : vector<16x8xf32>, vector<8x32xf32>, vector<16x32xf32> -> vector<16x32xf32>
    %406 = arith.addf %384, %405 : vector<16x32xf32>
    %407 = vector.extract_strided_slice %337 {offsets = [0, 0, 24], sizes = [2, 8, 8], strides = [1, 1, 1]} : vector<2x8x32xf32> to vector<2x8x8xf32>
    %408 = vector.extract_strided_slice %338 {offsets = [0, 0, 24], sizes = [2, 8, 8], strides = [1, 1, 1]} : vector<2x8x32xf32> to vector<2x8x8xf32>
    %409 = vector.extract_strided_slice %339 {offsets = [0, 0, 24], sizes = [2, 8, 8], strides = [1, 1, 1]} : vector<2x8x32xf32> to vector<2x8x8xf32>
    "tpu.trace_start"() <{level = 10 : i32, message = "bqd,bkd->bqk"}> : () -> ()
    %cst_174 = arith.constant dense<0.000000e+00> : vector<2x8x8xf32>
    %410 = tpu.matmul %407, %408, %cst_174 {dimension_numbers = #tpu.dot_dimension_numbers<[2], [2], [1], [1], [0, 0, 0, 1, 1, 1], [0], [0]>} : vector<2x8x8xf32>, vector<2x8x8xf32>, vector<2x8x8xf32> -> vector<2x8x8xf32>
    "tpu.trace_stop"() : () -> ()
    %cst_175 = arith.constant 0.353553385 : f32
    %411 = vector.broadcast %cst_175 : f32 to vector<2x8x8xf32>
    %412 = arith.mulf %410, %411 : vector<2x8x8xf32>
    %413 = arith.addf %412, %7 : vector<2x8x8xf32>
    %cst_176 = arith.constant dense<0xFF800000> : vector<2x8xf32>
    %414 = vector.multi_reduction <maximumf>, %413, %cst_176 [2] : vector<2x8x8xf32> to vector<2x8xf32>
    %415 = vector.shape_cast %414 : vector<2x8xf32> to vector<2x8x1xf32>
    %416 = vector.broadcast %415 : vector<2x8x1xf32> to vector<2x8x8xf32>
    %417 = arith.subf %413, %416 : vector<2x8x8xf32>
    %418 = math.exp %417 : vector<2x8x8xf32>
    %cst_177 = arith.constant dense<0.000000e+00> : vector<2x8xf32>
    %419 = vector.multi_reduction <add>, %418, %cst_177 [2] : vector<2x8x8xf32> to vector<2x8xf32>
    %420 = vector.shape_cast %419 : vector<2x8xf32> to vector<2x8x1xf32>
    %421 = tpu.reciprocal %420 {approx = true} : vector<2x8x1xf32> -> vector<2x8x1xf32>
    %422 = vector.broadcast %421 : vector<2x8x1xf32> to vector<2x8x8xf32>
    %423 = arith.mulf %418, %422 : vector<2x8x8xf32>
    "tpu.trace_start"() <{level = 10 : i32, message = "bqk,bkd->bqd"}> : () -> ()
    %cst_178 = arith.constant dense<0.000000e+00> : vector<2x8x8xf32>
    %424 = tpu.matmul %423, %409, %cst_178 {dimension_numbers = #tpu.dot_dimension_numbers<[2], [1], [1], [2], [0, 0, 0, 1, 1, 2], [0], [0]>} : vector<2x8x8xf32>, vector<2x8x8xf32>, vector<2x8x8xf32> -> vector<2x8x8xf32>
    "tpu.trace_stop"() : () -> ()
    %425 = vector.shape_cast %424 : vector<2x8x8xf32> to vector<16x8xf32>
    %426 = vector.extract_strided_slice %14 {offsets = [24, 0], sizes = [8, 32], strides = [1, 1]} : vector<32x32xf32> to vector<8x32xf32>
    %cst_179 = arith.constant dense<0.000000e+00> : vector<16x32xf32>
    %427 = tpu.matmul %425, %426, %cst_179 {dimension_numbers = #tpu.dot_dimension_numbers<[1], [0], [0], [1], [0, 0, 1, 1], [], []>} : vector<16x8xf32>, vector<8x32xf32>, vector<16x32xf32> -> vector<16x32xf32>
    %428 = arith.addf %406, %427 : vector<16x32xf32>
    %429 = vector.broadcast %9 : vector<1x32xf32> to vector<16x32xf32>
    %430 = arith.addf %428, %429 : vector<16x32xf32>
    %431 = arith.addf %430, %328 : vector<16x32xf32>
    %cst_180 = arith.constant dense<0.000000e+00> : vector<16xf32>
    %432 = vector.multi_reduction <add>, %431, %cst_180 [1] : vector<16x32xf32> to vector<16xf32>
    %433 = vector.shape_cast %432 : vector<16xf32> to vector<16x1xf32>
    %cst_181 = arith.constant 3.200000e+01 : f32
    %434 = vector.broadcast %cst_181 : f32 to vector<16x1xf32>
    %435 = arith.divf %433, %434 : vector<16x1xf32>
    %436 = vector.broadcast %435 : vector<16x1xf32> to vector<16x32xf32>
    %437 = arith.subf %431, %436 : vector<16x32xf32>
    %438 = arith.mulf %437, %437 : vector<16x32xf32>
    %cst_182 = arith.constant dense<0.000000e+00> : vector<16xf32>
    %439 = vector.multi_reduction <add>, %438, %cst_182 [1] : vector<16x32xf32> to vector<16xf32>
    %440 = vector.shape_cast %439 : vector<16xf32> to vector<16x1xf32>
    %cst_183 = arith.constant 3.200000e+01 : f32
    %441 = vector.broadcast %cst_183 : f32 to vector<16x1xf32>
    %442 = arith.divf %440, %441 : vector<16x1xf32>
    %443 = vector.broadcast %435 : vector<16x1xf32> to vector<16x32xf32>
    %444 = arith.subf %431, %443 : vector<16x32xf32>
    %cst_184 = arith.constant 9.99999974E-6 : f32
    %445 = vector.broadcast %cst_184 : f32 to vector<16x1xf32>
    %446 = arith.addf %442, %445 : vector<16x1xf32>
    %447 = math.rsqrt %446 : vector<16x1xf32>
    %448 = vector.broadcast %447 : vector<16x1xf32> to vector<16x32xf32>
    %449 = arith.mulf %444, %448 : vector<16x32xf32>
    %450 = vector.broadcast %12 : vector<1x32xf32> to vector<16x32xf32>
    %451 = arith.mulf %449, %450 : vector<16x32xf32>
    %452 = vector.broadcast %11 : vector<1x32xf32> to vector<16x32xf32>
    %453 = arith.addf %451, %452 : vector<16x32xf32>
    %cst_185 = arith.constant dense<0.000000e+00> : vector<16x64xf32>
    %454 = tpu.matmul %453, %20, %cst_185 {dimension_numbers = #tpu.dot_dimension_numbers<[1], [0], [0], [1], [0, 0, 1, 1], [], []>} : vector<16x32xf32>, vector<32x64xf32>, vector<16x64xf32> -> vector<16x64xf32>
    %455 = vector.broadcast %16 : vector<1x64xf32> to vector<16x64xf32>
    %456 = arith.addf %454, %455 : vector<16x64xf32>
    %cst_186 = arith.constant 0.000000e+00 : f32
    %457 = vector.broadcast %cst_186 : f32 to vector<16x64xf32>
    %458 = arith.maximumf %456, %457 : vector<16x64xf32>
    %cst_187 = arith.constant dense<0.000000e+00> : vector<16x32xf32>
    %459 = tpu.matmul %458, %21, %cst_187 {dimension_numbers = #tpu.dot_dimension_numbers<[1], [0], [0], [1], [0, 0, 1, 1], [], []>} : vector<16x64xf32>, vector<64x32xf32>, vector<16x32xf32> -> vector<16x32xf32>
    %460 = vector.broadcast %17 : vector<1x32xf32> to vector<16x32xf32>
    %461 = arith.addf %459, %460 : vector<16x32xf32>
    %462 = arith.addf %461, %453 : vector<16x32xf32>
    %cst_188 = arith.constant dense<0.000000e+00> : vector<16xf32>
    %463 = vector.multi_reduction <add>, %462, %cst_188 [1] : vector<16x32xf32> to vector<16xf32>
    %464 = vector.shape_cast %463 : vector<16xf32> to vector<16x1xf32>
    %cst_189 = arith.constant 3.200000e+01 : f32
    %465 = vector.broadcast %cst_189 : f32 to vector<16x1xf32>
    %466 = arith.divf %464, %465 : vector<16x1xf32>
    %467 = vector.broadcast %466 : vector<16x1xf32> to vector<16x32xf32>
    %468 = arith.subf %462, %467 : vector<16x32xf32>
    %469 = arith.mulf %468, %468 : vector<16x32xf32>
    %cst_190 = arith.constant dense<0.000000e+00> : vector<16xf32>
    %470 = vector.multi_reduction <add>, %469, %cst_190 [1] : vector<16x32xf32> to vector<16xf32>
    %471 = vector.shape_cast %470 : vector<16xf32> to vector<16x1xf32>
    %cst_191 = arith.constant 3.200000e+01 : f32
    %472 = vector.broadcast %cst_191 : f32 to vector<16x1xf32>
    %473 = arith.divf %471, %472 : vector<16x1xf32>
    %474 = vector.broadcast %466 : vector<16x1xf32> to vector<16x32xf32>
    %475 = arith.subf %462, %474 : vector<16x32xf32>
    %cst_192 = arith.constant 9.99999974E-6 : f32
    %476 = vector.broadcast %cst_192 : f32 to vector<16x1xf32>
    %477 = arith.addf %473, %476 : vector<16x1xf32>
    %478 = math.rsqrt %477 : vector<16x1xf32>
    %479 = vector.broadcast %478 : vector<16x1xf32> to vector<16x32xf32>
    %480 = arith.mulf %475, %479 : vector<16x32xf32>
    %481 = vector.broadcast %19 : vector<1x32xf32> to vector<16x32xf32>
    %482 = arith.mulf %480, %481 : vector<16x32xf32>
    %483 = vector.broadcast %18 : vector<1x32xf32> to vector<16x32xf32>
    %484 = arith.addf %482, %483 : vector<16x32xf32>
    %cst_193 = arith.constant dense<0.000000e+00> : vector<16x128xf32>
    %485 = tpu.matmul %484, %40, %cst_193 {dimension_numbers = #tpu.dot_dimension_numbers<[1], [0], [0], [1], [0, 0, 1, 1], [], []>} : vector<16x32xf32>, vector<32x128xf32>, vector<16x128xf32> -> vector<16x128xf32>
    %c0_194 = arith.constant 0 : index
    %c0_195 = arith.constant 0 : index
    %486 = vector.load %arg41[%c0_194, %c0_195] : memref<16x128xf32, #tpu.memory_space<vmem>>, vector<16x128xf32>
    tpu.vector_store %arg41[%c0_194, %c0_195], %485 {strides = array<i32>} : memref<16x128xf32, #tpu.memory_space<vmem>>, vector<16x128xf32>,
    return
  }
}

</mosaic_0001>

<llo_original>
// kernel: forward.1
$region0: #{forward.1}
  #allocation0 [shape = 'u32[]', space=smem, size = 0x4, offset = 0x4, fixed_abs, tag = 'smem constant byte address 0x4 - core index']
  #allocation1 [shape = 'u32[144,128]{1,0:T(1,128)}', space=vmem, size = 0x12000, scoped, tag = 'internal scratch']
  %s0 = inlined_call_operand.smem [shape: u32[42], index: -1, kind: input, shape index: {}]
  %s1 = sld [smem:[%s0]]
  %s2 = scalar_lea.smem %s0, 1
  %s3 = sld [smem:[%s2]]
  %s4 = scalar_lea.smem %s0, 2
  %s5 = sld [smem:[%s4]]
  %s6 = scalar_lea.smem %s0, 3
  %s7 = sld [smem:[%s6]]
  %s8 = scalar_lea.smem %s0, 4
  %s9 = sld [smem:[%s8]]
  %s10 = scalar_lea.smem %s0, 5
  %s11 = sld [smem:[%s10]]
  %s12 = scalar_lea.smem %s0, 6
  %s13 = sld [smem:[%s12]]
  %s14 = scalar_lea.smem %s0, 7
  %s15 = sld [smem:[%s14]]
  %s16 = scalar_lea.smem %s0, 8
  %s17 = sld [smem:[%s16]]
  %s18 = scalar_lea.smem %s0, 9
  %s19 = sld [smem:[%s18]]
  %s20 = scalar_lea.smem %s0, 10
  %s21 = sld [smem:[%s20]]
  %s22 = scalar_lea.smem %s0, 11
  %s23 = sld [smem:[%s22]]
  %s24 = scalar_lea.smem %s0, 12
  %s25 = sld [smem:[%s24]]
  %s26 = scalar_lea.smem %s0, 13
  %s27 = sld [smem:[%s26]]
  %s28 = scalar_lea.smem %s0, 14
  %s29 = sld [smem:[%s28]]
  %s30 = scalar_lea.smem %s0, 15
  %s31 = sld [smem:[%s30]]
  %s32 = scalar_lea.smem %s0, 16
  %s33 = sld [smem:[%s32]]
  %s34 = scalar_lea.smem %s0, 17
  %s35 = sld [smem:[%s34]]
  %s36 = scalar_lea.smem %s0, 18
  %s37 = sld [smem:[%s36]]
  %s38 = scalar_lea.smem %s0, 19
  %s39 = sld [smem:[%s38]]
  %s40 = scalar_lea.smem %s0, 20
  %s41 = sld [smem:[%s40]]
  %s42 = scalar_lea.smem %s0, 21
  %s43 = sld [smem:[%s42]]
  %s44 = scalar_lea.smem %s0, 22
  %s45 = sld [smem:[%s44]]
  %s46 = scalar_lea.smem %s0, 23
  %s47 = sld [smem:[%s46]]
  %s48 = scalar_lea.smem %s0, 24
  %s49 = sld [smem:[%s48]]
  %s50 = scalar_lea.smem %s0, 25
  %s51 = sld [smem:[%s50]]
  %s52 = scalar_lea.smem %s0, 26
  %s53 = sld [smem:[%s52]]
  %s54 = scalar_lea.smem %s0, 27
  %s55 = sld [smem:[%s54]]
  %s56 = scalar_lea.smem %s0, 28
  %s57 = sld [smem:[%s56]]
  %s58 = scalar_lea.smem %s0, 29
  %s59 = sld [smem:[%s58]]
  %s60 = scalar_lea.smem %s0, 30
  %s61 = sld [smem:[%s60]]
  %s62 = scalar_lea.smem %s0, 31
  %s63 = sld [smem:[%s62]]
  %s64 = scalar_lea.smem %s0, 32
  %s65 = sld [smem:[%s64]]
  %s66 = scalar_lea.smem %s0, 33
  %s67 = sld [smem:[%s66]]
  %s68 = scalar_lea.smem %s0, 34
  %s69 = sld [smem:[%s68]]
  %s70 = scalar_lea.smem %s0, 35
  %s71 = sld [smem:[%s70]]
  %s72 = scalar_lea.smem %s0, 36
  %s73 = sld [smem:[%s72]]
  %s74 = scalar_lea.smem %s0, 37
  %s75 = sld [smem:[%s74]]
  %s76 = scalar_lea.smem %s0, 38
  %s77 = sld [smem:[%s76]]
  %s78 = scalar_lea.smem %s0, 39
  %s79 = sld [smem:[%s78]]
  %s80 = scalar_lea.smem %s0, 40
  %s81 = sld [smem:[%s80]]
  %s82 = scalar_lea.smem %s0, 41
  %s83 = sld [smem:[%s82]]
  %s84 = sld [smem:[#allocation0]]
  $region174: #{forward.1} parent=0
    _
  %s86 = ssub.s32 1, %s84
  %s87 = scalar_select 0, %s86, %s84
  // Predicated region
  $region2: #{forward.1} parent=0 // pred_check
    _
  $region3: #{forward.1} parent=0 // pred_check_branch
    %89 = sbr.rel (0) target = $region5
  $region4: #{forward.1} parent=0 // pred_region
    _
  $region5: #{forward.1} parent=0 // pred_fallthru
    _
  // Predicated region
  $region6: #{forward.1} parent=0 // pred_check
    _
  $region7: #{forward.1} parent=0 // pred_check_branch
    %91 = sbr.rel (0) target = $region9
  $region8: #{forward.1} parent=0 // pred_region
    _
  $region9: #{forward.1} parent=0 // pred_fallthru
    _
  // Predicated region
  $region10: #{forward.1} parent=0 // pred_check
    _
  $region11: #{forward.1} parent=0 // pred_check_branch
    %93 = sbr.rel (0) target = $region13
  $region12: #{forward.1} parent=0 // pred_region
    _
  $region13: #{forward.1} parent=0 // pred_fallthru
    _
  // Predicated region
  $region14: #{forward.1} parent=0 // pred_check
    _
  $region15: #{forward.1} parent=0 // pred_check_branch
    %95 = sbr.rel (0) target = $region17
  $region16: #{forward.1} parent=0 // pred_region
    _
  $region17: #{forward.1} parent=0 // pred_fallthru
    _
  // Predicated region
  $region18: #{forward.1} parent=0 // pred_check
    _
  $region19: #{forward.1} parent=0 // pred_check_branch
    %97 = sbr.rel (0) target = $region21
  $region20: #{forward.1} parent=0 // pred_region
    _
  $region21: #{forward.1} parent=0 // pred_fallthru
    _
  // Predicated region
  $region22: #{forward.1} parent=0 // pred_check
    _
  $region23: #{forward.1} parent=0 // pred_check_branch
    %99 = sbr.rel (0) target = $region25
  $region24: #{forward.1} parent=0 // pred_region
    _
  $region25: #{forward.1} parent=0 // pred_fallthru
    _
  // Predicated region
  $region26: #{forward.1} parent=0 // pred_check
    _
  $region27: #{forward.1} parent=0 // pred_check_branch
    %101 = sbr.rel (0) target = $region29
  $region28: #{forward.1} parent=0 // pred_region
    _
  $region29: #{forward.1} parent=0 // pred_fallthru
    _
  // Predicated region
  $region30: #{forward.1} parent=0 // pred_check
    _
  $region31: #{forward.1} parent=0 // pred_check_branch
    %103 = sbr.rel (0) target = $region33
  $region32: #{forward.1} parent=0 // pred_region
    _
  $region33: #{forward.1} parent=0 // pred_fallthru
    _
  // Predicated region
  $region34: #{forward.1} parent=0 // pred_check
    _
  $region35: #{forward.1} parent=0 // pred_check_branch
    %105 = sbr.rel (0) target = $region37
  $region36: #{forward.1} parent=0 // pred_region
    _
  $region37: #{forward.1} parent=0 // pred_fallthru
    _
  // Predicated region
  $region38: #{forward.1} parent=0 // pred_check
    _
  $region39: #{forward.1} parent=0 // pred_check_branch
    %107 = sbr.rel (0) target = $region41
  $region40: #{forward.1} parent=0 // pred_region
    _
  $region41: #{forward.1} parent=0 // pred_fallthru
    _
  // Predicated region
  $region42: #{forward.1} parent=0 // pred_check
    _
  $region43: #{forward.1} parent=0 // pred_check_branch
    %109 = sbr.rel (0) target = $region45
  $region44: #{forward.1} parent=0 // pred_region
    _
  $region45: #{forward.1} parent=0 // pred_fallthru
    _
  // Predicated region
  $region46: #{forward.1} parent=0 // pred_check
    _
  $region47: #{forward.1} parent=0 // pred_check_branch
    %111 = sbr.rel (0) target = $region49
  $region48: #{forward.1} parent=0 // pred_region
    _
  $region49: #{forward.1} parent=0 // pred_fallthru
    _
  // Predicated region
  $region50: #{forward.1} parent=0 // pred_check
    _
  $region51: #{forward.1} parent=0 // pred_check_branch
    %113 = sbr.rel (0) target = $region53
  $region52: #{forward.1} parent=0 // pred_region
    _
  $region53: #{forward.1} parent=0 // pred_fallthru
    _
  // Predicated region
  $region54: #{forward.1} parent=0 // pred_check
    _
  $region55: #{forward.1} parent=0 // pred_check_branch
    %115 = sbr.rel (0) target = $region57
  $region56: #{forward.1} parent=0 // pred_region
    _
  $region57: #{forward.1} parent=0 // pred_fallthru
    _
  // Predicated region
  $region58: #{forward.1} parent=0 // pred_check
    _
  $region59: #{forward.1} parent=0 // pred_check_branch
    %117 = sbr.rel (0) target = $region61
  $region60: #{forward.1} parent=0 // pred_region
    _
  $region61: #{forward.1} parent=0 // pred_fallthru
    _
  // Predicated region
  $region62: #{forward.1} parent=0 // pred_check
    _
  $region63: #{forward.1} parent=0 // pred_check_branch
    %119 = sbr.rel (0) target = $region65
  $region64: #{forward.1} parent=0 // pred_region
    _
  $region65: #{forward.1} parent=0 // pred_fallthru
    _
  // Predicated region
  $region66: #{forward.1} parent=0 // pred_check
    _
  $region67: #{forward.1} parent=0 // pred_check_branch
    %121 = sbr.rel (0) target = $region69
  $region68: #{forward.1} parent=0 // pred_region
    _
  $region69: #{forward.1} parent=0 // pred_fallthru
    _
  // Predicated region
  $region70: #{forward.1} parent=0 // pred_check
    _
  $region71: #{forward.1} parent=0 // pred_check_branch
    %123 = sbr.rel (0) target = $region73
  $region72: #{forward.1} parent=0 // pred_region
    _
  $region73: #{forward.1} parent=0 // pred_fallthru
    _
  // Predicated region
  $region74: #{forward.1} parent=0 // pred_check
    _
  $region75: #{forward.1} parent=0 // pred_check_branch
    %125 = sbr.rel (0) target = $region77
  $region76: #{forward.1} parent=0 // pred_region
    _
  $region77: #{forward.1} parent=0 // pred_fallthru
    _
  // Predicated region
  $region78: #{forward.1} parent=0 // pred_check
    _
  $region79: #{forward.1} parent=0 // pred_check_branch
    %127 = sbr.rel (0) target = $region81
  $region80: #{forward.1} parent=0 // pred_region
    _
  $region81: #{forward.1} parent=0 // pred_fallthru
    _
  // Predicated region
  $region82: #{forward.1} parent=0 // pred_check
    _
  $region83: #{forward.1} parent=0 // pred_check_branch
    %129 = sbr.rel (0) target = $region85
  $region84: #{forward.1} parent=0 // pred_region
    _
  $region85: #{forward.1} parent=0 // pred_fallthru
    _
  // Predicated region
  $region86: #{forward.1} parent=0 // pred_check
    _
  $region87: #{forward.1} parent=0 // pred_check_branch
    %131 = sbr.rel (0) target = $region89
  $region88: #{forward.1} parent=0 // pred_region
    _
  $region89: #{forward.1} parent=0 // pred_fallthru
    _
  // Predicated region
  $region90: #{forward.1} parent=0 // pred_check
    _
  $region91: #{forward.1} parent=0 // pred_check_branch
    %133 = sbr.rel (0) target = $region93
  $region92: #{forward.1} parent=0 // pred_region
    _
  $region93: #{forward.1} parent=0 // pred_fallthru
    _
  // Predicated region
  $region94: #{forward.1} parent=0 // pred_check
    _
  $region95: #{forward.1} parent=0 // pred_check_branch
    %135 = sbr.rel (0) target = $region97
  $region96: #{forward.1} parent=0 // pred_region
    _
  $region97: #{forward.1} parent=0 // pred_fallthru
    _
  // Predicated region
  $region98: #{forward.1} parent=0 // pred_check
    _
  $region99: #{forward.1} parent=0 // pred_check_branch
    %137 = sbr.rel (0) target = $region101
  $region100: #{forward.1} parent=0 // pred_region
    _
  $region101: #{forward.1} parent=0 // pred_fallthru
    _
  // Predicated region
  $region102: #{forward.1} parent=0 // pred_check
    _
  $region103: #{forward.1} parent=0 // pred_check_branch
    %139 = sbr.rel (0) target = $region105
  $region104: #{forward.1} parent=0 // pred_region
    _
  $region105: #{forward.1} parent=0 // pred_fallthru
    _
  // Predicated region
  $region106: #{forward.1} parent=0 // pred_check
    _
  $region107: #{forward.1} parent=0 // pred_check_branch
    %141 = sbr.rel (0) target = $region109
  $region108: #{forward.1} parent=0 // pred_region
    _
  $region109: #{forward.1} parent=0 // pred_fallthru
    _
  // Predicated region
  $region110: #{forward.1} parent=0 // pred_check
    _
  $region111: #{forward.1} parent=0 // pred_check_branch
    %143 = sbr.rel (0) target = $region113
  $region112: #{forward.1} parent=0 // pred_region
    _
  $region113: #{forward.1} parent=0 // pred_fallthru
    _
  // Predicated region
  $region114: #{forward.1} parent=0 // pred_check
    _
  $region115: #{forward.1} parent=0 // pred_check_branch
    %145 = sbr.rel (0) target = $region117
  $region116: #{forward.1} parent=0 // pred_region
    _
  $region117: #{forward.1} parent=0 // pred_fallthru
    _
  // Predicated region
  $region118: #{forward.1} parent=0 // pred_check
    _
  $region119: #{forward.1} parent=0 // pred_check_branch
    %147 = sbr.rel (0) target = $region121
  $region120: #{forward.1} parent=0 // pred_region
    _
  $region121: #{forward.1} parent=0 // pred_fallthru
    _
  // Predicated region
  $region122: #{forward.1} parent=0 // pred_check
    _
  $region123: #{forward.1} parent=0 // pred_check_branch
    %149 = sbr.rel (0) target = $region125
  $region124: #{forward.1} parent=0 // pred_region
    _
  $region125: #{forward.1} parent=0 // pred_fallthru
    _
  // Predicated region
  $region126: #{forward.1} parent=0 // pred_check
    _
  $region127: #{forward.1} parent=0 // pred_check_branch
    %151 = sbr.rel (0) target = $region129
  $region128: #{forward.1} parent=0 // pred_region
    _
  $region129: #{forward.1} parent=0 // pred_fallthru
    _
  // Predicated region
  $region130: #{forward.1} parent=0 // pred_check
    _
  $region131: #{forward.1} parent=0 // pred_check_branch
    %153 = sbr.rel (0) target = $region133
  $region132: #{forward.1} parent=0 // pred_region
    _
  $region133: #{forward.1} parent=0 // pred_fallthru
    _
  // Predicated region
  $region134: #{forward.1} parent=0 // pred_check
    _
  $region135: #{forward.1} parent=0 // pred_check_branch
    %155 = sbr.rel (0) target = $region137
  $region136: #{forward.1} parent=0 // pred_region
    _
  $region137: #{forward.1} parent=0 // pred_fallthru
    _
  // Predicated region
  $region138: #{forward.1} parent=0 // pred_check
    _
  $region139: #{forward.1} parent=0 // pred_check_branch
    %157 = sbr.rel (0) target = $region141
  $region140: #{forward.1} parent=0 // pred_region
    _
  $region141: #{forward.1} parent=0 // pred_fallthru
    _
  // Predicated region
  $region142: #{forward.1} parent=0 // pred_check
    _
  $region143: #{forward.1} parent=0 // pred_check_branch
    %159 = sbr.rel (0) target = $region145
  $region144: #{forward.1} parent=0 // pred_region
    _
  $region145: #{forward.1} parent=0 // pred_fallthru
    _
  // Predicated region
  $region146: #{forward.1} parent=0 // pred_check
    _
  $region147: #{forward.1} parent=0 // pred_check_branch
    %161 = sbr.rel (0) target = $region149
  $region148: #{forward.1} parent=0 // pred_region
    _
  $region149: #{forward.1} parent=0 // pred_fallthru
    _
  // Predicated region
  $region150: #{forward.1} parent=0 // pred_check
    _
  $region151: #{forward.1} parent=0 // pred_check_branch
    %163 = sbr.rel (0) target = $region153
  $region152: #{forward.1} parent=0 // pred_region
    _
  $region153: #{forward.1} parent=0 // pred_fallthru
    _
  // Predicated region
  $region154: #{forward.1} parent=0 // pred_check
    _
  $region155: #{forward.1} parent=0 // pred_check_branch
    %165 = sbr.rel (0) target = $region157
  $region156: #{forward.1} parent=0 // pred_region
    _
  $region157: #{forward.1} parent=0 // pred_fallthru
    _
  // Predicated region
  $region158: #{forward.1} parent=0 // pred_check
    _
  $region159: #{forward.1} parent=0 // pred_check_branch
    %167 = sbr.rel (0) target = $region161
  $region160: #{forward.1} parent=0 // pred_region
    _
  $region161: #{forward.1} parent=0 // pred_fallthru
    _
  // Predicated region
  $region162: #{forward.1} parent=0 // pred_check
    _
  $region163: #{forward.1} parent=0 // pred_check_branch
    %169 = sbr.rel (0) target = $region165
  $region164: #{forward.1} parent=0 // pred_region
    _
  $region165: #{forward.1} parent=0 // pred_fallthru
    _
  %v170 = vld [vmem:[%s1] sm:$0xff]
  %v171 = vld [vmem:[%s1 + $0x8] sm:$0xff]
  %v172 = vld [vmem:[%s3] sm:$0xff]
  %v173 = vld [vmem:[%s3 + $0x8] sm:$0xff]
  %v174 = vld [vmem:[%s5] sm:$0xff]
  %v175 = vld [vmem:[%s5 + $0x8] sm:$0xff]
  %v176 = vld [vmem:[%s7] sm:$0xff]
  %v177 = vld [vmem:[%s7 + $0x8] sm:$0xff]
  %v178 = vld [vmem:[%s9] sm:$0xff]
  %v179 = vld [vmem:[%s9 + $0x8] sm:$0xff]
  %v180 = vld [vmem:[%s11] sm:$0xff]
  %v181 = vld [vmem:[%s11 + $0x8] sm:$0xff]
  %v182 = vld [vmem:[%s13] sm:$0xff]
  %v183 = vld [vmem:[%s13 + $0x8] sm:$0xff]
  %v184 = vld [vmem:[%s15] sm:$0xff]
  %v185 = vld [vmem:[%s15 + $0x8] sm:$0xff]
  %v186 = vld [vmem:[%s17] sm:$0x1]
  %v187 = vld [vmem:[%s19] sm:$0x1]
  %v188 = vld [vmem:[%s21] sm:$0x1]
  %v189 = vld [vmem:[%s23] sm:$0x1]
  %v190 = vld [vmem:[%s25] sm:$0x1]
  %v191 = vld [vmem:[%s27] sm:$0xff]
  %v192 = vld [vmem:[%s27 + $0x8] sm:$0xff]
  %v193 = vld [vmem:[%s27 + $0x10] sm:$0xff]
  %v194 = vld [vmem:[%s27 + $0x18] sm:$0xff]
  %v195 = vld [vmem:[%s29] sm:$0xff]
  %v196 = vld [vmem:[%s29 + $0x8] sm:$0xff]
  %v197 = vld [vmem:[%s29 + $0x10] sm:$0xff]
  %v198 = vld [vmem:[%s29 + $0x18] sm:$0xff]
  %v199 = vld [vmem:[%s31] sm:$0xff]
  %v200 = vld [vmem:[%s31 + $0x8] sm:$0xff]
  %v201 = vld [vmem:[%s31 + $0x10] sm:$0xff]
  %v202 = vld [vmem:[%s31 + $0x18] sm:$0xff]
  %v203 = vld [vmem:[%s33] sm:$0x1]
  %v204 = vld [vmem:[%s35] sm:$0x1]
  %v205 = vld [vmem:[%s37] sm:$0x1]
  %v206 = vld [vmem:[%s39] sm:$0x1]
  %v207 = vld [vmem:[%s41] sm:$0xff]
  %v208 = vld [vmem:[%s41 + $0x8] sm:$0xff]
  %v209 = vld [vmem:[%s41 + $0x10] sm:$0xff]
  %v210 = vld [vmem:[%s41 + $0x18] sm:$0xff]
  %v211 = vld [vmem:[%s43] sm:$0xff]
  %v212 = vld [vmem:[%s43 + $0x8] sm:$0xff]
  %v213 = vld [vmem:[%s43 + $0x10] sm:$0xff]
  %v214 = vld [vmem:[%s43 + $0x18] sm:$0xff]
  %v215 = vld [vmem:[%s43 + $0x20] sm:$0xff]
  %v216 = vld [vmem:[%s43 + $0x28] sm:$0xff]
  %v217 = vld [vmem:[%s43 + $0x30] sm:$0xff]
  %v218 = vld [vmem:[%s43 + $0x38] sm:$0xff]
  %v219 = vld [vmem:[%s45] sm:$0x1]
  %v220 = vld [vmem:[%s47] sm:$0x1]
  %v221 = vld [vmem:[%s49] sm:$0x1]
  %v222 = vld [vmem:[%s51] sm:$0x1]
  %v223 = vld [vmem:[%s53] sm:$0xff]
  %v224 = vld [vmem:[%s53 + $0x8] sm:$0xff]
  %v225 = vld [vmem:[%s53 + $0x10] sm:$0xff]
  %v226 = vld [vmem:[%s53 + $0x18] sm:$0xff]
  %v227 = vld [vmem:[%s55] sm:$0xff]
  %v228 = vld [vmem:[%s55 + $0x8] sm:$0xff]
  %v229 = vld [vmem:[%s55 + $0x10] sm:$0xff]
  %v230 = vld [vmem:[%s55 + $0x18] sm:$0xff]
  %v231 = vld [vmem:[%s57] sm:$0x1]
  %v232 = vld [vmem:[%s59] sm:$0x1]
  %v233 = vld [vmem:[%s61] sm:$0x1]
  %v234 = vld [vmem:[%s63] sm:$0x1]
  %v235 = vld [vmem:[%s65] sm:$0xff]
  %v236 = vld [vmem:[%s65 + $0x8] sm:$0xff]
  %v237 = vld [vmem:[%s65 + $0x10] sm:$0xff]
  %v238 = vld [vmem:[%s65 + $0x18] sm:$0xff]
  %v239 = vld [vmem:[%s67] sm:$0xff]
  %v240 = vld [vmem:[%s67 + $0x8] sm:$0xff]
  %v241 = vld [vmem:[%s67 + $0x10] sm:$0xff]
  %v242 = vld [vmem:[%s67 + $0x18] sm:$0xff]
  %v243 = vld [vmem:[%s67 + $0x20] sm:$0xff]
  %v244 = vld [vmem:[%s67 + $0x28] sm:$0xff]
  %v245 = vld [vmem:[%s67 + $0x30] sm:$0xff]
  %v246 = vld [vmem:[%s67 + $0x38] sm:$0xff]
  %v247 = vld [vmem:[%s69] sm:$0x1]
  %v248 = vld [vmem:[%s71] sm:$0x1]
  %v249 = vld [vmem:[%s73] sm:$0x1]
  %v250 = vld [vmem:[%s75] sm:$0x1]
  %v251 = vld [vmem:[%s77] sm:$0xff]
  %v252 = vld [vmem:[%s77 + $0x8] sm:$0xff]
  %v253 = vld [vmem:[%s77 + $0x10] sm:$0xff]
  %v254 = vld [vmem:[%s77 + $0x18] sm:$0xff]
  %v255 = vld [vmem:[%s79] sm:$0xff]
  %v256 = vld [vmem:[%s79 + $0x8] sm:$0xff]
  %v257 = vld [vmem:[%s79 + $0x10] sm:$0xff]
  %v258 = vld [vmem:[%s79 + $0x18] sm:$0xff]
  %v259 = vld [vmem:[%s81] sm:$0xff]
  %v260 = vld [vmem:[%s81 + $0x8] sm:$0xff]
  %v261 = vld [vmem:[%s81 + $0x10] sm:$0xff]
  %v262 = vld [vmem:[%s81 + $0x18] sm:$0xff]
  %v263 = vadd.f32 %v170, %v174
  %v264 = vadd.f32 %v171, %v175
  %266 = vset.pattern.permute.xlu0 0
  %267 = vperm.xlu0 %266, %v176
  %v268 = vpop.permute.xlu0 %267
  %271 = vset.pattern.permute.xlu0 0
  %272 = vperm.xlu0 %271, %v177
  %v273 = vpop.permute.xlu0 %272
  %v275 = vmul.f32 %v263, %v268
  %v276 = vmul.f32 %v264, %v273
  %v278 = vlaneseq
  %v279 = vshrl.u32 %v278, 7
  %v280 = vsub.s32 0, %v279
  %v281 = vrot.slane %v248, %v280
  %vm283 = vcmask 261120
  %v285 = vsel %vm283, %v275, 0
  %v288 = vsel %vm283, %v276, 0
  %290 = vmatprep.subr.mxu0 0.0
  %291 = vmatpush1.msra.mxu0 %v255
  %292 = vmatprep.subr.mxu0 0.0
  %293 = vmatpush1.msra.mxu0 %v256
  %294 = vmatprep.subr.mxu0 0.0
  %295 = vmatpush1.msra.mxu0 %v257
  %296 = vmatprep.subr.mxu0 0.0
  %297 = vmatpush1.msra.mxu0 %v258
  %298 = vmatprep.subr.mxu0 0.0
  %299 = vmatpush1.msra.mxu0 0.0
  %300 = vmatprep.subr.mxu0 0.0
  %301 = vmatpush1.msra.mxu0 0.0
  %302 = vmatprep.subr.mxu0 0.0
  %303 = vmatpush1.msra.mxu0 0.0
  %304 = vmatprep.subr.mxu0 0.0
  %305 = vmatpush1.msra.mxu0 0.0
  %306 = vmatprep.subr.mxu0 0.0
  %307 = vmatpush1.msra.mxu0 0.0
  %308 = vmatprep.subr.mxu0 0.0
  %309 = vmatpush1.msra.mxu0 0.0
  %310 = vmatprep.subr.mxu0 0.0
  %311 = vmatpush1.msra.mxu0 0.0
  %312 = vmatprep.subr.mxu0 0.0
  %313 = vmatpush1.msra.mxu0 0.0
  %314 = vmatprep.subr.mxu0 0.0
  %315 = vmatpush1.msra.mxu0 0.0
  %316 = vmatprep.subr.mxu0 0.0
  %317 = vmatpush1.msra.mxu0 0.0
  %318 = vmatprep.subr.mxu0 0.0
  %319 = vmatpush1.msra.mxu0 0.0
  %320 = vmatprep.subr.mxu0 0.0
  %321 = vmatpush1.msra.mxu0 0.0
  %322 = vmatprep.subr.mxu0 0.0
  %323 = vmatpush1.msra.mxu0 0.0
  %324 = vmatprep.subr.mxu0 0.0
  %325 = vmatpush1.msra.mxu0 0.0
  %326 = vmatprep.subr.mxu0 0.0
  %327 = vmatpush1.msra.mxu0 0.0
  %328 = vmatprep.subr.mxu0 0.0
  %329 = vmatpush1.msra.mxu0 0.0
  %330 = vmatprep.subr.mxu0 0.0
  %331 = vmatpush1.msra.mxu0 0.0
  %332 = vmatprep.subr.mxu0 0.0
  %333 = vmatpush1.msra.mxu0 0.0
  %334 = vmatprep.subr.mxu0 0.0
  %335 = vmatpush1.msra.mxu0 0.0
  %336 = vmatprep.subr.mxu0 0.0
  %337 = vmatpush1.msra.mxu0 0.0
  %338 = vmatprep.subr.mxu0 0.0
  %339 = vmatpush1.msra.mxu0 0.0
  %340 = vmatprep.subr.mxu0 0.0
  %341 = vmatpush1.msra.mxu0 0.0
  %342 = vmatprep.subr.mxu0 0.0
  %343 = vmatpush1.msra.mxu0 0.0
  %344 = vmatprep.subr.mxu0 0.0
  %345 = vmatpush1.msra.mxu0 0.0
  %346 = vmatprep.subr.mxu0 0.0
  %347 = vmatpush1.msra.mxu0 0.0
  %348 = vmatprep.subr.mxu0 0.0
  %349 = vmatpush1.msra.mxu0 0.0
  %350 = vmatprep.subr.mxu0 0.0
  %351 = vmatpush1.msra.mxu0 0.0
  %352 = vmatprep.subr.mxu0 0.0
  %353 = vmatpush1.msra.mxu0 0.0
  %354 = vmatprep.mubr.f32.mxu0 0.0
  %355 = vmatmul.mubr.f32.gmra.mrb[0].mxu0 %v285
  %v356 = vpop.f32.mrb[0].mxu0
  %v357 = vadd.f32 %v281, %v356
  %v358 = vpop.f32.mrb[0].mxu0
  %359 = vmatprep.mubr.f32.mxu0 0.0
  %360 = vmatmul.mubr.f32.gmra.mrb[0].mxu0 %v288
  %v361 = vpop.f32.mrb[0].mxu0
  %v362 = vadd.f32 %v281, %v361
  %v363 = vpop.f32.mrb[0].mxu0
  %364 = vdwg.mxu0
  %366 = vrot.lane.b32.xlu0 %v357, 96
  %v367 = vpop.permute.xlu0 %366
  %vm368 = vcmask 64512
  %v369 = vsel %vm368, %v357, 0
  %v371 = vsel %vm368, %v367, 0
  %373 = vmatprep.subr.mxu0 0.0
  %374 = vmatpush1.xpose.msra.mxu0 %v371
  %375 = vmatprep.subr.mxu0 0.0
  %376 = vmatpush1.xpose.msra.mxu0 0.0
  %377 = vmatprep.subr.mxu0 0.0
  %378 = vmatpush1.xpose.msra.mxu0 0.0
  %379 = vmatprep.subr.mxu0 0.0
  %380 = vmatpush1.xpose.msra.mxu0 0.0
  %381 = vmatprep.subr.mxu0 0.0
  %382 = vmatpush1.xpose.msra.mxu0 0.0
  %383 = vmatprep.subr.mxu0 0.0
  %384 = vmatpush1.xpose.msra.mxu0 0.0
  %385 = vmatprep.subr.mxu0 0.0
  %386 = vmatpush1.xpose.msra.mxu0 0.0
  %387 = vmatprep.subr.mxu0 0.0
  %388 = vmatpush1.xpose.msra.mxu0 0.0
  %389 = vmatprep.subr.mxu0 0.0
  %390 = vmatpush1.xpose.msra.mxu0 0.0
  %391 = vmatprep.subr.mxu0 0.0
  %392 = vmatpush1.xpose.msra.mxu0 0.0
  %393 = vmatprep.subr.mxu0 0.0
  %394 = vmatpush1.xpose.msra.mxu0 0.0
  %395 = vmatprep.subr.mxu0 0.0
  %396 = vmatpush1.xpose.msra.mxu0 0.0
  %397 = vmatprep.subr.mxu0 0.0
  %398 = vmatpush1.xpose.msra.mxu0 0.0
  %399 = vmatprep.subr.mxu0 0.0
  %400 = vmatpush1.xpose.msra.mxu0 0.0
  %401 = vmatprep.subr.mxu0 0.0
  %402 = vmatpush1.xpose.msra.mxu0 0.0
  %403 = vmatprep.subr.mxu0 0.0
  %404 = vmatpush1.xpose.msra.mxu0 0.0
  %405 = vmatprep.subr.mxu0 0.0
  %406 = vmatpush1.xpose.msra.mxu0 0.0
  %407 = vmatprep.subr.mxu0 0.0
  %408 = vmatpush1.xpose.msra.mxu0 0.0
  %409 = vmatprep.subr.mxu0 0.0
  %410 = vmatpush1.xpose.msra.mxu0 0.0
  %411 = vmatprep.subr.mxu0 0.0
  %412 = vmatpush1.xpose.msra.mxu0 0.0
  %413 = vmatprep.subr.mxu0 0.0
  %414 = vmatpush1.xpose.msra.mxu0 0.0
  %415 = vmatprep.subr.mxu0 0.0
  %416 = vmatpush1.xpose.msra.mxu0 0.0
  %417 = vmatprep.subr.mxu0 0.0
  %418 = vmatpush1.xpose.msra.mxu0 0.0
  %419 = vmatprep.subr.mxu0 0.0
  %420 = vmatpush1.xpose.msra.mxu0 0.0
  %421 = vmatprep.subr.mxu0 0.0
  %422 = vmatpush1.xpose.msra.mxu0 0.0
  %423 = vmatprep.subr.mxu0 0.0
  %424 = vmatpush1.xpose.msra.mxu0 0.0
  %425 = vmatprep.subr.mxu0 0.0
  %426 = vmatpush1.xpose.msra.mxu0 0.0
  %427 = vmatprep.subr.mxu0 0.0
  %428 = vmatpush1.xpose.msra.mxu0 0.0
  %429 = vmatprep.subr.mxu0 0.0
  %430 = vmatpush1.xpose.msra.mxu0 0.0
  %431 = vmatprep.subr.mxu0 0.0
  %432 = vmatpush1.xpose.msra.mxu0 0.0
  %433 = vmatprep.subr.mxu0 0.0
  %434 = vmatpush1.xpose.msra.mxu0 0.0
  %435 = vmatprep.subr.mxu0 0.0
  %436 = vmatpush1.xpose.msra.mxu0 0.0
  %437 = vmatprep.mubr.f32.mxu0 0.0
  %438 = vmatmul.mubr.f32.gmra.mrb[0].mxu0 %v369
  %v439 = vpop.f32.mrb[0].mxu0
  %v440 = vadd.f32 0.0, %v439
  %v441 = vpop.f32.mrb[0].mxu0
  %442 = vdwg.mxu0
  %444 = vrot.lane.b32.xlu0 %v362, 96
  %v445 = vpop.permute.xlu0 %444
  %v446 = vsel %vm368, %v362, 0
  %v448 = vsel %vm368, %v445, 0
  %450 = vmatprep.subr.mxu0 0.0
  %451 = vmatpush1.xpose.msra.mxu0 %v448
  %452 = vmatprep.subr.mxu0 0.0
  %453 = vmatpush1.xpose.msra.mxu0 0.0
  %454 = vmatprep.subr.mxu0 0.0
  %455 = vmatpush1.xpose.msra.mxu0 0.0
  %456 = vmatprep.subr.mxu0 0.0
  %457 = vmatpush1.xpose.msra.mxu0 0.0
  %458 = vmatprep.subr.mxu0 0.0
  %459 = vmatpush1.xpose.msra.mxu0 0.0
  %460 = vmatprep.subr.mxu0 0.0
  %461 = vmatpush1.xpose.msra.mxu0 0.0
  %462 = vmatprep.subr.mxu0 0.0
  %463 = vmatpush1.xpose.msra.mxu0 0.0
  %464 = vmatprep.subr.mxu0 0.0
  %465 = vmatpush1.xpose.msra.mxu0 0.0
  %466 = vmatprep.subr.mxu0 0.0
  %467 = vmatpush1.xpose.msra.mxu0 0.0
  %468 = vmatprep.subr.mxu0 0.0
  %469 = vmatpush1.xpose.msra.mxu0 0.0
  %470 = vmatprep.subr.mxu0 0.0
  %471 = vmatpush1.xpose.msra.mxu0 0.0
  %472 = vmatprep.subr.mxu0 0.0
  %473 = vmatpush1.xpose.msra.mxu0 0.0
  %474 = vmatprep.subr.mxu0 0.0
  %475 = vmatpush1.xpose.msra.mxu0 0.0
  %476 = vmatprep.subr.mxu0 0.0
  %477 = vmatpush1.xpose.msra.mxu0 0.0
  %478 = vmatprep.subr.mxu0 0.0
  %479 = vmatpush1.xpose.msra.mxu0 0.0
  %480 = vmatprep.subr.mxu0 0.0
  %481 = vmatpush1.xpose.msra.mxu0 0.0
  %482 = vmatprep.subr.mxu0 0.0
  %483 = vmatpush1.xpose.msra.mxu0 0.0
  %484 = vmatprep.subr.mxu0 0.0
  %485 = vmatpush1.xpose.msra.mxu0 0.0
  %486 = vmatprep.subr.mxu0 0.0
  %487 = vmatpush1.xpose.msra.mxu0 0.0
  %488 = vmatprep.subr.mxu0 0.0
  %489 = vmatpush1.xpose.msra.mxu0 0.0
  %490 = vmatprep.subr.mxu0 0.0
  %491 = vmatpush1.xpose.msra.mxu0 0.0
  %492 = vmatprep.subr.mxu0 0.0
  %493 = vmatpush1.xpose.msra.mxu0 0.0
  %494 = vmatprep.subr.mxu0 0.0
  %495 = vmatpush1.xpose.msra.mxu0 0.0
  %496 = vmatprep.subr.mxu0 0.0
  %497 = vmatpush1.xpose.msra.mxu0 0.0
  %498 = vmatprep.subr.mxu0 0.0
  %499 = vmatpush1.xpose.msra.mxu0 0.0
  %500 = vmatprep.subr.mxu0 0.0
  %501 = vmatpush1.xpose.msra.mxu0 0.0
  %502 = vmatprep.subr.mxu0 0.0
  %503 = vmatpush1.xpose.msra.mxu0 0.0
  %504 = vmatprep.subr.mxu0 0.0
  %505 = vmatpush1.xpose.msra.mxu0 0.0
  %506 = vmatprep.subr.mxu0 0.0
  %507 = vmatpush1.xpose.msra.mxu0 0.0
  %508 = vmatprep.subr.mxu0 0.0
  %509 = vmatpush1.xpose.msra.mxu0 0.0
  %510 = vmatprep.subr.mxu0 0.0
  %511 = vmatpush1.xpose.msra.mxu0 0.0
  %512 = vmatprep.subr.mxu0 0.0
  %513 = vmatpush1.xpose.msra.mxu0 0.0
  %514 = vmatprep.mubr.f32.mxu0 0.0
  %515 = vmatmul.mubr.f32.gmra.mrb[0].mxu0 %v446
  %v516 = vpop.f32.mrb[0].mxu0
  %v517 = vadd.f32 0.0, %v516
  %v518 = vpop.f32.mrb[0].mxu0
  %519 = vdwg.mxu0
  %v520 = vmul.f32 %v440, 0.35355338
  %v521 = vmul.f32 %v517, 0.35355338
  %v522 = vadd.f32 %v520, %v180
  %v523 = vadd.f32 %v521, %v181
  %v524 = vsel %vm368, %v522, -inf
  %525 = vmax.xlane.f32.xlu0 %v524
  %v526 = vpop.xlane.xlu0 %525
  %v527 = vsel %vm368, %v523, -inf
  %528 = vmax.xlane.f32.xlu0 %v527
  %v529 = vpop.xlane.xlu0 %528
  %v530 = vsub.f32 %v522, %v526
  %v531 = vsub.f32 %v523, %v529
  %v532 = vmul.f32 %v530, 1.442695
  %v533 = vpow.pop %v532
  %v534 = vmul.f32 %v531, 1.442695
  %v535 = vpow.pop %v534
  %v536 = vsel %vm368, %v533, 0.0
  %537 = vadd.xlane.f32.xlu0 %v536
  %v538 = vpop.xlane.xlu0 %537
  %v539 = vsel %vm368, %v535, 0.0
  %540 = vadd.xlane.f32.xlu0 %v539
  %v541 = vpop.xlane.xlu0 %540
  %v542 = vrcp.pop %v538
  %v543 = vrcp.pop %v541
  %v544 = vmul.f32 %v533, %v542
  %v545 = vmul.f32 %v535, %v543
  %546 = vrot.lane.b32.xlu0 %v357, 64
  %v547 = vpop.permute.xlu0 %546
  %v550 = vsel %vm368, %v544, 0
  %552 = vmatprep.subr.mxu0 0.0
  %553 = vmatpush1.msra.mxu0 %v547
  %554 = vmatprep.subr.mxu0 0.0
  %555 = vmatpush1.msra.mxu0 0.0
  %556 = vmatprep.subr.mxu0 0.0
  %557 = vmatpush1.msra.mxu0 0.0
  %558 = vmatprep.subr.mxu0 0.0
  %559 = vmatpush1.msra.mxu0 0.0
  %560 = vmatprep.subr.mxu0 0.0
  %561 = vmatpush1.msra.mxu0 0.0
  %562 = vmatprep.subr.mxu0 0.0
  %563 = vmatpush1.msra.mxu0 0.0
  %564 = vmatprep.subr.mxu0 0.0
  %565 = vmatpush1.msra.mxu0 0.0
  %566 = vmatprep.subr.mxu0 0.0
  %567 = vmatpush1.msra.mxu0 0.0
  %568 = vmatprep.subr.mxu0 0.0
  %569 = vmatpush1.msra.mxu0 0.0
  %570 = vmatprep.subr.mxu0 0.0
  %571 = vmatpush1.msra.mxu0 0.0
  %572 = vmatprep.subr.mxu0 0.0
  %573 = vmatpush1.msra.mxu0 0.0
  %574 = vmatprep.subr.mxu0 0.0
  %575 = vmatpush1.msra.mxu0 0.0
  %576 = vmatprep.subr.mxu0 0.0
  %577 = vmatpush1.msra.mxu0 0.0
  %578 = vmatprep.subr.mxu0 0.0
  %579 = vmatpush1.msra.mxu0 0.0
  %580 = vmatprep.subr.mxu0 0.0
  %581 = vmatpush1.msra.mxu0 0.0
  %582 = vmatprep.subr.mxu0 0.0
  %583 = vmatpush1.msra.mxu0 0.0
  %584 = vmatprep.subr.mxu0 0.0
  %585 = vmatpush1.msra.mxu0 0.0
  %586 = vmatprep.subr.mxu0 0.0
  %587 = vmatpush1.msra.mxu0 0.0
  %588 = vmatprep.subr.mxu0 0.0
  %589 = vmatpush1.msra.mxu0 0.0
  %590 = vmatprep.subr.mxu0 0.0
  %591 = vmatpush1.msra.mxu0 0.0
  %592 = vmatprep.subr.mxu0 0.0
  %593 = vmatpush1.msra.mxu0 0.0
  %594 = vmatprep.subr.mxu0 0.0
  %595 = vmatpush1.msra.mxu0 0.0
  %596 = vmatprep.subr.mxu0 0.0
  %597 = vmatpush1.msra.mxu0 0.0
  %598 = vmatprep.subr.mxu0 0.0
  %599 = vmatpush1.msra.mxu0 0.0
  %600 = vmatprep.subr.mxu0 0.0
  %601 = vmatpush1.msra.mxu0 0.0
  %602 = vmatprep.subr.mxu0 0.0
  %603 = vmatpush1.msra.mxu0 0.0
  %604 = vmatprep.subr.mxu0 0.0
  %605 = vmatpush1.msra.mxu0 0.0
  %606 = vmatprep.subr.mxu0 0.0
  %607 = vmatpush1.msra.mxu0 0.0
  %608 = vmatprep.subr.mxu0 0.0
  %609 = vmatpush1.msra.mxu0 0.0
  %610 = vmatprep.subr.mxu0 0.0
  %611 = vmatpush1.msra.mxu0 0.0
  %612 = vmatprep.subr.mxu0 0.0
  %613 = vmatpush1.msra.mxu0 0.0
  %614 = vmatprep.subr.mxu0 0.0
  %615 = vmatpush1.msra.mxu0 0.0
  %616 = vmatprep.mubr.f32.mxu0 0.0
  %617 = vmatmul.mubr.f32.gmra.mrb[0].mxu0 %v550
  %v618 = vpop.f32.mrb[0].mxu0
  %v619 = vadd.f32 0.0, %v618
  %v620 = vpop.f32.mrb[0].mxu0
  %621 = vdwg.mxu0
  %622 = vrot.lane.b32.xlu0 %v362, 64
  %v623 = vpop.permute.xlu0 %622
  %v626 = vsel %vm368, %v545, 0
  %628 = vmatprep.subr.mxu0 0.0
  %629 = vmatpush1.msra.mxu0 %v623
  %630 = vmatprep.subr.mxu0 0.0
  %631 = vmatpush1.msra.mxu0 0.0
  %632 = vmatprep.subr.mxu0 0.0
  %633 = vmatpush1.msra.mxu0 0.0
  %634 = vmatprep.subr.mxu0 0.0
  %635 = vmatpush1.msra.mxu0 0.0
  %636 = vmatprep.subr.mxu0 0.0
  %637 = vmatpush1.msra.mxu0 0.0
  %638 = vmatprep.subr.mxu0 0.0
  %639 = vmatpush1.msra.mxu0 0.0
  %640 = vmatprep.subr.mxu0 0.0
  %641 = vmatpush1.msra.mxu0 0.0
  %642 = vmatprep.subr.mxu0 0.0
  %643 = vmatpush1.msra.mxu0 0.0
  %644 = vmatprep.subr.mxu0 0.0
  %645 = vmatpush1.msra.mxu0 0.0
  %646 = vmatprep.subr.mxu0 0.0
  %647 = vmatpush1.msra.mxu0 0.0
  %648 = vmatprep.subr.mxu0 0.0
  %649 = vmatpush1.msra.mxu0 0.0
  %650 = vmatprep.subr.mxu0 0.0
  %651 = vmatpush1.msra.mxu0 0.0
  %652 = vmatprep.subr.mxu0 0.0
  %653 = vmatpush1.msra.mxu0 0.0
  %654 = vmatprep.subr.mxu0 0.0
  %655 = vmatpush1.msra.mxu0 0.0
  %656 = vmatprep.subr.mxu0 0.0
  %657 = vmatpush1.msra.mxu0 0.0
  %658 = vmatprep.subr.mxu0 0.0
  %659 = vmatpush1.msra.mxu0 0.0
  %660 = vmatprep.subr.mxu0 0.0
  %661 = vmatpush1.msra.mxu0 0.0
  %662 = vmatprep.subr.mxu0 0.0
  %663 = vmatpush1.msra.mxu0 0.0
  %664 = vmatprep.subr.mxu0 0.0
  %665 = vmatpush1.msra.mxu0 0.0
  %666 = vmatprep.subr.mxu0 0.0
  %667 = vmatpush1.msra.mxu0 0.0
  %668 = vmatprep.subr.mxu0 0.0
  %669 = vmatpush1.msra.mxu0 0.0
  %670 = vmatprep.subr.mxu0 0.0
  %671 = vmatpush1.msra.mxu0 0.0
  %672 = vmatprep.subr.mxu0 0.0
  %673 = vmatpush1.msra.mxu0 0.0
  %674 = vmatprep.subr.mxu0 0.0
  %675 = vmatpush1.msra.mxu0 0.0
  %676 = vmatprep.subr.mxu0 0.0
  %677 = vmatpush1.msra.mxu0 0.0
  %678 = vmatprep.subr.mxu0 0.0
  %679 = vmatpush1.msra.mxu0 0.0
  %680 = vmatprep.subr.mxu0 0.0
  %681 = vmatpush1.msra.mxu0 0.0
  %682 = vmatprep.subr.mxu0 0.0
  %683 = vmatpush1.msra.mxu0 0.0
  %684 = vmatprep.subr.mxu0 0.0
  %685 = vmatpush1.msra.mxu0 0.0
  %686 = vmatprep.subr.mxu0 0.0
  %687 = vmatpush1.msra.mxu0 0.0
  %688 = vmatprep.subr.mxu0 0.0
  %689 = vmatpush1.msra.mxu0 0.0
  %690 = vmatprep.subr.mxu0 0.0
  %691 = vmatpush1.msra.mxu0 0.0
  %692 = vmatprep.mubr.f32.mxu0 0.0
  %693 = vmatmul.mubr.f32.gmra.mrb[0].mxu0 %v626
  %v694 = vpop.f32.mrb[0].mxu0
  %v695 = vadd.f32 0.0, %v694
  %v696 = vpop.f32.mrb[0].mxu0
  %697 = vdwg.mxu0
  %698 = vrot.lane.b32.xlu0 %v357, 120
  %v699 = vpop.permute.xlu0 %698
  %700 = vrot.lane.b32.xlu0 %v357, 88
  %v701 = vpop.permute.xlu0 %700
  %v702 = vsel %vm368, %v699, 0
  %v704 = vsel %vm368, %v701, 0
  %706 = vmatprep.subr.mxu0 0.0
  %707 = vmatpush1.xpose.msra.mxu0 %v704
  %708 = vmatprep.subr.mxu0 0.0
  %709 = vmatpush1.xpose.msra.mxu0 0.0
  %710 = vmatprep.subr.mxu0 0.0
  %711 = vmatpush1.xpose.msra.mxu0 0.0
  %712 = vmatprep.subr.mxu0 0.0
  %713 = vmatpush1.xpose.msra.mxu0 0.0
  %714 = vmatprep.subr.mxu0 0.0
  %715 = vmatpush1.xpose.msra.mxu0 0.0
  %716 = vmatprep.subr.mxu0 0.0
  %717 = vmatpush1.xpose.msra.mxu0 0.0
  %718 = vmatprep.subr.mxu0 0.0
  %719 = vmatpush1.xpose.msra.mxu0 0.0
  %720 = vmatprep.subr.mxu0 0.0
  %721 = vmatpush1.xpose.msra.mxu0 0.0
  %722 = vmatprep.subr.mxu0 0.0
  %723 = vmatpush1.xpose.msra.mxu0 0.0
  %724 = vmatprep.subr.mxu0 0.0
  %725 = vmatpush1.xpose.msra.mxu0 0.0
  %726 = vmatprep.subr.mxu0 0.0
  %727 = vmatpush1.xpose.msra.mxu0 0.0
  %728 = vmatprep.subr.mxu0 0.0
  %729 = vmatpush1.xpose.msra.mxu0 0.0
  %730 = vmatprep.subr.mxu0 0.0
  %731 = vmatpush1.xpose.msra.mxu0 0.0
  %732 = vmatprep.subr.mxu0 0.0
  %733 = vmatpush1.xpose.msra.mxu0 0.0
  %734 = vmatprep.subr.mxu0 0.0
  %735 = vmatpush1.xpose.msra.mxu0 0.0
  %736 = vmatprep.subr.mxu0 0.0
  %737 = vmatpush1.xpose.msra.mxu0 0.0
  %738 = vmatprep.subr.mxu0 0.0
  %739 = vmatpush1.xpose.msra.mxu0 0.0
  %740 = vmatprep.subr.mxu0 0.0
  %741 = vmatpush1.xpose.msra.mxu0 0.0
  %742 = vmatprep.subr.mxu0 0.0
  %743 = vmatpush1.xpose.msra.mxu0 0.0
  %744 = vmatprep.subr.mxu0 0.0
  %745 = vmatpush1.xpose.msra.mxu0 0.0
  %746 = vmatprep.subr.mxu0 0.0
  %747 = vmatpush1.xpose.msra.mxu0 0.0
  %748 = vmatprep.subr.mxu0 0.0
  %749 = vmatpush1.xpose.msra.mxu0 0.0
  %750 = vmatprep.subr.mxu0 0.0
  %751 = vmatpush1.xpose.msra.mxu0 0.0
  %752 = vmatprep.subr.mxu0 0.0
  %753 = vmatpush1.xpose.msra.mxu0 0.0
  %754 = vmatprep.subr.mxu0 0.0
  %755 = vmatpush1.xpose.msra.mxu0 0.0
  %756 = vmatprep.subr.mxu0 0.0
  %757 = vmatpush1.xpose.msra.mxu0 0.0
  %758 = vmatprep.subr.mxu0 0.0
  %759 = vmatpush1.xpose.msra.mxu0 0.0
  %760 = vmatprep.subr.mxu0 0.0
  %761 = vmatpush1.xpose.msra.mxu0 0.0
  %762 = vmatprep.subr.mxu0 0.0
  %763 = vmatpush1.xpose.msra.mxu0 0.0
  %764 = vmatprep.subr.mxu0 0.0
  %765 = vmatpush1.xpose.msra.mxu0 0.0
  %766 = vmatprep.subr.mxu0 0.0
  %767 = vmatpush1.xpose.msra.mxu0 0.0
  %768 = vmatprep.subr.mxu0 0.0
  %769 = vmatpush1.xpose.msra.mxu0 0.0
  %770 = vmatprep.mubr.f32.mxu0 0.0
  %771 = vmatmul.mubr.f32.gmra.mrb[0].mxu0 %v702
  %v772 = vpop.f32.mrb[0].mxu0
  %v773 = vadd.f32 0.0, %v772
  %v774 = vpop.f32.mrb[0].mxu0
  %775 = vdwg.mxu0
  %776 = vrot.lane.b32.xlu0 %v362, 120
  %v777 = vpop.permute.xlu0 %776
  %778 = vrot.lane.b32.xlu0 %v362, 88
  %v779 = vpop.permute.xlu0 %778
  %v780 = vsel %vm368, %v777, 0
  %v782 = vsel %vm368, %v779, 0
  %784 = vmatprep.subr.mxu0 0.0
  %785 = vmatpush1.xpose.msra.mxu0 %v782
  %786 = vmatprep.subr.mxu0 0.0
  %787 = vmatpush1.xpose.msra.mxu0 0.0
  %788 = vmatprep.subr.mxu0 0.0
  %789 = vmatpush1.xpose.msra.mxu0 0.0
  %790 = vmatprep.subr.mxu0 0.0
  %791 = vmatpush1.xpose.msra.mxu0 0.0
  %792 = vmatprep.subr.mxu0 0.0
  %793 = vmatpush1.xpose.msra.mxu0 0.0
  %794 = vmatprep.subr.mxu0 0.0
  %795 = vmatpush1.xpose.msra.mxu0 0.0
  %796 = vmatprep.subr.mxu0 0.0
  %797 = vmatpush1.xpose.msra.mxu0 0.0
  %798 = vmatprep.subr.mxu0 0.0
  %799 = vmatpush1.xpose.msra.mxu0 0.0
  %800 = vmatprep.subr.mxu0 0.0
  %801 = vmatpush1.xpose.msra.mxu0 0.0
  %802 = vmatprep.subr.mxu0 0.0
  %803 = vmatpush1.xpose.msra.mxu0 0.0
  %804 = vmatprep.subr.mxu0 0.0
  %805 = vmatpush1.xpose.msra.mxu0 0.0
  %806 = vmatprep.subr.mxu0 0.0
  %807 = vmatpush1.xpose.msra.mxu0 0.0
  %808 = vmatprep.subr.mxu0 0.0
  %809 = vmatpush1.xpose.msra.mxu0 0.0
  %810 = vmatprep.subr.mxu0 0.0
  %811 = vmatpush1.xpose.msra.mxu0 0.0
  %812 = vmatprep.subr.mxu0 0.0
  %813 = vmatpush1.xpose.msra.mxu0 0.0
  %814 = vmatprep.subr.mxu0 0.0
  %815 = vmatpush1.xpose.msra.mxu0 0.0
  %816 = vmatprep.subr.mxu0 0.0
  %817 = vmatpush1.xpose.msra.mxu0 0.0
  %818 = vmatprep.subr.mxu0 0.0
  %819 = vmatpush1.xpose.msra.mxu0 0.0
  %820 = vmatprep.subr.mxu0 0.0
  %821 = vmatpush1.xpose.msra.mxu0 0.0
  %822 = vmatprep.subr.mxu0 0.0
  %823 = vmatpush1.xpose.msra.mxu0 0.0
  %824 = vmatprep.subr.mxu0 0.0
  %825 = vmatpush1.xpose.msra.mxu0 0.0
  %826 = vmatprep.subr.mxu0 0.0
  %827 = vmatpush1.xpose.msra.mxu0 0.0
  %828 = vmatprep.subr.mxu0 0.0
  %829 = vmatpush1.xpose.msra.mxu0 0.0
  %830 = vmatprep.subr.mxu0 0.0
  %831 = vmatpush1.xpose.msra.mxu0 0.0
  %832 = vmatprep.subr.mxu0 0.0
  %833 = vmatpush1.xpose.msra.mxu0 0.0
  %834 = vmatprep.subr.mxu0 0.0
  %835 = vmatpush1.xpose.msra.mxu0 0.0
  %836 = vmatprep.subr.mxu0 0.0
  %837 = vmatpush1.xpose.msra.mxu0 0.0
  %838 = vmatprep.subr.mxu0 0.0
  %839 = vmatpush1.xpose.msra.mxu0 0.0
  %840 = vmatprep.subr.mxu0 0.0
  %841 = vmatpush1.xpose.msra.mxu0 0.0
  %842 = vmatprep.subr.mxu0 0.0
  %843 = vmatpush1.xpose.msra.mxu0 0.0
  %844 = vmatprep.subr.mxu0 0.0
  %845 = vmatpush1.xpose.msra.mxu0 0.0
  %846 = vmatprep.subr.mxu0 0.0
  %847 = vmatpush1.xpose.msra.mxu0 0.0
  %848 = vmatprep.mubr.f32.mxu0 0.0
  %849 = vmatmul.mubr.f32.gmra.mrb[0].mxu0 %v780
  %v850 = vpop.f32.mrb[0].mxu0
  %v851 = vadd.f32 0.0, %v850
  %v852 = vpop.f32.mrb[0].mxu0
  %853 = vdwg.mxu0
  %v854 = vmul.f32 %v773, 0.35355338
  %v855 = vmul.f32 %v851, 0.35355338
  %v856 = vadd.f32 %v854, %v180
  %v857 = vadd.f32 %v855, %v181
  %v858 = vsel %vm368, %v856, -inf
  %859 = vmax.xlane.f32.xlu0 %v858
  %v860 = vpop.xlane.xlu0 %859
  %v861 = vsel %vm368, %v857, -inf
  %862 = vmax.xlane.f32.xlu0 %v861
  %v863 = vpop.xlane.xlu0 %862
  %v864 = vsub.f32 %v856, %v860
  %v865 = vsub.f32 %v857, %v863
  %v866 = vmul.f32 %v864, 1.442695
  %v867 = vpow.pop %v866
  %v868 = vmul.f32 %v865, 1.442695
  %v869 = vpow.pop %v868
  %v870 = vsel %vm368, %v867, 0.0
  %871 = vadd.xlane.f32.xlu0 %v870
  %v872 = vpop.xlane.xlu0 %871
  %v873 = vsel %vm368, %v869, 0.0
  %874 = vadd.xlane.f32.xlu0 %v873
  %v875 = vpop.xlane.xlu0 %874
  %v876 = vrcp.pop %v872
  %v877 = vrcp.pop %v875
  %v878 = vmul.f32 %v867, %v876
  %v879 = vmul.f32 %v869, %v877
  %880 = vrot.lane.b32.xlu0 %v357, 56
  %v881 = vpop.permute.xlu0 %880
  %v884 = vsel %vm368, %v878, 0
  %886 = vmatprep.subr.mxu0 0.0
  %887 = vmatpush1.msra.mxu0 %v881
  %888 = vmatprep.subr.mxu0 0.0
  %889 = vmatpush1.msra.mxu0 0.0
  %890 = vmatprep.subr.mxu0 0.0
  %891 = vmatpush1.msra.mxu0 0.0
  %892 = vmatprep.subr.mxu0 0.0
  %893 = vmatpush1.msra.mxu0 0.0
  %894 = vmatprep.subr.mxu0 0.0
  %895 = vmatpush1.msra.mxu0 0.0
  %896 = vmatprep.subr.mxu0 0.0
  %897 = vmatpush1.msra.mxu0 0.0
  %898 = vmatprep.subr.mxu0 0.0
  %899 = vmatpush1.msra.mxu0 0.0
  %900 = vmatprep.subr.mxu0 0.0
  %901 = vmatpush1.msra.mxu0 0.0
  %902 = vmatprep.subr.mxu0 0.0
  %903 = vmatpush1.msra.mxu0 0.0
  %904 = vmatprep.subr.mxu0 0.0
  %905 = vmatpush1.msra.mxu0 0.0
  %906 = vmatprep.subr.mxu0 0.0
  %907 = vmatpush1.msra.mxu0 0.0
  %908 = vmatprep.subr.mxu0 0.0
  %909 = vmatpush1.msra.mxu0 0.0
  %910 = vmatprep.subr.mxu0 0.0
  %911 = vmatpush1.msra.mxu0 0.0
  %912 = vmatprep.subr.mxu0 0.0
  %913 = vmatpush1.msra.mxu0 0.0
  %914 = vmatprep.subr.mxu0 0.0
  %915 = vmatpush1.msra.mxu0 0.0
  %916 = vmatprep.subr.mxu0 0.0
  %917 = vmatpush1.msra.mxu0 0.0
  %918 = vmatprep.subr.mxu0 0.0
  %919 = vmatpush1.msra.mxu0 0.0
  %920 = vmatprep.subr.mxu0 0.0
  %921 = vmatpush1.msra.mxu0 0.0
  %922 = vmatprep.subr.mxu0 0.0
  %923 = vmatpush1.msra.mxu0 0.0
  %924 = vmatprep.subr.mxu0 0.0
  %925 = vmatpush1.msra.mxu0 0.0
  %926 = vmatprep.subr.mxu0 0.0
  %927 = vmatpush1.msra.mxu0 0.0
  %928 = vmatprep.subr.mxu0 0.0
  %929 = vmatpush1.msra.mxu0 0.0
  %930 = vmatprep.subr.mxu0 0.0
  %931 = vmatpush1.msra.mxu0 0.0
  %932 = vmatprep.subr.mxu0 0.0
  %933 = vmatpush1.msra.mxu0 0.0
  %934 = vmatprep.subr.mxu0 0.0
  %935 = vmatpush1.msra.mxu0 0.0
  %936 = vmatprep.subr.mxu0 0.0
  %937 = vmatpush1.msra.mxu0 0.0
  %938 = vmatprep.subr.mxu0 0.0
  %939 = vmatpush1.msra.mxu0 0.0
  %940 = vmatprep.subr.mxu0 0.0
  %941 = vmatpush1.msra.mxu0 0.0
  %942 = vmatprep.subr.mxu0 0.0
  %943 = vmatpush1.msra.mxu0 0.0
  %944 = vmatprep.subr.mxu0 0.0
  %945 = vmatpush1.msra.mxu0 0.0
  %946 = vmatprep.subr.mxu0 0.0
  %947 = vmatpush1.msra.mxu0 0.0
  %948 = vmatprep.subr.mxu0 0.0
  %949 = vmatpush1.msra.mxu0 0.0
  %950 = vmatprep.mubr.f32.mxu0 0.0
  %951 = vmatmul.mubr.f32.gmra.mrb[0].mxu0 %v884
  %v952 = vpop.f32.mrb[0].mxu0
  %v953 = vadd.f32 0.0, %v952
  %v954 = vpop.f32.mrb[0].mxu0
  %955 = vdwg.mxu0
  %956 = vrot.lane.b32.xlu0 %v362, 56
  %v957 = vpop.permute.xlu0 %956
  %v960 = vsel %vm368, %v879, 0
  %962 = vmatprep.subr.mxu0 0.0
  %963 = vmatpush1.msra.mxu0 %v957
  %964 = vmatprep.subr.mxu0 0.0
  %965 = vmatpush1.msra.mxu0 0.0
  %966 = vmatprep.subr.mxu0 0.0
  %967 = vmatpush1.msra.mxu0 0.0
  %968 = vmatprep.subr.mxu0 0.0
  %969 = vmatpush1.msra.mxu0 0.0
  %970 = vmatprep.subr.mxu0 0.0
  %971 = vmatpush1.msra.mxu0 0.0
  %972 = vmatprep.subr.mxu0 0.0
  %973 = vmatpush1.msra.mxu0 0.0
  %974 = vmatprep.subr.mxu0 0.0
  %975 = vmatpush1.msra.mxu0 0.0
  %976 = vmatprep.subr.mxu0 0.0
  %977 = vmatpush1.msra.mxu0 0.0
  %978 = vmatprep.subr.mxu0 0.0
  %979 = vmatpush1.msra.mxu0 0.0
  %980 = vmatprep.subr.mxu0 0.0
  %981 = vmatpush1.msra.mxu0 0.0
  %982 = vmatprep.subr.mxu0 0.0
  %983 = vmatpush1.msra.mxu0 0.0
  %984 = vmatprep.subr.mxu0 0.0
  %985 = vmatpush1.msra.mxu0 0.0
  %986 = vmatprep.subr.mxu0 0.0
  %987 = vmatpush1.msra.mxu0 0.0
  %988 = vmatprep.subr.mxu0 0.0
  %989 = vmatpush1.msra.mxu0 0.0
  %990 = vmatprep.subr.mxu0 0.0
  %991 = vmatpush1.msra.mxu0 0.0
  %992 = vmatprep.subr.mxu0 0.0
  %993 = vmatpush1.msra.mxu0 0.0
  %994 = vmatprep.subr.mxu0 0.0
  %995 = vmatpush1.msra.mxu0 0.0
  %996 = vmatprep.subr.mxu0 0.0
  %997 = vmatpush1.msra.mxu0 0.0
  %998 = vmatprep.subr.mxu0 0.0
  %999 = vmatpush1.msra.mxu0 0.0
  %1000 = vmatprep.subr.mxu0 0.0
  %1001 = vmatpush1.msra.mxu0 0.0
  %1002 = vmatprep.subr.mxu0 0.0
  %1003 = vmatpush1.msra.mxu0 0.0
  %1004 = vmatprep.subr.mxu0 0.0
  %1005 = vmatpush1.msra.mxu0 0.0
  %1006 = vmatprep.subr.mxu0 0.0
  %1007 = vmatpush1.msra.mxu0 0.0
  %1008 = vmatprep.subr.mxu0 0.0
  %1009 = vmatpush1.msra.mxu0 0.0
  %1010 = vmatprep.subr.mxu0 0.0
  %1011 = vmatpush1.msra.mxu0 0.0
  %1012 = vmatprep.subr.mxu0 0.0
  %1013 = vmatpush1.msra.mxu0 0.0
  %1014 = vmatprep.subr.mxu0 0.0
  %1015 = vmatpush1.msra.mxu0 0.0
  %1016 = vmatprep.subr.mxu0 0.0
  %1017 = vmatpush1.msra.mxu0 0.0
  %1018 = vmatprep.subr.mxu0 0.0
  %1019 = vmatpush1.msra.mxu0 0.0
  %1020 = vmatprep.subr.mxu0 0.0
  %1021 = vmatpush1.msra.mxu0 0.0
  %1022 = vmatprep.subr.mxu0 0.0
  %1023 = vmatpush1.msra.mxu0 0.0
  %1024 = vmatprep.subr.mxu0 0.0
  %1025 = vmatpush1.msra.mxu0 0.0
  %1026 = vmatprep.mubr.f32.mxu0 0.0
  %1027 = vmatmul.mubr.f32.gmra.mrb[0].mxu0 %v960
  %v1028 = vpop.f32.mrb[0].mxu0
  %v1029 = vadd.f32 0.0, %v1028
  %v1030 = vpop.f32.mrb[0].mxu0
  %1031 = vdwg.mxu0
  %v1033 = vsel %vm368, %v953, 0
  %v1036 = vsel %vm368, %v1029, 0
  %1038 = vmatprep.subr.mxu0 0.0
  %1039 = vmatpush1.msra.mxu0 %v252
  %1040 = vmatprep.subr.mxu0 0.0
  %1041 = vmatpush1.msra.mxu0 0.0
  %1042 = vmatprep.subr.mxu0 0.0
  %1043 = vmatpush1.msra.mxu0 0.0
  %1044 = vmatprep.subr.mxu0 0.0
  %1045 = vmatpush1.msra.mxu0 0.0
  %1046 = vmatprep.subr.mxu0 0.0
  %1047 = vmatpush1.msra.mxu0 0.0
  %1048 = vmatprep.subr.mxu0 0.0
  %1049 = vmatpush1.msra.mxu0 0.0
  %1050 = vmatprep.subr.mxu0 0.0
  %1051 = vmatpush1.msra.mxu0 0.0
  %1052 = vmatprep.subr.mxu0 0.0
  %1053 = vmatpush1.msra.mxu0 0.0
  %1054 = vmatprep.subr.mxu0 0.0
  %1055 = vmatpush1.msra.mxu0 0.0
  %1056 = vmatprep.subr.mxu0 0.0
  %1057 = vmatpush1.msra.mxu0 0.0
  %1058 = vmatprep.subr.mxu0 0.0
  %1059 = vmatpush1.msra.mxu0 0.0
  %1060 = vmatprep.subr.mxu0 0.0
  %1061 = vmatpush1.msra.mxu0 0.0
  %1062 = vmatprep.subr.mxu0 0.0
  %1063 = vmatpush1.msra.mxu0 0.0
  %1064 = vmatprep.subr.mxu0 0.0
  %1065 = vmatpush1.msra.mxu0 0.0
  %1066 = vmatprep.subr.mxu0 0.0
  %1067 = vmatpush1.msra.mxu0 0.0
  %1068 = vmatprep.subr.mxu0 0.0
  %1069 = vmatpush1.msra.mxu0 0.0
  %1070 = vmatprep.subr.mxu0 0.0
  %1071 = vmatpush1.msra.mxu0 0.0
  %1072 = vmatprep.subr.mxu0 0.0
  %1073 = vmatpush1.msra.mxu0 0.0
  %1074 = vmatprep.subr.mxu0 0.0
  %1075 = vmatpush1.msra.mxu0 0.0
  %1076 = vmatprep.subr.mxu0 0.0
  %1077 = vmatpush1.msra.mxu0 0.0
  %1078 = vmatprep.subr.mxu0 0.0
  %1079 = vmatpush1.msra.mxu0 0.0
  %1080 = vmatprep.subr.mxu0 0.0
  %1081 = vmatpush1.msra.mxu0 0.0
  %1082 = vmatprep.subr.mxu0 0.0
  %1083 = vmatpush1.msra.mxu0 0.0
  %1084 = vmatprep.subr.mxu0 0.0
  %1085 = vmatpush1.msra.mxu0 0.0
  %1086 = vmatprep.subr.mxu0 0.0
  %1087 = vmatpush1.msra.mxu0 0.0
  %1088 = vmatprep.subr.mxu0 0.0
  %1089 = vmatpush1.msra.mxu0 0.0
  %1090 = vmatprep.subr.mxu0 0.0
  %1091 = vmatpush1.msra.mxu0 0.0
  %1092 = vmatprep.subr.mxu0 0.0
  %1093 = vmatpush1.msra.mxu0 0.0
  %1094 = vmatprep.subr.mxu0 0.0
  %1095 = vmatpush1.msra.mxu0 0.0
  %1096 = vmatprep.subr.mxu0 0.0
  %1097 = vmatpush1.msra.mxu0 0.0
  %1098 = vmatprep.subr.mxu0 0.0
  %1099 = vmatpush1.msra.mxu0 0.0
  %1100 = vmatprep.subr.mxu0 0.0
  %1101 = vmatpush1.msra.mxu0 0.0
  %1102 = vmatprep.mubr.f32.mxu0 0.0
  %1103 = vmatmul.mubr.f32.gmra.mrb[0].mxu0 %v1033
  %v1104 = vpop.f32.mrb[0].mxu0
  %v1105 = vadd.f32 0.0, %v1104
  %v1106 = vpop.f32.mrb[0].mxu0
  %1107 = vmatprep.mubr.f32.mxu0 0.0
  %1108 = vmatmul.mubr.f32.gmra.mrb[0].mxu0 %v1036
  %v1109 = vpop.f32.mrb[0].mxu0
  %v1110 = vadd.f32 0.0, %v1109
  %v1111 = vpop.f32.mrb[0].mxu0
  %1112 = vdwg.mxu0
  %v1114 = vsel %vm368, %v619, 0
  %v1117 = vsel %vm368, %v695, 0
  %1119 = vmatprep.subr.mxu0 0.0
  %1120 = vmatpush1.msra.mxu0 %v251
  %1121 = vmatprep.subr.mxu0 0.0
  %1122 = vmatpush1.msra.mxu0 0.0
  %1123 = vmatprep.subr.mxu0 0.0
  %1124 = vmatpush1.msra.mxu0 0.0
  %1125 = vmatprep.subr.mxu0 0.0
  %1126 = vmatpush1.msra.mxu0 0.0
  %1127 = vmatprep.subr.mxu0 0.0
  %1128 = vmatpush1.msra.mxu0 0.0
  %1129 = vmatprep.subr.mxu0 0.0
  %1130 = vmatpush1.msra.mxu0 0.0
  %1131 = vmatprep.subr.mxu0 0.0
  %1132 = vmatpush1.msra.mxu0 0.0
  %1133 = vmatprep.subr.mxu0 0.0
  %1134 = vmatpush1.msra.mxu0 0.0
  %1135 = vmatprep.subr.mxu0 0.0
  %1136 = vmatpush1.msra.mxu0 0.0
  %1137 = vmatprep.subr.mxu0 0.0
  %1138 = vmatpush1.msra.mxu0 0.0
  %1139 = vmatprep.subr.mxu0 0.0
  %1140 = vmatpush1.msra.mxu0 0.0
  %1141 = vmatprep.subr.mxu0 0.0
  %1142 = vmatpush1.msra.mxu0 0.0
  %1143 = vmatprep.subr.mxu0 0.0
  %1144 = vmatpush1.msra.mxu0 0.0
  %1145 = vmatprep.subr.mxu0 0.0
  %1146 = vmatpush1.msra.mxu0 0.0
  %1147 = vmatprep.subr.mxu0 0.0
  %1148 = vmatpush1.msra.mxu0 0.0
  %1149 = vmatprep.subr.mxu0 0.0
  %1150 = vmatpush1.msra.mxu0 0.0
  %1151 = vmatprep.subr.mxu0 0.0
  %1152 = vmatpush1.msra.mxu0 0.0
  %1153 = vmatprep.subr.mxu0 0.0
  %1154 = vmatpush1.msra.mxu0 0.0
  %1155 = vmatprep.subr.mxu0 0.0
  %1156 = vmatpush1.msra.mxu0 0.0
  %1157 = vmatprep.subr.mxu0 0.0
  %1158 = vmatpush1.msra.mxu0 0.0
  %1159 = vmatprep.subr.mxu0 0.0
  %1160 = vmatpush1.msra.mxu0 0.0
  %1161 = vmatprep.subr.mxu0 0.0
  %1162 = vmatpush1.msra.mxu0 0.0
  %1163 = vmatprep.subr.mxu0 0.0
  %1164 = vmatpush1.msra.mxu0 0.0
  %1165 = vmatprep.subr.mxu0 0.0
  %1166 = vmatpush1.msra.mxu0 0.0
  %1167 = vmatprep.subr.mxu0 0.0
  %1168 = vmatpush1.msra.mxu0 0.0
  %1169 = vmatprep.subr.mxu0 0.0
  %1170 = vmatpush1.msra.mxu0 0.0
  %1171 = vmatprep.subr.mxu0 0.0
  %1172 = vmatpush1.msra.mxu0 0.0
  %1173 = vmatprep.subr.mxu0 0.0
  %1174 = vmatpush1.msra.mxu0 0.0
  %1175 = vmatprep.subr.mxu0 0.0
  %1176 = vmatpush1.msra.mxu0 0.0
  %1177 = vmatprep.subr.mxu0 0.0
  %1178 = vmatpush1.msra.mxu0 0.0
  %1179 = vmatprep.subr.mxu0 0.0
  %1180 = vmatpush1.msra.mxu0 0.0
  %1181 = vmatprep.subr.mxu0 0.0
  %1182 = vmatpush1.msra.mxu0 0.0
  %1183 = vmatprep.mubr.f32.mxu0 0.0
  %1184 = vmatmul.mubr.f32.gmra.mrb[0].mxu0 %v1114
  %v1185 = vpop.f32.mrb[0].mxu0
  %v1186 = vadd.f32 %v1105, %v1185
  %v1187 = vpop.f32.mrb[0].mxu0
  %1188 = vmatprep.mubr.f32.mxu0 0.0
  %1189 = vmatmul.mubr.f32.gmra.mrb[0].mxu0 %v1117
  %v1190 = vpop.f32.mrb[0].mxu0
  %v1191 = vadd.f32 %v1110, %v1190
  %v1192 = vpop.f32.mrb[0].mxu0
  %1193 = vdwg.mxu0
  %1194 = vrot.lane.b32.xlu0 %v357, 112
  %v1195 = vpop.permute.xlu0 %1194
  %1196 = vrot.lane.b32.xlu0 %v357, 80
  %v1197 = vpop.permute.xlu0 %1196
  %v1198 = vsel %vm368, %v1195, 0
  %v1200 = vsel %vm368, %v1197, 0
  %1202 = vmatprep.subr.mxu0 0.0
  %1203 = vmatpush1.xpose.msra.mxu0 %v1200
  %1204 = vmatprep.subr.mxu0 0.0
  %1205 = vmatpush1.xpose.msra.mxu0 0.0
  %1206 = vmatprep.subr.mxu0 0.0
  %1207 = vmatpush1.xpose.msra.mxu0 0.0
  %1208 = vmatprep.subr.mxu0 0.0
  %1209 = vmatpush1.xpose.msra.mxu0 0.0
  %1210 = vmatprep.subr.mxu0 0.0
  %1211 = vmatpush1.xpose.msra.mxu0 0.0
  %1212 = vmatprep.subr.mxu0 0.0
  %1213 = vmatpush1.xpose.msra.mxu0 0.0
  %1214 = vmatprep.subr.mxu0 0.0
  %1215 = vmatpush1.xpose.msra.mxu0 0.0
  %1216 = vmatprep.subr.mxu0 0.0
  %1217 = vmatpush1.xpose.msra.mxu0 0.0
  %1218 = vmatprep.subr.mxu0 0.0
  %1219 = vmatpush1.xpose.msra.mxu0 0.0
  %1220 = vmatprep.subr.mxu0 0.0
  %1221 = vmatpush1.xpose.msra.mxu0 0.0
  %1222 = vmatprep.subr.mxu0 0.0
  %1223 = vmatpush1.xpose.msra.mxu0 0.0
  %1224 = vmatprep.subr.mxu0 0.0
  %1225 = vmatpush1.xpose.msra.mxu0 0.0
  %1226 = vmatprep.subr.mxu0 0.0
  %1227 = vmatpush1.xpose.msra.mxu0 0.0
  %1228 = vmatprep.subr.mxu0 0.0
  %1229 = vmatpush1.xpose.msra.mxu0 0.0
  %1230 = vmatprep.subr.mxu0 0.0
  %1231 = vmatpush1.xpose.msra.mxu0 0.0
  %1232 = vmatprep.subr.mxu0 0.0
  %1233 = vmatpush1.xpose.msra.mxu0 0.0
  %1234 = vmatprep.subr.mxu0 0.0
  %1235 = vmatpush1.xpose.msra.mxu0 0.0
  %1236 = vmatprep.subr.mxu0 0.0
  %1237 = vmatpush1.xpose.msra.mxu0 0.0
  %1238 = vmatprep.subr.mxu0 0.0
  %1239 = vmatpush1.xpose.msra.mxu0 0.0
  %1240 = vmatprep.subr.mxu0 0.0
  %1241 = vmatpush1.xpose.msra.mxu0 0.0
  %1242 = vmatprep.subr.mxu0 0.0
  %1243 = vmatpush1.xpose.msra.mxu0 0.0
  %1244 = vmatprep.subr.mxu0 0.0
  %1245 = vmatpush1.xpose.msra.mxu0 0.0
  %1246 = vmatprep.subr.mxu0 0.0
  %1247 = vmatpush1.xpose.msra.mxu0 0.0
  %1248 = vmatprep.subr.mxu0 0.0
  %1249 = vmatpush1.xpose.msra.mxu0 0.0
  %1250 = vmatprep.subr.mxu0 0.0
  %1251 = vmatpush1.xpose.msra.mxu0 0.0
  %1252 = vmatprep.subr.mxu0 0.0
  %1253 = vmatpush1.xpose.msra.mxu0 0.0
  %1254 = vmatprep.subr.mxu0 0.0
  %1255 = vmatpush1.xpose.msra.mxu0 0.0
  %1256 = vmatprep.subr.mxu0 0.0
  %1257 = vmatpush1.xpose.msra.mxu0 0.0
  %1258 = vmatprep.subr.mxu0 0.0
  %1259 = vmatpush1.xpose.msra.mxu0 0.0
  %1260 = vmatprep.subr.mxu0 0.0
  %1261 = vmatpush1.xpose.msra.mxu0 0.0
  %1262 = vmatprep.subr.mxu0 0.0
  %1263 = vmatpush1.xpose.msra.mxu0 0.0
  %1264 = vmatprep.subr.mxu0 0.0
  %1265 = vmatpush1.xpose.msra.mxu0 0.0
  %1266 = vmatprep.mubr.f32.mxu0 0.0
  %1267 = vmatmul.mubr.f32.gmra.mrb[0].mxu0 %v1198
  %v1268 = vpop.f32.mrb[0].mxu0
  %v1269 = vadd.f32 0.0, %v1268
  %v1270 = vpop.f32.mrb[0].mxu0
  %1271 = vdwg.mxu0
  %1272 = vrot.lane.b32.xlu0 %v362, 112
  %v1273 = vpop.permute.xlu0 %1272
  %1274 = vrot.lane.b32.xlu0 %v362, 80
  %v1275 = vpop.permute.xlu0 %1274
  %v1276 = vsel %vm368, %v1273, 0
  %v1278 = vsel %vm368, %v1275, 0
  %1280 = vmatprep.subr.mxu0 0.0
  %1281 = vmatpush1.xpose.msra.mxu0 %v1278
  %1282 = vmatprep.subr.mxu0 0.0
  %1283 = vmatpush1.xpose.msra.mxu0 0.0
  %1284 = vmatprep.subr.mxu0 0.0
  %1285 = vmatpush1.xpose.msra.mxu0 0.0
  %1286 = vmatprep.subr.mxu0 0.0
  %1287 = vmatpush1.xpose.msra.mxu0 0.0
  %1288 = vmatprep.subr.mxu0 0.0
  %1289 = vmatpush1.xpose.msra.mxu0 0.0
  %1290 = vmatprep.subr.mxu0 0.0
  %1291 = vmatpush1.xpose.msra.mxu0 0.0
  %1292 = vmatprep.subr.mxu0 0.0
  %1293 = vmatpush1.xpose.msra.mxu0 0.0
  %1294 = vmatprep.subr.mxu0 0.0
  %1295 = vmatpush1.xpose.msra.mxu0 0.0
  %1296 = vmatprep.subr.mxu0 0.0
  %1297 = vmatpush1.xpose.msra.mxu0 0.0
  %1298 = vmatprep.subr.mxu0 0.0
  %1299 = vmatpush1.xpose.msra.mxu0 0.0
  %1300 = vmatprep.subr.mxu0 0.0
  %1301 = vmatpush1.xpose.msra.mxu0 0.0
  %1302 = vmatprep.subr.mxu0 0.0
  %1303 = vmatpush1.xpose.msra.mxu0 0.0
  %1304 = vmatprep.subr.mxu0 0.0
  %1305 = vmatpush1.xpose.msra.mxu0 0.0
  %1306 = vmatprep.subr.mxu0 0.0
  %1307 = vmatpush1.xpose.msra.mxu0 0.0
  %1308 = vmatprep.subr.mxu0 0.0
  %1309 = vmatpush1.xpose.msra.mxu0 0.0
  %1310 = vmatprep.subr.mxu0 0.0
  %1311 = vmatpush1.xpose.msra.mxu0 0.0
  %1312 = vmatprep.subr.mxu0 0.0
  %1313 = vmatpush1.xpose.msra.mxu0 0.0
  %1314 = vmatprep.subr.mxu0 0.0
  %1315 = vmatpush1.xpose.msra.mxu0 0.0
  %1316 = vmatprep.subr.mxu0 0.0
  %1317 = vmatpush1.xpose.msra.mxu0 0.0
  %1318 = vmatprep.subr.mxu0 0.0
  %1319 = vmatpush1.xpose.msra.mxu0 0.0
  %1320 = vmatprep.subr.mxu0 0.0
  %1321 = vmatpush1.xpose.msra.mxu0 0.0
  %1322 = vmatprep.subr.mxu0 0.0
  %1323 = vmatpush1.xpose.msra.mxu0 0.0
  %1324 = vmatprep.subr.mxu0 0.0
  %1325 = vmatpush1.xpose.msra.mxu0 0.0
  %1326 = vmatprep.subr.mxu0 0.0
  %1327 = vmatpush1.xpose.msra.mxu0 0.0
  %1328 = vmatprep.subr.mxu0 0.0
  %1329 = vmatpush1.xpose.msra.mxu0 0.0
  %1330 = vmatprep.subr.mxu0 0.0
  %1331 = vmatpush1.xpose.msra.mxu0 0.0
  %1332 = vmatprep.subr.mxu0 0.0
  %1333 = vmatpush1.xpose.msra.mxu0 0.0
  %1334 = vmatprep.subr.mxu0 0.0
  %1335 = vmatpush1.xpose.msra.mxu0 0.0
  %1336 = vmatprep.subr.mxu0 0.0
  %1337 = vmatpush1.xpose.msra.mxu0 0.0
  %1338 = vmatprep.subr.mxu0 0.0
  %1339 = vmatpush1.xpose.msra.mxu0 0.0
  %1340 = vmatprep.subr.mxu0 0.0
  %1341 = vmatpush1.xpose.msra.mxu0 0.0
  %1342 = vmatprep.subr.mxu0 0.0
  %1343 = vmatpush1.xpose.msra.mxu0 0.0
  %1344 = vmatprep.mubr.f32.mxu0 0.0
  %1345 = vmatmul.mubr.f32.gmra.mrb[0].mxu0 %v1276
  %v1346 = vpop.f32.mrb[0].mxu0
  %v1347 = vadd.f32 0.0, %v1346
  %v1348 = vpop.f32.mrb[0].mxu0
  %1349 = vdwg.mxu0
  %v1350 = vmul.f32 %v1269, 0.35355338
  %v1351 = vmul.f32 %v1347, 0.35355338
  %v1352 = vadd.f32 %v1350, %v180
  %v1353 = vadd.f32 %v1351, %v181
  %v1354 = vsel %vm368, %v1352, -inf
  %1355 = vmax.xlane.f32.xlu0 %v1354
  %v1356 = vpop.xlane.xlu0 %1355
  %v1357 = vsel %vm368, %v1353, -inf
  %1358 = vmax.xlane.f32.xlu0 %v1357
  %v1359 = vpop.xlane.xlu0 %1358
  %v1360 = vsub.f32 %v1352, %v1356
  %v1361 = vsub.f32 %v1353, %v1359
  %v1362 = vmul.f32 %v1360, 1.442695
  %v1363 = vpow.pop %v1362
  %v1364 = vmul.f32 %v1361, 1.442695
  %v1365 = vpow.pop %v1364
  %v1366 = vsel %vm368, %v1363, 0.0
  %1367 = vadd.xlane.f32.xlu0 %v1366
  %v1368 = vpop.xlane.xlu0 %1367
  %v1369 = vsel %vm368, %v1365, 0.0
  %1370 = vadd.xlane.f32.xlu0 %v1369
  %v1371 = vpop.xlane.xlu0 %1370
  %v1372 = vrcp.pop %v1368
  %v1373 = vrcp.pop %v1371
  %v1374 = vmul.f32 %v1363, %v1372
  %v1375 = vmul.f32 %v1365, %v1373
  %1376 = vrot.lane.b32.xlu0 %v357, 48
  %v1377 = vpop.permute.xlu0 %1376
  %v1380 = vsel %vm368, %v1374, 0
  %1382 = vmatprep.subr.mxu0 0.0
  %1383 = vmatpush1.msra.mxu0 %v1377
  %1384 = vmatprep.subr.mxu0 0.0
  %1385 = vmatpush1.msra.mxu0 0.0
  %1386 = vmatprep.subr.mxu0 0.0
  %1387 = vmatpush1.msra.mxu0 0.0
  %1388 = vmatprep.subr.mxu0 0.0
  %1389 = vmatpush1.msra.mxu0 0.0
  %1390 = vmatprep.subr.mxu0 0.0
  %1391 = vmatpush1.msra.mxu0 0.0
  %1392 = vmatprep.subr.mxu0 0.0
  %1393 = vmatpush1.msra.mxu0 0.0
  %1394 = vmatprep.subr.mxu0 0.0
  %1395 = vmatpush1.msra.mxu0 0.0
  %1396 = vmatprep.subr.mxu0 0.0
  %1397 = vmatpush1.msra.mxu0 0.0
  %1398 = vmatprep.subr.mxu0 0.0
  %1399 = vmatpush1.msra.mxu0 0.0
  %1400 = vmatprep.subr.mxu0 0.0
  %1401 = vmatpush1.msra.mxu0 0.0
  %1402 = vmatprep.subr.mxu0 0.0
  %1403 = vmatpush1.msra.mxu0 0.0
  %1404 = vmatprep.subr.mxu0 0.0
  %1405 = vmatpush1.msra.mxu0 0.0
  %1406 = vmatprep.subr.mxu0 0.0
  %1407 = vmatpush1.msra.mxu0 0.0
  %1408 = vmatprep.subr.mxu0 0.0
  %1409 = vmatpush1.msra.mxu0 0.0
  %1410 = vmatprep.subr.mxu0 0.0
  %1411 = vmatpush1.msra.mxu0 0.0
  %1412 = vmatprep.subr.mxu0 0.0
  %1413 = vmatpush1.msra.mxu0 0.0
  %1414 = vmatprep.subr.mxu0 0.0
  %1415 = vmatpush1.msra.mxu0 0.0
  %1416 = vmatprep.subr.mxu0 0.0
  %1417 = vmatpush1.msra.mxu0 0.0
  %1418 = vmatprep.subr.mxu0 0.0
  %1419 = vmatpush1.msra.mxu0 0.0
  %1420 = vmatprep.subr.mxu0 0.0
  %1421 = vmatpush1.msra.mxu0 0.0
  %1422 = vmatprep.subr.mxu0 0.0
  %1423 = vmatpush1.msra.mxu0 0.0
  %1424 = vmatprep.subr.mxu0 0.0
  %1425 = vmatpush1.msra.mxu0 0.0
  %1426 = vmatprep.subr.mxu0 0.0
  %1427 = vmatpush1.msra.mxu0 0.0
  %1428 = vmatprep.subr.mxu0 0.0
  %1429 = vmatpush1.msra.mxu0 0.0
  %1430 = vmatprep.subr.mxu0 0.0
  %1431 = vmatpush1.msra.mxu0 0.0
  %1432 = vmatprep.subr.mxu0 0.0
  %1433 = vmatpush1.msra.mxu0 0.0
  %1434 = vmatprep.subr.mxu0 0.0
  %1435 = vmatpush1.msra.mxu0 0.0
  %1436 = vmatprep.subr.mxu0 0.0
  %1437 = vmatpush1.msra.mxu0 0.0
  %1438 = vmatprep.subr.mxu0 0.0
  %1439 = vmatpush1.msra.mxu0 0.0
  %1440 = vmatprep.subr.mxu0 0.0
  %1441 = vmatpush1.msra.mxu0 0.0
  %1442 = vmatprep.subr.mxu0 0.0
  %1443 = vmatpush1.msra.mxu0 0.0
  %1444 = vmatprep.subr.mxu0 0.0
  %1445 = vmatpush1.msra.mxu0 0.0
  %1446 = vmatprep.mubr.f32.mxu0 0.0
  %1447 = vmatmul.mubr.f32.gmra.mrb[0].mxu0 %v1380
  %v1448 = vpop.f32.mrb[0].mxu0
  %v1449 = vadd.f32 0.0, %v1448
  %v1450 = vpop.f32.mrb[0].mxu0
  %1451 = vdwg.mxu0
  %1452 = vrot.lane.b32.xlu0 %v362, 48
  %v1453 = vpop.permute.xlu0 %1452
  %v1456 = vsel %vm368, %v1375, 0
  %1458 = vmatprep.subr.mxu0 0.0
  %1459 = vmatpush1.msra.mxu0 %v1453
  %1460 = vmatprep.subr.mxu0 0.0
  %1461 = vmatpush1.msra.mxu0 0.0
  %1462 = vmatprep.subr.mxu0 0.0
  %1463 = vmatpush1.msra.mxu0 0.0
  %1464 = vmatprep.subr.mxu0 0.0
  %1465 = vmatpush1.msra.mxu0 0.0
  %1466 = vmatprep.subr.mxu0 0.0
  %1467 = vmatpush1.msra.mxu0 0.0
  %1468 = vmatprep.subr.mxu0 0.0
  %1469 = vmatpush1.msra.mxu0 0.0
  %1470 = vmatprep.subr.mxu0 0.0
  %1471 = vmatpush1.msra.mxu0 0.0
  %1472 = vmatprep.subr.mxu0 0.0
  %1473 = vmatpush1.msra.mxu0 0.0
  %1474 = vmatprep.subr.mxu0 0.0
  %1475 = vmatpush1.msra.mxu0 0.0
  %1476 = vmatprep.subr.mxu0 0.0
  %1477 = vmatpush1.msra.mxu0 0.0
  %1478 = vmatprep.subr.mxu0 0.0
  %1479 = vmatpush1.msra.mxu0 0.0
  %1480 = vmatprep.subr.mxu0 0.0
  %1481 = vmatpush1.msra.mxu0 0.0
  %1482 = vmatprep.subr.mxu0 0.0
  %1483 = vmatpush1.msra.mxu0 0.0
  %1484 = vmatprep.subr.mxu0 0.0
  %1485 = vmatpush1.msra.mxu0 0.0
  %1486 = vmatprep.subr.mxu0 0.0
  %1487 = vmatpush1.msra.mxu0 0.0
  %1488 = vmatprep.subr.mxu0 0.0
  %1489 = vmatpush1.msra.mxu0 0.0
  %1490 = vmatprep.subr.mxu0 0.0
  %1491 = vmatpush1.msra.mxu0 0.0
  %1492 = vmatprep.subr.mxu0 0.0
  %1493 = vmatpush1.msra.mxu0 0.0
  %1494 = vmatprep.subr.mxu0 0.0
  %1495 = vmatpush1.msra.mxu0 0.0
  %1496 = vmatprep.subr.mxu0 0.0
  %1497 = vmatpush1.msra.mxu0 0.0
  %1498 = vmatprep.subr.mxu0 0.0
  %1499 = vmatpush1.msra.mxu0 0.0
  %1500 = vmatprep.subr.mxu0 0.0
  %1501 = vmatpush1.msra.mxu0 0.0
  %1502 = vmatprep.subr.mxu0 0.0
  %1503 = vmatpush1.msra.mxu0 0.0
  %1504 = vmatprep.subr.mxu0 0.0
  %1505 = vmatpush1.msra.mxu0 0.0
  %1506 = vmatprep.subr.mxu0 0.0
  %1507 = vmatpush1.msra.mxu0 0.0
  %1508 = vmatprep.subr.mxu0 0.0
  %1509 = vmatpush1.msra.mxu0 0.0
  %1510 = vmatprep.subr.mxu0 0.0
  %1511 = vmatpush1.msra.mxu0 0.0
  %1512 = vmatprep.subr.mxu0 0.0
  %1513 = vmatpush1.msra.mxu0 0.0
  %1514 = vmatprep.subr.mxu0 0.0
  %1515 = vmatpush1.msra.mxu0 0.0
  %1516 = vmatprep.subr.mxu0 0.0
  %1517 = vmatpush1.msra.mxu0 0.0
  %1518 = vmatprep.subr.mxu0 0.0
  %1519 = vmatpush1.msra.mxu0 0.0
  %1520 = vmatprep.subr.mxu0 0.0
  %1521 = vmatpush1.msra.mxu0 0.0
  %1522 = vmatprep.mubr.f32.mxu0 0.0
  %1523 = vmatmul.mubr.f32.gmra.mrb[0].mxu0 %v1456
  %v1524 = vpop.f32.mrb[0].mxu0
  %v1525 = vadd.f32 0.0, %v1524
  %v1526 = vpop.f32.mrb[0].mxu0
  %1527 = vdwg.mxu0
  %v1529 = vsel %vm368, %v1449, 0
  %v1532 = vsel %vm368, %v1525, 0
  %1534 = vmatprep.subr.mxu0 0.0
  %1535 = vmatpush1.msra.mxu0 %v253
  %1536 = vmatprep.subr.mxu0 0.0
  %1537 = vmatpush1.msra.mxu0 0.0
  %1538 = vmatprep.subr.mxu0 0.0
  %1539 = vmatpush1.msra.mxu0 0.0
  %1540 = vmatprep.subr.mxu0 0.0
  %1541 = vmatpush1.msra.mxu0 0.0
  %1542 = vmatprep.subr.mxu0 0.0
  %1543 = vmatpush1.msra.mxu0 0.0
  %1544 = vmatprep.subr.mxu0 0.0
  %1545 = vmatpush1.msra.mxu0 0.0
  %1546 = vmatprep.subr.mxu0 0.0
  %1547 = vmatpush1.msra.mxu0 0.0
  %1548 = vmatprep.subr.mxu0 0.0
  %1549 = vmatpush1.msra.mxu0 0.0
  %1550 = vmatprep.subr.mxu0 0.0
  %1551 = vmatpush1.msra.mxu0 0.0
  %1552 = vmatprep.subr.mxu0 0.0
  %1553 = vmatpush1.msra.mxu0 0.0
  %1554 = vmatprep.subr.mxu0 0.0
  %1555 = vmatpush1.msra.mxu0 0.0
  %1556 = vmatprep.subr.mxu0 0.0
  %1557 = vmatpush1.msra.mxu0 0.0
  %1558 = vmatprep.subr.mxu0 0.0
  %1559 = vmatpush1.msra.mxu0 0.0
  %1560 = vmatprep.subr.mxu0 0.0
  %1561 = vmatpush1.msra.mxu0 0.0
  %1562 = vmatprep.subr.mxu0 0.0
  %1563 = vmatpush1.msra.mxu0 0.0
  %1564 = vmatprep.subr.mxu0 0.0
  %1565 = vmatpush1.msra.mxu0 0.0
  %1566 = vmatprep.subr.mxu0 0.0
  %1567 = vmatpush1.msra.mxu0 0.0
  %1568 = vmatprep.subr.mxu0 0.0
  %1569 = vmatpush1.msra.mxu0 0.0
  %1570 = vmatprep.subr.mxu0 0.0
  %1571 = vmatpush1.msra.mxu0 0.0
  %1572 = vmatprep.subr.mxu0 0.0
  %1573 = vmatpush1.msra.mxu0 0.0
  %1574 = vmatprep.subr.mxu0 0.0
  %1575 = vmatpush1.msra.mxu0 0.0
  %1576 = vmatprep.subr.mxu0 0.0
  %1577 = vmatpush1.msra.mxu0 0.0
  %1578 = vmatprep.subr.mxu0 0.0
  %1579 = vmatpush1.msra.mxu0 0.0
  %1580 = vmatprep.subr.mxu0 0.0
  %1581 = vmatpush1.msra.mxu0 0.0
  %1582 = vmatprep.subr.mxu0 0.0
  %1583 = vmatpush1.msra.mxu0 0.0
  %1584 = vmatprep.subr.mxu0 0.0
  %1585 = vmatpush1.msra.mxu0 0.0
  %1586 = vmatprep.subr.mxu0 0.0
  %1587 = vmatpush1.msra.mxu0 0.0
  %1588 = vmatprep.subr.mxu0 0.0
  %1589 = vmatpush1.msra.mxu0 0.0
  %1590 = vmatprep.subr.mxu0 0.0
  %1591 = vmatpush1.msra.mxu0 0.0
  %1592 = vmatprep.subr.mxu0 0.0
  %1593 = vmatpush1.msra.mxu0 0.0
  %1594 = vmatprep.subr.mxu0 0.0
  %1595 = vmatpush1.msra.mxu0 0.0
  %1596 = vmatprep.subr.mxu0 0.0
  %1597 = vmatpush1.msra.mxu0 0.0
  %1598 = vmatprep.mubr.f32.mxu0 0.0
  %1599 = vmatmul.mubr.f32.gmra.mrb[0].mxu0 %v1529
  %v1600 = vpop.f32.mrb[0].mxu0
  %v1601 = vadd.f32 0.0, %v1600
  %v1602 = vpop.f32.mrb[0].mxu0
  %1603 = vmatprep.mubr.f32.mxu0 0.0
  %1604 = vmatmul.mubr.f32.gmra.mrb[0].mxu0 %v1532
  %v1605 = vpop.f32.mrb[0].mxu0
  %v1606 = vadd.f32 0.0, %v1605
  %v1607 = vpop.f32.mrb[0].mxu0
  %1608 = vdwg.mxu0
  %v1609 = vadd.f32 %v1186, %v1601
  %v1610 = vadd.f32 %v1191, %v1606
  %1611 = vrot.lane.b32.xlu0 %v357, 104
  %v1612 = vpop.permute.xlu0 %1611
  %1613 = vrot.lane.b32.xlu0 %v357, 72
  %v1614 = vpop.permute.xlu0 %1613
  %v1615 = vsel %vm368, %v1612, 0
  %v1617 = vsel %vm368, %v1614, 0
  %1619 = vmatprep.subr.mxu0 0.0
  %1620 = vmatpush1.xpose.msra.mxu0 %v1617
  %1621 = vmatprep.subr.mxu0 0.0
  %1622 = vmatpush1.xpose.msra.mxu0 0.0
  %1623 = vmatprep.subr.mxu0 0.0
  %1624 = vmatpush1.xpose.msra.mxu0 0.0
  %1625 = vmatprep.subr.mxu0 0.0
  %1626 = vmatpush1.xpose.msra.mxu0 0.0
  %1627 = vmatprep.subr.mxu0 0.0
  %1628 = vmatpush1.xpose.msra.mxu0 0.0
  %1629 = vmatprep.subr.mxu0 0.0
  %1630 = vmatpush1.xpose.msra.mxu0 0.0
  %1631 = vmatprep.subr.mxu0 0.0
  %1632 = vmatpush1.xpose.msra.mxu0 0.0
  %1633 = vmatprep.subr.mxu0 0.0
  %1634 = vmatpush1.xpose.msra.mxu0 0.0
  %1635 = vmatprep.subr.mxu0 0.0
  %1636 = vmatpush1.xpose.msra.mxu0 0.0
  %1637 = vmatprep.subr.mxu0 0.0
  %1638 = vmatpush1.xpose.msra.mxu0 0.0
  %1639 = vmatprep.subr.mxu0 0.0
  %1640 = vmatpush1.xpose.msra.mxu0 0.0
  %1641 = vmatprep.subr.mxu0 0.0
  %1642 = vmatpush1.xpose.msra.mxu0 0.0
  %1643 = vmatprep.subr.mxu0 0.0
  %1644 = vmatpush1.xpose.msra.mxu0 0.0
  %1645 = vmatprep.subr.mxu0 0.0
  %1646 = vmatpush1.xpose.msra.mxu0 0.0
  %1647 = vmatprep.subr.mxu0 0.0
  %1648 = vmatpush1.xpose.msra.mxu0 0.0
  %1649 = vmatprep.subr.mxu0 0.0
  %1650 = vmatpush1.xpose.msra.mxu0 0.0
  %1651 = vmatprep.subr.mxu0 0.0
  %1652 = vmatpush1.xpose.msra.mxu0 0.0
  %1653 = vmatprep.subr.mxu0 0.0
  %1654 = vmatpush1.xpose.msra.mxu0 0.0
  %1655 = vmatprep.subr.mxu0 0.0
  %1656 = vmatpush1.xpose.msra.mxu0 0.0
  %1657 = vmatprep.subr.mxu0 0.0
  %1658 = vmatpush1.xpose.msra.mxu0 0.0
  %1659 = vmatprep.subr.mxu0 0.0
  %1660 = vmatpush1.xpose.msra.mxu0 0.0
  %1661 = vmatprep.subr.mxu0 0.0
  %1662 = vmatpush1.xpose.msra.mxu0 0.0
  %1663 = vmatprep.subr.mxu0 0.0
  %1664 = vmatpush1.xpose.msra.mxu0 0.0
  %1665 = vmatprep.subr.mxu0 0.0
  %1666 = vmatpush1.xpose.msra.mxu0 0.0
  %1667 = vmatprep.subr.mxu0 0.0
  %1668 = vmatpush1.xpose.msra.mxu0 0.0
  %1669 = vmatprep.subr.mxu0 0.0
  %1670 = vmatpush1.xpose.msra.mxu0 0.0
  %1671 = vmatprep.subr.mxu0 0.0
  %1672 = vmatpush1.xpose.msra.mxu0 0.0
  %1673 = vmatprep.subr.mxu0 0.0
  %1674 = vmatpush1.xpose.msra.mxu0 0.0
  %1675 = vmatprep.subr.mxu0 0.0
  %1676 = vmatpush1.xpose.msra.mxu0 0.0
  %1677 = vmatprep.subr.mxu0 0.0
  %1678 = vmatpush1.xpose.msra.mxu0 0.0
  %1679 = vmatprep.subr.mxu0 0.0
  %1680 = vmatpush1.xpose.msra.mxu0 0.0
  %1681 = vmatprep.subr.mxu0 0.0
  %1682 = vmatpush1.xpose.msra.mxu0 0.0
  %1683 = vmatprep.mubr.f32.mxu0 0.0
  %1684 = vmatmul.mubr.f32.gmra.mrb[0].mxu0 %v1615
  %v1685 = vpop.f32.mrb[0].mxu0
  %v1686 = vadd.f32 0.0, %v1685
  %v1687 = vpop.f32.mrb[0].mxu0
  %1688 = vdwg.mxu0
  %1689 = vrot.lane.b32.xlu0 %v362, 104
  %v1690 = vpop.permute.xlu0 %1689
  %1691 = vrot.lane.b32.xlu0 %v362, 72
  %v1692 = vpop.permute.xlu0 %1691
  %v1693 = vsel %vm368, %v1690, 0
  %v1695 = vsel %vm368, %v1692, 0
  %1697 = vmatprep.subr.mxu0 0.0
  %1698 = vmatpush1.xpose.msra.mxu0 %v1695
  %1699 = vmatprep.subr.mxu0 0.0
  %1700 = vmatpush1.xpose.msra.mxu0 0.0
  %1701 = vmatprep.subr.mxu0 0.0
  %1702 = vmatpush1.xpose.msra.mxu0 0.0
  %1703 = vmatprep.subr.mxu0 0.0
  %1704 = vmatpush1.xpose.msra.mxu0 0.0
  %1705 = vmatprep.subr.mxu0 0.0
  %1706 = vmatpush1.xpose.msra.mxu0 0.0
  %1707 = vmatprep.subr.mxu0 0.0
  %1708 = vmatpush1.xpose.msra.mxu0 0.0
  %1709 = vmatprep.subr.mxu0 0.0
  %1710 = vmatpush1.xpose.msra.mxu0 0.0
  %1711 = vmatprep.subr.mxu0 0.0
  %1712 = vmatpush1.xpose.msra.mxu0 0.0
  %1713 = vmatprep.subr.mxu0 0.0
  %1714 = vmatpush1.xpose.msra.mxu0 0.0
  %1715 = vmatprep.subr.mxu0 0.0
  %1716 = vmatpush1.xpose.msra.mxu0 0.0
  %1717 = vmatprep.subr.mxu0 0.0
  %1718 = vmatpush1.xpose.msra.mxu0 0.0
  %1719 = vmatprep.subr.mxu0 0.0
  %1720 = vmatpush1.xpose.msra.mxu0 0.0
  %1721 = vmatprep.subr.mxu0 0.0
  %1722 = vmatpush1.xpose.msra.mxu0 0.0
  %1723 = vmatprep.subr.mxu0 0.0
  %1724 = vmatpush1.xpose.msra.mxu0 0.0
  %1725 = vmatprep.subr.mxu0 0.0
  %1726 = vmatpush1.xpose.msra.mxu0 0.0
  %1727 = vmatprep.subr.mxu0 0.0
  %1728 = vmatpush1.xpose.msra.mxu0 0.0
  %1729 = vmatprep.subr.mxu0 0.0
  %1730 = vmatpush1.xpose.msra.mxu0 0.0
  %1731 = vmatprep.subr.mxu0 0.0
  %1732 = vmatpush1.xpose.msra.mxu0 0.0
  %1733 = vmatprep.subr.mxu0 0.0
  %1734 = vmatpush1.xpose.msra.mxu0 0.0
  %1735 = vmatprep.subr.mxu0 0.0
  %1736 = vmatpush1.xpose.msra.mxu0 0.0
  %1737 = vmatprep.subr.mxu0 0.0
  %1738 = vmatpush1.xpose.msra.mxu0 0.0
  %1739 = vmatprep.subr.mxu0 0.0
  %1740 = vmatpush1.xpose.msra.mxu0 0.0
  %1741 = vmatprep.subr.mxu0 0.0
  %1742 = vmatpush1.xpose.msra.mxu0 0.0
  %1743 = vmatprep.subr.mxu0 0.0
  %1744 = vmatpush1.xpose.msra.mxu0 0.0
  %1745 = vmatprep.subr.mxu0 0.0
  %1746 = vmatpush1.xpose.msra.mxu0 0.0
  %1747 = vmatprep.subr.mxu0 0.0
  %1748 = vmatpush1.xpose.msra.mxu0 0.0
  %1749 = vmatprep.subr.mxu0 0.0
  %1750 = vmatpush1.xpose.msra.mxu0 0.0
  %1751 = vmatprep.subr.mxu0 0.0
  %1752 = vmatpush1.xpose.msra.mxu0 0.0
  %1753 = vmatprep.subr.mxu0 0.0
  %1754 = vmatpush1.xpose.msra.mxu0 0.0
  %1755 = vmatprep.subr.mxu0 0.0
  %1756 = vmatpush1.xpose.msra.mxu0 0.0
  %1757 = vmatprep.subr.mxu0 0.0
  %1758 = vmatpush1.xpose.msra.mxu0 0.0
  %1759 = vmatprep.subr.mxu0 0.0
  %1760 = vmatpush1.xpose.msra.mxu0 0.0
  %1761 = vmatprep.mubr.f32.mxu0 0.0
  %1762 = vmatmul.mubr.f32.gmra.mrb[0].mxu0 %v1693
  %v1763 = vpop.f32.mrb[0].mxu0
  %v1764 = vadd.f32 0.0, %v1763
  %v1765 = vpop.f32.mrb[0].mxu0
  %1766 = vdwg.mxu0
  %v1767 = vmul.f32 %v1686, 0.35355338
  %v1768 = vmul.f32 %v1764, 0.35355338
  %v1769 = vadd.f32 %v1767, %v180
  %v1770 = vadd.f32 %v1768, %v181
  %v1771 = vsel %vm368, %v1769, -inf
  %1772 = vmax.xlane.f32.xlu0 %v1771
  %v1773 = vpop.xlane.xlu0 %1772
  %v1774 = vsel %vm368, %v1770, -inf
  %1775 = vmax.xlane.f32.xlu0 %v1774
  %v1776 = vpop.xlane.xlu0 %1775
  %v1777 = vsub.f32 %v1769, %v1773
  %v1778 = vsub.f32 %v1770, %v1776
  %v1779 = vmul.f32 %v1777, 1.442695
  %v1780 = vpow.pop %v1779
  %v1781 = vmul.f32 %v1778, 1.442695
  %v1782 = vpow.pop %v1781
  %v1783 = vsel %vm368, %v1780, 0.0
  %1784 = vadd.xlane.f32.xlu0 %v1783
  %v1785 = vpop.xlane.xlu0 %1784
  %v1786 = vsel %vm368, %v1782, 0.0
  %1787 = vadd.xlane.f32.xlu0 %v1786
  %v1788 = vpop.xlane.xlu0 %1787
  %v1789 = vrcp.pop %v1785
  %v1790 = vrcp.pop %v1788
  %v1791 = vmul.f32 %v1780, %v1789
  %v1792 = vmul.f32 %v1782, %v1790
  %1793 = vrot.lane.b32.xlu0 %v357, 40
  %v1794 = vpop.permute.xlu0 %1793
  %v1797 = vsel %vm368, %v1791, 0
  %1799 = vmatprep.subr.mxu0 0.0
  %1800 = vmatpush1.msra.mxu0 %v1794
  %1801 = vmatprep.subr.mxu0 0.0
  %1802 = vmatpush1.msra.mxu0 0.0
  %1803 = vmatprep.subr.mxu0 0.0
  %1804 = vmatpush1.msra.mxu0 0.0
  %1805 = vmatprep.subr.mxu0 0.0
  %1806 = vmatpush1.msra.mxu0 0.0
  %1807 = vmatprep.subr.mxu0 0.0
  %1808 = vmatpush1.msra.mxu0 0.0
  %1809 = vmatprep.subr.mxu0 0.0
  %1810 = vmatpush1.msra.mxu0 0.0
  %1811 = vmatprep.subr.mxu0 0.0
  %1812 = vmatpush1.msra.mxu0 0.0
  %1813 = vmatprep.subr.mxu0 0.0
  %1814 = vmatpush1.msra.mxu0 0.0
  %1815 = vmatprep.subr.mxu0 0.0
  %1816 = vmatpush1.msra.mxu0 0.0
  %1817 = vmatprep.subr.mxu0 0.0
  %1818 = vmatpush1.msra.mxu0 0.0
  %1819 = vmatprep.subr.mxu0 0.0
  %1820 = vmatpush1.msra.mxu0 0.0
  %1821 = vmatprep.subr.mxu0 0.0
  %1822 = vmatpush1.msra.mxu0 0.0
  %1823 = vmatprep.subr.mxu0 0.0
  %1824 = vmatpush1.msra.mxu0 0.0
  %1825 = vmatprep.subr.mxu0 0.0
  %1826 = vmatpush1.msra.mxu0 0.0
  %1827 = vmatprep.subr.mxu0 0.0
  %1828 = vmatpush1.msra.mxu0 0.0
  %1829 = vmatprep.subr.mxu0 0.0
  %1830 = vmatpush1.msra.mxu0 0.0
  %1831 = vmatprep.subr.mxu0 0.0
  %1832 = vmatpush1.msra.mxu0 0.0
  %1833 = vmatprep.subr.mxu0 0.0
  %1834 = vmatpush1.msra.mxu0 0.0
  %1835 = vmatprep.subr.mxu0 0.0
  %1836 = vmatpush1.msra.mxu0 0.0
  %1837 = vmatprep.subr.mxu0 0.0
  %1838 = vmatpush1.msra.mxu0 0.0
  %1839 = vmatprep.subr.mxu0 0.0
  %1840 = vmatpush1.msra.mxu0 0.0
  %1841 = vmatprep.subr.mxu0 0.0
  %1842 = vmatpush1.msra.mxu0 0.0
  %1843 = vmatprep.subr.mxu0 0.0
  %1844 = vmatpush1.msra.mxu0 0.0
  %1845 = vmatprep.subr.mxu0 0.0
  %1846 = vmatpush1.msra.mxu0 0.0
  %1847 = vmatprep.subr.mxu0 0.0
  %1848 = vmatpush1.msra.mxu0 0.0
  %1849 = vmatprep.subr.mxu0 0.0
  %1850 = vmatpush1.msra.mxu0 0.0
  %1851 = vmatprep.subr.mxu0 0.0
  %1852 = vmatpush1.msra.mxu0 0.0
  %1853 = vmatprep.subr.mxu0 0.0
  %1854 = vmatpush1.msra.mxu0 0.0
  %1855 = vmatprep.subr.mxu0 0.0
  %1856 = vmatpush1.msra.mxu0 0.0
  %1857 = vmatprep.subr.mxu0 0.0
  %1858 = vmatpush1.msra.mxu0 0.0
  %1859 = vmatprep.subr.mxu0 0.0
  %1860 = vmatpush1.msra.mxu0 0.0
  %1861 = vmatprep.subr.mxu0 0.0
  %1862 = vmatpush1.msra.mxu0 0.0
  %1863 = vmatprep.mubr.f32.mxu0 0.0
  %1864 = vmatmul.mubr.f32.gmra.mrb[0].mxu0 %v1797
  %v1865 = vpop.f32.mrb[0].mxu0
  %v1866 = vadd.f32 0.0, %v1865
  %v1867 = vpop.f32.mrb[0].mxu0
  %1868 = vdwg.mxu0
  %1869 = vrot.lane.b32.xlu0 %v362, 40
  %v1870 = vpop.permute.xlu0 %1869
  %v1873 = vsel %vm368, %v1792, 0
  %1875 = vmatprep.subr.mxu0 0.0
  %1876 = vmatpush1.msra.mxu0 %v1870
  %1877 = vmatprep.subr.mxu0 0.0
  %1878 = vmatpush1.msra.mxu0 0.0
  %1879 = vmatprep.subr.mxu0 0.0
  %1880 = vmatpush1.msra.mxu0 0.0
  %1881 = vmatprep.subr.mxu0 0.0
  %1882 = vmatpush1.msra.mxu0 0.0
  %1883 = vmatprep.subr.mxu0 0.0
  %1884 = vmatpush1.msra.mxu0 0.0
  %1885 = vmatprep.subr.mxu0 0.0
  %1886 = vmatpush1.msra.mxu0 0.0
  %1887 = vmatprep.subr.mxu0 0.0
  %1888 = vmatpush1.msra.mxu0 0.0
  %1889 = vmatprep.subr.mxu0 0.0
  %1890 = vmatpush1.msra.mxu0 0.0
  %1891 = vmatprep.subr.mxu0 0.0
  %1892 = vmatpush1.msra.mxu0 0.0
  %1893 = vmatprep.subr.mxu0 0.0
  %1894 = vmatpush1.msra.mxu0 0.0
  %1895 = vmatprep.subr.mxu0 0.0
  %1896 = vmatpush1.msra.mxu0 0.0
  %1897 = vmatprep.subr.mxu0 0.0
  %1898 = vmatpush1.msra.mxu0 0.0
  %1899 = vmatprep.subr.mxu0 0.0
  %1900 = vmatpush1.msra.mxu0 0.0
  %1901 = vmatprep.subr.mxu0 0.0
  %1902 = vmatpush1.msra.mxu0 0.0
  %1903 = vmatprep.subr.mxu0 0.0
  %1904 = vmatpush1.msra.mxu0 0.0
  %1905 = vmatprep.subr.mxu0 0.0
  %1906 = vmatpush1.msra.mxu0 0.0
  %1907 = vmatprep.subr.mxu0 0.0
  %1908 = vmatpush1.msra.mxu0 0.0
  %1909 = vmatprep.subr.mxu0 0.0
  %1910 = vmatpush1.msra.mxu0 0.0
  %1911 = vmatprep.subr.mxu0 0.0
  %1912 = vmatpush1.msra.mxu0 0.0
  %1913 = vmatprep.subr.mxu0 0.0
  %1914 = vmatpush1.msra.mxu0 0.0
  %1915 = vmatprep.subr.mxu0 0.0
  %1916 = vmatpush1.msra.mxu0 0.0
  %1917 = vmatprep.subr.mxu0 0.0
  %1918 = vmatpush1.msra.mxu0 0.0
  %1919 = vmatprep.subr.mxu0 0.0
  %1920 = vmatpush1.msra.mxu0 0.0
  %1921 = vmatprep.subr.mxu0 0.0
  %1922 = vmatpush1.msra.mxu0 0.0
  %1923 = vmatprep.subr.mxu0 0.0
  %1924 = vmatpush1.msra.mxu0 0.0
  %1925 = vmatprep.subr.mxu0 0.0
  %1926 = vmatpush1.msra.mxu0 0.0
  %1927 = vmatprep.subr.mxu0 0.0
  %1928 = vmatpush1.msra.mxu0 0.0
  %1929 = vmatprep.subr.mxu0 0.0
  %1930 = vmatpush1.msra.mxu0 0.0
  %1931 = vmatprep.subr.mxu0 0.0
  %1932 = vmatpush1.msra.mxu0 0.0
  %1933 = vmatprep.subr.mxu0 0.0
  %1934 = vmatpush1.msra.mxu0 0.0
  %1935 = vmatprep.subr.mxu0 0.0
  %1936 = vmatpush1.msra.mxu0 0.0
  %1937 = vmatprep.subr.mxu0 0.0
  %1938 = vmatpush1.msra.mxu0 0.0
  %1939 = vmatprep.mubr.f32.mxu0 0.0
  %1940 = vmatmul.mubr.f32.gmra.mrb[0].mxu0 %v1873
  %v1941 = vpop.f32.mrb[0].mxu0
  %v1942 = vadd.f32 0.0, %v1941
  %v1943 = vpop.f32.mrb[0].mxu0
  %1944 = vdwg.mxu0
  %v1946 = vsel %vm368, %v1866, 0
  %v1949 = vsel %vm368, %v1942, 0
  %1951 = vmatprep.subr.mxu0 0.0
  %1952 = vmatpush1.msra.mxu0 %v254
  %1953 = vmatprep.subr.mxu0 0.0
  %1954 = vmatpush1.msra.mxu0 0.0
  %1955 = vmatprep.subr.mxu0 0.0
  %1956 = vmatpush1.msra.mxu0 0.0
  %1957 = vmatprep.subr.mxu0 0.0
  %1958 = vmatpush1.msra.mxu0 0.0
  %1959 = vmatprep.subr.mxu0 0.0
  %1960 = vmatpush1.msra.mxu0 0.0
  %1961 = vmatprep.subr.mxu0 0.0
  %1962 = vmatpush1.msra.mxu0 0.0
  %1963 = vmatprep.subr.mxu0 0.0
  %1964 = vmatpush1.msra.mxu0 0.0
  %1965 = vmatprep.subr.mxu0 0.0
  %1966 = vmatpush1.msra.mxu0 0.0
  %1967 = vmatprep.subr.mxu0 0.0
  %1968 = vmatpush1.msra.mxu0 0.0
  %1969 = vmatprep.subr.mxu0 0.0
  %1970 = vmatpush1.msra.mxu0 0.0
  %1971 = vmatprep.subr.mxu0 0.0
  %1972 = vmatpush1.msra.mxu0 0.0
  %1973 = vmatprep.subr.mxu0 0.0
  %1974 = vmatpush1.msra.mxu0 0.0
  %1975 = vmatprep.subr.mxu0 0.0
  %1976 = vmatpush1.msra.mxu0 0.0
  %1977 = vmatprep.subr.mxu0 0.0
  %1978 = vmatpush1.msra.mxu0 0.0
  %1979 = vmatprep.subr.mxu0 0.0
  %1980 = vmatpush1.msra.mxu0 0.0
  %1981 = vmatprep.subr.mxu0 0.0
  %1982 = vmatpush1.msra.mxu0 0.0
  %1983 = vmatprep.subr.mxu0 0.0
  %1984 = vmatpush1.msra.mxu0 0.0
  %1985 = vmatprep.subr.mxu0 0.0
  %1986 = vmatpush1.msra.mxu0 0.0
  %1987 = vmatprep.subr.mxu0 0.0
  %1988 = vmatpush1.msra.mxu0 0.0
  %1989 = vmatprep.subr.mxu0 0.0
  %1990 = vmatpush1.msra.mxu0 0.0
  %1991 = vmatprep.subr.mxu0 0.0
  %1992 = vmatpush1.msra.mxu0 0.0
  %1993 = vmatprep.subr.mxu0 0.0
  %1994 = vmatpush1.msra.mxu0 0.0
  %1995 = vmatprep.subr.mxu0 0.0
  %1996 = vmatpush1.msra.mxu0 0.0
  %1997 = vmatprep.subr.mxu0 0.0
  %1998 = vmatpush1.msra.mxu0 0.0
  %1999 = vmatprep.subr.mxu0 0.0
  %2000 = vmatpush1.msra.mxu0 0.0
  %2001 = vmatprep.subr.mxu0 0.0
  %2002 = vmatpush1.msra.mxu0 0.0
  %2003 = vmatprep.subr.mxu0 0.0
  %2004 = vmatpush1.msra.mxu0 0.0
  %2005 = vmatprep.subr.mxu0 0.0
  %2006 = vmatpush1.msra.mxu0 0.0
  %2007 = vmatprep.subr.mxu0 0.0
  %2008 = vmatpush1.msra.mxu0 0.0
  %2009 = vmatprep.subr.mxu0 0.0
  %2010 = vmatpush1.msra.mxu0 0.0
  %2011 = vmatprep.subr.mxu0 0.0
  %2012 = vmatpush1.msra.mxu0 0.0
  %2013 = vmatprep.subr.mxu0 0.0
  %2014 = vmatpush1.msra.mxu0 0.0
  %2015 = vmatprep.mubr.f32.mxu0 0.0
  %2016 = vmatmul.mubr.f32.gmra.mrb[0].mxu0 %v1946
  %v2017 = vpop.f32.mrb[0].mxu0
  %v2018 = vadd.f32 0.0, %v2017
  %v2019 = vpop.f32.mrb[0].mxu0
  %2020 = vmatprep.mubr.f32.mxu0 0.0
  %2021 = vmatmul.mubr.f32.gmra.mrb[0].mxu0 %v1949
  %v2022 = vpop.f32.mrb[0].mxu0
  %v2023 = vadd.f32 0.0, %v2022
  %v2024 = vpop.f32.mrb[0].mxu0
  %2025 = vdwg.mxu0
  %v2026 = vadd.f32 %v1609, %v2018
  %v2027 = vadd.f32 %v1610, %v2023
  %v2029 = vlaneseq
  %v2030 = vshrl.u32 %v2029, 7
  %v2031 = vsub.s32 0, %v2030
  %v2032 = vrot.slane %v247, %v2031
  %v2034 = vadd.f32 %v2026, %v2032
  %v2035 = vadd.f32 %v2027, %v2032
  %v2036 = vadd.f32 %v2034, %v275
  %v2037 = vadd.f32 %v2035, %v276
  %v2038 = vsel %vm283, %v2036, 0.0
  %2039 = vadd.xlane.f32.xlu0 %v2038
  %v2040 = vpop.xlane.xlu0 %2039
  %v2041 = vsel %vm283, %v2037, 0.0
  %2042 = vadd.xlane.f32.xlu0 %v2041
  %v2043 = vpop.xlane.xlu0 %2042
  %v2044 = vrcp.pop 32.0
  %v2045 = vmul.f32 %v2040, %v2044
  %v2046 = vmul.f32 %v2043, %v2044
  %v2047 = vsub.f32 %v2036, %v2045
  %v2048 = vsub.f32 %v2037, %v2046
  %v2049 = vmul.f32 %v2047, %v2047
  %v2050 = vmul.f32 %v2048, %v2048
  %v2051 = vsel %vm283, %v2049, 0.0
  %2052 = vadd.xlane.f32.xlu0 %v2051
  %v2053 = vpop.xlane.xlu0 %2052
  %v2054 = vsel %vm283, %v2050, 0.0
  %2055 = vadd.xlane.f32.xlu0 %v2054
  %v2056 = vpop.xlane.xlu0 %2055
  %v2057 = vmul.f32 %v2053, %v2044
  %v2058 = vmul.f32 %v2056, %v2044
  %v2059 = vadd.f32 %v2057, 1e-05
  %v2060 = vadd.f32 %v2058, 1e-05
  %v2061 = vrsqrt.pop %v2059
  %v2062 = vrsqrt.pop %v2060
  %v2063 = vmul.f32 %v2047, %v2061
  %v2064 = vmul.f32 %v2048, %v2062
  %v2066 = vlaneseq
  %v2067 = vshrl.u32 %v2066, 7
  %v2068 = vsub.s32 0, %v2067
  %v2069 = vrot.slane %v250, %v2068
  %v2071 = vmul.f32 %v2063, %v2069
  %v2072 = vmul.f32 %v2064, %v2069
  %v2074 = vlaneseq
  %v2075 = vshrl.u32 %v2074, 7
  %v2076 = vsub.s32 0, %v2075
  %v2077 = vrot.slane %v249, %v2076
  %v2079 = vadd.f32 %v2071, %v2077
  %v2080 = vadd.f32 %v2072, %v2077
  %v2082 = vlaneseq
  %v2083 = vshrl.u32 %v2082, 7
  %v2084 = vsub.s32 0, %v2083
  %v2085 = vrot.slane %v231, %v2084
  %v2088 = vsel %vm283, %v2079, 0
  %v2091 = vsel %vm283, %v2080, 0
  %2093 = vmatprep.subr.mxu0 0.0
  %2094 = vmatpush1.msra.mxu0 %v235
  %2095 = vmatprep.subr.mxu0 0.0
  %2096 = vmatpush1.msra.mxu0 %v236
  %2097 = vmatprep.subr.mxu0 0.0
  %2098 = vmatpush1.msra.mxu0 %v237
  %2099 = vmatprep.subr.mxu0 0.0
  %2100 = vmatpush1.msra.mxu0 %v238
  %2101 = vmatprep.subr.mxu0 0.0
  %2102 = vmatpush1.msra.mxu0 0.0
  %2103 = vmatprep.subr.mxu0 0.0
  %2104 = vmatpush1.msra.mxu0 0.0
  %2105 = vmatprep.subr.mxu0 0.0
  %2106 = vmatpush1.msra.mxu0 0.0
  %2107 = vmatprep.subr.mxu0 0.0
  %2108 = vmatpush1.msra.mxu0 0.0
  %2109 = vmatprep.subr.mxu0 0.0
  %2110 = vmatpush1.msra.mxu0 0.0
  %2111 = vmatprep.subr.mxu0 0.0
  %2112 = vmatpush1.msra.mxu0 0.0
  %2113 = vmatprep.subr.mxu0 0.0
  %2114 = vmatpush1.msra.mxu0 0.0
  %2115 = vmatprep.subr.mxu0 0.0
  %2116 = vmatpush1.msra.mxu0 0.0
  %2117 = vmatprep.subr.mxu0 0.0
  %2118 = vmatpush1.msra.mxu0 0.0
  %2119 = vmatprep.subr.mxu0 0.0
  %2120 = vmatpush1.msra.mxu0 0.0
  %2121 = vmatprep.subr.mxu0 0.0
  %2122 = vmatpush1.msra.mxu0 0.0
  %2123 = vmatprep.subr.mxu0 0.0
  %2124 = vmatpush1.msra.mxu0 0.0
  %2125 = vmatprep.subr.mxu0 0.0
  %2126 = vmatpush1.msra.mxu0 0.0
  %2127 = vmatprep.subr.mxu0 0.0
  %2128 = vmatpush1.msra.mxu0 0.0
  %2129 = vmatprep.subr.mxu0 0.0
  %2130 = vmatpush1.msra.mxu0 0.0
  %2131 = vmatprep.subr.mxu0 0.0
  %2132 = vmatpush1.msra.mxu0 0.0
  %2133 = vmatprep.subr.mxu0 0.0
  %2134 = vmatpush1.msra.mxu0 0.0
  %2135 = vmatprep.subr.mxu0 0.0
  %2136 = vmatpush1.msra.mxu0 0.0
  %2137 = vmatprep.subr.mxu0 0.0
  %2138 = vmatpush1.msra.mxu0 0.0
  %2139 = vmatprep.subr.mxu0 0.0
  %2140 = vmatpush1.msra.mxu0 0.0
  %2141 = vmatprep.subr.mxu0 0.0
  %2142 = vmatpush1.msra.mxu0 0.0
  %2143 = vmatprep.subr.mxu0 0.0
  %2144 = vmatpush1.msra.mxu0 0.0
  %2145 = vmatprep.subr.mxu0 0.0
  %2146 = vmatpush1.msra.mxu0 0.0
  %2147 = vmatprep.subr.mxu0 0.0
  %2148 = vmatpush1.msra.mxu0 0.0
  %2149 = vmatprep.subr.mxu0 0.0
  %2150 = vmatpush1.msra.mxu0 0.0
  %2151 = vmatprep.subr.mxu0 0.0
  %2152 = vmatpush1.msra.mxu0 0.0
  %2153 = vmatprep.subr.mxu0 0.0
  %2154 = vmatpush1.msra.mxu0 0.0
  %2155 = vmatprep.subr.mxu0 0.0
  %2156 = vmatpush1.msra.mxu0 0.0
  %2157 = vmatprep.mubr.f32.mxu0 0.0
  %2158 = vmatmul.mubr.f32.gmra.mrb[0].mxu0 %v2088
  %v2159 = vpop.f32.mrb[0].mxu0
  %v2160 = vadd.f32 %v2085, %v2159
  %v2161 = vpop.f32.mrb[0].mxu0
  %2162 = vmatprep.mubr.f32.mxu0 0.0
  %2163 = vmatmul.mubr.f32.gmra.mrb[0].mxu0 %v2091
  %v2164 = vpop.f32.mrb[0].mxu0
  %v2165 = vadd.f32 %v2085, %v2164
  %v2166 = vpop.f32.mrb[0].mxu0
  %2167 = vdwg.mxu0
  %v2168 = vmax.f32 %v2160, 0.0
  %v2169 = vmax.f32 %v2165, 0.0
  %v2171 = vlaneseq
  %v2172 = vshrl.u32 %v2171, 7
  %v2173 = vsub.s32 0, %v2172
  %v2174 = vrot.slane %v232, %v2173
  %vm2176 = vcmask 523264
  %v2178 = vsel %vm2176, %v2168, 0
  %v2181 = vsel %vm2176, %v2169, 0
  %2183 = vmatprep.subr.mxu0 0.0
  %2184 = vmatpush1.msra.mxu0 %v239
  %2185 = vmatprep.subr.mxu0 0.0
  %2186 = vmatpush1.msra.mxu0 %v240
  %2187 = vmatprep.subr.mxu0 0.0
  %2188 = vmatpush1.msra.mxu0 %v241
  %2189 = vmatprep.subr.mxu0 0.0
  %2190 = vmatpush1.msra.mxu0 %v242
  %2191 = vmatprep.subr.mxu0 0.0
  %2192 = vmatpush1.msra.mxu0 %v243
  %2193 = vmatprep.subr.mxu0 0.0
  %2194 = vmatpush1.msra.mxu0 %v244
  %2195 = vmatprep.subr.mxu0 0.0
  %2196 = vmatpush1.msra.mxu0 %v245
  %2197 = vmatprep.subr.mxu0 0.0
  %2198 = vmatpush1.msra.mxu0 %v246
  %2199 = vmatprep.subr.mxu0 0.0
  %2200 = vmatpush1.msra.mxu0 0.0
  %2201 = vmatprep.subr.mxu0 0.0
  %2202 = vmatpush1.msra.mxu0 0.0
  %2203 = vmatprep.subr.mxu0 0.0
  %2204 = vmatpush1.msra.mxu0 0.0
  %2205 = vmatprep.subr.mxu0 0.0
  %2206 = vmatpush1.msra.mxu0 0.0
  %2207 = vmatprep.subr.mxu0 0.0
  %2208 = vmatpush1.msra.mxu0 0.0
  %2209 = vmatprep.subr.mxu0 0.0
  %2210 = vmatpush1.msra.mxu0 0.0
  %2211 = vmatprep.subr.mxu0 0.0
  %2212 = vmatpush1.msra.mxu0 0.0
  %2213 = vmatprep.subr.mxu0 0.0
  %2214 = vmatpush1.msra.mxu0 0.0
  %2215 = vmatprep.subr.mxu0 0.0
  %2216 = vmatpush1.msra.mxu0 0.0
  %2217 = vmatprep.subr.mxu0 0.0
  %2218 = vmatpush1.msra.mxu0 0.0
  %2219 = vmatprep.subr.mxu0 0.0
  %2220 = vmatpush1.msra.mxu0 0.0
  %2221 = vmatprep.subr.mxu0 0.0
  %2222 = vmatpush1.msra.mxu0 0.0
  %2223 = vmatprep.subr.mxu0 0.0
  %2224 = vmatpush1.msra.mxu0 0.0
  %2225 = vmatprep.subr.mxu0 0.0
  %2226 = vmatpush1.msra.mxu0 0.0
  %2227 = vmatprep.subr.mxu0 0.0
  %2228 = vmatpush1.msra.mxu0 0.0
  %2229 = vmatprep.subr.mxu0 0.0
  %2230 = vmatpush1.msra.mxu0 0.0
  %2231 = vmatprep.subr.mxu0 0.0
  %2232 = vmatpush1.msra.mxu0 0.0
  %2233 = vmatprep.subr.mxu0 0.0
  %2234 = vmatpush1.msra.mxu0 0.0
  %2235 = vmatprep.subr.mxu0 0.0
  %2236 = vmatpush1.msra.mxu0 0.0
  %2237 = vmatprep.subr.mxu0 0.0
  %2238 = vmatpush1.msra.mxu0 0.0
  %2239 = vmatprep.subr.mxu0 0.0
  %2240 = vmatpush1.msra.mxu0 0.0
  %2241 = vmatprep.subr.mxu0 0.0
  %2242 = vmatpush1.msra.mxu0 0.0
  %2243 = vmatprep.subr.mxu0 0.0
  %2244 = vmatpush1.msra.mxu0 0.0
  %2245 = vmatprep.subr.mxu0 0.0
  %2246 = vmatpush1.msra.mxu0 0.0
  %2247 = vmatprep.mubr.f32.mxu0 0.0
  %2248 = vmatmul.mubr.f32.gmra.mrb[0].mxu0 %v2178
  %v2249 = vpop.f32.mrb[0].mxu0
  %v2250 = vadd.f32 %v2174, %v2249
  %v2251 = vpop.f32.mrb[0].mxu0
  %2252 = vmatprep.mubr.f32.mxu0 0.0
  %2253 = vmatmul.mubr.f32.gmra.mrb[0].mxu0 %v2181
  %v2254 = vpop.f32.mrb[0].mxu0
  %v2255 = vadd.f32 %v2174, %v2254
  %v2256 = vpop.f32.mrb[0].mxu0
  %2257 = vdwg.mxu0
  %v2258 = vadd.f32 %v2250, %v2079
  %v2259 = vadd.f32 %v2255, %v2080
  %v2260 = vsel %vm283, %v2258, 0.0
  %2261 = vadd.xlane.f32.xlu0 %v2260
  %v2262 = vpop.xlane.xlu0 %2261
  %v2263 = vsel %vm283, %v2259, 0.0
  %2264 = vadd.xlane.f32.xlu0 %v2263
  %v2265 = vpop.xlane.xlu0 %2264
  %v2266 = vmul.f32 %v2262, %v2044
  %v2267 = vmul.f32 %v2265, %v2044
  %v2268 = vsub.f32 %v2258, %v2266
  %v2269 = vsub.f32 %v2259, %v2267
  %v2270 = vmul.f32 %v2268, %v2268
  %v2271 = vmul.f32 %v2269, %v2269
  %v2272 = vsel %vm283, %v2270, 0.0
  %2273 = vadd.xlane.f32.xlu0 %v2272
  %v2274 = vpop.xlane.xlu0 %2273
  %v2275 = vsel %vm283, %v2271, 0.0
  %2276 = vadd.xlane.f32.xlu0 %v2275
  %v2277 = vpop.xlane.xlu0 %2276
  %v2278 = vmul.f32 %v2274, %v2044
  %v2279 = vmul.f32 %v2277, %v2044
  %v2280 = vadd.f32 %v2278, 1e-05
  %v2281 = vadd.f32 %v2279, 1e-05
  %v2282 = vrsqrt.pop %v2280
  %v2283 = vrsqrt.pop %v2281
  %v2284 = vmul.f32 %v2268, %v2282
  %v2285 = vmul.f32 %v2269, %v2283
  %v2287 = vlaneseq
  %v2288 = vshrl.u32 %v2287, 7
  %v2289 = vsub.s32 0, %v2288
  %v2290 = vrot.slane %v234, %v2289
  %v2292 = vmul.f32 %v2284, %v2290
  %v2293 = vmul.f32 %v2285, %v2290
  %v2295 = vlaneseq
  %v2296 = vshrl.u32 %v2295, 7
  %v2297 = vsub.s32 0, %v2296
  %v2298 = vrot.slane %v233, %v2297
  %v2300 = vadd.f32 %v2292, %v2298
  %v2301 = vadd.f32 %v2293, %v2298
  %v2302 = vlaneseq
  %v2303 = vshrl.u32 %v2302, 7
  %v2304 = vsub.s32 7, %v2303
  %v2305 = vrot.slane %v2300, %v2304
  %v2306 = vlaneseq
  %v2307 = vshrl.u32 %v2306, 7
  %v2308 = vsub.s32 7, %v2307
  %v2309 = vrot.slane %v2301, %v2308
  %v2310 = vadd.f32 %v172, %v174
  %v2311 = vadd.f32 %v173, %v175
  %2313 = vset.pattern.permute.xlu0 0
  %2314 = vperm.xlu0 %2313, %v178
  %v2315 = vpop.permute.xlu0 %2314
  %2318 = vset.pattern.permute.xlu0 0
  %2319 = vperm.xlu0 %2318, %v179
  %v2320 = vpop.permute.xlu0 %2319
  %v2322 = vmul.f32 %v2310, %v2315
  %v2323 = vmul.f32 %v2311, %v2320
  %v2325 = vlaneseq
  %v2326 = vshrl.u32 %v2325, 7
  %v2327 = vsub.s32 0, %v2326
  %v2328 = vrot.slane %v220, %v2327
  %v2331 = vsel %vm283, %v2322, 0
  %v2334 = vsel %vm283, %v2323, 0
  %2336 = vmatprep.subr.mxu0 0.0
  %2337 = vmatpush1.msra.mxu0 %v227
  %2338 = vmatprep.subr.mxu0 0.0
  %2339 = vmatpush1.msra.mxu0 %v228
  %2340 = vmatprep.subr.mxu0 0.0
  %2341 = vmatpush1.msra.mxu0 %v229
  %2342 = vmatprep.subr.mxu0 0.0
  %2343 = vmatpush1.msra.mxu0 %v230
  %2344 = vmatprep.subr.mxu0 0.0
  %2345 = vmatpush1.msra.mxu0 0.0
  %2346 = vmatprep.subr.mxu0 0.0
  %2347 = vmatpush1.msra.mxu0 0.0
  %2348 = vmatprep.subr.mxu0 0.0
  %2349 = vmatpush1.msra.mxu0 0.0
  %2350 = vmatprep.subr.mxu0 0.0
  %2351 = vmatpush1.msra.mxu0 0.0
  %2352 = vmatprep.subr.mxu0 0.0
  %2353 = vmatpush1.msra.mxu0 0.0
  %2354 = vmatprep.subr.mxu0 0.0
  %2355 = vmatpush1.msra.mxu0 0.0
  %2356 = vmatprep.subr.mxu0 0.0
  %2357 = vmatpush1.msra.mxu0 0.0
  %2358 = vmatprep.subr.mxu0 0.0
  %2359 = vmatpush1.msra.mxu0 0.0
  %2360 = vmatprep.subr.mxu0 0.0
  %2361 = vmatpush1.msra.mxu0 0.0
  %2362 = vmatprep.subr.mxu0 0.0
  %2363 = vmatpush1.msra.mxu0 0.0
  %2364 = vmatprep.subr.mxu0 0.0
  %2365 = vmatpush1.msra.mxu0 0.0
  %2366 = vmatprep.subr.mxu0 0.0
  %2367 = vmatpush1.msra.mxu0 0.0
  %2368 = vmatprep.subr.mxu0 0.0
  %2369 = vmatpush1.msra.mxu0 0.0
  %2370 = vmatprep.subr.mxu0 0.0
  %2371 = vmatpush1.msra.mxu0 0.0
  %2372 = vmatprep.subr.mxu0 0.0
  %2373 = vmatpush1.msra.mxu0 0.0
  %2374 = vmatprep.subr.mxu0 0.0
  %2375 = vmatpush1.msra.mxu0 0.0
  %2376 = vmatprep.subr.mxu0 0.0
  %2377 = vmatpush1.msra.mxu0 0.0
  %2378 = vmatprep.subr.mxu0 0.0
  %2379 = vmatpush1.msra.mxu0 0.0
  %2380 = vmatprep.subr.mxu0 0.0
  %2381 = vmatpush1.msra.mxu0 0.0
  %2382 = vmatprep.subr.mxu0 0.0
  %2383 = vmatpush1.msra.mxu0 0.0
  %2384 = vmatprep.subr.mxu0 0.0
  %2385 = vmatpush1.msra.mxu0 0.0
  %2386 = vmatprep.subr.mxu0 0.0
  %2387 = vmatpush1.msra.mxu0 0.0
  %2388 = vmatprep.subr.mxu0 0.0
  %2389 = vmatpush1.msra.mxu0 0.0
  %2390 = vmatprep.subr.mxu0 0.0
  %2391 = vmatpush1.msra.mxu0 0.0
  %2392 = vmatprep.subr.mxu0 0.0
  %2393 = vmatpush1.msra.mxu0 0.0
  %2394 = vmatprep.subr.mxu0 0.0
  %2395 = vmatpush1.msra.mxu0 0.0
  %2396 = vmatprep.subr.mxu0 0.0
  %2397 = vmatpush1.msra.mxu0 0.0
  %2398 = vmatprep.subr.mxu0 0.0
  %2399 = vmatpush1.msra.mxu0 0.0
  %2400 = vmatprep.mubr.f32.mxu0 0.0
  %2401 = vmatmul.mubr.f32.gmra.mrb[0].mxu0 %v2331
  %v2402 = vpop.f32.mrb[0].mxu0
  %v2403 = vadd.f32 %v2328, %v2402
  %v2404 = vpop.f32.mrb[0].mxu0
  %2405 = vmatprep.mubr.f32.mxu0 0.0
  %2406 = vmatmul.mubr.f32.gmra.mrb[0].mxu0 %v2334
  %v2407 = vpop.f32.mrb[0].mxu0
  %v2408 = vadd.f32 %v2328, %v2407
  %v2409 = vpop.f32.mrb[0].mxu0
  %2410 = vdwg.mxu0
  %2412 = vrot.lane.b32.xlu0 %v2403, 96
  %v2413 = vpop.permute.xlu0 %2412
  %v2414 = vsel %vm368, %v2403, 0
  %v2416 = vsel %vm368, %v2413, 0
  %2418 = vmatprep.subr.mxu0 0.0
  %2419 = vmatpush1.xpose.msra.mxu0 %v2416
  %2420 = vmatprep.subr.mxu0 0.0
  %2421 = vmatpush1.xpose.msra.mxu0 0.0
  %2422 = vmatprep.subr.mxu0 0.0
  %2423 = vmatpush1.xpose.msra.mxu0 0.0
  %2424 = vmatprep.subr.mxu0 0.0
  %2425 = vmatpush1.xpose.msra.mxu0 0.0
  %2426 = vmatprep.subr.mxu0 0.0
  %2427 = vmatpush1.xpose.msra.mxu0 0.0
  %2428 = vmatprep.subr.mxu0 0.0
  %2429 = vmatpush1.xpose.msra.mxu0 0.0
  %2430 = vmatprep.subr.mxu0 0.0
  %2431 = vmatpush1.xpose.msra.mxu0 0.0
  %2432 = vmatprep.subr.mxu0 0.0
  %2433 = vmatpush1.xpose.msra.mxu0 0.0
  %2434 = vmatprep.subr.mxu0 0.0
  %2435 = vmatpush1.xpose.msra.mxu0 0.0
  %2436 = vmatprep.subr.mxu0 0.0
  %2437 = vmatpush1.xpose.msra.mxu0 0.0
  %2438 = vmatprep.subr.mxu0 0.0
  %2439 = vmatpush1.xpose.msra.mxu0 0.0
  %2440 = vmatprep.subr.mxu0 0.0
  %2441 = vmatpush1.xpose.msra.mxu0 0.0
  %2442 = vmatprep.subr.mxu0 0.0
  %2443 = vmatpush1.xpose.msra.mxu0 0.0
  %2444 = vmatprep.subr.mxu0 0.0
  %2445 = vmatpush1.xpose.msra.mxu0 0.0
  %2446 = vmatprep.subr.mxu0 0.0
  %2447 = vmatpush1.xpose.msra.mxu0 0.0
  %2448 = vmatprep.subr.mxu0 0.0
  %2449 = vmatpush1.xpose.msra.mxu0 0.0
  %2450 = vmatprep.subr.mxu0 0.0
  %2451 = vmatpush1.xpose.msra.mxu0 0.0
  %2452 = vmatprep.subr.mxu0 0.0
  %2453 = vmatpush1.xpose.msra.mxu0 0.0
  %2454 = vmatprep.subr.mxu0 0.0
  %2455 = vmatpush1.xpose.msra.mxu0 0.0
  %2456 = vmatprep.subr.mxu0 0.0
  %2457 = vmatpush1.xpose.msra.mxu0 0.0
  %2458 = vmatprep.subr.mxu0 0.0
  %2459 = vmatpush1.xpose.msra.mxu0 0.0
  %2460 = vmatprep.subr.mxu0 0.0
  %2461 = vmatpush1.xpose.msra.mxu0 0.0
  %2462 = vmatprep.subr.mxu0 0.0
  %2463 = vmatpush1.xpose.msra.mxu0 0.0
  %2464 = vmatprep.subr.mxu0 0.0
  %2465 = vmatpush1.xpose.msra.mxu0 0.0
  %2466 = vmatprep.subr.mxu0 0.0
  %2467 = vmatpush1.xpose.msra.mxu0 0.0
  %2468 = vmatprep.subr.mxu0 0.0
  %2469 = vmatpush1.xpose.msra.mxu0 0.0
  %2470 = vmatprep.subr.mxu0 0.0
  %2471 = vmatpush1.xpose.msra.mxu0 0.0
  %2472 = vmatprep.subr.mxu0 0.0
  %2473 = vmatpush1.xpose.msra.mxu0 0.0
  %2474 = vmatprep.subr.mxu0 0.0
  %2475 = vmatpush1.xpose.msra.mxu0 0.0
  %2476 = vmatprep.subr.mxu0 0.0
  %2477 = vmatpush1.xpose.msra.mxu0 0.0
  %2478 = vmatprep.subr.mxu0 0.0
  %2479 = vmatpush1.xpose.msra.mxu0 0.0
  %2480 = vmatprep.subr.mxu0 0.0
  %2481 = vmatpush1.xpose.msra.mxu0 0.0
  %2482 = vmatprep.mubr.f32.mxu0 0.0
  %2483 = vmatmul.mubr.f32.gmra.mrb[0].mxu0 %v2414
  %v2484 = vpop.f32.mrb[0].mxu0
  %v2485 = vadd.f32 0.0, %v2484
  %v2486 = vpop.f32.mrb[0].mxu0
  %2487 = vdwg.mxu0
  %2489 = vrot.lane.b32.xlu0 %v2408, 96
  %v2490 = vpop.permute.xlu0 %2489
  %v2491 = vsel %vm368, %v2408, 0
  %v2493 = vsel %vm368, %v2490, 0
  %2495 = vmatprep.subr.mxu0 0.0
  %2496 = vmatpush1.xpose.msra.mxu0 %v2493
  %2497 = vmatprep.subr.mxu0 0.0
  %2498 = vmatpush1.xpose.msra.mxu0 0.0
  %2499 = vmatprep.subr.mxu0 0.0
  %2500 = vmatpush1.xpose.msra.mxu0 0.0
  %2501 = vmatprep.subr.mxu0 0.0
  %2502 = vmatpush1.xpose.msra.mxu0 0.0
  %2503 = vmatprep.subr.mxu0 0.0
  %2504 = vmatpush1.xpose.msra.mxu0 0.0
  %2505 = vmatprep.subr.mxu0 0.0
  %2506 = vmatpush1.xpose.msra.mxu0 0.0
  %2507 = vmatprep.subr.mxu0 0.0
  %2508 = vmatpush1.xpose.msra.mxu0 0.0
  %2509 = vmatprep.subr.mxu0 0.0
  %2510 = vmatpush1.xpose.msra.mxu0 0.0
  %2511 = vmatprep.subr.mxu0 0.0
  %2512 = vmatpush1.xpose.msra.mxu0 0.0
  %2513 = vmatprep.subr.mxu0 0.0
  %2514 = vmatpush1.xpose.msra.mxu0 0.0
  %2515 = vmatprep.subr.mxu0 0.0
  %2516 = vmatpush1.xpose.msra.mxu0 0.0
  %2517 = vmatprep.subr.mxu0 0.0
  %2518 = vmatpush1.xpose.msra.mxu0 0.0
  %2519 = vmatprep.subr.mxu0 0.0
  %2520 = vmatpush1.xpose.msra.mxu0 0.0
  %2521 = vmatprep.subr.mxu0 0.0
  %2522 = vmatpush1.xpose.msra.mxu0 0.0
  %2523 = vmatprep.subr.mxu0 0.0
  %2524 = vmatpush1.xpose.msra.mxu0 0.0
  %2525 = vmatprep.subr.mxu0 0.0
  %2526 = vmatpush1.xpose.msra.mxu0 0.0
  %2527 = vmatprep.subr.mxu0 0.0
  %2528 = vmatpush1.xpose.msra.mxu0 0.0
  %2529 = vmatprep.subr.mxu0 0.0
  %2530 = vmatpush1.xpose.msra.mxu0 0.0
  %2531 = vmatprep.subr.mxu0 0.0
  %2532 = vmatpush1.xpose.msra.mxu0 0.0
  %2533 = vmatprep.subr.mxu0 0.0
  %2534 = vmatpush1.xpose.msra.mxu0 0.0
  %2535 = vmatprep.subr.mxu0 0.0
  %2536 = vmatpush1.xpose.msra.mxu0 0.0
  %2537 = vmatprep.subr.mxu0 0.0
  %2538 = vmatpush1.xpose.msra.mxu0 0.0
  %2539 = vmatprep.subr.mxu0 0.0
  %2540 = vmatpush1.xpose.msra.mxu0 0.0
  %2541 = vmatprep.subr.mxu0 0.0
  %2542 = vmatpush1.xpose.msra.mxu0 0.0
  %2543 = vmatprep.subr.mxu0 0.0
  %2544 = vmatpush1.xpose.msra.mxu0 0.0
  %2545 = vmatprep.subr.mxu0 0.0
  %2546 = vmatpush1.xpose.msra.mxu0 0.0
  %2547 = vmatprep.subr.mxu0 0.0
  %2548 = vmatpush1.xpose.msra.mxu0 0.0
  %2549 = vmatprep.subr.mxu0 0.0
  %2550 = vmatpush1.xpose.msra.mxu0 0.0
  %2551 = vmatprep.subr.mxu0 0.0
  %2552 = vmatpush1.xpose.msra.mxu0 0.0
  %2553 = vmatprep.subr.mxu0 0.0
  %2554 = vmatpush1.xpose.msra.mxu0 0.0
  %2555 = vmatprep.subr.mxu0 0.0
  %2556 = vmatpush1.xpose.msra.mxu0 0.0
  %2557 = vmatprep.subr.mxu0 0.0
  %2558 = vmatpush1.xpose.msra.mxu0 0.0
  %2559 = vmatprep.mubr.f32.mxu0 0.0
  %2560 = vmatmul.mubr.f32.gmra.mrb[0].mxu0 %v2491
  %v2561 = vpop.f32.mrb[0].mxu0
  %v2562 = vadd.f32 0.0, %v2561
  %v2563 = vpop.f32.mrb[0].mxu0
  %2564 = vdwg.mxu0
  %v2565 = vmul.f32 %v2485, 0.35355338
  %v2566 = vmul.f32 %v2562, 0.35355338
  %v2567 = vadd.f32 %v2565, %v182
  %v2568 = vadd.f32 %v2566, %v183
  %v2569 = vsel %vm368, %v2567, -inf
  %2570 = vmax.xlane.f32.xlu0 %v2569
  %v2571 = vpop.xlane.xlu0 %2570
  %v2572 = vsel %vm368, %v2568, -inf
  %2573 = vmax.xlane.f32.xlu0 %v2572
  %v2574 = vpop.xlane.xlu0 %2573
  %v2575 = vsub.f32 %v2567, %v2571
  %v2576 = vsub.f32 %v2568, %v2574
  %v2577 = vmul.f32 %v2575, 1.442695
  %v2578 = vpow.pop %v2577
  %v2579 = vmul.f32 %v2576, 1.442695
  %v2580 = vpow.pop %v2579
  %v2581 = vsel %vm368, %v2578, 0.0
  %2582 = vadd.xlane.f32.xlu0 %v2581
  %v2583 = vpop.xlane.xlu0 %2582
  %v2584 = vsel %vm368, %v2580, 0.0
  %2585 = vadd.xlane.f32.xlu0 %v2584
  %v2586 = vpop.xlane.xlu0 %2585
  %v2587 = vrcp.pop %v2583
  %v2588 = vrcp.pop %v2586
  %v2589 = vmul.f32 %v2578, %v2587
  %v2590 = vmul.f32 %v2580, %v2588
  %2591 = vrot.lane.b32.xlu0 %v2403, 64
  %v2592 = vpop.permute.xlu0 %2591
  %v2595 = vsel %vm368, %v2589, 0
  %2597 = vmatprep.subr.mxu0 0.0
  %2598 = vmatpush1.msra.mxu0 %v2592
  %2599 = vmatprep.subr.mxu0 0.0
  %2600 = vmatpush1.msra.mxu0 0.0
  %2601 = vmatprep.subr.mxu0 0.0
  %2602 = vmatpush1.msra.mxu0 0.0
  %2603 = vmatprep.subr.mxu0 0.0
  %2604 = vmatpush1.msra.mxu0 0.0
  %2605 = vmatprep.subr.mxu0 0.0
  %2606 = vmatpush1.msra.mxu0 0.0
  %2607 = vmatprep.subr.mxu0 0.0
  %2608 = vmatpush1.msra.mxu0 0.0
  %2609 = vmatprep.subr.mxu0 0.0
  %2610 = vmatpush1.msra.mxu0 0.0
  %2611 = vmatprep.subr.mxu0 0.0
  %2612 = vmatpush1.msra.mxu0 0.0
  %2613 = vmatprep.subr.mxu0 0.0
  %2614 = vmatpush1.msra.mxu0 0.0
  %2615 = vmatprep.subr.mxu0 0.0
  %2616 = vmatpush1.msra.mxu0 0.0
  %2617 = vmatprep.subr.mxu0 0.0
  %2618 = vmatpush1.msra.mxu0 0.0
  %2619 = vmatprep.subr.mxu0 0.0
  %2620 = vmatpush1.msra.mxu0 0.0
  %2621 = vmatprep.subr.mxu0 0.0
  %2622 = vmatpush1.msra.mxu0 0.0
  %2623 = vmatprep.subr.mxu0 0.0
  %2624 = vmatpush1.msra.mxu0 0.0
  %2625 = vmatprep.subr.mxu0 0.0
  %2626 = vmatpush1.msra.mxu0 0.0
  %2627 = vmatprep.subr.mxu0 0.0
  %2628 = vmatpush1.msra.mxu0 0.0
  %2629 = vmatprep.subr.mxu0 0.0
  %2630 = vmatpush1.msra.mxu0 0.0
  %2631 = vmatprep.subr.mxu0 0.0
  %2632 = vmatpush1.msra.mxu0 0.0
  %2633 = vmatprep.subr.mxu0 0.0
  %2634 = vmatpush1.msra.mxu0 0.0
  %2635 = vmatprep.subr.mxu0 0.0
  %2636 = vmatpush1.msra.mxu0 0.0
  %2637 = vmatprep.subr.mxu0 0.0
  %2638 = vmatpush1.msra.mxu0 0.0
  %2639 = vmatprep.subr.mxu0 0.0
  %2640 = vmatpush1.msra.mxu0 0.0
  %2641 = vmatprep.subr.mxu0 0.0
  %2642 = vmatpush1.msra.mxu0 0.0
  %2643 = vmatprep.subr.mxu0 0.0
  %2644 = vmatpush1.msra.mxu0 0.0
  %2645 = vmatprep.subr.mxu0 0.0
  %2646 = vmatpush1.msra.mxu0 0.0
  %2647 = vmatprep.subr.mxu0 0.0
  %2648 = vmatpush1.msra.mxu0 0.0
  %2649 = vmatprep.subr.mxu0 0.0
  %2650 = vmatpush1.msra.mxu0 0.0
  %2651 = vmatprep.subr.mxu0 0.0
  %2652 = vmatpush1.msra.mxu0 0.0
  %2653 = vmatprep.subr.mxu0 0.0
  %2654 = vmatpush1.msra.mxu0 0.0
  %2655 = vmatprep.subr.mxu0 0.0
  %2656 = vmatpush1.msra.mxu0 0.0
  %2657 = vmatprep.subr.mxu0 0.0
  %2658 = vmatpush1.msra.mxu0 0.0
  %2659 = vmatprep.subr.mxu0 0.0
  %2660 = vmatpush1.msra.mxu0 0.0
  %2661 = vmatprep.mubr.f32.mxu0 0.0
  %2662 = vmatmul.mubr.f32.gmra.mrb[0].mxu0 %v2595
  %v2663 = vpop.f32.mrb[0].mxu0
  %v2664 = vadd.f32 0.0, %v2663
  %v2665 = vpop.f32.mrb[0].mxu0
  %2666 = vdwg.mxu0
  %2667 = vrot.lane.b32.xlu0 %v2408, 64
  %v2668 = vpop.permute.xlu0 %2667
  %v2671 = vsel %vm368, %v2590, 0
  %2673 = vmatprep.subr.mxu0 0.0
  %2674 = vmatpush1.msra.mxu0 %v2668
  %2675 = vmatprep.subr.mxu0 0.0
  %2676 = vmatpush1.msra.mxu0 0.0
  %2677 = vmatprep.subr.mxu0 0.0
  %2678 = vmatpush1.msra.mxu0 0.0
  %2679 = vmatprep.subr.mxu0 0.0
  %2680 = vmatpush1.msra.mxu0 0.0
  %2681 = vmatprep.subr.mxu0 0.0
  %2682 = vmatpush1.msra.mxu0 0.0
  %2683 = vmatprep.subr.mxu0 0.0
  %2684 = vmatpush1.msra.mxu0 0.0
  %2685 = vmatprep.subr.mxu0 0.0
  %2686 = vmatpush1.msra.mxu0 0.0
  %2687 = vmatprep.subr.mxu0 0.0
  %2688 = vmatpush1.msra.mxu0 0.0
  %2689 = vmatprep.subr.mxu0 0.0
  %2690 = vmatpush1.msra.mxu0 0.0
  %2691 = vmatprep.subr.mxu0 0.0
  %2692 = vmatpush1.msra.mxu0 0.0
  %2693 = vmatprep.subr.mxu0 0.0
  %2694 = vmatpush1.msra.mxu0 0.0
  %2695 = vmatprep.subr.mxu0 0.0
  %2696 = vmatpush1.msra.mxu0 0.0
  %2697 = vmatprep.subr.mxu0 0.0
  %2698 = vmatpush1.msra.mxu0 0.0
  %2699 = vmatprep.subr.mxu0 0.0
  %2700 = vmatpush1.msra.mxu0 0.0
  %2701 = vmatprep.subr.mxu0 0.0
  %2702 = vmatpush1.msra.mxu0 0.0
  %2703 = vmatprep.subr.mxu0 0.0
  %2704 = vmatpush1.msra.mxu0 0.0
  %2705 = vmatprep.subr.mxu0 0.0
  %2706 = vmatpush1.msra.mxu0 0.0
  %2707 = vmatprep.subr.mxu0 0.0
  %2708 = vmatpush1.msra.mxu0 0.0
  %2709 = vmatprep.subr.mxu0 0.0
  %2710 = vmatpush1.msra.mxu0 0.0
  %2711 = vmatprep.subr.mxu0 0.0
  %2712 = vmatpush1.msra.mxu0 0.0
  %2713 = vmatprep.subr.mxu0 0.0
  %2714 = vmatpush1.msra.mxu0 0.0
  %2715 = vmatprep.subr.mxu0 0.0
  %2716 = vmatpush1.msra.mxu0 0.0
  %2717 = vmatprep.subr.mxu0 0.0
  %2718 = vmatpush1.msra.mxu0 0.0
  %2719 = vmatprep.subr.mxu0 0.0
  %2720 = vmatpush1.msra.mxu0 0.0
  %2721 = vmatprep.subr.mxu0 0.0
  %2722 = vmatpush1.msra.mxu0 0.0
  %2723 = vmatprep.subr.mxu0 0.0
  %2724 = vmatpush1.msra.mxu0 0.0
  %2725 = vmatprep.subr.mxu0 0.0
  %2726 = vmatpush1.msra.mxu0 0.0
  %2727 = vmatprep.subr.mxu0 0.0
  %2728 = vmatpush1.msra.mxu0 0.0
  %2729 = vmatprep.subr.mxu0 0.0
  %2730 = vmatpush1.msra.mxu0 0.0
  %2731 = vmatprep.subr.mxu0 0.0
  %2732 = vmatpush1.msra.mxu0 0.0
  %2733 = vmatprep.subr.mxu0 0.0
  %2734 = vmatpush1.msra.mxu0 0.0
  %2735 = vmatprep.subr.mxu0 0.0
  %2736 = vmatpush1.msra.mxu0 0.0
  %2737 = vmatprep.mubr.f32.mxu0 0.0
  %2738 = vmatmul.mubr.f32.gmra.mrb[0].mxu0 %v2671
  %v2739 = vpop.f32.mrb[0].mxu0
  %v2740 = vadd.f32 0.0, %v2739
  %v2741 = vpop.f32.mrb[0].mxu0
  %2742 = vdwg.mxu0
  %2743 = vrot.lane.b32.xlu0 %v2403, 120
  %v2744 = vpop.permute.xlu0 %2743
  %2745 = vrot.lane.b32.xlu0 %v2403, 88
  %v2746 = vpop.permute.xlu0 %2745
  %v2747 = vsel %vm368, %v2744, 0
  %v2749 = vsel %vm368, %v2746, 0
  %2751 = vmatprep.subr.mxu0 0.0
  %2752 = vmatpush1.xpose.msra.mxu0 %v2749
  %2753 = vmatprep.subr.mxu0 0.0
  %2754 = vmatpush1.xpose.msra.mxu0 0.0
  %2755 = vmatprep.subr.mxu0 0.0
  %2756 = vmatpush1.xpose.msra.mxu0 0.0
  %2757 = vmatprep.subr.mxu0 0.0
  %2758 = vmatpush1.xpose.msra.mxu0 0.0
  %2759 = vmatprep.subr.mxu0 0.0
  %2760 = vmatpush1.xpose.msra.mxu0 0.0
  %2761 = vmatprep.subr.mxu0 0.0
  %2762 = vmatpush1.xpose.msra.mxu0 0.0
  %2763 = vmatprep.subr.mxu0 0.0
  %2764 = vmatpush1.xpose.msra.mxu0 0.0
  %2765 = vmatprep.subr.mxu0 0.0
  %2766 = vmatpush1.xpose.msra.mxu0 0.0
  %2767 = vmatprep.subr.mxu0 0.0
  %2768 = vmatpush1.xpose.msra.mxu0 0.0
  %2769 = vmatprep.subr.mxu0 0.0
  %2770 = vmatpush1.xpose.msra.mxu0 0.0
  %2771 = vmatprep.subr.mxu0 0.0
  %2772 = vmatpush1.xpose.msra.mxu0 0.0
  %2773 = vmatprep.subr.mxu0 0.0
  %2774 = vmatpush1.xpose.msra.mxu0 0.0
  %2775 = vmatprep.subr.mxu0 0.0
  %2776 = vmatpush1.xpose.msra.mxu0 0.0
  %2777 = vmatprep.subr.mxu0 0.0
  %2778 = vmatpush1.xpose.msra.mxu0 0.0
  %2779 = vmatprep.subr.mxu0 0.0
  %2780 = vmatpush1.xpose.msra.mxu0 0.0
  %2781 = vmatprep.subr.mxu0 0.0
  %2782 = vmatpush1.xpose.msra.mxu0 0.0
  %2783 = vmatprep.subr.mxu0 0.0
  %2784 = vmatpush1.xpose.msra.mxu0 0.0
  %2785 = vmatprep.subr.mxu0 0.0
  %2786 = vmatpush1.xpose.msra.mxu0 0.0
  %2787 = vmatprep.subr.mxu0 0.0
  %2788 = vmatpush1.xpose.msra.mxu0 0.0
  %2789 = vmatprep.subr.mxu0 0.0
  %2790 = vmatpush1.xpose.msra.mxu0 0.0
  %2791 = vmatprep.subr.mxu0 0.0
  %2792 = vmatpush1.xpose.msra.mxu0 0.0
  %2793 = vmatprep.subr.mxu0 0.0
  %2794 = vmatpush1.xpose.msra.mxu0 0.0
  %2795 = vmatprep.subr.mxu0 0.0
  %2796 = vmatpush1.xpose.msra.mxu0 0.0
  %2797 = vmatprep.subr.mxu0 0.0
  %2798 = vmatpush1.xpose.msra.mxu0 0.0
  %2799 = vmatprep.subr.mxu0 0.0
  %2800 = vmatpush1.xpose.msra.mxu0 0.0
  %2801 = vmatprep.subr.mxu0 0.0
  %2802 = vmatpush1.xpose.msra.mxu0 0.0
  %2803 = vmatprep.subr.mxu0 0.0
  %2804 = vmatpush1.xpose.msra.mxu0 0.0
  %2805 = vmatprep.subr.mxu0 0.0
  %2806 = vmatpush1.xpose.msra.mxu0 0.0
  %2807 = vmatprep.subr.mxu0 0.0
  %2808 = vmatpush1.xpose.msra.mxu0 0.0
  %2809 = vmatprep.subr.mxu0 0.0
  %2810 = vmatpush1.xpose.msra.mxu0 0.0
  %2811 = vmatprep.subr.mxu0 0.0
  %2812 = vmatpush1.xpose.msra.mxu0 0.0
  %2813 = vmatprep.subr.mxu0 0.0
  %2814 = vmatpush1.xpose.msra.mxu0 0.0
  %2815 = vmatprep.mubr.f32.mxu0 0.0
  %2816 = vmatmul.mubr.f32.gmra.mrb[0].mxu0 %v2747
  %v2817 = vpop.f32.mrb[0].mxu0
  %v2818 = vadd.f32 0.0, %v2817
  %v2819 = vpop.f32.mrb[0].mxu0
  %2820 = vdwg.mxu0
  %2821 = vrot.lane.b32.xlu0 %v2408, 120
  %v2822 = vpop.permute.xlu0 %2821
  %2823 = vrot.lane.b32.xlu0 %v2408, 88
  %v2824 = vpop.permute.xlu0 %2823
  %v2825 = vsel %vm368, %v2822, 0
  %v2827 = vsel %vm368, %v2824, 0
  %2829 = vmatprep.subr.mxu0 0.0
  %2830 = vmatpush1.xpose.msra.mxu0 %v2827
  %2831 = vmatprep.subr.mxu0 0.0
  %2832 = vmatpush1.xpose.msra.mxu0 0.0
  %2833 = vmatprep.subr.mxu0 0.0
  %2834 = vmatpush1.xpose.msra.mxu0 0.0
  %2835 = vmatprep.subr.mxu0 0.0
  %2836 = vmatpush1.xpose.msra.mxu0 0.0
  %2837 = vmatprep.subr.mxu0 0.0
  %2838 = vmatpush1.xpose.msra.mxu0 0.0
  %2839 = vmatprep.subr.mxu0 0.0
  %2840 = vmatpush1.xpose.msra.mxu0 0.0
  %2841 = vmatprep.subr.mxu0 0.0
  %2842 = vmatpush1.xpose.msra.mxu0 0.0
  %2843 = vmatprep.subr.mxu0 0.0
  %2844 = vmatpush1.xpose.msra.mxu0 0.0
  %2845 = vmatprep.subr.mxu0 0.0
  %2846 = vmatpush1.xpose.msra.mxu0 0.0
  %2847 = vmatprep.subr.mxu0 0.0
  %2848 = vmatpush1.xpose.msra.mxu0 0.0
  %2849 = vmatprep.subr.mxu0 0.0
  %2850 = vmatpush1.xpose.msra.mxu0 0.0
  %2851 = vmatprep.subr.mxu0 0.0
  %2852 = vmatpush1.xpose.msra.mxu0 0.0
  %2853 = vmatprep.subr.mxu0 0.0
  %2854 = vmatpush1.xpose.msra.mxu0 0.0
  %2855 = vmatprep.subr.mxu0 0.0
  %2856 = vmatpush1.xpose.msra.mxu0 0.0
  %2857 = vmatprep.subr.mxu0 0.0
  %2858 = vmatpush1.xpose.msra.mxu0 0.0
  %2859 = vmatprep.subr.mxu0 0.0
  %2860 = vmatpush1.xpose.msra.mxu0 0.0
  %2861 = vmatprep.subr.mxu0 0.0
  %2862 = vmatpush1.xpose.msra.mxu0 0.0
  %2863 = vmatprep.subr.mxu0 0.0
  %2864 = vmatpush1.xpose.msra.mxu0 0.0
  %2865 = vmatprep.subr.mxu0 0.0
  %2866 = vmatpush1.xpose.msra.mxu0 0.0
  %2867 = vmatprep.subr.mxu0 0.0
  %2868 = vmatpush1.xpose.msra.mxu0 0.0
  %2869 = vmatprep.subr.mxu0 0.0
  %2870 = vmatpush1.xpose.msra.mxu0 0.0
  %2871 = vmatprep.subr.mxu0 0.0
  %2872 = vmatpush1.xpose.msra.mxu0 0.0
  %2873 = vmatprep.subr.mxu0 0.0
  %2874 = vmatpush1.xpose.msra.mxu0 0.0
  %2875 = vmatprep.subr.mxu0 0.0
  %2876 = vmatpush1.xpose.msra.mxu0 0.0
  %2877 = vmatprep.subr.mxu0 0.0
  %2878 = vmatpush1.xpose.msra.mxu0 0.0
  %2879 = vmatprep.subr.mxu0 0.0
  %2880 = vmatpush1.xpose.msra.mxu0 0.0
  %2881 = vmatprep.subr.mxu0 0.0
  %2882 = vmatpush1.xpose.msra.mxu0 0.0
  %2883 = vmatprep.subr.mxu0 0.0
  %2884 = vmatpush1.xpose.msra.mxu0 0.0
  %2885 = vmatprep.subr.mxu0 0.0
  %2886 = vmatpush1.xpose.msra.mxu0 0.0
  %2887 = vmatprep.subr.mxu0 0.0
  %2888 = vmatpush1.xpose.msra.mxu0 0.0
  %2889 = vmatprep.subr.mxu0 0.0
  %2890 = vmatpush1.xpose.msra.mxu0 0.0
  %2891 = vmatprep.subr.mxu0 0.0
  %2892 = vmatpush1.xpose.msra.mxu0 0.0
  %2893 = vmatprep.mubr.f32.mxu0 0.0
  %2894 = vmatmul.mubr.f32.gmra.mrb[0].mxu0 %v2825
  %v2895 = vpop.f32.mrb[0].mxu0
  %v2896 = vadd.f32 0.0, %v2895
  %v2897 = vpop.f32.mrb[0].mxu0
  %2898 = vdwg.mxu0
  %v2899 = vmul.f32 %v2818, 0.35355338
  %v2900 = vmul.f32 %v2896, 0.35355338
  %v2901 = vadd.f32 %v2899, %v182
  %v2902 = vadd.f32 %v2900, %v183
  %v2903 = vsel %vm368, %v2901, -inf
  %2904 = vmax.xlane.f32.xlu0 %v2903
  %v2905 = vpop.xlane.xlu0 %2904
  %v2906 = vsel %vm368, %v2902, -inf
  %2907 = vmax.xlane.f32.xlu0 %v2906
  %v2908 = vpop.xlane.xlu0 %2907
  %v2909 = vsub.f32 %v2901, %v2905
  %v2910 = vsub.f32 %v2902, %v2908
  %v2911 = vmul.f32 %v2909, 1.442695
  %v2912 = vpow.pop %v2911
  %v2913 = vmul.f32 %v2910, 1.442695
  %v2914 = vpow.pop %v2913
  %v2915 = vsel %vm368, %v2912, 0.0
  %2916 = vadd.xlane.f32.xlu0 %v2915
  %v2917 = vpop.xlane.xlu0 %2916
  %v2918 = vsel %vm368, %v2914, 0.0
  %2919 = vadd.xlane.f32.xlu0 %v2918
  %v2920 = vpop.xlane.xlu0 %2919
  %v2921 = vrcp.pop %v2917
  %v2922 = vrcp.pop %v2920
  %v2923 = vmul.f32 %v2912, %v2921
  %v2924 = vmul.f32 %v2914, %v2922
  %2925 = vrot.lane.b32.xlu0 %v2403, 56
  %v2926 = vpop.permute.xlu0 %2925
  %v2929 = vsel %vm368, %v2923, 0
  %2931 = vmatprep.subr.mxu0 0.0
  %2932 = vmatpush1.msra.mxu0 %v2926
  %2933 = vmatprep.subr.mxu0 0.0
  %2934 = vmatpush1.msra.mxu0 0.0
  %2935 = vmatprep.subr.mxu0 0.0
  %2936 = vmatpush1.msra.mxu0 0.0
  %2937 = vmatprep.subr.mxu0 0.0
  %2938 = vmatpush1.msra.mxu0 0.0
  %2939 = vmatprep.subr.mxu0 0.0
  %2940 = vmatpush1.msra.mxu0 0.0
  %2941 = vmatprep.subr.mxu0 0.0
  %2942 = vmatpush1.msra.mxu0 0.0
  %2943 = vmatprep.subr.mxu0 0.0
  %2944 = vmatpush1.msra.mxu0 0.0
  %2945 = vmatprep.subr.mxu0 0.0
  %2946 = vmatpush1.msra.mxu0 0.0
  %2947 = vmatprep.subr.mxu0 0.0
  %2948 = vmatpush1.msra.mxu0 0.0
  %2949 = vmatprep.subr.mxu0 0.0
  %2950 = vmatpush1.msra.mxu0 0.0
  %2951 = vmatprep.subr.mxu0 0.0
  %2952 = vmatpush1.msra.mxu0 0.0
  %2953 = vmatprep.subr.mxu0 0.0
  %2954 = vmatpush1.msra.mxu0 0.0
  %2955 = vmatprep.subr.mxu0 0.0
  %2956 = vmatpush1.msra.mxu0 0.0
  %2957 = vmatprep.subr.mxu0 0.0
  %2958 = vmatpush1.msra.mxu0 0.0
  %2959 = vmatprep.subr.mxu0 0.0
  %2960 = vmatpush1.msra.mxu0 0.0
  %2961 = vmatprep.subr.mxu0 0.0
  %2962 = vmatpush1.msra.mxu0 0.0
  %2963 = vmatprep.subr.mxu0 0.0
  %2964 = vmatpush1.msra.mxu0 0.0
  %2965 = vmatprep.subr.mxu0 0.0
  %2966 = vmatpush1.msra.mxu0 0.0
  %2967 = vmatprep.subr.mxu0 0.0
  %2968 = vmatpush1.msra.mxu0 0.0
  %2969 = vmatprep.subr.mxu0 0.0
  %2970 = vmatpush1.msra.mxu0 0.0
  %2971 = vmatprep.subr.mxu0 0.0
  %2972 = vmatpush1.msra.mxu0 0.0
  %2973 = vmatprep.subr.mxu0 0.0
  %2974 = vmatpush1.msra.mxu0 0.0
  %2975 = vmatprep.subr.mxu0 0.0
  %2976 = vmatpush1.msra.mxu0 0.0
  %2977 = vmatprep.subr.mxu0 0.0
  %2978 = vmatpush1.msra.mxu0 0.0
  %2979 = vmatprep.subr.mxu0 0.0
  %2980 = vmatpush1.msra.mxu0 0.0
  %2981 = vmatprep.subr.mxu0 0.0
  %2982 = vmatpush1.msra.mxu0 0.0
  %2983 = vmatprep.subr.mxu0 0.0
  %2984 = vmatpush1.msra.mxu0 0.0
  %2985 = vmatprep.subr.mxu0 0.0
  %2986 = vmatpush1.msra.mxu0 0.0
  %2987 = vmatprep.subr.mxu0 0.0
  %2988 = vmatpush1.msra.mxu0 0.0
  %2989 = vmatprep.subr.mxu0 0.0
  %2990 = vmatpush1.msra.mxu0 0.0
  %2991 = vmatprep.subr.mxu0 0.0
  %2992 = vmatpush1.msra.mxu0 0.0
  %2993 = vmatprep.subr.mxu0 0.0
  %2994 = vmatpush1.msra.mxu0 0.0
  %2995 = vmatprep.mubr.f32.mxu0 0.0
  %2996 = vmatmul.mubr.f32.gmra.mrb[0].mxu0 %v2929
  %v2997 = vpop.f32.mrb[0].mxu0
  %v2998 = vadd.f32 0.0, %v2997
  %v2999 = vpop.f32.mrb[0].mxu0
  %3000 = vdwg.mxu0
  %3001 = vrot.lane.b32.xlu0 %v2408, 56
  %v3002 = vpop.permute.xlu0 %3001
  %v3005 = vsel %vm368, %v2924, 0
  %3007 = vmatprep.subr.mxu0 0.0
  %3008 = vmatpush1.msra.mxu0 %v3002
  %3009 = vmatprep.subr.mxu0 0.0
  %3010 = vmatpush1.msra.mxu0 0.0
  %3011 = vmatprep.subr.mxu0 0.0
  %3012 = vmatpush1.msra.mxu0 0.0
  %3013 = vmatprep.subr.mxu0 0.0
  %3014 = vmatpush1.msra.mxu0 0.0
  %3015 = vmatprep.subr.mxu0 0.0
  %3016 = vmatpush1.msra.mxu0 0.0
  %3017 = vmatprep.subr.mxu0 0.0
  %3018 = vmatpush1.msra.mxu0 0.0
  %3019 = vmatprep.subr.mxu0 0.0
  %3020 = vmatpush1.msra.mxu0 0.0
  %3021 = vmatprep.subr.mxu0 0.0
  %3022 = vmatpush1.msra.mxu0 0.0
  %3023 = vmatprep.subr.mxu0 0.0
  %3024 = vmatpush1.msra.mxu0 0.0
  %3025 = vmatprep.subr.mxu0 0.0
  %3026 = vmatpush1.msra.mxu0 0.0
  %3027 = vmatprep.subr.mxu0 0.0
  %3028 = vmatpush1.msra.mxu0 0.0
  %3029 = vmatprep.subr.mxu0 0.0
  %3030 = vmatpush1.msra.mxu0 0.0
  %3031 = vmatprep.subr.mxu0 0.0
  %3032 = vmatpush1.msra.mxu0 0.0
  %3033 = vmatprep.subr.mxu0 0.0
  %3034 = vmatpush1.msra.mxu0 0.0
  %3035 = vmatprep.subr.mxu0 0.0
  %3036 = vmatpush1.msra.mxu0 0.0
  %3037 = vmatprep.subr.mxu0 0.0
  %3038 = vmatpush1.msra.mxu0 0.0
  %3039 = vmatprep.subr.mxu0 0.0
  %3040 = vmatpush1.msra.mxu0 0.0
  %3041 = vmatprep.subr.mxu0 0.0
  %3042 = vmatpush1.msra.mxu0 0.0
  %3043 = vmatprep.subr.mxu0 0.0
  %3044 = vmatpush1.msra.mxu0 0.0
  %3045 = vmatprep.subr.mxu0 0.0
  %3046 = vmatpush1.msra.mxu0 0.0
  %3047 = vmatprep.subr.mxu0 0.0
  %3048 = vmatpush1.msra.mxu0 0.0
  %3049 = vmatprep.subr.mxu0 0.0
  %3050 = vmatpush1.msra.mxu0 0.0
  %3051 = vmatprep.subr.mxu0 0.0
  %3052 = vmatpush1.msra.mxu0 0.0
  %3053 = vmatprep.subr.mxu0 0.0
  %3054 = vmatpush1.msra.mxu0 0.0
  %3055 = vmatprep.subr.mxu0 0.0
  %3056 = vmatpush1.msra.mxu0 0.0
  %3057 = vmatprep.subr.mxu0 0.0
  %3058 = vmatpush1.msra.mxu0 0.0
  %3059 = vmatprep.subr.mxu0 0.0
  %3060 = vmatpush1.msra.mxu0 0.0
  %3061 = vmatprep.subr.mxu0 0.0
  %3062 = vmatpush1.msra.mxu0 0.0
  %3063 = vmatprep.subr.mxu0 0.0
  %3064 = vmatpush1.msra.mxu0 0.0
  %3065 = vmatprep.subr.mxu0 0.0
  %3066 = vmatpush1.msra.mxu0 0.0
  %3067 = vmatprep.subr.mxu0 0.0
  %3068 = vmatpush1.msra.mxu0 0.0
  %3069 = vmatprep.subr.mxu0 0.0
  %3070 = vmatpush1.msra.mxu0 0.0
  %3071 = vmatprep.mubr.f32.mxu0 0.0
  %3072 = vmatmul.mubr.f32.gmra.mrb[0].mxu0 %v3005
  %v3073 = vpop.f32.mrb[0].mxu0
  %v3074 = vadd.f32 0.0, %v3073
  %v3075 = vpop.f32.mrb[0].mxu0
  %3076 = vdwg.mxu0
  %v3078 = vsel %vm368, %v2998, 0
  %v3081 = vsel %vm368, %v3074, 0
  %3083 = vmatprep.subr.mxu0 0.0
  %3084 = vmatpush1.msra.mxu0 %v224
  %3085 = vmatprep.subr.mxu0 0.0
  %3086 = vmatpush1.msra.mxu0 0.0
  %3087 = vmatprep.subr.mxu0 0.0
  %3088 = vmatpush1.msra.mxu0 0.0
  %3089 = vmatprep.subr.mxu0 0.0
  %3090 = vmatpush1.msra.mxu0 0.0
  %3091 = vmatprep.subr.mxu0 0.0
  %3092 = vmatpush1.msra.mxu0 0.0
  %3093 = vmatprep.subr.mxu0 0.0
  %3094 = vmatpush1.msra.mxu0 0.0
  %3095 = vmatprep.subr.mxu0 0.0
  %3096 = vmatpush1.msra.mxu0 0.0
  %3097 = vmatprep.subr.mxu0 0.0
  %3098 = vmatpush1.msra.mxu0 0.0
  %3099 = vmatprep.subr.mxu0 0.0
  %3100 = vmatpush1.msra.mxu0 0.0
  %3101 = vmatprep.subr.mxu0 0.0
  %3102 = vmatpush1.msra.mxu0 0.0
  %3103 = vmatprep.subr.mxu0 0.0
  %3104 = vmatpush1.msra.mxu0 0.0
  %3105 = vmatprep.subr.mxu0 0.0
  %3106 = vmatpush1.msra.mxu0 0.0
  %3107 = vmatprep.subr.mxu0 0.0
  %3108 = vmatpush1.msra.mxu0 0.0
  %3109 = vmatprep.subr.mxu0 0.0
  %3110 = vmatpush1.msra.mxu0 0.0
  %3111 = vmatprep.subr.mxu0 0.0
  %3112 = vmatpush1.msra.mxu0 0.0
  %3113 = vmatprep.subr.mxu0 0.0
  %3114 = vmatpush1.msra.mxu0 0.0
  %3115 = vmatprep.subr.mxu0 0.0
  %3116 = vmatpush1.msra.mxu0 0.0
  %3117 = vmatprep.subr.mxu0 0.0
  %3118 = vmatpush1.msra.mxu0 0.0
  %3119 = vmatprep.subr.mxu0 0.0
  %3120 = vmatpush1.msra.mxu0 0.0
  %3121 = vmatprep.subr.mxu0 0.0
  %3122 = vmatpush1.msra.mxu0 0.0
  %3123 = vmatprep.subr.mxu0 0.0
  %3124 = vmatpush1.msra.mxu0 0.0
  %3125 = vmatprep.subr.mxu0 0.0
  %3126 = vmatpush1.msra.mxu0 0.0
  %3127 = vmatprep.subr.mxu0 0.0
  %3128 = vmatpush1.msra.mxu0 0.0
  %3129 = vmatprep.subr.mxu0 0.0
  %3130 = vmatpush1.msra.mxu0 0.0
  %3131 = vmatprep.subr.mxu0 0.0
  %3132 = vmatpush1.msra.mxu0 0.0
  %3133 = vmatprep.subr.mxu0 0.0
  %3134 = vmatpush1.msra.mxu0 0.0
  %3135 = vmatprep.subr.mxu0 0.0
  %3136 = vmatpush1.msra.mxu0 0.0
  %3137 = vmatprep.subr.mxu0 0.0
  %3138 = vmatpush1.msra.mxu0 0.0
  %3139 = vmatprep.subr.mxu0 0.0
  %3140 = vmatpush1.msra.mxu0 0.0
  %3141 = vmatprep.subr.mxu0 0.0
  %3142 = vmatpush1.msra.mxu0 0.0
  %3143 = vmatprep.subr.mxu0 0.0
  %3144 = vmatpush1.msra.mxu0 0.0
  %3145 = vmatprep.subr.mxu0 0.0
  %3146 = vmatpush1.msra.mxu0 0.0
  %3147 = vmatprep.mubr.f32.mxu0 0.0
  %3148 = vmatmul.mubr.f32.gmra.mrb[0].mxu0 %v3078
  %v3149 = vpop.f32.mrb[0].mxu0
  %v3150 = vadd.f32 0.0, %v3149
  %v3151 = vpop.f32.mrb[0].mxu0
  %3152 = vmatprep.mubr.f32.mxu0 0.0
  %3153 = vmatmul.mubr.f32.gmra.mrb[0].mxu0 %v3081
  %v3154 = vpop.f32.mrb[0].mxu0
  %v3155 = vadd.f32 0.0, %v3154
  %v3156 = vpop.f32.mrb[0].mxu0
  %3157 = vdwg.mxu0
  %v3159 = vsel %vm368, %v2664, 0
  %v3162 = vsel %vm368, %v2740, 0
  %3164 = vmatprep.subr.mxu0 0.0
  %3165 = vmatpush1.msra.mxu0 %v223
  %3166 = vmatprep.subr.mxu0 0.0
  %3167 = vmatpush1.msra.mxu0 0.0
  %3168 = vmatprep.subr.mxu0 0.0
  %3169 = vmatpush1.msra.mxu0 0.0
  %3170 = vmatprep.subr.mxu0 0.0
  %3171 = vmatpush1.msra.mxu0 0.0
  %3172 = vmatprep.subr.mxu0 0.0
  %3173 = vmatpush1.msra.mxu0 0.0
  %3174 = vmatprep.subr.mxu0 0.0
  %3175 = vmatpush1.msra.mxu0 0.0
  %3176 = vmatprep.subr.mxu0 0.0
  %3177 = vmatpush1.msra.mxu0 0.0
  %3178 = vmatprep.subr.mxu0 0.0
  %3179 = vmatpush1.msra.mxu0 0.0
  %3180 = vmatprep.subr.mxu0 0.0
  %3181 = vmatpush1.msra.mxu0 0.0
  %3182 = vmatprep.subr.mxu0 0.0
  %3183 = vmatpush1.msra.mxu0 0.0
  %3184 = vmatprep.subr.mxu0 0.0
  %3185 = vmatpush1.msra.mxu0 0.0
  %3186 = vmatprep.subr.mxu0 0.0
  %3187 = vmatpush1.msra.mxu0 0.0
  %3188 = vmatprep.subr.mxu0 0.0
  %3189 = vmatpush1.msra.mxu0 0.0
  %3190 = vmatprep.subr.mxu0 0.0
  %3191 = vmatpush1.msra.mxu0 0.0
  %3192 = vmatprep.subr.mxu0 0.0
  %3193 = vmatpush1.msra.mxu0 0.0
  %3194 = vmatprep.subr.mxu0 0.0
  %3195 = vmatpush1.msra.mxu0 0.0
  %3196 = vmatprep.subr.mxu0 0.0
  %3197 = vmatpush1.msra.mxu0 0.0
  %3198 = vmatprep.subr.mxu0 0.0
  %3199 = vmatpush1.msra.mxu0 0.0
  %3200 = vmatprep.subr.mxu0 0.0
  %3201 = vmatpush1.msra.mxu0 0.0
  %3202 = vmatprep.subr.mxu0 0.0
  %3203 = vmatpush1.msra.mxu0 0.0
  %3204 = vmatprep.subr.mxu0 0.0
  %3205 = vmatpush1.msra.mxu0 0.0
  %3206 = vmatprep.subr.mxu0 0.0
  %3207 = vmatpush1.msra.mxu0 0.0
  %3208 = vmatprep.subr.mxu0 0.0
  %3209 = vmatpush1.msra.mxu0 0.0
  %3210 = vmatprep.subr.mxu0 0.0
  %3211 = vmatpush1.msra.mxu0 0.0
  %3212 = vmatprep.subr.mxu0 0.0
  %3213 = vmatpush1.msra.mxu0 0.0
  %3214 = vmatprep.subr.mxu0 0.0
  %3215 = vmatpush1.msra.mxu0 0.0
  %3216 = vmatprep.subr.mxu0 0.0
  %3217 = vmatpush1.msra.mxu0 0.0
  %3218 = vmatprep.subr.mxu0 0.0
  %3219 = vmatpush1.msra.mxu0 0.0
  %3220 = vmatprep.subr.mxu0 0.0
  %3221 = vmatpush1.msra.mxu0 0.0
  %3222 = vmatprep.subr.mxu0 0.0
  %3223 = vmatpush1.msra.mxu0 0.0
  %3224 = vmatprep.subr.mxu0 0.0
  %3225 = vmatpush1.msra.mxu0 0.0
  %3226 = vmatprep.subr.mxu0 0.0
  %3227 = vmatpush1.msra.mxu0 0.0
  %3228 = vmatprep.mubr.f32.mxu0 0.0
  %3229 = vmatmul.mubr.f32.gmra.mrb[0].mxu0 %v3159
  %v3230 = vpop.f32.mrb[0].mxu0
  %v3231 = vadd.f32 %v3150, %v3230
  %v3232 = vpop.f32.mrb[0].mxu0
  %3233 = vmatprep.mubr.f32.mxu0 0.0
  %3234 = vmatmul.mubr.f32.gmra.mrb[0].mxu0 %v3162
  %v3235 = vpop.f32.mrb[0].mxu0
  %v3236 = vadd.f32 %v3155, %v3235
  %v3237 = vpop.f32.mrb[0].mxu0
  %3238 = vdwg.mxu0
  %3239 = vrot.lane.b32.xlu0 %v2403, 112
  %v3240 = vpop.permute.xlu0 %3239
  %3241 = vrot.lane.b32.xlu0 %v2403, 80
  %v3242 = vpop.permute.xlu0 %3241
  %v3243 = vsel %vm368, %v3240, 0
  %v3245 = vsel %vm368, %v3242, 0
  %3247 = vmatprep.subr.mxu0 0.0
  %3248 = vmatpush1.xpose.msra.mxu0 %v3245
  %3249 = vmatprep.subr.mxu0 0.0
  %3250 = vmatpush1.xpose.msra.mxu0 0.0
  %3251 = vmatprep.subr.mxu0 0.0
  %3252 = vmatpush1.xpose.msra.mxu0 0.0
  %3253 = vmatprep.subr.mxu0 0.0
  %3254 = vmatpush1.xpose.msra.mxu0 0.0
  %3255 = vmatprep.subr.mxu0 0.0
  %3256 = vmatpush1.xpose.msra.mxu0 0.0
  %3257 = vmatprep.subr.mxu0 0.0
  %3258 = vmatpush1.xpose.msra.mxu0 0.0
  %3259 = vmatprep.subr.mxu0 0.0
  %3260 = vmatpush1.xpose.msra.mxu0 0.0
  %3261 = vmatprep.subr.mxu0 0.0
  %3262 = vmatpush1.xpose.msra.mxu0 0.0
  %3263 = vmatprep.subr.mxu0 0.0
  %3264 = vmatpush1.xpose.msra.mxu0 0.0
  %3265 = vmatprep.subr.mxu0 0.0
  %3266 = vmatpush1.xpose.msra.mxu0 0.0
  %3267 = vmatprep.subr.mxu0 0.0
  %3268 = vmatpush1.xpose.msra.mxu0 0.0
  %3269 = vmatprep.subr.mxu0 0.0
  %3270 = vmatpush1.xpose.msra.mxu0 0.0
  %3271 = vmatprep.subr.mxu0 0.0
  %3272 = vmatpush1.xpose.msra.mxu0 0.0
  %3273 = vmatprep.subr.mxu0 0.0
  %3274 = vmatpush1.xpose.msra.mxu0 0.0
  %3275 = vmatprep.subr.mxu0 0.0
  %3276 = vmatpush1.xpose.msra.mxu0 0.0
  %3277 = vmatprep.subr.mxu0 0.0
  %3278 = vmatpush1.xpose.msra.mxu0 0.0
  %3279 = vmatprep.subr.mxu0 0.0
  %3280 = vmatpush1.xpose.msra.mxu0 0.0
  %3281 = vmatprep.subr.mxu0 0.0
  %3282 = vmatpush1.xpose.msra.mxu0 0.0
  %3283 = vmatprep.subr.mxu0 0.0
  %3284 = vmatpush1.xpose.msra.mxu0 0.0
  %3285 = vmatprep.subr.mxu0 0.0
  %3286 = vmatpush1.xpose.msra.mxu0 0.0
  %3287 = vmatprep.subr.mxu0 0.0
  %3288 = vmatpush1.xpose.msra.mxu0 0.0
  %3289 = vmatprep.subr.mxu0 0.0
  %3290 = vmatpush1.xpose.msra.mxu0 0.0
  %3291 = vmatprep.subr.mxu0 0.0
  %3292 = vmatpush1.xpose.msra.mxu0 0.0
  %3293 = vmatprep.subr.mxu0 0.0
  %3294 = vmatpush1.xpose.msra.mxu0 0.0
  %3295 = vmatprep.subr.mxu0 0.0
  %3296 = vmatpush1.xpose.msra.mxu0 0.0
  %3297 = vmatprep.subr.mxu0 0.0
  %3298 = vmatpush1.xpose.msra.mxu0 0.0
  %3299 = vmatprep.subr.mxu0 0.0
  %3300 = vmatpush1.xpose.msra.mxu0 0.0
  %3301 = vmatprep.subr.mxu0 0.0
  %3302 = vmatpush1.xpose.msra.mxu0 0.0
  %3303 = vmatprep.subr.mxu0 0.0
  %3304 = vmatpush1.xpose.msra.mxu0 0.0
  %3305 = vmatprep.subr.mxu0 0.0
  %3306 = vmatpush1.xpose.msra.mxu0 0.0
  %3307 = vmatprep.subr.mxu0 0.0
  %3308 = vmatpush1.xpose.msra.mxu0 0.0
  %3309 = vmatprep.subr.mxu0 0.0
  %3310 = vmatpush1.xpose.msra.mxu0 0.0
  %3311 = vmatprep.mubr.f32.mxu0 0.0
  %3312 = vmatmul.mubr.f32.gmra.mrb[0].mxu0 %v3243
  %v3313 = vpop.f32.mrb[0].mxu0
  %v3314 = vadd.f32 0.0, %v3313
  %v3315 = vpop.f32.mrb[0].mxu0
  %3316 = vdwg.mxu0
  %3317 = vrot.lane.b32.xlu0 %v2408, 112
  %v3318 = vpop.permute.xlu0 %3317
  %3319 = vrot.lane.b32.xlu0 %v2408, 80
  %v3320 = vpop.permute.xlu0 %3319
  %v3321 = vsel %vm368, %v3318, 0
  %v3323 = vsel %vm368, %v3320, 0
  %3325 = vmatprep.subr.mxu0 0.0
  %3326 = vmatpush1.xpose.msra.mxu0 %v3323
  %3327 = vmatprep.subr.mxu0 0.0
  %3328 = vmatpush1.xpose.msra.mxu0 0.0
  %3329 = vmatprep.subr.mxu0 0.0
  %3330 = vmatpush1.xpose.msra.mxu0 0.0
  %3331 = vmatprep.subr.mxu0 0.0
  %3332 = vmatpush1.xpose.msra.mxu0 0.0
  %3333 = vmatprep.subr.mxu0 0.0
  %3334 = vmatpush1.xpose.msra.mxu0 0.0
  %3335 = vmatprep.subr.mxu0 0.0
  %3336 = vmatpush1.xpose.msra.mxu0 0.0
  %3337 = vmatprep.subr.mxu0 0.0
  %3338 = vmatpush1.xpose.msra.mxu0 0.0
  %3339 = vmatprep.subr.mxu0 0.0
  %3340 = vmatpush1.xpose.msra.mxu0 0.0
  %3341 = vmatprep.subr.mxu0 0.0
  %3342 = vmatpush1.xpose.msra.mxu0 0.0
  %3343 = vmatprep.subr.mxu0 0.0
  %3344 = vmatpush1.xpose.msra.mxu0 0.0
  %3345 = vmatprep.subr.mxu0 0.0
  %3346 = vmatpush1.xpose.msra.mxu0 0.0
  %3347 = vmatprep.subr.mxu0 0.0
  %3348 = vmatpush1.xpose.msra.mxu0 0.0
  %3349 = vmatprep.subr.mxu0 0.0
  %3350 = vmatpush1.xpose.msra.mxu0 0.0
  %3351 = vmatprep.subr.mxu0 0.0
  %3352 = vmatpush1.xpose.msra.mxu0 0.0
  %3353 = vmatprep.subr.mxu0 0.0
  %3354 = vmatpush1.xpose.msra.mxu0 0.0
  %3355 = vmatprep.subr.mxu0 0.0
  %3356 = vmatpush1.xpose.msra.mxu0 0.0
  %3357 = vmatprep.subr.mxu0 0.0
  %3358 = vmatpush1.xpose.msra.mxu0 0.0
  %3359 = vmatprep.subr.mxu0 0.0
  %3360 = vmatpush1.xpose.msra.mxu0 0.0
  %3361 = vmatprep.subr.mxu0 0.0
  %3362 = vmatpush1.xpose.msra.mxu0 0.0
  %3363 = vmatprep.subr.mxu0 0.0
  %3364 = vmatpush1.xpose.msra.mxu0 0.0
  %3365 = vmatprep.subr.mxu0 0.0
  %3366 = vmatpush1.xpose.msra.mxu0 0.0
  %3367 = vmatprep.subr.mxu0 0.0
  %3368 = vmatpush1.xpose.msra.mxu0 0.0
  %3369 = vmatprep.subr.mxu0 0.0
  %3370 = vmatpush1.xpose.msra.mxu0 0.0
  %3371 = vmatprep.subr.mxu0 0.0
  %3372 = vmatpush1.xpose.msra.mxu0 0.0
  %3373 = vmatprep.subr.mxu0 0.0
  %3374 = vmatpush1.xpose.msra.mxu0 0.0
  %3375 = vmatprep.subr.mxu0 0.0
  %3376 = vmatpush1.xpose.msra.mxu0 0.0
  %3377 = vmatprep.subr.mxu0 0.0
  %3378 = vmatpush1.xpose.msra.mxu0 0.0
  %3379 = vmatprep.subr.mxu0 0.0
  %3380 = vmatpush1.xpose.msra.mxu0 0.0
  %3381 = vmatprep.subr.mxu0 0.0
  %3382 = vmatpush1.xpose.msra.mxu0 0.0
  %3383 = vmatprep.subr.mxu0 0.0
  %3384 = vmatpush1.xpose.msra.mxu0 0.0
  %3385 = vmatprep.subr.mxu0 0.0
  %3386 = vmatpush1.xpose.msra.mxu0 0.0
  %3387 = vmatprep.subr.mxu0 0.0
  %3388 = vmatpush1.xpose.msra.mxu0 0.0
  %3389 = vmatprep.mubr.f32.mxu0 0.0
  %3390 = vmatmul.mubr.f32.gmra.mrb[0].mxu0 %v3321
  %v3391 = vpop.f32.mrb[0].mxu0
  %v3392 = vadd.f32 0.0, %v3391
  %v3393 = vpop.f32.mrb[0].mxu0
  %3394 = vdwg.mxu0
  %v3395 = vmul.f32 %v3314, 0.35355338
  %v3396 = vmul.f32 %v3392, 0.35355338
  %v3397 = vadd.f32 %v3395, %v182
  %v3398 = vadd.f32 %v3396, %v183
  %v3399 = vsel %vm368, %v3397, -inf
  %3400 = vmax.xlane.f32.xlu0 %v3399
  %v3401 = vpop.xlane.xlu0 %3400
  %v3402 = vsel %vm368, %v3398, -inf
  %3403 = vmax.xlane.f32.xlu0 %v3402
  %v3404 = vpop.xlane.xlu0 %3403
  %v3405 = vsub.f32 %v3397, %v3401
  %v3406 = vsub.f32 %v3398, %v3404
  %v3407 = vmul.f32 %v3405, 1.442695
  %v3408 = vpow.pop %v3407
  %v3409 = vmul.f32 %v3406, 1.442695
  %v3410 = vpow.pop %v3409
  %v3411 = vsel %vm368, %v3408, 0.0
  %3412 = vadd.xlane.f32.xlu0 %v3411
  %v3413 = vpop.xlane.xlu0 %3412
  %v3414 = vsel %vm368, %v3410, 0.0
  %3415 = vadd.xlane.f32.xlu0 %v3414
  %v3416 = vpop.xlane.xlu0 %3415
  %v3417 = vrcp.pop %v3413
  %v3418 = vrcp.pop %v3416
  %v3419 = vmul.f32 %v3408, %v3417
  %v3420 = vmul.f32 %v3410, %v3418
  %3421 = vrot.lane.b32.xlu0 %v2403, 48
  %v3422 = vpop.permute.xlu0 %3421
  %v3425 = vsel %vm368, %v3419, 0
  %3427 = vmatprep.subr.mxu0 0.0
  %3428 = vmatpush1.msra.mxu0 %v3422
  %3429 = vmatprep.subr.mxu0 0.0
  %3430 = vmatpush1.msra.mxu0 0.0
  %3431 = vmatprep.subr.mxu0 0.0
  %3432 = vmatpush1.msra.mxu0 0.0
  %3433 = vmatprep.subr.mxu0 0.0
  %3434 = vmatpush1.msra.mxu0 0.0
  %3435 = vmatprep.subr.mxu0 0.0
  %3436 = vmatpush1.msra.mxu0 0.0
  %3437 = vmatprep.subr.mxu0 0.0
  %3438 = vmatpush1.msra.mxu0 0.0
  %3439 = vmatprep.subr.mxu0 0.0
  %3440 = vmatpush1.msra.mxu0 0.0
  %3441 = vmatprep.subr.mxu0 0.0
  %3442 = vmatpush1.msra.mxu0 0.0
  %3443 = vmatprep.subr.mxu0 0.0
  %3444 = vmatpush1.msra.mxu0 0.0
  %3445 = vmatprep.subr.mxu0 0.0
  %3446 = vmatpush1.msra.mxu0 0.0
  %3447 = vmatprep.subr.mxu0 0.0
  %3448 = vmatpush1.msra.mxu0 0.0
  %3449 = vmatprep.subr.mxu0 0.0
  %3450 = vmatpush1.msra.mxu0 0.0
  %3451 = vmatprep.subr.mxu0 0.0
  %3452 = vmatpush1.msra.mxu0 0.0
  %3453 = vmatprep.subr.mxu0 0.0
  %3454 = vmatpush1.msra.mxu0 0.0
  %3455 = vmatprep.subr.mxu0 0.0
  %3456 = vmatpush1.msra.mxu0 0.0
  %3457 = vmatprep.subr.mxu0 0.0
  %3458 = vmatpush1.msra.mxu0 0.0
  %3459 = vmatprep.subr.mxu0 0.0
  %3460 = vmatpush1.msra.mxu0 0.0
  %3461 = vmatprep.subr.mxu0 0.0
  %3462 = vmatpush1.msra.mxu0 0.0
  %3463 = vmatprep.subr.mxu0 0.0
  %3464 = vmatpush1.msra.mxu0 0.0
  %3465 = vmatprep.subr.mxu0 0.0
  %3466 = vmatpush1.msra.mxu0 0.0
  %3467 = vmatprep.subr.mxu0 0.0
  %3468 = vmatpush1.msra.mxu0 0.0
  %3469 = vmatprep.subr.mxu0 0.0
  %3470 = vmatpush1.msra.mxu0 0.0
  %3471 = vmatprep.subr.mxu0 0.0
  %3472 = vmatpush1.msra.mxu0 0.0
  %3473 = vmatprep.subr.mxu0 0.0
  %3474 = vmatpush1.msra.mxu0 0.0
  %3475 = vmatprep.subr.mxu0 0.0
  %3476 = vmatpush1.msra.mxu0 0.0
  %3477 = vmatprep.subr.mxu0 0.0
  %3478 = vmatpush1.msra.mxu0 0.0
  %3479 = vmatprep.subr.mxu0 0.0
  %3480 = vmatpush1.msra.mxu0 0.0
  %3481 = vmatprep.subr.mxu0 0.0
  %3482 = vmatpush1.msra.mxu0 0.0
  %3483 = vmatprep.subr.mxu0 0.0
  %3484 = vmatpush1.msra.mxu0 0.0
  %3485 = vmatprep.subr.mxu0 0.0
  %3486 = vmatpush1.msra.mxu0 0.0
  %3487 = vmatprep.subr.mxu0 0.0
  %3488 = vmatpush1.msra.mxu0 0.0
  %3489 = vmatprep.subr.mxu0 0.0
  %3490 = vmatpush1.msra.mxu0 0.0
  %3491 = vmatprep.mubr.f32.mxu0 0.0
  %3492 = vmatmul.mubr.f32.gmra.mrb[0].mxu0 %v3425
  %v3493 = vpop.f32.mrb[0].mxu0
  %v3494 = vadd.f32 0.0, %v3493
  %v3495 = vpop.f32.mrb[0].mxu0
  %3496 = vdwg.mxu0
  %3497 = vrot.lane.b32.xlu0 %v2408, 48
  %v3498 = vpop.permute.xlu0 %3497
  %v3501 = vsel %vm368, %v3420, 0
  %3503 = vmatprep.subr.mxu0 0.0
  %3504 = vmatpush1.msra.mxu0 %v3498
  %3505 = vmatprep.subr.mxu0 0.0
  %3506 = vmatpush1.msra.mxu0 0.0
  %3507 = vmatprep.subr.mxu0 0.0
  %3508 = vmatpush1.msra.mxu0 0.0
  %3509 = vmatprep.subr.mxu0 0.0
  %3510 = vmatpush1.msra.mxu0 0.0
  %3511 = vmatprep.subr.mxu0 0.0
  %3512 = vmatpush1.msra.mxu0 0.0
  %3513 = vmatprep.subr.mxu0 0.0
  %3514 = vmatpush1.msra.mxu0 0.0
  %3515 = vmatprep.subr.mxu0 0.0
  %3516 = vmatpush1.msra.mxu0 0.0
  %3517 = vmatprep.subr.mxu0 0.0
  %3518 = vmatpush1.msra.mxu0 0.0
  %3519 = vmatprep.subr.mxu0 0.0
  %3520 = vmatpush1.msra.mxu0 0.0
  %3521 = vmatprep.subr.mxu0 0.0
  %3522 = vmatpush1.msra.mxu0 0.0
  %3523 = vmatprep.subr.mxu0 0.0
  %3524 = vmatpush1.msra.mxu0 0.0
  %3525 = vmatprep.subr.mxu0 0.0
  %3526 = vmatpush1.msra.mxu0 0.0
  %3527 = vmatprep.subr.mxu0 0.0
  %3528 = vmatpush1.msra.mxu0 0.0
  %3529 = vmatprep.subr.mxu0 0.0
  %3530 = vmatpush1.msra.mxu0 0.0
  %3531 = vmatprep.subr.mxu0 0.0
  %3532 = vmatpush1.msra.mxu0 0.0
  %3533 = vmatprep.subr.mxu0 0.0
  %3534 = vmatpush1.msra.mxu0 0.0
  %3535 = vmatprep.subr.mxu0 0.0
  %3536 = vmatpush1.msra.mxu0 0.0
  %3537 = vmatprep.subr.mxu0 0.0
  %3538 = vmatpush1.msra.mxu0 0.0
  %3539 = vmatprep.subr.mxu0 0.0
  %3540 = vmatpush1.msra.mxu0 0.0
  %3541 = vmatprep.subr.mxu0 0.0
  %3542 = vmatpush1.msra.mxu0 0.0
  %3543 = vmatprep.subr.mxu0 0.0
  %3544 = vmatpush1.msra.mxu0 0.0
  %3545 = vmatprep.subr.mxu0 0.0
  %3546 = vmatpush1.msra.mxu0 0.0
  %3547 = vmatprep.subr.mxu0 0.0
  %3548 = vmatpush1.msra.mxu0 0.0
  %3549 = vmatprep.subr.mxu0 0.0
  %3550 = vmatpush1.msra.mxu0 0.0
  %3551 = vmatprep.subr.mxu0 0.0
  %3552 = vmatpush1.msra.mxu0 0.0
  %3553 = vmatprep.subr.mxu0 0.0
  %3554 = vmatpush1.msra.mxu0 0.0
  %3555 = vmatprep.subr.mxu0 0.0
  %3556 = vmatpush1.msra.mxu0 0.0
  %3557 = vmatprep.subr.mxu0 0.0
  %3558 = vmatpush1.msra.mxu0 0.0
  %3559 = vmatprep.subr.mxu0 0.0
  %3560 = vmatpush1.msra.mxu0 0.0
  %3561 = vmatprep.subr.mxu0 0.0
  %3562 = vmatpush1.msra.mxu0 0.0
  %3563 = vmatprep.subr.mxu0 0.0
  %3564 = vmatpush1.msra.mxu0 0.0
  %3565 = vmatprep.subr.mxu0 0.0
  %3566 = vmatpush1.msra.mxu0 0.0
  %3567 = vmatprep.mubr.f32.mxu0 0.0
  %3568 = vmatmul.mubr.f32.gmra.mrb[0].mxu0 %v3501
  %v3569 = vpop.f32.mrb[0].mxu0
  %v3570 = vadd.f32 0.0, %v3569
  %v3571 = vpop.f32.mrb[0].mxu0
  %3572 = vdwg.mxu0
  %v3574 = vsel %vm368, %v3494, 0
  %v3577 = vsel %vm368, %v3570, 0
  %3579 = vmatprep.subr.mxu0 0.0
  %3580 = vmatpush1.msra.mxu0 %v225
  %3581 = vmatprep.subr.mxu0 0.0
  %3582 = vmatpush1.msra.mxu0 0.0
  %3583 = vmatprep.subr.mxu0 0.0
  %3584 = vmatpush1.msra.mxu0 0.0
  %3585 = vmatprep.subr.mxu0 0.0
  %3586 = vmatpush1.msra.mxu0 0.0
  %3587 = vmatprep.subr.mxu0 0.0
  %3588 = vmatpush1.msra.mxu0 0.0
  %3589 = vmatprep.subr.mxu0 0.0
  %3590 = vmatpush1.msra.mxu0 0.0
  %3591 = vmatprep.subr.mxu0 0.0
  %3592 = vmatpush1.msra.mxu0 0.0
  %3593 = vmatprep.subr.mxu0 0.0
  %3594 = vmatpush1.msra.mxu0 0.0
  %3595 = vmatprep.subr.mxu0 0.0
  %3596 = vmatpush1.msra.mxu0 0.0
  %3597 = vmatprep.subr.mxu0 0.0
  %3598 = vmatpush1.msra.mxu0 0.0
  %3599 = vmatprep.subr.mxu0 0.0
  %3600 = vmatpush1.msra.mxu0 0.0
  %3601 = vmatprep.subr.mxu0 0.0
  %3602 = vmatpush1.msra.mxu0 0.0
  %3603 = vmatprep.subr.mxu0 0.0
  %3604 = vmatpush1.msra.mxu0 0.0
  %3605 = vmatprep.subr.mxu0 0.0
  %3606 = vmatpush1.msra.mxu0 0.0
  %3607 = vmatprep.subr.mxu0 0.0
  %3608 = vmatpush1.msra.mxu0 0.0
  %3609 = vmatprep.subr.mxu0 0.0
  %3610 = vmatpush1.msra.mxu0 0.0
  %3611 = vmatprep.subr.mxu0 0.0
  %3612 = vmatpush1.msra.mxu0 0.0
  %3613 = vmatprep.subr.mxu0 0.0
  %3614 = vmatpush1.msra.mxu0 0.0
  %3615 = vmatprep.subr.mxu0 0.0
  %3616 = vmatpush1.msra.mxu0 0.0
  %3617 = vmatprep.subr.mxu0 0.0
  %3618 = vmatpush1.msra.mxu0 0.0
  %3619 = vmatprep.subr.mxu0 0.0
  %3620 = vmatpush1.msra.mxu0 0.0
  %3621 = vmatprep.subr.mxu0 0.0
  %3622 = vmatpush1.msra.mxu0 0.0
  %3623 = vmatprep.subr.mxu0 0.0
  %3624 = vmatpush1.msra.mxu0 0.0
  %3625 = vmatprep.subr.mxu0 0.0
  %3626 = vmatpush1.msra.mxu0 0.0
  %3627 = vmatprep.subr.mxu0 0.0
  %3628 = vmatpush1.msra.mxu0 0.0
  %3629 = vmatprep.subr.mxu0 0.0
  %3630 = vmatpush1.msra.mxu0 0.0
  %3631 = vmatprep.subr.mxu0 0.0
  %3632 = vmatpush1.msra.mxu0 0.0
  %3633 = vmatprep.subr.mxu0 0.0
  %3634 = vmatpush1.msra.mxu0 0.0
  %3635 = vmatprep.subr.mxu0 0.0
  %3636 = vmatpush1.msra.mxu0 0.0
  %3637 = vmatprep.subr.mxu0 0.0
  %3638 = vmatpush1.msra.mxu0 0.0
  %3639 = vmatprep.subr.mxu0 0.0
  %3640 = vmatpush1.msra.mxu0 0.0
  %3641 = vmatprep.subr.mxu0 0.0
  %3642 = vmatpush1.msra.mxu0 0.0
  %3643 = vmatprep.mubr.f32.mxu0 0.0
  %3644 = vmatmul.mubr.f32.gmra.mrb[0].mxu0 %v3574
  %v3645 = vpop.f32.mrb[0].mxu0
  %v3646 = vadd.f32 0.0, %v3645
  %v3647 = vpop.f32.mrb[0].mxu0
  %3648 = vmatprep.mubr.f32.mxu0 0.0
  %3649 = vmatmul.mubr.f32.gmra.mrb[0].mxu0 %v3577
  %v3650 = vpop.f32.mrb[0].mxu0
  %v3651 = vadd.f32 0.0, %v3650
  %v3652 = vpop.f32.mrb[0].mxu0
  %3653 = vdwg.mxu0
  %v3654 = vadd.f32 %v3231, %v3646
  %v3655 = vadd.f32 %v3236, %v3651
  %3656 = vrot.lane.b32.xlu0 %v2403, 104
  %v3657 = vpop.permute.xlu0 %3656
  %3658 = vrot.lane.b32.xlu0 %v2403, 72
  %v3659 = vpop.permute.xlu0 %3658
  %v3660 = vsel %vm368, %v3657, 0
  %v3662 = vsel %vm368, %v3659, 0
  %3664 = vmatprep.subr.mxu0 0.0
  %3665 = vmatpush1.xpose.msra.mxu0 %v3662
  %3666 = vmatprep.subr.mxu0 0.0
  %3667 = vmatpush1.xpose.msra.mxu0 0.0
  %3668 = vmatprep.subr.mxu0 0.0
  %3669 = vmatpush1.xpose.msra.mxu0 0.0
  %3670 = vmatprep.subr.mxu0 0.0
  %3671 = vmatpush1.xpose.msra.mxu0 0.0
  %3672 = vmatprep.subr.mxu0 0.0
  %3673 = vmatpush1.xpose.msra.mxu0 0.0
  %3674 = vmatprep.subr.mxu0 0.0
  %3675 = vmatpush1.xpose.msra.mxu0 0.0
  %3676 = vmatprep.subr.mxu0 0.0
  %3677 = vmatpush1.xpose.msra.mxu0 0.0
  %3678 = vmatprep.subr.mxu0 0.0
  %3679 = vmatpush1.xpose.msra.mxu0 0.0
  %3680 = vmatprep.subr.mxu0 0.0
  %3681 = vmatpush1.xpose.msra.mxu0 0.0
  %3682 = vmatprep.subr.mxu0 0.0
  %3683 = vmatpush1.xpose.msra.mxu0 0.0
  %3684 = vmatprep.subr.mxu0 0.0
  %3685 = vmatpush1.xpose.msra.mxu0 0.0
  %3686 = vmatprep.subr.mxu0 0.0
  %3687 = vmatpush1.xpose.msra.mxu0 0.0
  %3688 = vmatprep.subr.mxu0 0.0
  %3689 = vmatpush1.xpose.msra.mxu0 0.0
  %3690 = vmatprep.subr.mxu0 0.0
  %3691 = vmatpush1.xpose.msra.mxu0 0.0
  %3692 = vmatprep.subr.mxu0 0.0
  %3693 = vmatpush1.xpose.msra.mxu0 0.0
  %3694 = vmatprep.subr.mxu0 0.0
  %3695 = vmatpush1.xpose.msra.mxu0 0.0
  %3696 = vmatprep.subr.mxu0 0.0
  %3697 = vmatpush1.xpose.msra.mxu0 0.0
  %3698 = vmatprep.subr.mxu0 0.0
  %3699 = vmatpush1.xpose.msra.mxu0 0.0
  %3700 = vmatprep.subr.mxu0 0.0
  %3701 = vmatpush1.xpose.msra.mxu0 0.0
  %3702 = vmatprep.subr.mxu0 0.0
  %3703 = vmatpush1.xpose.msra.mxu0 0.0
  %3704 = vmatprep.subr.mxu0 0.0
  %3705 = vmatpush1.xpose.msra.mxu0 0.0
  %3706 = vmatprep.subr.mxu0 0.0
  %3707 = vmatpush1.xpose.msra.mxu0 0.0
  %3708 = vmatprep.subr.mxu0 0.0
  %3709 = vmatpush1.xpose.msra.mxu0 0.0
  %3710 = vmatprep.subr.mxu0 0.0
  %3711 = vmatpush1.xpose.msra.mxu0 0.0
  %3712 = vmatprep.subr.mxu0 0.0
  %3713 = vmatpush1.xpose.msra.mxu0 0.0
  %3714 = vmatprep.subr.mxu0 0.0
  %3715 = vmatpush1.xpose.msra.mxu0 0.0
  %3716 = vmatprep.subr.mxu0 0.0
  %3717 = vmatpush1.xpose.msra.mxu0 0.0
  %3718 = vmatprep.subr.mxu0 0.0
  %3719 = vmatpush1.xpose.msra.mxu0 0.0
  %3720 = vmatprep.subr.mxu0 0.0
  %3721 = vmatpush1.xpose.msra.mxu0 0.0
  %3722 = vmatprep.subr.mxu0 0.0
  %3723 = vmatpush1.xpose.msra.mxu0 0.0
  %3724 = vmatprep.subr.mxu0 0.0
  %3725 = vmatpush1.xpose.msra.mxu0 0.0
  %3726 = vmatprep.subr.mxu0 0.0
  %3727 = vmatpush1.xpose.msra.mxu0 0.0
  %3728 = vmatprep.mubr.f32.mxu0 0.0
  %3729 = vmatmul.mubr.f32.gmra.mrb[0].mxu0 %v3660
  %v3730 = vpop.f32.mrb[0].mxu0
  %v3731 = vadd.f32 0.0, %v3730
  %v3732 = vpop.f32.mrb[0].mxu0
  %3733 = vdwg.mxu0
  %3734 = vrot.lane.b32.xlu0 %v2408, 104
  %v3735 = vpop.permute.xlu0 %3734
  %3736 = vrot.lane.b32.xlu0 %v2408, 72
  %v3737 = vpop.permute.xlu0 %3736
  %v3738 = vsel %vm368, %v3735, 0
  %v3740 = vsel %vm368, %v3737, 0
  %3742 = vmatprep.subr.mxu0 0.0
  %3743 = vmatpush1.xpose.msra.mxu0 %v3740
  %3744 = vmatprep.subr.mxu0 0.0
  %3745 = vmatpush1.xpose.msra.mxu0 0.0
  %3746 = vmatprep.subr.mxu0 0.0
  %3747 = vmatpush1.xpose.msra.mxu0 0.0
  %3748 = vmatprep.subr.mxu0 0.0
  %3749 = vmatpush1.xpose.msra.mxu0 0.0
  %3750 = vmatprep.subr.mxu0 0.0
  %3751 = vmatpush1.xpose.msra.mxu0 0.0
  %3752 = vmatprep.subr.mxu0 0.0
  %3753 = vmatpush1.xpose.msra.mxu0 0.0
  %3754 = vmatprep.subr.mxu0 0.0
  %3755 = vmatpush1.xpose.msra.mxu0 0.0
  %3756 = vmatprep.subr.mxu0 0.0
  %3757 = vmatpush1.xpose.msra.mxu0 0.0
  %3758 = vmatprep.subr.mxu0 0.0
  %3759 = vmatpush1.xpose.msra.mxu0 0.0
  %3760 = vmatprep.subr.mxu0 0.0
  %3761 = vmatpush1.xpose.msra.mxu0 0.0
  %3762 = vmatprep.subr.mxu0 0.0
  %3763 = vmatpush1.xpose.msra.mxu0 0.0
  %3764 = vmatprep.subr.mxu0 0.0
  %3765 = vmatpush1.xpose.msra.mxu0 0.0
  %3766 = vmatprep.subr.mxu0 0.0
  %3767 = vmatpush1.xpose.msra.mxu0 0.0
  %3768 = vmatprep.subr.mxu0 0.0
  %3769 = vmatpush1.xpose.msra.mxu0 0.0
  %3770 = vmatprep.subr.mxu0 0.0
  %3771 = vmatpush1.xpose.msra.mxu0 0.0
  %3772 = vmatprep.subr.mxu0 0.0
  %3773 = vmatpush1.xpose.msra.mxu0 0.0
  %3774 = vmatprep.subr.mxu0 0.0
  %3775 = vmatpush1.xpose.msra.mxu0 0.0
  %3776 = vmatprep.subr.mxu0 0.0
  %3777 = vmatpush1.xpose.msra.mxu0 0.0
  %3778 = vmatprep.subr.mxu0 0.0
  %3779 = vmatpush1.xpose.msra.mxu0 0.0
  %3780 = vmatprep.subr.mxu0 0.0
  %3781 = vmatpush1.xpose.msra.mxu0 0.0
  %3782 = vmatprep.subr.mxu0 0.0
  %3783 = vmatpush1.xpose.msra.mxu0 0.0
  %3784 = vmatprep.subr.mxu0 0.0
  %3785 = vmatpush1.xpose.msra.mxu0 0.0
  %3786 = vmatprep.subr.mxu0 0.0
  %3787 = vmatpush1.xpose.msra.mxu0 0.0
  %3788 = vmatprep.subr.mxu0 0.0
  %3789 = vmatpush1.xpose.msra.mxu0 0.0
  %3790 = vmatprep.subr.mxu0 0.0
  %3791 = vmatpush1.xpose.msra.mxu0 0.0
  %3792 = vmatprep.subr.mxu0 0.0
  %3793 = vmatpush1.xpose.msra.mxu0 0.0
  %3794 = vmatprep.subr.mxu0 0.0
  %3795 = vmatpush1.xpose.msra.mxu0 0.0
  %3796 = vmatprep.subr.mxu0 0.0
  %3797 = vmatpush1.xpose.msra.mxu0 0.0
  %3798 = vmatprep.subr.mxu0 0.0
  %3799 = vmatpush1.xpose.msra.mxu0 0.0
  %3800 = vmatprep.subr.mxu0 0.0
  %3801 = vmatpush1.xpose.msra.mxu0 0.0
  %3802 = vmatprep.subr.mxu0 0.0
  %3803 = vmatpush1.xpose.msra.mxu0 0.0
  %3804 = vmatprep.subr.mxu0 0.0
  %3805 = vmatpush1.xpose.msra.mxu0 0.0
  %3806 = vmatprep.mubr.f32.mxu0 0.0
  %3807 = vmatmul.mubr.f32.gmra.mrb[0].mxu0 %v3738
  %v3808 = vpop.f32.mrb[0].mxu0
  %v3809 = vadd.f32 0.0, %v3808
  %v3810 = vpop.f32.mrb[0].mxu0
  %3811 = vdwg.mxu0
  %v3812 = vmul.f32 %v3731, 0.35355338
  %v3813 = vmul.f32 %v3809, 0.35355338
  %v3814 = vadd.f32 %v3812, %v182
  %v3815 = vadd.f32 %v3813, %v183
  %v3816 = vsel %vm368, %v3814, -inf
  %3817 = vmax.xlane.f32.xlu0 %v3816
  %v3818 = vpop.xlane.xlu0 %3817
  %v3819 = vsel %vm368, %v3815, -inf
  %3820 = vmax.xlane.f32.xlu0 %v3819
  %v3821 = vpop.xlane.xlu0 %3820
  %v3822 = vsub.f32 %v3814, %v3818
  %v3823 = vsub.f32 %v3815, %v3821
  %v3824 = vmul.f32 %v3822, 1.442695
  %v3825 = vpow.pop %v3824
  %v3826 = vmul.f32 %v3823, 1.442695
  %v3827 = vpow.pop %v3826
  %v3828 = vsel %vm368, %v3825, 0.0
  %3829 = vadd.xlane.f32.xlu0 %v3828
  %v3830 = vpop.xlane.xlu0 %3829
  %v3831 = vsel %vm368, %v3827, 0.0
  %3832 = vadd.xlane.f32.xlu0 %v3831
  %v3833 = vpop.xlane.xlu0 %3832
  %v3834 = vrcp.pop %v3830
  %v3835 = vrcp.pop %v3833
  %v3836 = vmul.f32 %v3825, %v3834
  %v3837 = vmul.f32 %v3827, %v3835
  %3838 = vrot.lane.b32.xlu0 %v2403, 40
  %v3839 = vpop.permute.xlu0 %3838
  %v3842 = vsel %vm368, %v3836, 0
  %3844 = vmatprep.subr.mxu0 0.0
  %3845 = vmatpush1.msra.mxu0 %v3839
  %3846 = vmatprep.subr.mxu0 0.0
  %3847 = vmatpush1.msra.mxu0 0.0
  %3848 = vmatprep.subr.mxu0 0.0
  %3849 = vmatpush1.msra.mxu0 0.0
  %3850 = vmatprep.subr.mxu0 0.0
  %3851 = vmatpush1.msra.mxu0 0.0
  %3852 = vmatprep.subr.mxu0 0.0
  %3853 = vmatpush1.msra.mxu0 0.0
  %3854 = vmatprep.subr.mxu0 0.0
  %3855 = vmatpush1.msra.mxu0 0.0
  %3856 = vmatprep.subr.mxu0 0.0
  %3857 = vmatpush1.msra.mxu0 0.0
  %3858 = vmatprep.subr.mxu0 0.0
  %3859 = vmatpush1.msra.mxu0 0.0
  %3860 = vmatprep.subr.mxu0 0.0
  %3861 = vmatpush1.msra.mxu0 0.0
  %3862 = vmatprep.subr.mxu0 0.0
  %3863 = vmatpush1.msra.mxu0 0.0
  %3864 = vmatprep.subr.mxu0 0.0
  %3865 = vmatpush1.msra.mxu0 0.0
  %3866 = vmatprep.subr.mxu0 0.0
  %3867 = vmatpush1.msra.mxu0 0.0
  %3868 = vmatprep.subr.mxu0 0.0
  %3869 = vmatpush1.msra.mxu0 0.0
  %3870 = vmatprep.subr.mxu0 0.0
  %3871 = vmatpush1.msra.mxu0 0.0
  %3872 = vmatprep.subr.mxu0 0.0
  %3873 = vmatpush1.msra.mxu0 0.0
  %3874 = vmatprep.subr.mxu0 0.0
  %3875 = vmatpush1.msra.mxu0 0.0
  %3876 = vmatprep.subr.mxu0 0.0
  %3877 = vmatpush1.msra.mxu0 0.0
  %3878 = vmatprep.subr.mxu0 0.0
  %3879 = vmatpush1.msra.mxu0 0.0
  %3880 = vmatprep.subr.mxu0 0.0
  %3881 = vmatpush1.msra.mxu0 0.0
  %3882 = vmatprep.subr.mxu0 0.0
  %3883 = vmatpush1.msra.mxu0 0.0
  %3884 = vmatprep.subr.mxu0 0.0
  %3885 = vmatpush1.msra.mxu0 0.0
  %3886 = vmatprep.subr.mxu0 0.0
  %3887 = vmatpush1.msra.mxu0 0.0
  %3888 = vmatprep.subr.mxu0 0.0
  %3889 = vmatpush1.msra.mxu0 0.0
  %3890 = vmatprep.subr.mxu0 0.0
  %3891 = vmatpush1.msra.mxu0 0.0
  %3892 = vmatprep.subr.mxu0 0.0
  %3893 = vmatpush1.msra.mxu0 0.0
  %3894 = vmatprep.subr.mxu0 0.0
  %3895 = vmatpush1.msra.mxu0 0.0
  %3896 = vmatprep.subr.mxu0 0.0
  %3897 = vmatpush1.msra.mxu0 0.0
  %3898 = vmatprep.subr.mxu0 0.0
  %3899 = vmatpush1.msra.mxu0 0.0
  %3900 = vmatprep.subr.mxu0 0.0
  %3901 = vmatpush1.msra.mxu0 0.0
  %3902 = vmatprep.subr.mxu0 0.0
  %3903 = vmatpush1.msra.mxu0 0.0
  %3904 = vmatprep.subr.mxu0 0.0
  %3905 = vmatpush1.msra.mxu0 0.0
  %3906 = vmatprep.subr.mxu0 0.0
  %3907 = vmatpush1.msra.mxu0 0.0
  %3908 = vmatprep.mubr.f32.mxu0 0.0
  %3909 = vmatmul.mubr.f32.gmra.mrb[0].mxu0 %v3842
  %v3910 = vpop.f32.mrb[0].mxu0
  %v3911 = vadd.f32 0.0, %v3910
  %v3912 = vpop.f32.mrb[0].mxu0
  %3913 = vdwg.mxu0
  %3914 = vrot.lane.b32.xlu0 %v2408, 40
  %v3915 = vpop.permute.xlu0 %3914
  %v3918 = vsel %vm368, %v3837, 0
  %3920 = vmatprep.subr.mxu0 0.0
  %3921 = vmatpush1.msra.mxu0 %v3915
  %3922 = vmatprep.subr.mxu0 0.0
  %3923 = vmatpush1.msra.mxu0 0.0
  %3924 = vmatprep.subr.mxu0 0.0
  %3925 = vmatpush1.msra.mxu0 0.0
  %3926 = vmatprep.subr.mxu0 0.0
  %3927 = vmatpush1.msra.mxu0 0.0
  %3928 = vmatprep.subr.mxu0 0.0
  %3929 = vmatpush1.msra.mxu0 0.0
  %3930 = vmatprep.subr.mxu0 0.0
  %3931 = vmatpush1.msra.mxu0 0.0
  %3932 = vmatprep.subr.mxu0 0.0
  %3933 = vmatpush1.msra.mxu0 0.0
  %3934 = vmatprep.subr.mxu0 0.0
  %3935 = vmatpush1.msra.mxu0 0.0
  %3936 = vmatprep.subr.mxu0 0.0
  %3937 = vmatpush1.msra.mxu0 0.0
  %3938 = vmatprep.subr.mxu0 0.0
  %3939 = vmatpush1.msra.mxu0 0.0
  %3940 = vmatprep.subr.mxu0 0.0
  %3941 = vmatpush1.msra.mxu0 0.0
  %3942 = vmatprep.subr.mxu0 0.0
  %3943 = vmatpush1.msra.mxu0 0.0
  %3944 = vmatprep.subr.mxu0 0.0
  %3945 = vmatpush1.msra.mxu0 0.0
  %3946 = vmatprep.subr.mxu0 0.0
  %3947 = vmatpush1.msra.mxu0 0.0
  %3948 = vmatprep.subr.mxu0 0.0
  %3949 = vmatpush1.msra.mxu0 0.0
  %3950 = vmatprep.subr.mxu0 0.0
  %3951 = vmatpush1.msra.mxu0 0.0
  %3952 = vmatprep.subr.mxu0 0.0
  %3953 = vmatpush1.msra.mxu0 0.0
  %3954 = vmatprep.subr.mxu0 0.0
  %3955 = vmatpush1.msra.mxu0 0.0
  %3956 = vmatprep.subr.mxu0 0.0
  %3957 = vmatpush1.msra.mxu0 0.0
  %3958 = vmatprep.subr.mxu0 0.0
  %3959 = vmatpush1.msra.mxu0 0.0
  %3960 = vmatprep.subr.mxu0 0.0
  %3961 = vmatpush1.msra.mxu0 0.0
  %3962 = vmatprep.subr.mxu0 0.0
  %3963 = vmatpush1.msra.mxu0 0.0
  %3964 = vmatprep.subr.mxu0 0.0
  %3965 = vmatpush1.msra.mxu0 0.0
  %3966 = vmatprep.subr.mxu0 0.0
  %3967 = vmatpush1.msra.mxu0 0.0
  %3968 = vmatprep.subr.mxu0 0.0
  %3969 = vmatpush1.msra.mxu0 0.0
  %3970 = vmatprep.subr.mxu0 0.0
  %3971 = vmatpush1.msra.mxu0 0.0
  %3972 = vmatprep.subr.mxu0 0.0
  %3973 = vmatpush1.msra.mxu0 0.0
  %3974 = vmatprep.subr.mxu0 0.0
  %3975 = vmatpush1.msra.mxu0 0.0
  %3976 = vmatprep.subr.mxu0 0.0
  %3977 = vmatpush1.msra.mxu0 0.0
  %3978 = vmatprep.subr.mxu0 0.0
  %3979 = vmatpush1.msra.mxu0 0.0
  %3980 = vmatprep.subr.mxu0 0.0
  %3981 = vmatpush1.msra.mxu0 0.0
  %3982 = vmatprep.subr.mxu0 0.0
  %3983 = vmatpush1.msra.mxu0 0.0
  %3984 = vmatprep.mubr.f32.mxu0 0.0
  %3985 = vmatmul.mubr.f32.gmra.mrb[0].mxu0 %v3918
  %v3986 = vpop.f32.mrb[0].mxu0
  %v3987 = vadd.f32 0.0, %v3986
  %v3988 = vpop.f32.mrb[0].mxu0
  %3989 = vdwg.mxu0
  %v3991 = vsel %vm368, %v3911, 0
  %v3994 = vsel %vm368, %v3987, 0
  %3996 = vmatprep.subr.mxu0 0.0
  %3997 = vmatpush1.msra.mxu0 %v226
  %3998 = vmatprep.subr.mxu0 0.0
  %3999 = vmatpush1.msra.mxu0 0.0
  %4000 = vmatprep.subr.mxu0 0.0
  %4001 = vmatpush1.msra.mxu0 0.0
  %4002 = vmatprep.subr.mxu0 0.0
  %4003 = vmatpush1.msra.mxu0 0.0
  %4004 = vmatprep.subr.mxu0 0.0
  %4005 = vmatpush1.msra.mxu0 0.0
  %4006 = vmatprep.subr.mxu0 0.0
  %4007 = vmatpush1.msra.mxu0 0.0
  %4008 = vmatprep.subr.mxu0 0.0
  %4009 = vmatpush1.msra.mxu0 0.0
  %4010 = vmatprep.subr.mxu0 0.0
  %4011 = vmatpush1.msra.mxu0 0.0
  %4012 = vmatprep.subr.mxu0 0.0
  %4013 = vmatpush1.msra.mxu0 0.0
  %4014 = vmatprep.subr.mxu0 0.0
  %4015 = vmatpush1.msra.mxu0 0.0
  %4016 = vmatprep.subr.mxu0 0.0
  %4017 = vmatpush1.msra.mxu0 0.0
  %4018 = vmatprep.subr.mxu0 0.0
  %4019 = vmatpush1.msra.mxu0 0.0
  %4020 = vmatprep.subr.mxu0 0.0
  %4021 = vmatpush1.msra.mxu0 0.0
  %4022 = vmatprep.subr.mxu0 0.0
  %4023 = vmatpush1.msra.mxu0 0.0
  %4024 = vmatprep.subr.mxu0 0.0
  %4025 = vmatpush1.msra.mxu0 0.0
  %4026 = vmatprep.subr.mxu0 0.0
  %4027 = vmatpush1.msra.mxu0 0.0
  %4028 = vmatprep.subr.mxu0 0.0
  %4029 = vmatpush1.msra.mxu0 0.0
  %4030 = vmatprep.subr.mxu0 0.0
  %4031 = vmatpush1.msra.mxu0 0.0
  %4032 = vmatprep.subr.mxu0 0.0
  %4033 = vmatpush1.msra.mxu0 0.0
  %4034 = vmatprep.subr.mxu0 0.0
  %4035 = vmatpush1.msra.mxu0 0.0
  %4036 = vmatprep.subr.mxu0 0.0
  %4037 = vmatpush1.msra.mxu0 0.0
  %4038 = vmatprep.subr.mxu0 0.0
  %4039 = vmatpush1.msra.mxu0 0.0
  %4040 = vmatprep.subr.mxu0 0.0
  %4041 = vmatpush1.msra.mxu0 0.0
  %4042 = vmatprep.subr.mxu0 0.0
  %4043 = vmatpush1.msra.mxu0 0.0
  %4044 = vmatprep.subr.mxu0 0.0
  %4045 = vmatpush1.msra.mxu0 0.0
  %4046 = vmatprep.subr.mxu0 0.0
  %4047 = vmatpush1.msra.mxu0 0.0
  %4048 = vmatprep.subr.mxu0 0.0
  %4049 = vmatpush1.msra.mxu0 0.0
  %4050 = vmatprep.subr.mxu0 0.0
  %4051 = vmatpush1.msra.mxu0 0.0
  %4052 = vmatprep.subr.mxu0 0.0
  %4053 = vmatpush1.msra.mxu0 0.0
  %4054 = vmatprep.subr.mxu0 0.0
  %4055 = vmatpush1.msra.mxu0 0.0
  %4056 = vmatprep.subr.mxu0 0.0
  %4057 = vmatpush1.msra.mxu0 0.0
  %4058 = vmatprep.subr.mxu0 0.0
  %4059 = vmatpush1.msra.mxu0 0.0
  %4060 = vmatprep.mubr.f32.mxu0 0.0
  %4061 = vmatmul.mubr.f32.gmra.mrb[0].mxu0 %v3991
  %v4062 = vpop.f32.mrb[0].mxu0
  %v4063 = vadd.f32 0.0, %v4062
  %v4064 = vpop.f32.mrb[0].mxu0
  %4065 = vmatprep.mubr.f32.mxu0 0.0
  %4066 = vmatmul.mubr.f32.gmra.mrb[0].mxu0 %v3994
  %v4067 = vpop.f32.mrb[0].mxu0
  %v4068 = vadd.f32 0.0, %v4067
  %v4069 = vpop.f32.mrb[0].mxu0
  %4070 = vdwg.mxu0
  %v4071 = vadd.f32 %v3654, %v4063
  %v4072 = vadd.f32 %v3655, %v4068
  %v4074 = vlaneseq
  %v4075 = vshrl.u32 %v4074, 7
  %v4076 = vsub.s32 0, %v4075
  %v4077 = vrot.slane %v219, %v4076
  %v4079 = vadd.f32 %v4071, %v4077
  %v4080 = vadd.f32 %v4072, %v4077
  %v4081 = vadd.f32 %v4079, %v2322
  %v4082 = vadd.f32 %v4080, %v2323
  %v4083 = vsel %vm283, %v4081, 0.0
  %4084 = vadd.xlane.f32.xlu0 %v4083
  %v4085 = vpop.xlane.xlu0 %4084
  %v4086 = vsel %vm283, %v4082, 0.0
  %4087 = vadd.xlane.f32.xlu0 %v4086
  %v4088 = vpop.xlane.xlu0 %4087
  %v4089 = vmul.f32 %v4085, %v2044
  %v4090 = vmul.f32 %v4088, %v2044
  %v4091 = vsub.f32 %v4081, %v4089
  %v4092 = vsub.f32 %v4082, %v4090
  %v4093 = vmul.f32 %v4091, %v4091
  %v4094 = vmul.f32 %v4092, %v4092
  %v4095 = vsel %vm283, %v4093, 0.0
  %4096 = vadd.xlane.f32.xlu0 %v4095
  %v4097 = vpop.xlane.xlu0 %4096
  %v4098 = vsel %vm283, %v4094, 0.0
  %4099 = vadd.xlane.f32.xlu0 %v4098
  %v4100 = vpop.xlane.xlu0 %4099
  %v4101 = vmul.f32 %v4097, %v2044
  %v4102 = vmul.f32 %v4100, %v2044
  %v4103 = vadd.f32 %v4101, 1e-05
  %v4104 = vadd.f32 %v4102, 1e-05
  %v4105 = vrsqrt.pop %v4103
  %v4106 = vrsqrt.pop %v4104
  %v4107 = vmul.f32 %v4091, %v4105
  %v4108 = vmul.f32 %v4092, %v4106
  %v4110 = vlaneseq
  %v4111 = vshrl.u32 %v4110, 7
  %v4112 = vsub.s32 0, %v4111
  %v4113 = vrot.slane %v222, %v4112
  %v4115 = vmul.f32 %v4107, %v4113
  %v4116 = vmul.f32 %v4108, %v4113
  %v4118 = vlaneseq
  %v4119 = vshrl.u32 %v4118, 7
  %v4120 = vsub.s32 0, %v4119
  %v4121 = vrot.slane %v221, %v4120
  %v4123 = vadd.f32 %v4115, %v4121
  %v4124 = vadd.f32 %v4116, %v4121
  %v4126 = vlaneseq
  %v4127 = vshrl.u32 %v4126, 7
  %v4128 = vsub.s32 0, %v4127
  %v4129 = vrot.slane %v188, %v4128
  %v4132 = vsel %vm283, %v4123, 0
  %v4135 = vsel %vm283, %v4124, 0
  %4137 = vmatprep.subr.mxu0 0.0
  %4138 = vmatpush1.msra.mxu0 %v199
  %4139 = vmatprep.subr.mxu0 0.0
  %4140 = vmatpush1.msra.mxu0 %v200
  %4141 = vmatprep.subr.mxu0 0.0
  %4142 = vmatpush1.msra.mxu0 %v201
  %4143 = vmatprep.subr.mxu0 0.0
  %4144 = vmatpush1.msra.mxu0 %v202
  %4145 = vmatprep.subr.mxu0 0.0
  %4146 = vmatpush1.msra.mxu0 0.0
  %4147 = vmatprep.subr.mxu0 0.0
  %4148 = vmatpush1.msra.mxu0 0.0
  %4149 = vmatprep.subr.mxu0 0.0
  %4150 = vmatpush1.msra.mxu0 0.0
  %4151 = vmatprep.subr.mxu0 0.0
  %4152 = vmatpush1.msra.mxu0 0.0
  %4153 = vmatprep.subr.mxu0 0.0
  %4154 = vmatpush1.msra.mxu0 0.0
  %4155 = vmatprep.subr.mxu0 0.0
  %4156 = vmatpush1.msra.mxu0 0.0
  %4157 = vmatprep.subr.mxu0 0.0
  %4158 = vmatpush1.msra.mxu0 0.0
  %4159 = vmatprep.subr.mxu0 0.0
  %4160 = vmatpush1.msra.mxu0 0.0
  %4161 = vmatprep.subr.mxu0 0.0
  %4162 = vmatpush1.msra.mxu0 0.0
  %4163 = vmatprep.subr.mxu0 0.0
  %4164 = vmatpush1.msra.mxu0 0.0
  %4165 = vmatprep.subr.mxu0 0.0
  %4166 = vmatpush1.msra.mxu0 0.0
  %4167 = vmatprep.subr.mxu0 0.0
  %4168 = vmatpush1.msra.mxu0 0.0
  %4169 = vmatprep.subr.mxu0 0.0
  %4170 = vmatpush1.msra.mxu0 0.0
  %4171 = vmatprep.subr.mxu0 0.0
  %4172 = vmatpush1.msra.mxu0 0.0
  %4173 = vmatprep.subr.mxu0 0.0
  %4174 = vmatpush1.msra.mxu0 0.0
  %4175 = vmatprep.subr.mxu0 0.0
  %4176 = vmatpush1.msra.mxu0 0.0
  %4177 = vmatprep.subr.mxu0 0.0
  %4178 = vmatpush1.msra.mxu0 0.0
  %4179 = vmatprep.subr.mxu0 0.0
  %4180 = vmatpush1.msra.mxu0 0.0
  %4181 = vmatprep.subr.mxu0 0.0
  %4182 = vmatpush1.msra.mxu0 0.0
  %4183 = vmatprep.subr.mxu0 0.0
  %4184 = vmatpush1.msra.mxu0 0.0
  %4185 = vmatprep.subr.mxu0 0.0
  %4186 = vmatpush1.msra.mxu0 0.0
  %4187 = vmatprep.subr.mxu0 0.0
  %4188 = vmatpush1.msra.mxu0 0.0
  %4189 = vmatprep.subr.mxu0 0.0
  %4190 = vmatpush1.msra.mxu0 0.0
  %4191 = vmatprep.subr.mxu0 0.0
  %4192 = vmatpush1.msra.mxu0 0.0
  %4193 = vmatprep.subr.mxu0 0.0
  %4194 = vmatpush1.msra.mxu0 0.0
  %4195 = vmatprep.subr.mxu0 0.0
  %4196 = vmatpush1.msra.mxu0 0.0
  %4197 = vmatprep.subr.mxu0 0.0
  %4198 = vmatpush1.msra.mxu0 0.0
  %4199 = vmatprep.subr.mxu0 0.0
  %4200 = vmatpush1.msra.mxu0 0.0
  %4201 = vmatprep.mubr.f32.mxu0 0.0
  %4202 = vmatmul.mubr.f32.gmra.mrb[0].mxu0 %v4132
  %v4203 = vpop.f32.mrb[0].mxu0
  %v4204 = vadd.f32 %v4129, %v4203
  %v4205 = vpop.f32.mrb[0].mxu0
  %4206 = vmatprep.mubr.f32.mxu0 0.0
  %4207 = vmatmul.mubr.f32.gmra.mrb[0].mxu0 %v4135
  %v4208 = vpop.f32.mrb[0].mxu0
  %v4209 = vadd.f32 %v4129, %v4208
  %v4210 = vpop.f32.mrb[0].mxu0
  %4211 = vdwg.mxu0
  %v4213 = vlaneseq
  %v4214 = vshrl.u32 %v4213, 7
  %v4215 = vsub.s32 0, %v4214
  %v4216 = vrot.slane %v186, %v4215
  %v4219 = vsel %vm283, %v2305, 0
  %v4222 = vsel %vm283, %v2309, 0
  %4224 = vmatprep.subr.mxu0 0.0
  %4225 = vmatpush1.msra.mxu0 %v191
  %4226 = vmatprep.subr.mxu0 0.0
  %4227 = vmatpush1.msra.mxu0 %v192
  %4228 = vmatprep.subr.mxu0 0.0
  %4229 = vmatpush1.msra.mxu0 %v193
  %4230 = vmatprep.subr.mxu0 0.0
  %4231 = vmatpush1.msra.mxu0 %v194
  %4232 = vmatprep.subr.mxu0 0.0
  %4233 = vmatpush1.msra.mxu0 0.0
  %4234 = vmatprep.subr.mxu0 0.0
  %4235 = vmatpush1.msra.mxu0 0.0
  %4236 = vmatprep.subr.mxu0 0.0
  %4237 = vmatpush1.msra.mxu0 0.0
  %4238 = vmatprep.subr.mxu0 0.0
  %4239 = vmatpush1.msra.mxu0 0.0
  %4240 = vmatprep.subr.mxu0 0.0
  %4241 = vmatpush1.msra.mxu0 0.0
  %4242 = vmatprep.subr.mxu0 0.0
  %4243 = vmatpush1.msra.mxu0 0.0
  %4244 = vmatprep.subr.mxu0 0.0
  %4245 = vmatpush1.msra.mxu0 0.0
  %4246 = vmatprep.subr.mxu0 0.0
  %4247 = vmatpush1.msra.mxu0 0.0
  %4248 = vmatprep.subr.mxu0 0.0
  %4249 = vmatpush1.msra.mxu0 0.0
  %4250 = vmatprep.subr.mxu0 0.0
  %4251 = vmatpush1.msra.mxu0 0.0
  %4252 = vmatprep.subr.mxu0 0.0
  %4253 = vmatpush1.msra.mxu0 0.0
  %4254 = vmatprep.subr.mxu0 0.0
  %4255 = vmatpush1.msra.mxu0 0.0
  %4256 = vmatprep.subr.mxu0 0.0
  %4257 = vmatpush1.msra.mxu0 0.0
  %4258 = vmatprep.subr.mxu0 0.0
  %4259 = vmatpush1.msra.mxu0 0.0
  %4260 = vmatprep.subr.mxu0 0.0
  %4261 = vmatpush1.msra.mxu0 0.0
  %4262 = vmatprep.subr.mxu0 0.0
  %4263 = vmatpush1.msra.mxu0 0.0
  %4264 = vmatprep.subr.mxu0 0.0
  %4265 = vmatpush1.msra.mxu0 0.0
  %4266 = vmatprep.subr.mxu0 0.0
  %4267 = vmatpush1.msra.mxu0 0.0
  %4268 = vmatprep.subr.mxu0 0.0
  %4269 = vmatpush1.msra.mxu0 0.0
  %4270 = vmatprep.subr.mxu0 0.0
  %4271 = vmatpush1.msra.mxu0 0.0
  %4272 = vmatprep.subr.mxu0 0.0
  %4273 = vmatpush1.msra.mxu0 0.0
  %4274 = vmatprep.subr.mxu0 0.0
  %4275 = vmatpush1.msra.mxu0 0.0
  %4276 = vmatprep.subr.mxu0 0.0
  %4277 = vmatpush1.msra.mxu0 0.0
  %4278 = vmatprep.subr.mxu0 0.0
  %4279 = vmatpush1.msra.mxu0 0.0
  %4280 = vmatprep.subr.mxu0 0.0
  %4281 = vmatpush1.msra.mxu0 0.0
  %4282 = vmatprep.subr.mxu0 0.0
  %4283 = vmatpush1.msra.mxu0 0.0
  %4284 = vmatprep.subr.mxu0 0.0
  %4285 = vmatpush1.msra.mxu0 0.0
  %4286 = vmatprep.subr.mxu0 0.0
  %4287 = vmatpush1.msra.mxu0 0.0
  %4288 = vmatprep.mubr.f32.mxu0 0.0
  %4289 = vmatmul.mubr.f32.gmra.mrb[0].mxu0 %v4219
  %v4290 = vpop.f32.mrb[0].mxu0
  %v4291 = vadd.f32 %v4216, %v4290
  %v4292 = vpop.f32.mrb[0].mxu0
  %4293 = vmatprep.mubr.f32.mxu0 0.0
  %4294 = vmatmul.mubr.f32.gmra.mrb[0].mxu0 %v4222
  %v4295 = vpop.f32.mrb[0].mxu0
  %v4296 = vadd.f32 %v4216, %v4295
  %v4297 = vpop.f32.mrb[0].mxu0
  %4298 = vdwg.mxu0
  %v4300 = vsel %vm368, %v4204, 0
  %v4303 = vsel %vm368, %v4291, 0
  %4305 = vmatprep.subr.mxu0 0.0
  %4306 = vmatpush1.xpose.msra.mxu0 %v4303
  %4307 = vmatprep.subr.mxu0 0.0
  %4308 = vmatpush1.xpose.msra.mxu0 0.0
  %4309 = vmatprep.subr.mxu0 0.0
  %4310 = vmatpush1.xpose.msra.mxu0 0.0
  %4311 = vmatprep.subr.mxu0 0.0
  %4312 = vmatpush1.xpose.msra.mxu0 0.0
  %4313 = vmatprep.subr.mxu0 0.0
  %4314 = vmatpush1.xpose.msra.mxu0 0.0
  %4315 = vmatprep.subr.mxu0 0.0
  %4316 = vmatpush1.xpose.msra.mxu0 0.0
  %4317 = vmatprep.subr.mxu0 0.0
  %4318 = vmatpush1.xpose.msra.mxu0 0.0
  %4319 = vmatprep.subr.mxu0 0.0
  %4320 = vmatpush1.xpose.msra.mxu0 0.0
  %4321 = vmatprep.subr.mxu0 0.0
  %4322 = vmatpush1.xpose.msra.mxu0 0.0
  %4323 = vmatprep.subr.mxu0 0.0
  %4324 = vmatpush1.xpose.msra.mxu0 0.0
  %4325 = vmatprep.subr.mxu0 0.0
  %4326 = vmatpush1.xpose.msra.mxu0 0.0
  %4327 = vmatprep.subr.mxu0 0.0
  %4328 = vmatpush1.xpose.msra.mxu0 0.0
  %4329 = vmatprep.subr.mxu0 0.0
  %4330 = vmatpush1.xpose.msra.mxu0 0.0
  %4331 = vmatprep.subr.mxu0 0.0
  %4332 = vmatpush1.xpose.msra.mxu0 0.0
  %4333 = vmatprep.subr.mxu0 0.0
  %4334 = vmatpush1.xpose.msra.mxu0 0.0
  %4335 = vmatprep.subr.mxu0 0.0
  %4336 = vmatpush1.xpose.msra.mxu0 0.0
  %4337 = vmatprep.subr.mxu0 0.0
  %4338 = vmatpush1.xpose.msra.mxu0 0.0
  %4339 = vmatprep.subr.mxu0 0.0
  %4340 = vmatpush1.xpose.msra.mxu0 0.0
  %4341 = vmatprep.subr.mxu0 0.0
  %4342 = vmatpush1.xpose.msra.mxu0 0.0
  %4343 = vmatprep.subr.mxu0 0.0
  %4344 = vmatpush1.xpose.msra.mxu0 0.0
  %4345 = vmatprep.subr.mxu0 0.0
  %4346 = vmatpush1.xpose.msra.mxu0 0.0
  %4347 = vmatprep.subr.mxu0 0.0
  %4348 = vmatpush1.xpose.msra.mxu0 0.0
  %4349 = vmatprep.subr.mxu0 0.0
  %4350 = vmatpush1.xpose.msra.mxu0 0.0
  %4351 = vmatprep.subr.mxu0 0.0
  %4352 = vmatpush1.xpose.msra.mxu0 0.0
  %4353 = vmatprep.subr.mxu0 0.0
  %4354 = vmatpush1.xpose.msra.mxu0 0.0
  %4355 = vmatprep.subr.mxu0 0.0
  %4356 = vmatpush1.xpose.msra.mxu0 0.0
  %4357 = vmatprep.subr.mxu0 0.0
  %4358 = vmatpush1.xpose.msra.mxu0 0.0
  %4359 = vmatprep.subr.mxu0 0.0
  %4360 = vmatpush1.xpose.msra.mxu0 0.0
  %4361 = vmatprep.subr.mxu0 0.0
  %4362 = vmatpush1.xpose.msra.mxu0 0.0
  %4363 = vmatprep.subr.mxu0 0.0
  %4364 = vmatpush1.xpose.msra.mxu0 0.0
  %4365 = vmatprep.subr.mxu0 0.0
  %4366 = vmatpush1.xpose.msra.mxu0 0.0
  %4367 = vmatprep.subr.mxu0 0.0
  %4368 = vmatpush1.xpose.msra.mxu0 0.0
  %4369 = vmatprep.mubr.f32.mxu0 0.0
  %4370 = vmatmul.mubr.f32.gmra.mrb[0].mxu0 %v4300
  %v4371 = vpop.f32.mrb[0].mxu0
  %v4372 = vadd.f32 0.0, %v4371
  %v4373 = vpop.f32.mrb[0].mxu0
  %4374 = vdwg.mxu0
  %v4376 = vsel %vm368, %v4209, 0
  %v4379 = vsel %vm368, %v4296, 0
  %4381 = vmatprep.subr.mxu0 0.0
  %4382 = vmatpush1.xpose.msra.mxu0 %v4379
  %4383 = vmatprep.subr.mxu0 0.0
  %4384 = vmatpush1.xpose.msra.mxu0 0.0
  %4385 = vmatprep.subr.mxu0 0.0
  %4386 = vmatpush1.xpose.msra.mxu0 0.0
  %4387 = vmatprep.subr.mxu0 0.0
  %4388 = vmatpush1.xpose.msra.mxu0 0.0
  %4389 = vmatprep.subr.mxu0 0.0
  %4390 = vmatpush1.xpose.msra.mxu0 0.0
  %4391 = vmatprep.subr.mxu0 0.0
  %4392 = vmatpush1.xpose.msra.mxu0 0.0
  %4393 = vmatprep.subr.mxu0 0.0
  %4394 = vmatpush1.xpose.msra.mxu0 0.0
  %4395 = vmatprep.subr.mxu0 0.0
  %4396 = vmatpush1.xpose.msra.mxu0 0.0
  %4397 = vmatprep.subr.mxu0 0.0
  %4398 = vmatpush1.xpose.msra.mxu0 0.0
  %4399 = vmatprep.subr.mxu0 0.0
  %4400 = vmatpush1.xpose.msra.mxu0 0.0
  %4401 = vmatprep.subr.mxu0 0.0
  %4402 = vmatpush1.xpose.msra.mxu0 0.0
  %4403 = vmatprep.subr.mxu0 0.0
  %4404 = vmatpush1.xpose.msra.mxu0 0.0
  %4405 = vmatprep.subr.mxu0 0.0
  %4406 = vmatpush1.xpose.msra.mxu0 0.0
  %4407 = vmatprep.subr.mxu0 0.0
  %4408 = vmatpush1.xpose.msra.mxu0 0.0
  %4409 = vmatprep.subr.mxu0 0.0
  %4410 = vmatpush1.xpose.msra.mxu0 0.0
  %4411 = vmatprep.subr.mxu0 0.0
  %4412 = vmatpush1.xpose.msra.mxu0 0.0
  %4413 = vmatprep.subr.mxu0 0.0
  %4414 = vmatpush1.xpose.msra.mxu0 0.0
  %4415 = vmatprep.subr.mxu0 0.0
  %4416 = vmatpush1.xpose.msra.mxu0 0.0
  %4417 = vmatprep.subr.mxu0 0.0
  %4418 = vmatpush1.xpose.msra.mxu0 0.0
  %4419 = vmatprep.subr.mxu0 0.0
  %4420 = vmatpush1.xpose.msra.mxu0 0.0
  %4421 = vmatprep.subr.mxu0 0.0
  %4422 = vmatpush1.xpose.msra.mxu0 0.0
  %4423 = vmatprep.subr.mxu0 0.0
  %4424 = vmatpush1.xpose.msra.mxu0 0.0
  %4425 = vmatprep.subr.mxu0 0.0
  %4426 = vmatpush1.xpose.msra.mxu0 0.0
  %4427 = vmatprep.subr.mxu0 0.0
  %4428 = vmatpush1.xpose.msra.mxu0 0.0
  %4429 = vmatprep.subr.mxu0 0.0
  %4430 = vmatpush1.xpose.msra.mxu0 0.0
  %4431 = vmatprep.subr.mxu0 0.0
  %4432 = vmatpush1.xpose.msra.mxu0 0.0
  %4433 = vmatprep.subr.mxu0 0.0
  %4434 = vmatpush1.xpose.msra.mxu0 0.0
  %4435 = vmatprep.subr.mxu0 0.0
  %4436 = vmatpush1.xpose.msra.mxu0 0.0
  %4437 = vmatprep.subr.mxu0 0.0
  %4438 = vmatpush1.xpose.msra.mxu0 0.0
  %4439 = vmatprep.subr.mxu0 0.0
  %4440 = vmatpush1.xpose.msra.mxu0 0.0
  %4441 = vmatprep.subr.mxu0 0.0
  %4442 = vmatpush1.xpose.msra.mxu0 0.0
  %4443 = vmatprep.subr.mxu0 0.0
  %4444 = vmatpush1.xpose.msra.mxu0 0.0
  %4445 = vmatprep.mubr.f32.mxu0 0.0
  %4446 = vmatmul.mubr.f32.gmra.mrb[0].mxu0 %v4376
  %v4447 = vpop.f32.mrb[0].mxu0
  %v4448 = vadd.f32 0.0, %v4447
  %v4449 = vpop.f32.mrb[0].mxu0
  %4450 = vdwg.mxu0
  %v4451 = vmul.f32 %v4372, 0.35355338
  %v4452 = vmul.f32 %v4448, 0.35355338
  %v4453 = vadd.f32 %v4451, %v184
  %v4454 = vadd.f32 %v4452, %v185
  %v4455 = vsel %vm368, %v4453, -inf
  %4456 = vmax.xlane.f32.xlu0 %v4455
  %v4457 = vpop.xlane.xlu0 %4456
  %v4458 = vsel %vm368, %v4454, -inf
  %4459 = vmax.xlane.f32.xlu0 %v4458
  %v4460 = vpop.xlane.xlu0 %4459
  %v4461 = vsub.f32 %v4453, %v4457
  %v4462 = vsub.f32 %v4454, %v4460
  %v4463 = vmul.f32 %v4461, 1.442695
  %v4464 = vpow.pop %v4463
  %v4465 = vmul.f32 %v4462, 1.442695
  %v4466 = vpow.pop %v4465
  %v4467 = vsel %vm368, %v4464, 0.0
  %4468 = vadd.xlane.f32.xlu0 %v4467
  %v4469 = vpop.xlane.xlu0 %4468
  %v4470 = vsel %vm368, %v4466, 0.0
  %4471 = vadd.xlane.f32.xlu0 %v4470
  %v4472 = vpop.xlane.xlu0 %4471
  %v4473 = vrcp.pop %v4469
  %v4474 = vrcp.pop %v4472
  %v4475 = vmul.f32 %v4464, %v4473
  %v4476 = vmul.f32 %v4466, %v4474
  %4477 = vrot.lane.b32.xlu0 %v4291, 96
  %v4478 = vpop.permute.xlu0 %4477
  %v4481 = vsel %vm368, %v4475, 0
  %4483 = vmatprep.subr.mxu0 0.0
  %4484 = vmatpush1.msra.mxu0 %v4478
  %4485 = vmatprep.subr.mxu0 0.0
  %4486 = vmatpush1.msra.mxu0 0.0
  %4487 = vmatprep.subr.mxu0 0.0
  %4488 = vmatpush1.msra.mxu0 0.0
  %4489 = vmatprep.subr.mxu0 0.0
  %4490 = vmatpush1.msra.mxu0 0.0
  %4491 = vmatprep.subr.mxu0 0.0
  %4492 = vmatpush1.msra.mxu0 0.0
  %4493 = vmatprep.subr.mxu0 0.0
  %4494 = vmatpush1.msra.mxu0 0.0
  %4495 = vmatprep.subr.mxu0 0.0
  %4496 = vmatpush1.msra.mxu0 0.0
  %4497 = vmatprep.subr.mxu0 0.0
  %4498 = vmatpush1.msra.mxu0 0.0
  %4499 = vmatprep.subr.mxu0 0.0
  %4500 = vmatpush1.msra.mxu0 0.0
  %4501 = vmatprep.subr.mxu0 0.0
  %4502 = vmatpush1.msra.mxu0 0.0
  %4503 = vmatprep.subr.mxu0 0.0
  %4504 = vmatpush1.msra.mxu0 0.0
  %4505 = vmatprep.subr.mxu0 0.0
  %4506 = vmatpush1.msra.mxu0 0.0
  %4507 = vmatprep.subr.mxu0 0.0
  %4508 = vmatpush1.msra.mxu0 0.0
  %4509 = vmatprep.subr.mxu0 0.0
  %4510 = vmatpush1.msra.mxu0 0.0
  %4511 = vmatprep.subr.mxu0 0.0
  %4512 = vmatpush1.msra.mxu0 0.0
  %4513 = vmatprep.subr.mxu0 0.0
  %4514 = vmatpush1.msra.mxu0 0.0
  %4515 = vmatprep.subr.mxu0 0.0
  %4516 = vmatpush1.msra.mxu0 0.0
  %4517 = vmatprep.subr.mxu0 0.0
  %4518 = vmatpush1.msra.mxu0 0.0
  %4519 = vmatprep.subr.mxu0 0.0
  %4520 = vmatpush1.msra.mxu0 0.0
  %4521 = vmatprep.subr.mxu0 0.0
  %4522 = vmatpush1.msra.mxu0 0.0
  %4523 = vmatprep.subr.mxu0 0.0
  %4524 = vmatpush1.msra.mxu0 0.0
  %4525 = vmatprep.subr.mxu0 0.0
  %4526 = vmatpush1.msra.mxu0 0.0
  %4527 = vmatprep.subr.mxu0 0.0
  %4528 = vmatpush1.msra.mxu0 0.0
  %4529 = vmatprep.subr.mxu0 0.0
  %4530 = vmatpush1.msra.mxu0 0.0
  %4531 = vmatprep.subr.mxu0 0.0
  %4532 = vmatpush1.msra.mxu0 0.0
  %4533 = vmatprep.subr.mxu0 0.0
  %4534 = vmatpush1.msra.mxu0 0.0
  %4535 = vmatprep.subr.mxu0 0.0
  %4536 = vmatpush1.msra.mxu0 0.0
  %4537 = vmatprep.subr.mxu0 0.0
  %4538 = vmatpush1.msra.mxu0 0.0
  %4539 = vmatprep.subr.mxu0 0.0
  %4540 = vmatpush1.msra.mxu0 0.0
  %4541 = vmatprep.subr.mxu0 0.0
  %4542 = vmatpush1.msra.mxu0 0.0
  %4543 = vmatprep.subr.mxu0 0.0
  %4544 = vmatpush1.msra.mxu0 0.0
  %4545 = vmatprep.subr.mxu0 0.0
  %4546 = vmatpush1.msra.mxu0 0.0
  %4547 = vmatprep.mubr.f32.mxu0 0.0
  %4548 = vmatmul.mubr.f32.gmra.mrb[0].mxu0 %v4481
  %v4549 = vpop.f32.mrb[0].mxu0
  %v4550 = vadd.f32 0.0, %v4549
  %v4551 = vpop.f32.mrb[0].mxu0
  %4552 = vdwg.mxu0
  %4553 = vrot.lane.b32.xlu0 %v4296, 96
  %v4554 = vpop.permute.xlu0 %4553
  %v4557 = vsel %vm368, %v4476, 0
  %4559 = vmatprep.subr.mxu0 0.0
  %4560 = vmatpush1.msra.mxu0 %v4554
  %4561 = vmatprep.subr.mxu0 0.0
  %4562 = vmatpush1.msra.mxu0 0.0
  %4563 = vmatprep.subr.mxu0 0.0
  %4564 = vmatpush1.msra.mxu0 0.0
  %4565 = vmatprep.subr.mxu0 0.0
  %4566 = vmatpush1.msra.mxu0 0.0
  %4567 = vmatprep.subr.mxu0 0.0
  %4568 = vmatpush1.msra.mxu0 0.0
  %4569 = vmatprep.subr.mxu0 0.0
  %4570 = vmatpush1.msra.mxu0 0.0
  %4571 = vmatprep.subr.mxu0 0.0
  %4572 = vmatpush1.msra.mxu0 0.0
  %4573 = vmatprep.subr.mxu0 0.0
  %4574 = vmatpush1.msra.mxu0 0.0
  %4575 = vmatprep.subr.mxu0 0.0
  %4576 = vmatpush1.msra.mxu0 0.0
  %4577 = vmatprep.subr.mxu0 0.0
  %4578 = vmatpush1.msra.mxu0 0.0
  %4579 = vmatprep.subr.mxu0 0.0
  %4580 = vmatpush1.msra.mxu0 0.0
  %4581 = vmatprep.subr.mxu0 0.0
  %4582 = vmatpush1.msra.mxu0 0.0
  %4583 = vmatprep.subr.mxu0 0.0
  %4584 = vmatpush1.msra.mxu0 0.0
  %4585 = vmatprep.subr.mxu0 0.0
  %4586 = vmatpush1.msra.mxu0 0.0
  %4587 = vmatprep.subr.mxu0 0.0
  %4588 = vmatpush1.msra.mxu0 0.0
  %4589 = vmatprep.subr.mxu0 0.0
  %4590 = vmatpush1.msra.mxu0 0.0
  %4591 = vmatprep.subr.mxu0 0.0
  %4592 = vmatpush1.msra.mxu0 0.0
  %4593 = vmatprep.subr.mxu0 0.0
  %4594 = vmatpush1.msra.mxu0 0.0
  %4595 = vmatprep.subr.mxu0 0.0
  %4596 = vmatpush1.msra.mxu0 0.0
  %4597 = vmatprep.subr.mxu0 0.0
  %4598 = vmatpush1.msra.mxu0 0.0
  %4599 = vmatprep.subr.mxu0 0.0
  %4600 = vmatpush1.msra.mxu0 0.0
  %4601 = vmatprep.subr.mxu0 0.0
  %4602 = vmatpush1.msra.mxu0 0.0
  %4603 = vmatprep.subr.mxu0 0.0
  %4604 = vmatpush1.msra.mxu0 0.0
  %4605 = vmatprep.subr.mxu0 0.0
  %4606 = vmatpush1.msra.mxu0 0.0
  %4607 = vmatprep.subr.mxu0 0.0
  %4608 = vmatpush1.msra.mxu0 0.0
  %4609 = vmatprep.subr.mxu0 0.0
  %4610 = vmatpush1.msra.mxu0 0.0
  %4611 = vmatprep.subr.mxu0 0.0
  %4612 = vmatpush1.msra.mxu0 0.0
  %4613 = vmatprep.subr.mxu0 0.0
  %4614 = vmatpush1.msra.mxu0 0.0
  %4615 = vmatprep.subr.mxu0 0.0
  %4616 = vmatpush1.msra.mxu0 0.0
  %4617 = vmatprep.subr.mxu0 0.0
  %4618 = vmatpush1.msra.mxu0 0.0
  %4619 = vmatprep.subr.mxu0 0.0
  %4620 = vmatpush1.msra.mxu0 0.0
  %4621 = vmatprep.subr.mxu0 0.0
  %4622 = vmatpush1.msra.mxu0 0.0
  %4623 = vmatprep.mubr.f32.mxu0 0.0
  %4624 = vmatmul.mubr.f32.gmra.mrb[0].mxu0 %v4557
  %v4625 = vpop.f32.mrb[0].mxu0
  %v4626 = vadd.f32 0.0, %v4625
  %v4627 = vpop.f32.mrb[0].mxu0
  %4628 = vdwg.mxu0
  %4629 = vrot.lane.b32.xlu0 %v4204, 120
  %v4630 = vpop.permute.xlu0 %4629
  %4631 = vrot.lane.b32.xlu0 %v4291, 120
  %v4632 = vpop.permute.xlu0 %4631
  %v4633 = vsel %vm368, %v4630, 0
  %v4635 = vsel %vm368, %v4632, 0
  %4637 = vmatprep.subr.mxu0 0.0
  %4638 = vmatpush1.xpose.msra.mxu0 %v4635
  %4639 = vmatprep.subr.mxu0 0.0
  %4640 = vmatpush1.xpose.msra.mxu0 0.0
  %4641 = vmatprep.subr.mxu0 0.0
  %4642 = vmatpush1.xpose.msra.mxu0 0.0
  %4643 = vmatprep.subr.mxu0 0.0
  %4644 = vmatpush1.xpose.msra.mxu0 0.0
  %4645 = vmatprep.subr.mxu0 0.0
  %4646 = vmatpush1.xpose.msra.mxu0 0.0
  %4647 = vmatprep.subr.mxu0 0.0
  %4648 = vmatpush1.xpose.msra.mxu0 0.0
  %4649 = vmatprep.subr.mxu0 0.0
  %4650 = vmatpush1.xpose.msra.mxu0 0.0
  %4651 = vmatprep.subr.mxu0 0.0
  %4652 = vmatpush1.xpose.msra.mxu0 0.0
  %4653 = vmatprep.subr.mxu0 0.0
  %4654 = vmatpush1.xpose.msra.mxu0 0.0
  %4655 = vmatprep.subr.mxu0 0.0
  %4656 = vmatpush1.xpose.msra.mxu0 0.0
  %4657 = vmatprep.subr.mxu0 0.0
  %4658 = vmatpush1.xpose.msra.mxu0 0.0
  %4659 = vmatprep.subr.mxu0 0.0
  %4660 = vmatpush1.xpose.msra.mxu0 0.0
  %4661 = vmatprep.subr.mxu0 0.0
  %4662 = vmatpush1.xpose.msra.mxu0 0.0
  %4663 = vmatprep.subr.mxu0 0.0
  %4664 = vmatpush1.xpose.msra.mxu0 0.0
  %4665 = vmatprep.subr.mxu0 0.0
  %4666 = vmatpush1.xpose.msra.mxu0 0.0
  %4667 = vmatprep.subr.mxu0 0.0
  %4668 = vmatpush1.xpose.msra.mxu0 0.0
  %4669 = vmatprep.subr.mxu0 0.0
  %4670 = vmatpush1.xpose.msra.mxu0 0.0
  %4671 = vmatprep.subr.mxu0 0.0
  %4672 = vmatpush1.xpose.msra.mxu0 0.0
  %4673 = vmatprep.subr.mxu0 0.0
  %4674 = vmatpush1.xpose.msra.mxu0 0.0
  %4675 = vmatprep.subr.mxu0 0.0
  %4676 = vmatpush1.xpose.msra.mxu0 0.0
  %4677 = vmatprep.subr.mxu0 0.0
  %4678 = vmatpush1.xpose.msra.mxu0 0.0
  %4679 = vmatprep.subr.mxu0 0.0
  %4680 = vmatpush1.xpose.msra.mxu0 0.0
  %4681 = vmatprep.subr.mxu0 0.0
  %4682 = vmatpush1.xpose.msra.mxu0 0.0
  %4683 = vmatprep.subr.mxu0 0.0
  %4684 = vmatpush1.xpose.msra.mxu0 0.0
  %4685 = vmatprep.subr.mxu0 0.0
  %4686 = vmatpush1.xpose.msra.mxu0 0.0
  %4687 = vmatprep.subr.mxu0 0.0
  %4688 = vmatpush1.xpose.msra.mxu0 0.0
  %4689 = vmatprep.subr.mxu0 0.0
  %4690 = vmatpush1.xpose.msra.mxu0 0.0
  %4691 = vmatprep.subr.mxu0 0.0
  %4692 = vmatpush1.xpose.msra.mxu0 0.0
  %4693 = vmatprep.subr.mxu0 0.0
  %4694 = vmatpush1.xpose.msra.mxu0 0.0
  %4695 = vmatprep.subr.mxu0 0.0
  %4696 = vmatpush1.xpose.msra.mxu0 0.0
  %4697 = vmatprep.subr.mxu0 0.0
  %4698 = vmatpush1.xpose.msra.mxu0 0.0
  %4699 = vmatprep.subr.mxu0 0.0
  %4700 = vmatpush1.xpose.msra.mxu0 0.0
  %4701 = vmatprep.mubr.f32.mxu0 0.0
  %4702 = vmatmul.mubr.f32.gmra.mrb[0].mxu0 %v4633
  %v4703 = vpop.f32.mrb[0].mxu0
  %v4704 = vadd.f32 0.0, %v4703
  %v4705 = vpop.f32.mrb[0].mxu0
  %4706 = vdwg.mxu0
  %4707 = vrot.lane.b32.xlu0 %v4209, 120
  %v4708 = vpop.permute.xlu0 %4707
  %4709 = vrot.lane.b32.xlu0 %v4296, 120
  %v4710 = vpop.permute.xlu0 %4709
  %v4711 = vsel %vm368, %v4708, 0
  %v4713 = vsel %vm368, %v4710, 0
  %4715 = vmatprep.subr.mxu0 0.0
  %4716 = vmatpush1.xpose.msra.mxu0 %v4713
  %4717 = vmatprep.subr.mxu0 0.0
  %4718 = vmatpush1.xpose.msra.mxu0 0.0
  %4719 = vmatprep.subr.mxu0 0.0
  %4720 = vmatpush1.xpose.msra.mxu0 0.0
  %4721 = vmatprep.subr.mxu0 0.0
  %4722 = vmatpush1.xpose.msra.mxu0 0.0
  %4723 = vmatprep.subr.mxu0 0.0
  %4724 = vmatpush1.xpose.msra.mxu0 0.0
  %4725 = vmatprep.subr.mxu0 0.0
  %4726 = vmatpush1.xpose.msra.mxu0 0.0
  %4727 = vmatprep.subr.mxu0 0.0
  %4728 = vmatpush1.xpose.msra.mxu0 0.0
  %4729 = vmatprep.subr.mxu0 0.0
  %4730 = vmatpush1.xpose.msra.mxu0 0.0
  %4731 = vmatprep.subr.mxu0 0.0
  %4732 = vmatpush1.xpose.msra.mxu0 0.0
  %4733 = vmatprep.subr.mxu0 0.0
  %4734 = vmatpush1.xpose.msra.mxu0 0.0
  %4735 = vmatprep.subr.mxu0 0.0
  %4736 = vmatpush1.xpose.msra.mxu0 0.0
  %4737 = vmatprep.subr.mxu0 0.0
  %4738 = vmatpush1.xpose.msra.mxu0 0.0
  %4739 = vmatprep.subr.mxu0 0.0
  %4740 = vmatpush1.xpose.msra.mxu0 0.0
  %4741 = vmatprep.subr.mxu0 0.0
  %4742 = vmatpush1.xpose.msra.mxu0 0.0
  %4743 = vmatprep.subr.mxu0 0.0
  %4744 = vmatpush1.xpose.msra.mxu0 0.0
  %4745 = vmatprep.subr.mxu0 0.0
  %4746 = vmatpush1.xpose.msra.mxu0 0.0
  %4747 = vmatprep.subr.mxu0 0.0
  %4748 = vmatpush1.xpose.msra.mxu0 0.0
  %4749 = vmatprep.subr.mxu0 0.0
  %4750 = vmatpush1.xpose.msra.mxu0 0.0
  %4751 = vmatprep.subr.mxu0 0.0
  %4752 = vmatpush1.xpose.msra.mxu0 0.0
  %4753 = vmatprep.subr.mxu0 0.0
  %4754 = vmatpush1.xpose.msra.mxu0 0.0
  %4755 = vmatprep.subr.mxu0 0.0
  %4756 = vmatpush1.xpose.msra.mxu0 0.0
  %4757 = vmatprep.subr.mxu0 0.0
  %4758 = vmatpush1.xpose.msra.mxu0 0.0
  %4759 = vmatprep.subr.mxu0 0.0
  %4760 = vmatpush1.xpose.msra.mxu0 0.0
  %4761 = vmatprep.subr.mxu0 0.0
  %4762 = vmatpush1.xpose.msra.mxu0 0.0
  %4763 = vmatprep.subr.mxu0 0.0
  %4764 = vmatpush1.xpose.msra.mxu0 0.0
  %4765 = vmatprep.subr.mxu0 0.0
  %4766 = vmatpush1.xpose.msra.mxu0 0.0
  %4767 = vmatprep.subr.mxu0 0.0
  %4768 = vmatpush1.xpose.msra.mxu0 0.0
  %4769 = vmatprep.subr.mxu0 0.0
  %4770 = vmatpush1.xpose.msra.mxu0 0.0
  %4771 = vmatprep.subr.mxu0 0.0
  %4772 = vmatpush1.xpose.msra.mxu0 0.0
  %4773 = vmatprep.subr.mxu0 0.0
  %4774 = vmatpush1.xpose.msra.mxu0 0.0
  %4775 = vmatprep.subr.mxu0 0.0
  %4776 = vmatpush1.xpose.msra.mxu0 0.0
  %4777 = vmatprep.subr.mxu0 0.0
  %4778 = vmatpush1.xpose.msra.mxu0 0.0
  %4779 = vmatprep.mubr.f32.mxu0 0.0
  %4780 = vmatmul.mubr.f32.gmra.mrb[0].mxu0 %v4711
  %v4781 = vpop.f32.mrb[0].mxu0
  %v4782 = vadd.f32 0.0, %v4781
  %v4783 = vpop.f32.mrb[0].mxu0
  %4784 = vdwg.mxu0
  %v4785 = vmul.f32 %v4704, 0.35355338
  %v4786 = vmul.f32 %v4782, 0.35355338
  %v4787 = vadd.f32 %v4785, %v184
  %v4788 = vadd.f32 %v4786, %v185
  %v4789 = vsel %vm368, %v4787, -inf
  %4790 = vmax.xlane.f32.xlu0 %v4789
  %v4791 = vpop.xlane.xlu0 %4790
  %v4792 = vsel %vm368, %v4788, -inf
  %4793 = vmax.xlane.f32.xlu0 %v4792
  %v4794 = vpop.xlane.xlu0 %4793
  %v4795 = vsub.f32 %v4787, %v4791
  %v4796 = vsub.f32 %v4788, %v4794
  %v4797 = vmul.f32 %v4795, 1.442695
  %v4798 = vpow.pop %v4797
  %v4799 = vmul.f32 %v4796, 1.442695
  %v4800 = vpow.pop %v4799
  %v4801 = vsel %vm368, %v4798, 0.0
  %4802 = vadd.xlane.f32.xlu0 %v4801
  %v4803 = vpop.xlane.xlu0 %4802
  %v4804 = vsel %vm368, %v4800, 0.0
  %4805 = vadd.xlane.f32.xlu0 %v4804
  %v4806 = vpop.xlane.xlu0 %4805
  %v4807 = vrcp.pop %v4803
  %v4808 = vrcp.pop %v4806
  %v4809 = vmul.f32 %v4798, %v4807
  %v4810 = vmul.f32 %v4800, %v4808
  %4811 = vrot.lane.b32.xlu0 %v4291, 88
  %v4812 = vpop.permute.xlu0 %4811
  %v4815 = vsel %vm368, %v4809, 0
  %4817 = vmatprep.subr.mxu0 0.0
  %4818 = vmatpush1.msra.mxu0 %v4812
  %4819 = vmatprep.subr.mxu0 0.0
  %4820 = vmatpush1.msra.mxu0 0.0
  %4821 = vmatprep.subr.mxu0 0.0
  %4822 = vmatpush1.msra.mxu0 0.0
  %4823 = vmatprep.subr.mxu0 0.0
  %4824 = vmatpush1.msra.mxu0 0.0
  %4825 = vmatprep.subr.mxu0 0.0
  %4826 = vmatpush1.msra.mxu0 0.0
  %4827 = vmatprep.subr.mxu0 0.0
  %4828 = vmatpush1.msra.mxu0 0.0
  %4829 = vmatprep.subr.mxu0 0.0
  %4830 = vmatpush1.msra.mxu0 0.0
  %4831 = vmatprep.subr.mxu0 0.0
  %4832 = vmatpush1.msra.mxu0 0.0
  %4833 = vmatprep.subr.mxu0 0.0
  %4834 = vmatpush1.msra.mxu0 0.0
  %4835 = vmatprep.subr.mxu0 0.0
  %4836 = vmatpush1.msra.mxu0 0.0
  %4837 = vmatprep.subr.mxu0 0.0
  %4838 = vmatpush1.msra.mxu0 0.0
  %4839 = vmatprep.subr.mxu0 0.0
  %4840 = vmatpush1.msra.mxu0 0.0
  %4841 = vmatprep.subr.mxu0 0.0
  %4842 = vmatpush1.msra.mxu0 0.0
  %4843 = vmatprep.subr.mxu0 0.0
  %4844 = vmatpush1.msra.mxu0 0.0
  %4845 = vmatprep.subr.mxu0 0.0
  %4846 = vmatpush1.msra.mxu0 0.0
  %4847 = vmatprep.subr.mxu0 0.0
  %4848 = vmatpush1.msra.mxu0 0.0
  %4849 = vmatprep.subr.mxu0 0.0
  %4850 = vmatpush1.msra.mxu0 0.0
  %4851 = vmatprep.subr.mxu0 0.0
  %4852 = vmatpush1.msra.mxu0 0.0
  %4853 = vmatprep.subr.mxu0 0.0
  %4854 = vmatpush1.msra.mxu0 0.0
  %4855 = vmatprep.subr.mxu0 0.0
  %4856 = vmatpush1.msra.mxu0 0.0
  %4857 = vmatprep.subr.mxu0 0.0
  %4858 = vmatpush1.msra.mxu0 0.0
  %4859 = vmatprep.subr.mxu0 0.0
  %4860 = vmatpush1.msra.mxu0 0.0
  %4861 = vmatprep.subr.mxu0 0.0
  %4862 = vmatpush1.msra.mxu0 0.0
  %4863 = vmatprep.subr.mxu0 0.0
  %4864 = vmatpush1.msra.mxu0 0.0
  %4865 = vmatprep.subr.mxu0 0.0
  %4866 = vmatpush1.msra.mxu0 0.0
  %4867 = vmatprep.subr.mxu0 0.0
  %4868 = vmatpush1.msra.mxu0 0.0
  %4869 = vmatprep.subr.mxu0 0.0
  %4870 = vmatpush1.msra.mxu0 0.0
  %4871 = vmatprep.subr.mxu0 0.0
  %4872 = vmatpush1.msra.mxu0 0.0
  %4873 = vmatprep.subr.mxu0 0.0
  %4874 = vmatpush1.msra.mxu0 0.0
  %4875 = vmatprep.subr.mxu0 0.0
  %4876 = vmatpush1.msra.mxu0 0.0
  %4877 = vmatprep.subr.mxu0 0.0
  %4878 = vmatpush1.msra.mxu0 0.0
  %4879 = vmatprep.subr.mxu0 0.0
  %4880 = vmatpush1.msra.mxu0 0.0
  %4881 = vmatprep.mubr.f32.mxu0 0.0
  %4882 = vmatmul.mubr.f32.gmra.mrb[0].mxu0 %v4815
  %v4883 = vpop.f32.mrb[0].mxu0
  %v4884 = vadd.f32 0.0, %v4883
  %v4885 = vpop.f32.mrb[0].mxu0
  %4886 = vdwg.mxu0
  %4887 = vrot.lane.b32.xlu0 %v4296, 88
  %v4888 = vpop.permute.xlu0 %4887
  %v4891 = vsel %vm368, %v4810, 0
  %4893 = vmatprep.subr.mxu0 0.0
  %4894 = vmatpush1.msra.mxu0 %v4888
  %4895 = vmatprep.subr.mxu0 0.0
  %4896 = vmatpush1.msra.mxu0 0.0
  %4897 = vmatprep.subr.mxu0 0.0
  %4898 = vmatpush1.msra.mxu0 0.0
  %4899 = vmatprep.subr.mxu0 0.0
  %4900 = vmatpush1.msra.mxu0 0.0
  %4901 = vmatprep.subr.mxu0 0.0
  %4902 = vmatpush1.msra.mxu0 0.0
  %4903 = vmatprep.subr.mxu0 0.0
  %4904 = vmatpush1.msra.mxu0 0.0
  %4905 = vmatprep.subr.mxu0 0.0
  %4906 = vmatpush1.msra.mxu0 0.0
  %4907 = vmatprep.subr.mxu0 0.0
  %4908 = vmatpush1.msra.mxu0 0.0
  %4909 = vmatprep.subr.mxu0 0.0
  %4910 = vmatpush1.msra.mxu0 0.0
  %4911 = vmatprep.subr.mxu0 0.0
  %4912 = vmatpush1.msra.mxu0 0.0
  %4913 = vmatprep.subr.mxu0 0.0
  %4914 = vmatpush1.msra.mxu0 0.0
  %4915 = vmatprep.subr.mxu0 0.0
  %4916 = vmatpush1.msra.mxu0 0.0
  %4917 = vmatprep.subr.mxu0 0.0
  %4918 = vmatpush1.msra.mxu0 0.0
  %4919 = vmatprep.subr.mxu0 0.0
  %4920 = vmatpush1.msra.mxu0 0.0
  %4921 = vmatprep.subr.mxu0 0.0
  %4922 = vmatpush1.msra.mxu0 0.0
  %4923 = vmatprep.subr.mxu0 0.0
  %4924 = vmatpush1.msra.mxu0 0.0
  %4925 = vmatprep.subr.mxu0 0.0
  %4926 = vmatpush1.msra.mxu0 0.0
  %4927 = vmatprep.subr.mxu0 0.0
  %4928 = vmatpush1.msra.mxu0 0.0
  %4929 = vmatprep.subr.mxu0 0.0
  %4930 = vmatpush1.msra.mxu0 0.0
  %4931 = vmatprep.subr.mxu0 0.0
  %4932 = vmatpush1.msra.mxu0 0.0
  %4933 = vmatprep.subr.mxu0 0.0
  %4934 = vmatpush1.msra.mxu0 0.0
  %4935 = vmatprep.subr.mxu0 0.0
  %4936 = vmatpush1.msra.mxu0 0.0
  %4937 = vmatprep.subr.mxu0 0.0
  %4938 = vmatpush1.msra.mxu0 0.0
  %4939 = vmatprep.subr.mxu0 0.0
  %4940 = vmatpush1.msra.mxu0 0.0
  %4941 = vmatprep.subr.mxu0 0.0
  %4942 = vmatpush1.msra.mxu0 0.0
  %4943 = vmatprep.subr.mxu0 0.0
  %4944 = vmatpush1.msra.mxu0 0.0
  %4945 = vmatprep.subr.mxu0 0.0
  %4946 = vmatpush1.msra.mxu0 0.0
  %4947 = vmatprep.subr.mxu0 0.0
  %4948 = vmatpush1.msra.mxu0 0.0
  %4949 = vmatprep.subr.mxu0 0.0
  %4950 = vmatpush1.msra.mxu0 0.0
  %4951 = vmatprep.subr.mxu0 0.0
  %4952 = vmatpush1.msra.mxu0 0.0
  %4953 = vmatprep.subr.mxu0 0.0
  %4954 = vmatpush1.msra.mxu0 0.0
  %4955 = vmatprep.subr.mxu0 0.0
  %4956 = vmatpush1.msra.mxu0 0.0
  %4957 = vmatprep.mubr.f32.mxu0 0.0
  %4958 = vmatmul.mubr.f32.gmra.mrb[0].mxu0 %v4891
  %v4959 = vpop.f32.mrb[0].mxu0
  %v4960 = vadd.f32 0.0, %v4959
  %v4961 = vpop.f32.mrb[0].mxu0
  %4962 = vdwg.mxu0
  %v4964 = vsel %vm368, %v4884, 0
  %v4967 = vsel %vm368, %v4960, 0
  %4969 = vmatprep.subr.mxu0 0.0
  %4970 = vmatpush1.msra.mxu0 %v196
  %4971 = vmatprep.subr.mxu0 0.0
  %4972 = vmatpush1.msra.mxu0 0.0
  %4973 = vmatprep.subr.mxu0 0.0
  %4974 = vmatpush1.msra.mxu0 0.0
  %4975 = vmatprep.subr.mxu0 0.0
  %4976 = vmatpush1.msra.mxu0 0.0
  %4977 = vmatprep.subr.mxu0 0.0
  %4978 = vmatpush1.msra.mxu0 0.0
  %4979 = vmatprep.subr.mxu0 0.0
  %4980 = vmatpush1.msra.mxu0 0.0
  %4981 = vmatprep.subr.mxu0 0.0
  %4982 = vmatpush1.msra.mxu0 0.0
  %4983 = vmatprep.subr.mxu0 0.0
  %4984 = vmatpush1.msra.mxu0 0.0
  %4985 = vmatprep.subr.mxu0 0.0
  %4986 = vmatpush1.msra.mxu0 0.0
  %4987 = vmatprep.subr.mxu0 0.0
  %4988 = vmatpush1.msra.mxu0 0.0
  %4989 = vmatprep.subr.mxu0 0.0
  %4990 = vmatpush1.msra.mxu0 0.0
  %4991 = vmatprep.subr.mxu0 0.0
  %4992 = vmatpush1.msra.mxu0 0.0
  %4993 = vmatprep.subr.mxu0 0.0
  %4994 = vmatpush1.msra.mxu0 0.0
  %4995 = vmatprep.subr.mxu0 0.0
  %4996 = vmatpush1.msra.mxu0 0.0
  %4997 = vmatprep.subr.mxu0 0.0
  %4998 = vmatpush1.msra.mxu0 0.0
  %4999 = vmatprep.subr.mxu0 0.0
  %5000 = vmatpush1.msra.mxu0 0.0
  %5001 = vmatprep.subr.mxu0 0.0
  %5002 = vmatpush1.msra.mxu0 0.0
  %5003 = vmatprep.subr.mxu0 0.0
  %5004 = vmatpush1.msra.mxu0 0.0
  %5005 = vmatprep.subr.mxu0 0.0
  %5006 = vmatpush1.msra.mxu0 0.0
  %5007 = vmatprep.subr.mxu0 0.0
  %5008 = vmatpush1.msra.mxu0 0.0
  %5009 = vmatprep.subr.mxu0 0.0
  %5010 = vmatpush1.msra.mxu0 0.0
  %5011 = vmatprep.subr.mxu0 0.0
  %5012 = vmatpush1.msra.mxu0 0.0
  %5013 = vmatprep.subr.mxu0 0.0
  %5014 = vmatpush1.msra.mxu0 0.0
  %5015 = vmatprep.subr.mxu0 0.0
  %5016 = vmatpush1.msra.mxu0 0.0
  %5017 = vmatprep.subr.mxu0 0.0
  %5018 = vmatpush1.msra.mxu0 0.0
  %5019 = vmatprep.subr.mxu0 0.0
  %5020 = vmatpush1.msra.mxu0 0.0
  %5021 = vmatprep.subr.mxu0 0.0
  %5022 = vmatpush1.msra.mxu0 0.0
  %5023 = vmatprep.subr.mxu0 0.0
  %5024 = vmatpush1.msra.mxu0 0.0
  %5025 = vmatprep.subr.mxu0 0.0
  %5026 = vmatpush1.msra.mxu0 0.0
  %5027 = vmatprep.subr.mxu0 0.0
  %5028 = vmatpush1.msra.mxu0 0.0
  %5029 = vmatprep.subr.mxu0 0.0
  %5030 = vmatpush1.msra.mxu0 0.0
  %5031 = vmatprep.subr.mxu0 0.0
  %5032 = vmatpush1.msra.mxu0 0.0
  %5033 = vmatprep.mubr.f32.mxu0 0.0
  %5034 = vmatmul.mubr.f32.gmra.mrb[0].mxu0 %v4964
  %v5035 = vpop.f32.mrb[0].mxu0
  %v5036 = vadd.f32 0.0, %v5035
  %v5037 = vpop.f32.mrb[0].mxu0
  %5038 = vmatprep.mubr.f32.mxu0 0.0
  %5039 = vmatmul.mubr.f32.gmra.mrb[0].mxu0 %v4967
  %v5040 = vpop.f32.mrb[0].mxu0
  %v5041 = vadd.f32 0.0, %v5040
  %v5042 = vpop.f32.mrb[0].mxu0
  %5043 = vdwg.mxu0
  %v5045 = vsel %vm368, %v4550, 0
  %v5048 = vsel %vm368, %v4626, 0
  %5050 = vmatprep.subr.mxu0 0.0
  %5051 = vmatpush1.msra.mxu0 %v195
  %5052 = vmatprep.subr.mxu0 0.0
  %5053 = vmatpush1.msra.mxu0 0.0
  %5054 = vmatprep.subr.mxu0 0.0
  %5055 = vmatpush1.msra.mxu0 0.0
  %5056 = vmatprep.subr.mxu0 0.0
  %5057 = vmatpush1.msra.mxu0 0.0
  %5058 = vmatprep.subr.mxu0 0.0
  %5059 = vmatpush1.msra.mxu0 0.0
  %5060 = vmatprep.subr.mxu0 0.0
  %5061 = vmatpush1.msra.mxu0 0.0
  %5062 = vmatprep.subr.mxu0 0.0
  %5063 = vmatpush1.msra.mxu0 0.0
  %5064 = vmatprep.subr.mxu0 0.0
  %5065 = vmatpush1.msra.mxu0 0.0
  %5066 = vmatprep.subr.mxu0 0.0
  %5067 = vmatpush1.msra.mxu0 0.0
  %5068 = vmatprep.subr.mxu0 0.0
  %5069 = vmatpush1.msra.mxu0 0.0
  %5070 = vmatprep.subr.mxu0 0.0
  %5071 = vmatpush1.msra.mxu0 0.0
  %5072 = vmatprep.subr.mxu0 0.0
  %5073 = vmatpush1.msra.mxu0 0.0
  %5074 = vmatprep.subr.mxu0 0.0
  %5075 = vmatpush1.msra.mxu0 0.0
  %5076 = vmatprep.subr.mxu0 0.0
  %5077 = vmatpush1.msra.mxu0 0.0
  %5078 = vmatprep.subr.mxu0 0.0
  %5079 = vmatpush1.msra.mxu0 0.0
  %5080 = vmatprep.subr.mxu0 0.0
  %5081 = vmatpush1.msra.mxu0 0.0
  %5082 = vmatprep.subr.mxu0 0.0
  %5083 = vmatpush1.msra.mxu0 0.0
  %5084 = vmatprep.subr.mxu0 0.0
  %5085 = vmatpush1.msra.mxu0 0.0
  %5086 = vmatprep.subr.mxu0 0.0
  %5087 = vmatpush1.msra.mxu0 0.0
  %5088 = vmatprep.subr.mxu0 0.0
  %5089 = vmatpush1.msra.mxu0 0.0
  %5090 = vmatprep.subr.mxu0 0.0
  %5091 = vmatpush1.msra.mxu0 0.0
  %5092 = vmatprep.subr.mxu0 0.0
  %5093 = vmatpush1.msra.mxu0 0.0
  %5094 = vmatprep.subr.mxu0 0.0
  %5095 = vmatpush1.msra.mxu0 0.0
  %5096 = vmatprep.subr.mxu0 0.0
  %5097 = vmatpush1.msra.mxu0 0.0
  %5098 = vmatprep.subr.mxu0 0.0
  %5099 = vmatpush1.msra.mxu0 0.0
  %5100 = vmatprep.subr.mxu0 0.0
  %5101 = vmatpush1.msra.mxu0 0.0
  %5102 = vmatprep.subr.mxu0 0.0
  %5103 = vmatpush1.msra.mxu0 0.0
  %5104 = vmatprep.subr.mxu0 0.0
  %5105 = vmatpush1.msra.mxu0 0.0
  %5106 = vmatprep.subr.mxu0 0.0
  %5107 = vmatpush1.msra.mxu0 0.0
  %5108 = vmatprep.subr.mxu0 0.0
  %5109 = vmatpush1.msra.mxu0 0.0
  %5110 = vmatprep.subr.mxu0 0.0
  %5111 = vmatpush1.msra.mxu0 0.0
  %5112 = vmatprep.subr.mxu0 0.0
  %5113 = vmatpush1.msra.mxu0 0.0
  %5114 = vmatprep.mubr.f32.mxu0 0.0
  %5115 = vmatmul.mubr.f32.gmra.mrb[0].mxu0 %v5045
  %v5116 = vpop.f32.mrb[0].mxu0
  %v5117 = vadd.f32 %v5036, %v5116
  %v5118 = vpop.f32.mrb[0].mxu0
  %5119 = vmatprep.mubr.f32.mxu0 0.0
  %5120 = vmatmul.mubr.f32.gmra.mrb[0].mxu0 %v5048
  %v5121 = vpop.f32.mrb[0].mxu0
  %v5122 = vadd.f32 %v5041, %v5121
  %v5123 = vpop.f32.mrb[0].mxu0
  %5124 = vdwg.mxu0
  %5125 = vrot.lane.b32.xlu0 %v4204, 112
  %v5126 = vpop.permute.xlu0 %5125
  %5127 = vrot.lane.b32.xlu0 %v4291, 112
  %v5128 = vpop.permute.xlu0 %5127
  %v5129 = vsel %vm368, %v5126, 0
  %v5131 = vsel %vm368, %v5128, 0
  %5133 = vmatprep.subr.mxu0 0.0
  %5134 = vmatpush1.xpose.msra.mxu0 %v5131
  %5135 = vmatprep.subr.mxu0 0.0
  %5136 = vmatpush1.xpose.msra.mxu0 0.0
  %5137 = vmatprep.subr.mxu0 0.0
  %5138 = vmatpush1.xpose.msra.mxu0 0.0
  %5139 = vmatprep.subr.mxu0 0.0
  %5140 = vmatpush1.xpose.msra.mxu0 0.0
  %5141 = vmatprep.subr.mxu0 0.0
  %5142 = vmatpush1.xpose.msra.mxu0 0.0
  %5143 = vmatprep.subr.mxu0 0.0
  %5144 = vmatpush1.xpose.msra.mxu0 0.0
  %5145 = vmatprep.subr.mxu0 0.0
  %5146 = vmatpush1.xpose.msra.mxu0 0.0
  %5147 = vmatprep.subr.mxu0 0.0
  %5148 = vmatpush1.xpose.msra.mxu0 0.0
  %5149 = vmatprep.subr.mxu0 0.0
  %5150 = vmatpush1.xpose.msra.mxu0 0.0
  %5151 = vmatprep.subr.mxu0 0.0
  %5152 = vmatpush1.xpose.msra.mxu0 0.0
  %5153 = vmatprep.subr.mxu0 0.0
  %5154 = vmatpush1.xpose.msra.mxu0 0.0
  %5155 = vmatprep.subr.mxu0 0.0
  %5156 = vmatpush1.xpose.msra.mxu0 0.0
  %5157 = vmatprep.subr.mxu0 0.0
  %5158 = vmatpush1.xpose.msra.mxu0 0.0
  %5159 = vmatprep.subr.mxu0 0.0
  %5160 = vmatpush1.xpose.msra.mxu0 0.0
  %5161 = vmatprep.subr.mxu0 0.0
  %5162 = vmatpush1.xpose.msra.mxu0 0.0
  %5163 = vmatprep.subr.mxu0 0.0
  %5164 = vmatpush1.xpose.msra.mxu0 0.0
  %5165 = vmatprep.subr.mxu0 0.0
  %5166 = vmatpush1.xpose.msra.mxu0 0.0
  %5167 = vmatprep.subr.mxu0 0.0
  %5168 = vmatpush1.xpose.msra.mxu0 0.0
  %5169 = vmatprep.subr.mxu0 0.0
  %5170 = vmatpush1.xpose.msra.mxu0 0.0
  %5171 = vmatprep.subr.mxu0 0.0
  %5172 = vmatpush1.xpose.msra.mxu0 0.0
  %5173 = vmatprep.subr.mxu0 0.0
  %5174 = vmatpush1.xpose.msra.mxu0 0.0
  %5175 = vmatprep.subr.mxu0 0.0
  %5176 = vmatpush1.xpose.msra.mxu0 0.0
  %5177 = vmatprep.subr.mxu0 0.0
  %5178 = vmatpush1.xpose.msra.mxu0 0.0
  %5179 = vmatprep.subr.mxu0 0.0
  %5180 = vmatpush1.xpose.msra.mxu0 0.0
  %5181 = vmatprep.subr.mxu0 0.0
  %5182 = vmatpush1.xpose.msra.mxu0 0.0
  %5183 = vmatprep.subr.mxu0 0.0
  %5184 = vmatpush1.xpose.msra.mxu0 0.0
  %5185 = vmatprep.subr.mxu0 0.0
  %5186 = vmatpush1.xpose.msra.mxu0 0.0
  %5187 = vmatprep.subr.mxu0 0.0
  %5188 = vmatpush1.xpose.msra.mxu0 0.0
  %5189 = vmatprep.subr.mxu0 0.0
  %5190 = vmatpush1.xpose.msra.mxu0 0.0
  %5191 = vmatprep.subr.mxu0 0.0
  %5192 = vmatpush1.xpose.msra.mxu0 0.0
  %5193 = vmatprep.subr.mxu0 0.0
  %5194 = vmatpush1.xpose.msra.mxu0 0.0
  %5195 = vmatprep.subr.mxu0 0.0
  %5196 = vmatpush1.xpose.msra.mxu0 0.0
  %5197 = vmatprep.mubr.f32.mxu0 0.0
  %5198 = vmatmul.mubr.f32.gmra.mrb[0].mxu0 %v5129
  %v5199 = vpop.f32.mrb[0].mxu0
  %v5200 = vadd.f32 0.0, %v5199
  %v5201 = vpop.f32.mrb[0].mxu0
  %5202 = vdwg.mxu0
  %5203 = vrot.lane.b32.xlu0 %v4209, 112
  %v5204 = vpop.permute.xlu0 %5203
  %5205 = vrot.lane.b32.xlu0 %v4296, 112
  %v5206 = vpop.permute.xlu0 %5205
  %v5207 = vsel %vm368, %v5204, 0
  %v5209 = vsel %vm368, %v5206, 0
  %5211 = vmatprep.subr.mxu0 0.0
  %5212 = vmatpush1.xpose.msra.mxu0 %v5209
  %5213 = vmatprep.subr.mxu0 0.0
  %5214 = vmatpush1.xpose.msra.mxu0 0.0
  %5215 = vmatprep.subr.mxu0 0.0
  %5216 = vmatpush1.xpose.msra.mxu0 0.0
  %5217 = vmatprep.subr.mxu0 0.0
  %5218 = vmatpush1.xpose.msra.mxu0 0.0
  %5219 = vmatprep.subr.mxu0 0.0
  %5220 = vmatpush1.xpose.msra.mxu0 0.0
  %5221 = vmatprep.subr.mxu0 0.0
  %5222 = vmatpush1.xpose.msra.mxu0 0.0
  %5223 = vmatprep.subr.mxu0 0.0
  %5224 = vmatpush1.xpose.msra.mxu0 0.0
  %5225 = vmatprep.subr.mxu0 0.0
  %5226 = vmatpush1.xpose.msra.mxu0 0.0
  %5227 = vmatprep.subr.mxu0 0.0
  %5228 = vmatpush1.xpose.msra.mxu0 0.0
  %5229 = vmatprep.subr.mxu0 0.0
  %5230 = vmatpush1.xpose.msra.mxu0 0.0
  %5231 = vmatprep.subr.mxu0 0.0
  %5232 = vmatpush1.xpose.msra.mxu0 0.0
  %5233 = vmatprep.subr.mxu0 0.0
  %5234 = vmatpush1.xpose.msra.mxu0 0.0
  %5235 = vmatprep.subr.mxu0 0.0
  %5236 = vmatpush1.xpose.msra.mxu0 0.0
  %5237 = vmatprep.subr.mxu0 0.0
  %5238 = vmatpush1.xpose.msra.mxu0 0.0
  %5239 = vmatprep.subr.mxu0 0.0
  %5240 = vmatpush1.xpose.msra.mxu0 0.0
  %5241 = vmatprep.subr.mxu0 0.0
  %5242 = vmatpush1.xpose.msra.mxu0 0.0
  %5243 = vmatprep.subr.mxu0 0.0
  %5244 = vmatpush1.xpose.msra.mxu0 0.0
  %5245 = vmatprep.subr.mxu0 0.0
  %5246 = vmatpush1.xpose.msra.mxu0 0.0
  %5247 = vmatprep.subr.mxu0 0.0
  %5248 = vmatpush1.xpose.msra.mxu0 0.0
  %5249 = vmatprep.subr.mxu0 0.0
  %5250 = vmatpush1.xpose.msra.mxu0 0.0
  %5251 = vmatprep.subr.mxu0 0.0
  %5252 = vmatpush1.xpose.msra.mxu0 0.0
  %5253 = vmatprep.subr.mxu0 0.0
  %5254 = vmatpush1.xpose.msra.mxu0 0.0
  %5255 = vmatprep.subr.mxu0 0.0
  %5256 = vmatpush1.xpose.msra.mxu0 0.0
  %5257 = vmatprep.subr.mxu0 0.0
  %5258 = vmatpush1.xpose.msra.mxu0 0.0
  %5259 = vmatprep.subr.mxu0 0.0
  %5260 = vmatpush1.xpose.msra.mxu0 0.0
  %5261 = vmatprep.subr.mxu0 0.0
  %5262 = vmatpush1.xpose.msra.mxu0 0.0
  %5263 = vmatprep.subr.mxu0 0.0
  %5264 = vmatpush1.xpose.msra.mxu0 0.0
  %5265 = vmatprep.subr.mxu0 0.0
  %5266 = vmatpush1.xpose.msra.mxu0 0.0
  %5267 = vmatprep.subr.mxu0 0.0
  %5268 = vmatpush1.xpose.msra.mxu0 0.0
  %5269 = vmatprep.subr.mxu0 0.0
  %5270 = vmatpush1.xpose.msra.mxu0 0.0
  %5271 = vmatprep.subr.mxu0 0.0
  %5272 = vmatpush1.xpose.msra.mxu0 0.0
  %5273 = vmatprep.subr.mxu0 0.0
  %5274 = vmatpush1.xpose.msra.mxu0 0.0
  %5275 = vmatprep.mubr.f32.mxu0 0.0
  %5276 = vmatmul.mubr.f32.gmra.mrb[0].mxu0 %v5207
  %v5277 = vpop.f32.mrb[0].mxu0
  %v5278 = vadd.f32 0.0, %v5277
  %v5279 = vpop.f32.mrb[0].mxu0
  %5280 = vdwg.mxu0
  %v5281 = vmul.f32 %v5200, 0.35355338
  %v5282 = vmul.f32 %v5278, 0.35355338
  %v5283 = vadd.f32 %v5281, %v184
  %v5284 = vadd.f32 %v5282, %v185
  %v5285 = vsel %vm368, %v5283, -inf
  %5286 = vmax.xlane.f32.xlu0 %v5285
  %v5287 = vpop.xlane.xlu0 %5286
  %v5288 = vsel %vm368, %v5284, -inf
  %5289 = vmax.xlane.f32.xlu0 %v5288
  %v5290 = vpop.xlane.xlu0 %5289
  %v5291 = vsub.f32 %v5283, %v5287
  %v5292 = vsub.f32 %v5284, %v5290
  %v5293 = vmul.f32 %v5291, 1.442695
  %v5294 = vpow.pop %v5293
  %v5295 = vmul.f32 %v5292, 1.442695
  %v5296 = vpow.pop %v5295
  %v5297 = vsel %vm368, %v5294, 0.0
  %5298 = vadd.xlane.f32.xlu0 %v5297
  %v5299 = vpop.xlane.xlu0 %5298
  %v5300 = vsel %vm368, %v5296, 0.0
  %5301 = vadd.xlane.f32.xlu0 %v5300
  %v5302 = vpop.xlane.xlu0 %5301
  %v5303 = vrcp.pop %v5299
  %v5304 = vrcp.pop %v5302
  %v5305 = vmul.f32 %v5294, %v5303
  %v5306 = vmul.f32 %v5296, %v5304
  %5307 = vrot.lane.b32.xlu0 %v4291, 80
  %v5308 = vpop.permute.xlu0 %5307
  %v5311 = vsel %vm368, %v5305, 0
  %5313 = vmatprep.subr.mxu0 0.0
  %5314 = vmatpush1.msra.mxu0 %v5308
  %5315 = vmatprep.subr.mxu0 0.0
  %5316 = vmatpush1.msra.mxu0 0.0
  %5317 = vmatprep.subr.mxu0 0.0
  %5318 = vmatpush1.msra.mxu0 0.0
  %5319 = vmatprep.subr.mxu0 0.0
  %5320 = vmatpush1.msra.mxu0 0.0
  %5321 = vmatprep.subr.mxu0 0.0
  %5322 = vmatpush1.msra.mxu0 0.0
  %5323 = vmatprep.subr.mxu0 0.0
  %5324 = vmatpush1.msra.mxu0 0.0
  %5325 = vmatprep.subr.mxu0 0.0
  %5326 = vmatpush1.msra.mxu0 0.0
  %5327 = vmatprep.subr.mxu0 0.0
  %5328 = vmatpush1.msra.mxu0 0.0
  %5329 = vmatprep.subr.mxu0 0.0
  %5330 = vmatpush1.msra.mxu0 0.0
  %5331 = vmatprep.subr.mxu0 0.0
  %5332 = vmatpush1.msra.mxu0 0.0
  %5333 = vmatprep.subr.mxu0 0.0
  %5334 = vmatpush1.msra.mxu0 0.0
  %5335 = vmatprep.subr.mxu0 0.0
  %5336 = vmatpush1.msra.mxu0 0.0
  %5337 = vmatprep.subr.mxu0 0.0
  %5338 = vmatpush1.msra.mxu0 0.0
  %5339 = vmatprep.subr.mxu0 0.0
  %5340 = vmatpush1.msra.mxu0 0.0
  %5341 = vmatprep.subr.mxu0 0.0
  %5342 = vmatpush1.msra.mxu0 0.0
  %5343 = vmatprep.subr.mxu0 0.0
  %5344 = vmatpush1.msra.mxu0 0.0
  %5345 = vmatprep.subr.mxu0 0.0
  %5346 = vmatpush1.msra.mxu0 0.0
  %5347 = vmatprep.subr.mxu0 0.0
  %5348 = vmatpush1.msra.mxu0 0.0
  %5349 = vmatprep.subr.mxu0 0.0
  %5350 = vmatpush1.msra.mxu0 0.0
  %5351 = vmatprep.subr.mxu0 0.0
  %5352 = vmatpush1.msra.mxu0 0.0
  %5353 = vmatprep.subr.mxu0 0.0
  %5354 = vmatpush1.msra.mxu0 0.0
  %5355 = vmatprep.subr.mxu0 0.0
  %5356 = vmatpush1.msra.mxu0 0.0
  %5357 = vmatprep.subr.mxu0 0.0
  %5358 = vmatpush1.msra.mxu0 0.0
  %5359 = vmatprep.subr.mxu0 0.0
  %5360 = vmatpush1.msra.mxu0 0.0
  %5361 = vmatprep.subr.mxu0 0.0
  %5362 = vmatpush1.msra.mxu0 0.0
  %5363 = vmatprep.subr.mxu0 0.0
  %5364 = vmatpush1.msra.mxu0 0.0
  %5365 = vmatprep.subr.mxu0 0.0
  %5366 = vmatpush1.msra.mxu0 0.0
  %5367 = vmatprep.subr.mxu0 0.0
  %5368 = vmatpush1.msra.mxu0 0.0
  %5369 = vmatprep.subr.mxu0 0.0
  %5370 = vmatpush1.msra.mxu0 0.0
  %5371 = vmatprep.subr.mxu0 0.0
  %5372 = vmatpush1.msra.mxu0 0.0
  %5373 = vmatprep.subr.mxu0 0.0
  %5374 = vmatpush1.msra.mxu0 0.0
  %5375 = vmatprep.subr.mxu0 0.0
  %5376 = vmatpush1.msra.mxu0 0.0
  %5377 = vmatprep.mubr.f32.mxu0 0.0
  %5378 = vmatmul.mubr.f32.gmra.mrb[0].mxu0 %v5311
  %v5379 = vpop.f32.mrb[0].mxu0
  %v5380 = vadd.f32 0.0, %v5379
  %v5381 = vpop.f32.mrb[0].mxu0
  %5382 = vdwg.mxu0
  %5383 = vrot.lane.b32.xlu0 %v4296, 80
  %v5384 = vpop.permute.xlu0 %5383
  %v5387 = vsel %vm368, %v5306, 0
  %5389 = vmatprep.subr.mxu0 0.0
  %5390 = vmatpush1.msra.mxu0 %v5384
  %5391 = vmatprep.subr.mxu0 0.0
  %5392 = vmatpush1.msra.mxu0 0.0
  %5393 = vmatprep.subr.mxu0 0.0
  %5394 = vmatpush1.msra.mxu0 0.0
  %5395 = vmatprep.subr.mxu0 0.0
  %5396 = vmatpush1.msra.mxu0 0.0
  %5397 = vmatprep.subr.mxu0 0.0
  %5398 = vmatpush1.msra.mxu0 0.0
  %5399 = vmatprep.subr.mxu0 0.0
  %5400 = vmatpush1.msra.mxu0 0.0
  %5401 = vmatprep.subr.mxu0 0.0
  %5402 = vmatpush1.msra.mxu0 0.0
  %5403 = vmatprep.subr.mxu0 0.0
  %5404 = vmatpush1.msra.mxu0 0.0
  %5405 = vmatprep.subr.mxu0 0.0
  %5406 = vmatpush1.msra.mxu0 0.0
  %5407 = vmatprep.subr.mxu0 0.0
  %5408 = vmatpush1.msra.mxu0 0.0
  %5409 = vmatprep.subr.mxu0 0.0
  %5410 = vmatpush1.msra.mxu0 0.0
  %5411 = vmatprep.subr.mxu0 0.0
  %5412 = vmatpush1.msra.mxu0 0.0
  %5413 = vmatprep.subr.mxu0 0.0
  %5414 = vmatpush1.msra.mxu0 0.0
  %5415 = vmatprep.subr.mxu0 0.0
  %5416 = vmatpush1.msra.mxu0 0.0
  %5417 = vmatprep.subr.mxu0 0.0
  %5418 = vmatpush1.msra.mxu0 0.0
  %5419 = vmatprep.subr.mxu0 0.0
  %5420 = vmatpush1.msra.mxu0 0.0
  %5421 = vmatprep.subr.mxu0 0.0
  %5422 = vmatpush1.msra.mxu0 0.0
  %5423 = vmatprep.subr.mxu0 0.0
  %5424 = vmatpush1.msra.mxu0 0.0
  %5425 = vmatprep.subr.mxu0 0.0
  %5426 = vmatpush1.msra.mxu0 0.0
  %5427 = vmatprep.subr.mxu0 0.0
  %5428 = vmatpush1.msra.mxu0 0.0
  %5429 = vmatprep.subr.mxu0 0.0
  %5430 = vmatpush1.msra.mxu0 0.0
  %5431 = vmatprep.subr.mxu0 0.0
  %5432 = vmatpush1.msra.mxu0 0.0
  %5433 = vmatprep.subr.mxu0 0.0
  %5434 = vmatpush1.msra.mxu0 0.0
  %5435 = vmatprep.subr.mxu0 0.0
  %5436 = vmatpush1.msra.mxu0 0.0
  %5437 = vmatprep.subr.mxu0 0.0
  %5438 = vmatpush1.msra.mxu0 0.0
  %5439 = vmatprep.subr.mxu0 0.0
  %5440 = vmatpush1.msra.mxu0 0.0
  %5441 = vmatprep.subr.mxu0 0.0
  %5442 = vmatpush1.msra.mxu0 0.0
  %5443 = vmatprep.subr.mxu0 0.0
  %5444 = vmatpush1.msra.mxu0 0.0
  %5445 = vmatprep.subr.mxu0 0.0
  %5446 = vmatpush1.msra.mxu0 0.0
  %5447 = vmatprep.subr.mxu0 0.0
  %5448 = vmatpush1.msra.mxu0 0.0
  %5449 = vmatprep.subr.mxu0 0.0
  %5450 = vmatpush1.msra.mxu0 0.0
  %5451 = vmatprep.subr.mxu0 0.0
  %5452 = vmatpush1.msra.mxu0 0.0
  %5453 = vmatprep.mubr.f32.mxu0 0.0
  %5454 = vmatmul.mubr.f32.gmra.mrb[0].mxu0 %v5387
  %v5455 = vpop.f32.mrb[0].mxu0
  %v5456 = vadd.f32 0.0, %v5455
  %v5457 = vpop.f32.mrb[0].mxu0
  %5458 = vdwg.mxu0
  %v5460 = vsel %vm368, %v5380, 0
  %v5463 = vsel %vm368, %v5456, 0
  %5465 = vmatprep.subr.mxu0 0.0
  %5466 = vmatpush1.msra.mxu0 %v197
  %5467 = vmatprep.subr.mxu0 0.0
  %5468 = vmatpush1.msra.mxu0 0.0
  %5469 = vmatprep.subr.mxu0 0.0
  %5470 = vmatpush1.msra.mxu0 0.0
  %5471 = vmatprep.subr.mxu0 0.0
  %5472 = vmatpush1.msra.mxu0 0.0
  %5473 = vmatprep.subr.mxu0 0.0
  %5474 = vmatpush1.msra.mxu0 0.0
  %5475 = vmatprep.subr.mxu0 0.0
  %5476 = vmatpush1.msra.mxu0 0.0
  %5477 = vmatprep.subr.mxu0 0.0
  %5478 = vmatpush1.msra.mxu0 0.0
  %5479 = vmatprep.subr.mxu0 0.0
  %5480 = vmatpush1.msra.mxu0 0.0
  %5481 = vmatprep.subr.mxu0 0.0
  %5482 = vmatpush1.msra.mxu0 0.0
  %5483 = vmatprep.subr.mxu0 0.0
  %5484 = vmatpush1.msra.mxu0 0.0
  %5485 = vmatprep.subr.mxu0 0.0
  %5486 = vmatpush1.msra.mxu0 0.0
  %5487 = vmatprep.subr.mxu0 0.0
  %5488 = vmatpush1.msra.mxu0 0.0
  %5489 = vmatprep.subr.mxu0 0.0
  %5490 = vmatpush1.msra.mxu0 0.0
  %5491 = vmatprep.subr.mxu0 0.0
  %5492 = vmatpush1.msra.mxu0 0.0
  %5493 = vmatprep.subr.mxu0 0.0
  %5494 = vmatpush1.msra.mxu0 0.0
  %5495 = vmatprep.subr.mxu0 0.0
  %5496 = vmatpush1.msra.mxu0 0.0
  %5497 = vmatprep.subr.mxu0 0.0
  %5498 = vmatpush1.msra.mxu0 0.0
  %5499 = vmatprep.subr.mxu0 0.0
  %5500 = vmatpush1.msra.mxu0 0.0
  %5501 = vmatprep.subr.mxu0 0.0
  %5502 = vmatpush1.msra.mxu0 0.0
  %5503 = vmatprep.subr.mxu0 0.0
  %5504 = vmatpush1.msra.mxu0 0.0
  %5505 = vmatprep.subr.mxu0 0.0
  %5506 = vmatpush1.msra.mxu0 0.0
  %5507 = vmatprep.subr.mxu0 0.0
  %5508 = vmatpush1.msra.mxu0 0.0
  %5509 = vmatprep.subr.mxu0 0.0
  %5510 = vmatpush1.msra.mxu0 0.0
  %5511 = vmatprep.subr.mxu0 0.0
  %5512 = vmatpush1.msra.mxu0 0.0
  %5513 = vmatprep.subr.mxu0 0.0
  %5514 = vmatpush1.msra.mxu0 0.0
  %5515 = vmatprep.subr.mxu0 0.0
  %5516 = vmatpush1.msra.mxu0 0.0
  %5517 = vmatprep.subr.mxu0 0.0
  %5518 = vmatpush1.msra.mxu0 0.0
  %5519 = vmatprep.subr.mxu0 0.0
  %5520 = vmatpush1.msra.mxu0 0.0
  %5521 = vmatprep.subr.mxu0 0.0
  %5522 = vmatpush1.msra.mxu0 0.0
  %5523 = vmatprep.subr.mxu0 0.0
  %5524 = vmatpush1.msra.mxu0 0.0
  %5525 = vmatprep.subr.mxu0 0.0
  %5526 = vmatpush1.msra.mxu0 0.0
  %5527 = vmatprep.subr.mxu0 0.0
  %5528 = vmatpush1.msra.mxu0 0.0
  %5529 = vmatprep.mubr.f32.mxu0 0.0
  %5530 = vmatmul.mubr.f32.gmra.mrb[0].mxu0 %v5460
  %v5531 = vpop.f32.mrb[0].mxu0
  %v5532 = vadd.f32 0.0, %v5531
  %v5533 = vpop.f32.mrb[0].mxu0
  %5534 = vmatprep.mubr.f32.mxu0 0.0
  %5535 = vmatmul.mubr.f32.gmra.mrb[0].mxu0 %v5463
  %v5536 = vpop.f32.mrb[0].mxu0
  %v5537 = vadd.f32 0.0, %v5536
  %v5538 = vpop.f32.mrb[0].mxu0
  %5539 = vdwg.mxu0
  %v5540 = vadd.f32 %v5117, %v5532
  %v5541 = vadd.f32 %v5122, %v5537
  %5542 = vrot.lane.b32.xlu0 %v4204, 104
  %v5543 = vpop.permute.xlu0 %5542
  %5544 = vrot.lane.b32.xlu0 %v4291, 104
  %v5545 = vpop.permute.xlu0 %5544
  %v5546 = vsel %vm368, %v5543, 0
  %v5548 = vsel %vm368, %v5545, 0
  %5550 = vmatprep.subr.mxu0 0.0
  %5551 = vmatpush1.xpose.msra.mxu0 %v5548
  %5552 = vmatprep.subr.mxu0 0.0
  %5553 = vmatpush1.xpose.msra.mxu0 0.0
  %5554 = vmatprep.subr.mxu0 0.0
  %5555 = vmatpush1.xpose.msra.mxu0 0.0
  %5556 = vmatprep.subr.mxu0 0.0
  %5557 = vmatpush1.xpose.msra.mxu0 0.0
  %5558 = vmatprep.subr.mxu0 0.0
  %5559 = vmatpush1.xpose.msra.mxu0 0.0
  %5560 = vmatprep.subr.mxu0 0.0
  %5561 = vmatpush1.xpose.msra.mxu0 0.0
  %5562 = vmatprep.subr.mxu0 0.0
  %5563 = vmatpush1.xpose.msra.mxu0 0.0
  %5564 = vmatprep.subr.mxu0 0.0
  %5565 = vmatpush1.xpose.msra.mxu0 0.0
  %5566 = vmatprep.subr.mxu0 0.0
  %5567 = vmatpush1.xpose.msra.mxu0 0.0
  %5568 = vmatprep.subr.mxu0 0.0
  %5569 = vmatpush1.xpose.msra.mxu0 0.0
  %5570 = vmatprep.subr.mxu0 0.0
  %5571 = vmatpush1.xpose.msra.mxu0 0.0
  %5572 = vmatprep.subr.mxu0 0.0
  %5573 = vmatpush1.xpose.msra.mxu0 0.0
  %5574 = vmatprep.subr.mxu0 0.0
  %5575 = vmatpush1.xpose.msra.mxu0 0.0
  %5576 = vmatprep.subr.mxu0 0.0
  %5577 = vmatpush1.xpose.msra.mxu0 0.0
  %5578 = vmatprep.subr.mxu0 0.0
  %5579 = vmatpush1.xpose.msra.mxu0 0.0
  %5580 = vmatprep.subr.mxu0 0.0
  %5581 = vmatpush1.xpose.msra.mxu0 0.0
  %5582 = vmatprep.subr.mxu0 0.0
  %5583 = vmatpush1.xpose.msra.mxu0 0.0
  %5584 = vmatprep.subr.mxu0 0.0
  %5585 = vmatpush1.xpose.msra.mxu0 0.0
  %5586 = vmatprep.subr.mxu0 0.0
  %5587 = vmatpush1.xpose.msra.mxu0 0.0
  %5588 = vmatprep.subr.mxu0 0.0
  %5589 = vmatpush1.xpose.msra.mxu0 0.0
  %5590 = vmatprep.subr.mxu0 0.0
  %5591 = vmatpush1.xpose.msra.mxu0 0.0
  %5592 = vmatprep.subr.mxu0 0.0
  %5593 = vmatpush1.xpose.msra.mxu0 0.0
  %5594 = vmatprep.subr.mxu0 0.0
  %5595 = vmatpush1.xpose.msra.mxu0 0.0
  %5596 = vmatprep.subr.mxu0 0.0
  %5597 = vmatpush1.xpose.msra.mxu0 0.0
  %5598 = vmatprep.subr.mxu0 0.0
  %5599 = vmatpush1.xpose.msra.mxu0 0.0
  %5600 = vmatprep.subr.mxu0 0.0
  %5601 = vmatpush1.xpose.msra.mxu0 0.0
  %5602 = vmatprep.subr.mxu0 0.0
  %5603 = vmatpush1.xpose.msra.mxu0 0.0
  %5604 = vmatprep.subr.mxu0 0.0
  %5605 = vmatpush1.xpose.msra.mxu0 0.0
  %5606 = vmatprep.subr.mxu0 0.0
  %5607 = vmatpush1.xpose.msra.mxu0 0.0
  %5608 = vmatprep.subr.mxu0 0.0
  %5609 = vmatpush1.xpose.msra.mxu0 0.0
  %5610 = vmatprep.subr.mxu0 0.0
  %5611 = vmatpush1.xpose.msra.mxu0 0.0
  %5612 = vmatprep.subr.mxu0 0.0
  %5613 = vmatpush1.xpose.msra.mxu0 0.0
  %5614 = vmatprep.mubr.f32.mxu0 0.0
  %5615 = vmatmul.mubr.f32.gmra.mrb[0].mxu0 %v5546
  %v5616 = vpop.f32.mrb[0].mxu0
  %v5617 = vadd.f32 0.0, %v5616
  %v5618 = vpop.f32.mrb[0].mxu0
  %5619 = vdwg.mxu0
  %5620 = vrot.lane.b32.xlu0 %v4209, 104
  %v5621 = vpop.permute.xlu0 %5620
  %5622 = vrot.lane.b32.xlu0 %v4296, 104
  %v5623 = vpop.permute.xlu0 %5622
  %v5624 = vsel %vm368, %v5621, 0
  %v5626 = vsel %vm368, %v5623, 0
  %5628 = vmatprep.subr.mxu0 0.0
  %5629 = vmatpush1.xpose.msra.mxu0 %v5626
  %5630 = vmatprep.subr.mxu0 0.0
  %5631 = vmatpush1.xpose.msra.mxu0 0.0
  %5632 = vmatprep.subr.mxu0 0.0
  %5633 = vmatpush1.xpose.msra.mxu0 0.0
  %5634 = vmatprep.subr.mxu0 0.0
  %5635 = vmatpush1.xpose.msra.mxu0 0.0
  %5636 = vmatprep.subr.mxu0 0.0
  %5637 = vmatpush1.xpose.msra.mxu0 0.0
  %5638 = vmatprep.subr.mxu0 0.0
  %5639 = vmatpush1.xpose.msra.mxu0 0.0
  %5640 = vmatprep.subr.mxu0 0.0
  %5641 = vmatpush1.xpose.msra.mxu0 0.0
  %5642 = vmatprep.subr.mxu0 0.0
  %5643 = vmatpush1.xpose.msra.mxu0 0.0
  %5644 = vmatprep.subr.mxu0 0.0
  %5645 = vmatpush1.xpose.msra.mxu0 0.0
  %5646 = vmatprep.subr.mxu0 0.0
  %5647 = vmatpush1.xpose.msra.mxu0 0.0
  %5648 = vmatprep.subr.mxu0 0.0
  %5649 = vmatpush1.xpose.msra.mxu0 0.0
  %5650 = vmatprep.subr.mxu0 0.0
  %5651 = vmatpush1.xpose.msra.mxu0 0.0
  %5652 = vmatprep.subr.mxu0 0.0
  %5653 = vmatpush1.xpose.msra.mxu0 0.0
  %5654 = vmatprep.subr.mxu0 0.0
  %5655 = vmatpush1.xpose.msra.mxu0 0.0
  %5656 = vmatprep.subr.mxu0 0.0
  %5657 = vmatpush1.xpose.msra.mxu0 0.0
  %5658 = vmatprep.subr.mxu0 0.0
  %5659 = vmatpush1.xpose.msra.mxu0 0.0
  %5660 = vmatprep.subr.mxu0 0.0
  %5661 = vmatpush1.xpose.msra.mxu0 0.0
  %5662 = vmatprep.subr.mxu0 0.0
  %5663 = vmatpush1.xpose.msra.mxu0 0.0
  %5664 = vmatprep.subr.mxu0 0.0
  %5665 = vmatpush1.xpose.msra.mxu0 0.0
  %5666 = vmatprep.subr.mxu0 0.0
  %5667 = vmatpush1.xpose.msra.mxu0 0.0
  %5668 = vmatprep.subr.mxu0 0.0
  %5669 = vmatpush1.xpose.msra.mxu0 0.0
  %5670 = vmatprep.subr.mxu0 0.0
  %5671 = vmatpush1.xpose.msra.mxu0 0.0
  %5672 = vmatprep.subr.mxu0 0.0
  %5673 = vmatpush1.xpose.msra.mxu0 0.0
  %5674 = vmatprep.subr.mxu0 0.0
  %5675 = vmatpush1.xpose.msra.mxu0 0.0
  %5676 = vmatprep.subr.mxu0 0.0
  %5677 = vmatpush1.xpose.msra.mxu0 0.0
  %5678 = vmatprep.subr.mxu0 0.0
  %5679 = vmatpush1.xpose.msra.mxu0 0.0
  %5680 = vmatprep.subr.mxu0 0.0
  %5681 = vmatpush1.xpose.msra.mxu0 0.0
  %5682 = vmatprep.subr.mxu0 0.0
  %5683 = vmatpush1.xpose.msra.mxu0 0.0
  %5684 = vmatprep.subr.mxu0 0.0
  %5685 = vmatpush1.xpose.msra.mxu0 0.0
  %5686 = vmatprep.subr.mxu0 0.0
  %5687 = vmatpush1.xpose.msra.mxu0 0.0
  %5688 = vmatprep.subr.mxu0 0.0
  %5689 = vmatpush1.xpose.msra.mxu0 0.0
  %5690 = vmatprep.subr.mxu0 0.0
  %5691 = vmatpush1.xpose.msra.mxu0 0.0
  %5692 = vmatprep.mubr.f32.mxu0 0.0
  %5693 = vmatmul.mubr.f32.gmra.mrb[0].mxu0 %v5624
  %v5694 = vpop.f32.mrb[0].mxu0
  %v5695 = vadd.f32 0.0, %v5694
  %v5696 = vpop.f32.mrb[0].mxu0
  %5697 = vdwg.mxu0
  %v5698 = vmul.f32 %v5617, 0.35355338
  %v5699 = vmul.f32 %v5695, 0.35355338
  %v5700 = vadd.f32 %v5698, %v184
  %v5701 = vadd.f32 %v5699, %v185
  %v5702 = vsel %vm368, %v5700, -inf
  %5703 = vmax.xlane.f32.xlu0 %v5702
  %v5704 = vpop.xlane.xlu0 %5703
  %v5705 = vsel %vm368, %v5701, -inf
  %5706 = vmax.xlane.f32.xlu0 %v5705
  %v5707 = vpop.xlane.xlu0 %5706
  %v5708 = vsub.f32 %v5700, %v5704
  %v5709 = vsub.f32 %v5701, %v5707
  %v5710 = vmul.f32 %v5708, 1.442695
  %v5711 = vpow.pop %v5710
  %v5712 = vmul.f32 %v5709, 1.442695
  %v5713 = vpow.pop %v5712
  %v5714 = vsel %vm368, %v5711, 0.0
  %5715 = vadd.xlane.f32.xlu0 %v5714
  %v5716 = vpop.xlane.xlu0 %5715
  %v5717 = vsel %vm368, %v5713, 0.0
  %5718 = vadd.xlane.f32.xlu0 %v5717
  %v5719 = vpop.xlane.xlu0 %5718
  %v5720 = vrcp.pop %v5716
  %v5721 = vrcp.pop %v5719
  %v5722 = vmul.f32 %v5711, %v5720
  %v5723 = vmul.f32 %v5713, %v5721
  %5724 = vrot.lane.b32.xlu0 %v4291, 72
  %v5725 = vpop.permute.xlu0 %5724
  %v5728 = vsel %vm368, %v5722, 0
  %5730 = vmatprep.subr.mxu0 0.0
  %5731 = vmatpush1.msra.mxu0 %v5725
  %5732 = vmatprep.subr.mxu0 0.0
  %5733 = vmatpush1.msra.mxu0 0.0
  %5734 = vmatprep.subr.mxu0 0.0
  %5735 = vmatpush1.msra.mxu0 0.0
  %5736 = vmatprep.subr.mxu0 0.0
  %5737 = vmatpush1.msra.mxu0 0.0
  %5738 = vmatprep.subr.mxu0 0.0
  %5739 = vmatpush1.msra.mxu0 0.0
  %5740 = vmatprep.subr.mxu0 0.0
  %5741 = vmatpush1.msra.mxu0 0.0
  %5742 = vmatprep.subr.mxu0 0.0
  %5743 = vmatpush1.msra.mxu0 0.0
  %5744 = vmatprep.subr.mxu0 0.0
  %5745 = vmatpush1.msra.mxu0 0.0
  %5746 = vmatprep.subr.mxu0 0.0
  %5747 = vmatpush1.msra.mxu0 0.0
  %5748 = vmatprep.subr.mxu0 0.0
  %5749 = vmatpush1.msra.mxu0 0.0
  %5750 = vmatprep.subr.mxu0 0.0
  %5751 = vmatpush1.msra.mxu0 0.0
  %5752 = vmatprep.subr.mxu0 0.0
  %5753 = vmatpush1.msra.mxu0 0.0
  %5754 = vmatprep.subr.mxu0 0.0
  %5755 = vmatpush1.msra.mxu0 0.0
  %5756 = vmatprep.subr.mxu0 0.0
  %5757 = vmatpush1.msra.mxu0 0.0
  %5758 = vmatprep.subr.mxu0 0.0
  %5759 = vmatpush1.msra.mxu0 0.0
  %5760 = vmatprep.subr.mxu0 0.0
  %5761 = vmatpush1.msra.mxu0 0.0
  %5762 = vmatprep.subr.mxu0 0.0
  %5763 = vmatpush1.msra.mxu0 0.0
  %5764 = vmatprep.subr.mxu0 0.0
  %5765 = vmatpush1.msra.mxu0 0.0
  %5766 = vmatprep.subr.mxu0 0.0
  %5767 = vmatpush1.msra.mxu0 0.0
  %5768 = vmatprep.subr.mxu0 0.0
  %5769 = vmatpush1.msra.mxu0 0.0
  %5770 = vmatprep.subr.mxu0 0.0
  %5771 = vmatpush1.msra.mxu0 0.0
  %5772 = vmatprep.subr.mxu0 0.0
  %5773 = vmatpush1.msra.mxu0 0.0
  %5774 = vmatprep.subr.mxu0 0.0
  %5775 = vmatpush1.msra.mxu0 0.0
  %5776 = vmatprep.subr.mxu0 0.0
  %5777 = vmatpush1.msra.mxu0 0.0
  %5778 = vmatprep.subr.mxu0 0.0
  %5779 = vmatpush1.msra.mxu0 0.0
  %5780 = vmatprep.subr.mxu0 0.0
  %5781 = vmatpush1.msra.mxu0 0.0
  %5782 = vmatprep.subr.mxu0 0.0
  %5783 = vmatpush1.msra.mxu0 0.0
  %5784 = vmatprep.subr.mxu0 0.0
  %5785 = vmatpush1.msra.mxu0 0.0
  %5786 = vmatprep.subr.mxu0 0.0
  %5787 = vmatpush1.msra.mxu0 0.0
  %5788 = vmatprep.subr.mxu0 0.0
  %5789 = vmatpush1.msra.mxu0 0.0
  %5790 = vmatprep.subr.mxu0 0.0
  %5791 = vmatpush1.msra.mxu0 0.0
  %5792 = vmatprep.subr.mxu0 0.0
  %5793 = vmatpush1.msra.mxu0 0.0
  %5794 = vmatprep.mubr.f32.mxu0 0.0
  %5795 = vmatmul.mubr.f32.gmra.mrb[0].mxu0 %v5728
  %v5796 = vpop.f32.mrb[0].mxu0
  %v5797 = vadd.f32 0.0, %v5796
  %v5798 = vpop.f32.mrb[0].mxu0
  %5799 = vdwg.mxu0
  %5800 = vrot.lane.b32.xlu0 %v4296, 72
  %v5801 = vpop.permute.xlu0 %5800
  %v5804 = vsel %vm368, %v5723, 0
  %5806 = vmatprep.subr.mxu0 0.0
  %5807 = vmatpush1.msra.mxu0 %v5801
  %5808 = vmatprep.subr.mxu0 0.0
  %5809 = vmatpush1.msra.mxu0 0.0
  %5810 = vmatprep.subr.mxu0 0.0
  %5811 = vmatpush1.msra.mxu0 0.0
  %5812 = vmatprep.subr.mxu0 0.0
  %5813 = vmatpush1.msra.mxu0 0.0
  %5814 = vmatprep.subr.mxu0 0.0
  %5815 = vmatpush1.msra.mxu0 0.0
  %5816 = vmatprep.subr.mxu0 0.0
  %5817 = vmatpush1.msra.mxu0 0.0
  %5818 = vmatprep.subr.mxu0 0.0
  %5819 = vmatpush1.msra.mxu0 0.0
  %5820 = vmatprep.subr.mxu0 0.0
  %5821 = vmatpush1.msra.mxu0 0.0
  %5822 = vmatprep.subr.mxu0 0.0
  %5823 = vmatpush1.msra.mxu0 0.0
  %5824 = vmatprep.subr.mxu0 0.0
  %5825 = vmatpush1.msra.mxu0 0.0
  %5826 = vmatprep.subr.mxu0 0.0
  %5827 = vmatpush1.msra.mxu0 0.0
  %5828 = vmatprep.subr.mxu0 0.0
  %5829 = vmatpush1.msra.mxu0 0.0
  %5830 = vmatprep.subr.mxu0 0.0
  %5831 = vmatpush1.msra.mxu0 0.0
  %5832 = vmatprep.subr.mxu0 0.0
  %5833 = vmatpush1.msra.mxu0 0.0
  %5834 = vmatprep.subr.mxu0 0.0
  %5835 = vmatpush1.msra.mxu0 0.0
  %5836 = vmatprep.subr.mxu0 0.0
  %5837 = vmatpush1.msra.mxu0 0.0
  %5838 = vmatprep.subr.mxu0 0.0
  %5839 = vmatpush1.msra.mxu0 0.0
  %5840 = vmatprep.subr.mxu0 0.0
  %5841 = vmatpush1.msra.mxu0 0.0
  %5842 = vmatprep.subr.mxu0 0.0
  %5843 = vmatpush1.msra.mxu0 0.0
  %5844 = vmatprep.subr.mxu0 0.0
  %5845 = vmatpush1.msra.mxu0 0.0
  %5846 = vmatprep.subr.mxu0 0.0
  %5847 = vmatpush1.msra.mxu0 0.0
  %5848 = vmatprep.subr.mxu0 0.0
  %5849 = vmatpush1.msra.mxu0 0.0
  %5850 = vmatprep.subr.mxu0 0.0
  %5851 = vmatpush1.msra.mxu0 0.0
  %5852 = vmatprep.subr.mxu0 0.0
  %5853 = vmatpush1.msra.mxu0 0.0
  %5854 = vmatprep.subr.mxu0 0.0
  %5855 = vmatpush1.msra.mxu0 0.0
  %5856 = vmatprep.subr.mxu0 0.0
  %5857 = vmatpush1.msra.mxu0 0.0
  %5858 = vmatprep.subr.mxu0 0.0
  %5859 = vmatpush1.msra.mxu0 0.0
  %5860 = vmatprep.subr.mxu0 0.0
  %5861 = vmatpush1.msra.mxu0 0.0
  %5862 = vmatprep.subr.mxu0 0.0
  %5863 = vmatpush1.msra.mxu0 0.0
  %5864 = vmatprep.subr.mxu0 0.0
  %5865 = vmatpush1.msra.mxu0 0.0
  %5866 = vmatprep.subr.mxu0 0.0
  %5867 = vmatpush1.msra.mxu0 0.0
  %5868 = vmatprep.subr.mxu0 0.0
  %5869 = vmatpush1.msra.mxu0 0.0
  %5870 = vmatprep.mubr.f32.mxu0 0.0
  %5871 = vmatmul.mubr.f32.gmra.mrb[0].mxu0 %v5804
  %v5872 = vpop.f32.mrb[0].mxu0
  %v5873 = vadd.f32 0.0, %v5872
  %v5874 = vpop.f32.mrb[0].mxu0
  %5875 = vdwg.mxu0
  %v5877 = vsel %vm368, %v5797, 0
  %v5880 = vsel %vm368, %v5873, 0
  %5882 = vmatprep.subr.mxu0 0.0
  %5883 = vmatpush1.msra.mxu0 %v198
  %5884 = vmatprep.subr.mxu0 0.0
  %5885 = vmatpush1.msra.mxu0 0.0
  %5886 = vmatprep.subr.mxu0 0.0
  %5887 = vmatpush1.msra.mxu0 0.0
  %5888 = vmatprep.subr.mxu0 0.0
  %5889 = vmatpush1.msra.mxu0 0.0
  %5890 = vmatprep.subr.mxu0 0.0
  %5891 = vmatpush1.msra.mxu0 0.0
  %5892 = vmatprep.subr.mxu0 0.0
  %5893 = vmatpush1.msra.mxu0 0.0
  %5894 = vmatprep.subr.mxu0 0.0
  %5895 = vmatpush1.msra.mxu0 0.0
  %5896 = vmatprep.subr.mxu0 0.0
  %5897 = vmatpush1.msra.mxu0 0.0
  %5898 = vmatprep.subr.mxu0 0.0
  %5899 = vmatpush1.msra.mxu0 0.0
  %5900 = vmatprep.subr.mxu0 0.0
  %5901 = vmatpush1.msra.mxu0 0.0
  %5902 = vmatprep.subr.mxu0 0.0
  %5903 = vmatpush1.msra.mxu0 0.0
  %5904 = vmatprep.subr.mxu0 0.0
  %5905 = vmatpush1.msra.mxu0 0.0
  %5906 = vmatprep.subr.mxu0 0.0
  %5907 = vmatpush1.msra.mxu0 0.0
  %5908 = vmatprep.subr.mxu0 0.0
  %5909 = vmatpush1.msra.mxu0 0.0
  %5910 = vmatprep.subr.mxu0 0.0
  %5911 = vmatpush1.msra.mxu0 0.0
  %5912 = vmatprep.subr.mxu0 0.0
  %5913 = vmatpush1.msra.mxu0 0.0
  %5914 = vmatprep.subr.mxu0 0.0
  %5915 = vmatpush1.msra.mxu0 0.0
  %5916 = vmatprep.subr.mxu0 0.0
  %5917 = vmatpush1.msra.mxu0 0.0
  %5918 = vmatprep.subr.mxu0 0.0
  %5919 = vmatpush1.msra.mxu0 0.0
  %5920 = vmatprep.subr.mxu0 0.0
  %5921 = vmatpush1.msra.mxu0 0.0
  %5922 = vmatprep.subr.mxu0 0.0
  %5923 = vmatpush1.msra.mxu0 0.0
  %5924 = vmatprep.subr.mxu0 0.0
  %5925 = vmatpush1.msra.mxu0 0.0
  %5926 = vmatprep.subr.mxu0 0.0
  %5927 = vmatpush1.msra.mxu0 0.0
  %5928 = vmatprep.subr.mxu0 0.0
  %5929 = vmatpush1.msra.mxu0 0.0
  %5930 = vmatprep.subr.mxu0 0.0
  %5931 = vmatpush1.msra.mxu0 0.0
  %5932 = vmatprep.subr.mxu0 0.0
  %5933 = vmatpush1.msra.mxu0 0.0
  %5934 = vmatprep.subr.mxu0 0.0
  %5935 = vmatpush1.msra.mxu0 0.0
  %5936 = vmatprep.subr.mxu0 0.0
  %5937 = vmatpush1.msra.mxu0 0.0
  %5938 = vmatprep.subr.mxu0 0.0
  %5939 = vmatpush1.msra.mxu0 0.0
  %5940 = vmatprep.subr.mxu0 0.0
  %5941 = vmatpush1.msra.mxu0 0.0
  %5942 = vmatprep.subr.mxu0 0.0
  %5943 = vmatpush1.msra.mxu0 0.0
  %5944 = vmatprep.subr.mxu0 0.0
  %5945 = vmatpush1.msra.mxu0 0.0
  %5946 = vmatprep.mubr.f32.mxu0 0.0
  %5947 = vmatmul.mubr.f32.gmra.mrb[0].mxu0 %v5877
  %v5948 = vpop.f32.mrb[0].mxu0
  %v5949 = vadd.f32 0.0, %v5948
  %v5950 = vpop.f32.mrb[0].mxu0
  %5951 = vmatprep.mubr.f32.mxu0 0.0
  %5952 = vmatmul.mubr.f32.gmra.mrb[0].mxu0 %v5880
  %v5953 = vpop.f32.mrb[0].mxu0
  %v5954 = vadd.f32 0.0, %v5953
  %v5955 = vpop.f32.mrb[0].mxu0
  %5956 = vdwg.mxu0
  %v5957 = vadd.f32 %v5540, %v5949
  %v5958 = vadd.f32 %v5541, %v5954
  %v5960 = vlaneseq
  %v5961 = vshrl.u32 %v5960, 7
  %v5962 = vsub.s32 0, %v5961
  %v5963 = vrot.slane %v187, %v5962
  %v5965 = vadd.f32 %v5957, %v5963
  %v5966 = vadd.f32 %v5958, %v5963
  %v5967 = vadd.f32 %v5965, %v4123
  %v5968 = vadd.f32 %v5966, %v4124
  %v5969 = vsel %vm283, %v5967, 0.0
  %5970 = vadd.xlane.f32.xlu0 %v5969
  %v5971 = vpop.xlane.xlu0 %5970
  %v5972 = vsel %vm283, %v5968, 0.0
  %5973 = vadd.xlane.f32.xlu0 %v5972
  %v5974 = vpop.xlane.xlu0 %5973
  %v5975 = vmul.f32 %v5971, %v2044
  %v5976 = vmul.f32 %v5974, %v2044
  %v5977 = vsub.f32 %v5967, %v5975
  %v5978 = vsub.f32 %v5968, %v5976
  %v5979 = vmul.f32 %v5977, %v5977
  %v5980 = vmul.f32 %v5978, %v5978
  %v5981 = vsel %vm283, %v5979, 0.0
  %5982 = vadd.xlane.f32.xlu0 %v5981
  %v5983 = vpop.xlane.xlu0 %5982
  %v5984 = vsel %vm283, %v5980, 0.0
  %5985 = vadd.xlane.f32.xlu0 %v5984
  %v5986 = vpop.xlane.xlu0 %5985
  %v5987 = vmul.f32 %v5983, %v2044
  %v5988 = vmul.f32 %v5986, %v2044
  %v5989 = vadd.f32 %v5987, 1e-05
  %v5990 = vadd.f32 %v5988, 1e-05
  %v5991 = vrsqrt.pop %v5989
  %v5992 = vrsqrt.pop %v5990
  %v5993 = vmul.f32 %v5977, %v5991
  %v5994 = vmul.f32 %v5978, %v5992
  %v5996 = vlaneseq
  %v5997 = vshrl.u32 %v5996, 7
  %v5998 = vsub.s32 0, %v5997
  %v5999 = vrot.slane %v190, %v5998
  %v6001 = vmul.f32 %v5993, %v5999
  %v6002 = vmul.f32 %v5994, %v5999
  %v6004 = vlaneseq
  %v6005 = vshrl.u32 %v6004, 7
  %v6006 = vsub.s32 0, %v6005
  %v6007 = vrot.slane %v189, %v6006
  %v6009 = vadd.f32 %v6001, %v6007
  %v6010 = vadd.f32 %v6002, %v6007
  %v6012 = vlaneseq
  %v6013 = vshrl.u32 %v6012, 7
  %v6014 = vsub.s32 0, %v6013
  %v6015 = vrot.slane %v203, %v6014
  %v6018 = vsel %vm283, %v6009, 0
  %v6021 = vsel %vm283, %v6010, 0
  %6023 = vmatprep.subr.mxu0 0.0
  %6024 = vmatpush1.msra.mxu0 %v207
  %6025 = vmatprep.subr.mxu0 0.0
  %6026 = vmatpush1.msra.mxu0 %v208
  %6027 = vmatprep.subr.mxu0 0.0
  %6028 = vmatpush1.msra.mxu0 %v209
  %6029 = vmatprep.subr.mxu0 0.0
  %6030 = vmatpush1.msra.mxu0 %v210
  %6031 = vmatprep.subr.mxu0 0.0
  %6032 = vmatpush1.msra.mxu0 0.0
  %6033 = vmatprep.subr.mxu0 0.0
  %6034 = vmatpush1.msra.mxu0 0.0
  %6035 = vmatprep.subr.mxu0 0.0
  %6036 = vmatpush1.msra.mxu0 0.0
  %6037 = vmatprep.subr.mxu0 0.0
  %6038 = vmatpush1.msra.mxu0 0.0
  %6039 = vmatprep.subr.mxu0 0.0
  %6040 = vmatpush1.msra.mxu0 0.0
  %6041 = vmatprep.subr.mxu0 0.0
  %6042 = vmatpush1.msra.mxu0 0.0
  %6043 = vmatprep.subr.mxu0 0.0
  %6044 = vmatpush1.msra.mxu0 0.0
  %6045 = vmatprep.subr.mxu0 0.0
  %6046 = vmatpush1.msra.mxu0 0.0
  %6047 = vmatprep.subr.mxu0 0.0
  %6048 = vmatpush1.msra.mxu0 0.0
  %6049 = vmatprep.subr.mxu0 0.0
  %6050 = vmatpush1.msra.mxu0 0.0
  %6051 = vmatprep.subr.mxu0 0.0
  %6052 = vmatpush1.msra.mxu0 0.0
  %6053 = vmatprep.subr.mxu0 0.0
  %6054 = vmatpush1.msra.mxu0 0.0
  %6055 = vmatprep.subr.mxu0 0.0
  %6056 = vmatpush1.msra.mxu0 0.0
  %6057 = vmatprep.subr.mxu0 0.0
  %6058 = vmatpush1.msra.mxu0 0.0
  %6059 = vmatprep.subr.mxu0 0.0
  %6060 = vmatpush1.msra.mxu0 0.0
  %6061 = vmatprep.subr.mxu0 0.0
  %6062 = vmatpush1.msra.mxu0 0.0
  %6063 = vmatprep.subr.mxu0 0.0
  %6064 = vmatpush1.msra.mxu0 0.0
  %6065 = vmatprep.subr.mxu0 0.0
  %6066 = vmatpush1.msra.mxu0 0.0
  %6067 = vmatprep.subr.mxu0 0.0
  %6068 = vmatpush1.msra.mxu0 0.0
  %6069 = vmatprep.subr.mxu0 0.0
  %6070 = vmatpush1.msra.mxu0 0.0
  %6071 = vmatprep.subr.mxu0 0.0
  %6072 = vmatpush1.msra.mxu0 0.0
  %6073 = vmatprep.subr.mxu0 0.0
  %6074 = vmatpush1.msra.mxu0 0.0
  %6075 = vmatprep.subr.mxu0 0.0
  %6076 = vmatpush1.msra.mxu0 0.0
  %6077 = vmatprep.subr.mxu0 0.0
  %6078 = vmatpush1.msra.mxu0 0.0
  %6079 = vmatprep.subr.mxu0 0.0
  %6080 = vmatpush1.msra.mxu0 0.0
  %6081 = vmatprep.subr.mxu0 0.0
  %6082 = vmatpush1.msra.mxu0 0.0
  %6083 = vmatprep.subr.mxu0 0.0
  %6084 = vmatpush1.msra.mxu0 0.0
  %6085 = vmatprep.subr.mxu0 0.0
  %6086 = vmatpush1.msra.mxu0 0.0
  %6087 = vmatprep.mubr.f32.mxu0 0.0
  %6088 = vmatmul.mubr.f32.gmra.mrb[0].mxu0 %v6018
  %v6089 = vpop.f32.mrb[0].mxu0
  %v6090 = vadd.f32 %v6015, %v6089
  %v6091 = vpop.f32.mrb[0].mxu0
  %6092 = vmatprep.mubr.f32.mxu0 0.0
  %6093 = vmatmul.mubr.f32.gmra.mrb[0].mxu0 %v6021
  %v6094 = vpop.f32.mrb[0].mxu0
  %v6095 = vadd.f32 %v6015, %v6094
  %v6096 = vpop.f32.mrb[0].mxu0
  %6097 = vdwg.mxu0
  %v6098 = vmax.f32 %v6090, 0.0
  %v6099 = vmax.f32 %v6095, 0.0
  %v6101 = vlaneseq
  %v6102 = vshrl.u32 %v6101, 7
  %v6103 = vsub.s32 0, %v6102
  %v6104 = vrot.slane %v204, %v6103
  %v6107 = vsel %vm2176, %v6098, 0
  %v6110 = vsel %vm2176, %v6099, 0
  %6112 = vmatprep.subr.mxu0 0.0
  %6113 = vmatpush1.msra.mxu0 %v211
  %6114 = vmatprep.subr.mxu0 0.0
  %6115 = vmatpush1.msra.mxu0 %v212
  %6116 = vmatprep.subr.mxu0 0.0
  %6117 = vmatpush1.msra.mxu0 %v213
  %6118 = vmatprep.subr.mxu0 0.0
  %6119 = vmatpush1.msra.mxu0 %v214
  %6120 = vmatprep.subr.mxu0 0.0
  %6121 = vmatpush1.msra.mxu0 %v215
  %6122 = vmatprep.subr.mxu0 0.0
  %6123 = vmatpush1.msra.mxu0 %v216
  %6124 = vmatprep.subr.mxu0 0.0
  %6125 = vmatpush1.msra.mxu0 %v217
  %6126 = vmatprep.subr.mxu0 0.0
  %6127 = vmatpush1.msra.mxu0 %v218
  %6128 = vmatprep.subr.mxu0 0.0
  %6129 = vmatpush1.msra.mxu0 0.0
  %6130 = vmatprep.subr.mxu0 0.0
  %6131 = vmatpush1.msra.mxu0 0.0
  %6132 = vmatprep.subr.mxu0 0.0
  %6133 = vmatpush1.msra.mxu0 0.0
  %6134 = vmatprep.subr.mxu0 0.0
  %6135 = vmatpush1.msra.mxu0 0.0
  %6136 = vmatprep.subr.mxu0 0.0
  %6137 = vmatpush1.msra.mxu0 0.0
  %6138 = vmatprep.subr.mxu0 0.0
  %6139 = vmatpush1.msra.mxu0 0.0
  %6140 = vmatprep.subr.mxu0 0.0
  %6141 = vmatpush1.msra.mxu0 0.0
  %6142 = vmatprep.subr.mxu0 0.0
  %6143 = vmatpush1.msra.mxu0 0.0
  %6144 = vmatprep.subr.mxu0 0.0
  %6145 = vmatpush1.msra.mxu0 0.0
  %6146 = vmatprep.subr.mxu0 0.0
  %6147 = vmatpush1.msra.mxu0 0.0
  %6148 = vmatprep.subr.mxu0 0.0
  %6149 = vmatpush1.msra.mxu0 0.0
  %6150 = vmatprep.subr.mxu0 0.0
  %6151 = vmatpush1.msra.mxu0 0.0
  %6152 = vmatprep.subr.mxu0 0.0
  %6153 = vmatpush1.msra.mxu0 0.0
  %6154 = vmatprep.subr.mxu0 0.0
  %6155 = vmatpush1.msra.mxu0 0.0
  %6156 = vmatprep.subr.mxu0 0.0
  %6157 = vmatpush1.msra.mxu0 0.0
  %6158 = vmatprep.subr.mxu0 0.0
  %6159 = vmatpush1.msra.mxu0 0.0
  %6160 = vmatprep.subr.mxu0 0.0
  %6161 = vmatpush1.msra.mxu0 0.0
  %6162 = vmatprep.subr.mxu0 0.0
  %6163 = vmatpush1.msra.mxu0 0.0
  %6164 = vmatprep.subr.mxu0 0.0
  %6165 = vmatpush1.msra.mxu0 0.0
  %6166 = vmatprep.subr.mxu0 0.0
  %6167 = vmatpush1.msra.mxu0 0.0
  %6168 = vmatprep.subr.mxu0 0.0
  %6169 = vmatpush1.msra.mxu0 0.0
  %6170 = vmatprep.subr.mxu0 0.0
  %6171 = vmatpush1.msra.mxu0 0.0
  %6172 = vmatprep.subr.mxu0 0.0
  %6173 = vmatpush1.msra.mxu0 0.0
  %6174 = vmatprep.subr.mxu0 0.0
  %6175 = vmatpush1.msra.mxu0 0.0
  %6176 = vmatprep.mubr.f32.mxu0 0.0
  %6177 = vmatmul.mubr.f32.gmra.mrb[0].mxu0 %v6107
  %v6178 = vpop.f32.mrb[0].mxu0
  %v6179 = vadd.f32 %v6104, %v6178
  %v6180 = vpop.f32.mrb[0].mxu0
  %6181 = vmatprep.mubr.f32.mxu0 0.0
  %6182 = vmatmul.mubr.f32.gmra.mrb[0].mxu0 %v6110
  %v6183 = vpop.f32.mrb[0].mxu0
  %v6184 = vadd.f32 %v6104, %v6183
  %v6185 = vpop.f32.mrb[0].mxu0
  %6186 = vdwg.mxu0
  %v6187 = vadd.f32 %v6179, %v6009
  %v6188 = vadd.f32 %v6184, %v6010
  %v6189 = vsel %vm283, %v6187, 0.0
  %6190 = vadd.xlane.f32.xlu0 %v6189
  %v6191 = vpop.xlane.xlu0 %6190
  %v6192 = vsel %vm283, %v6188, 0.0
  %6193 = vadd.xlane.f32.xlu0 %v6192
  %v6194 = vpop.xlane.xlu0 %6193
  %v6195 = vmul.f32 %v6191, %v2044
  %v6196 = vmul.f32 %v6194, %v2044
  %v6197 = vsub.f32 %v6187, %v6195
  %v6198 = vsub.f32 %v6188, %v6196
  %v6199 = vmul.f32 %v6197, %v6197
  %v6200 = vmul.f32 %v6198, %v6198
  %v6201 = vsel %vm283, %v6199, 0.0
  %6202 = vadd.xlane.f32.xlu0 %v6201
  %v6203 = vpop.xlane.xlu0 %6202
  %v6204 = vsel %vm283, %v6200, 0.0
  %6205 = vadd.xlane.f32.xlu0 %v6204
  %v6206 = vpop.xlane.xlu0 %6205
  %v6207 = vmul.f32 %v6203, %v2044
  %v6208 = vmul.f32 %v6206, %v2044
  %v6209 = vadd.f32 %v6207, 1e-05
  %v6210 = vadd.f32 %v6208, 1e-05
  %v6211 = vrsqrt.pop %v6209
  %v6212 = vrsqrt.pop %v6210
  %v6213 = vmul.f32 %v6197, %v6211
  %v6214 = vmul.f32 %v6198, %v6212
  %v6216 = vlaneseq
  %v6217 = vshrl.u32 %v6216, 7
  %v6218 = vsub.s32 0, %v6217
  %v6219 = vrot.slane %v206, %v6218
  %v6221 = vmul.f32 %v6213, %v6219
  %v6222 = vmul.f32 %v6214, %v6219
  %v6224 = vlaneseq
  %v6225 = vshrl.u32 %v6224, 7
  %v6226 = vsub.s32 0, %v6225
  %v6227 = vrot.slane %v205, %v6226
  %v6229 = vadd.f32 %v6221, %v6227
  %v6230 = vadd.f32 %v6222, %v6227
  %v6232 = vsel %vm283, %v6229, 0
  %v6235 = vsel %vm283, %v6230, 0
  %6237 = vmatprep.subr.mxu0 0.0
  %6238 = vmatpush1.msra.mxu0 %v259
  %6239 = vmatprep.subr.mxu0 0.0
  %6240 = vmatpush1.msra.mxu0 %v260
  %6241 = vmatprep.subr.mxu0 0.0
  %6242 = vmatpush1.msra.mxu0 %v261
  %6243 = vmatprep.subr.mxu0 0.0
  %6244 = vmatpush1.msra.mxu0 %v262
  %6245 = vmatprep.subr.mxu0 0.0
  %6246 = vmatpush1.msra.mxu0 0.0
  %6247 = vmatprep.subr.mxu0 0.0
  %6248 = vmatpush1.msra.mxu0 0.0
  %6249 = vmatprep.subr.mxu0 0.0
  %6250 = vmatpush1.msra.mxu0 0.0
  %6251 = vmatprep.subr.mxu0 0.0
  %6252 = vmatpush1.msra.mxu0 0.0
  %6253 = vmatprep.subr.mxu0 0.0
  %6254 = vmatpush1.msra.mxu0 0.0
  %6255 = vmatprep.subr.mxu0 0.0
  %6256 = vmatpush1.msra.mxu0 0.0
  %6257 = vmatprep.subr.mxu0 0.0
  %6258 = vmatpush1.msra.mxu0 0.0
  %6259 = vmatprep.subr.mxu0 0.0
  %6260 = vmatpush1.msra.mxu0 0.0
  %6261 = vmatprep.subr.mxu0 0.0
  %6262 = vmatpush1.msra.mxu0 0.0
  %6263 = vmatprep.subr.mxu0 0.0
  %6264 = vmatpush1.msra.mxu0 0.0
  %6265 = vmatprep.subr.mxu0 0.0
  %6266 = vmatpush1.msra.mxu0 0.0
  %6267 = vmatprep.subr.mxu0 0.0
  %6268 = vmatpush1.msra.mxu0 0.0
  %6269 = vmatprep.subr.mxu0 0.0
  %6270 = vmatpush1.msra.mxu0 0.0
  %6271 = vmatprep.subr.mxu0 0.0
  %6272 = vmatpush1.msra.mxu0 0.0
  %6273 = vmatprep.subr.mxu0 0.0
  %6274 = vmatpush1.msra.mxu0 0.0
  %6275 = vmatprep.subr.mxu0 0.0
  %6276 = vmatpush1.msra.mxu0 0.0
  %6277 = vmatprep.subr.mxu0 0.0
  %6278 = vmatpush1.msra.mxu0 0.0
  %6279 = vmatprep.subr.mxu0 0.0
  %6280 = vmatpush1.msra.mxu0 0.0
  %6281 = vmatprep.subr.mxu0 0.0
  %6282 = vmatpush1.msra.mxu0 0.0
  %6283 = vmatprep.subr.mxu0 0.0
  %6284 = vmatpush1.msra.mxu0 0.0
  %6285 = vmatprep.subr.mxu0 0.0
  %6286 = vmatpush1.msra.mxu0 0.0
  %6287 = vmatprep.subr.mxu0 0.0
  %6288 = vmatpush1.msra.mxu0 0.0
  %6289 = vmatprep.subr.mxu0 0.0
  %6290 = vmatpush1.msra.mxu0 0.0
  %6291 = vmatprep.subr.mxu0 0.0
  %6292 = vmatpush1.msra.mxu0 0.0
  %6293 = vmatprep.subr.mxu0 0.0
  %6294 = vmatpush1.msra.mxu0 0.0
  %6295 = vmatprep.subr.mxu0 0.0
  %6296 = vmatpush1.msra.mxu0 0.0
  %6297 = vmatprep.subr.mxu0 0.0
  %6298 = vmatpush1.msra.mxu0 0.0
  %6299 = vmatprep.subr.mxu0 0.0
  %6300 = vmatpush1.msra.mxu0 0.0
  %6301 = vmatprep.mubr.f32.mxu0 0.0
  %6302 = vmatmul.mubr.f32.gmra.mrb[0].mxu0 %v6232
  %v6303 = vpop.f32.mrb[0].mxu0
  %v6304 = vadd.f32 0.0, %v6303
  %v6305 = vpop.f32.mrb[0].mxu0
  %6306 = vmatprep.mubr.f32.mxu0 0.0
  %6307 = vmatmul.mubr.f32.gmra.mrb[0].mxu0 %v6235
  %v6308 = vpop.f32.mrb[0].mxu0
  %v6309 = vadd.f32 0.0, %v6308
  %v6310 = vpop.f32.mrb[0].mxu0
  %6311 = vdwg.mxu0
  %6312 = vst [vmem:[%s83] sm:$0xff] %v6304
  %6313 = vst [vmem:[%s83 + $0x8] sm:$0xff] %v6309
  // Predicated region
  $region166: #{forward.1} parent=0 // pred_check
    _
  $region167: #{forward.1} parent=0 // pred_check_branch
    %6315 = sbr.rel (0) target = $region169
  $region168: #{forward.1} parent=0 // pred_region
    _
  $region169: #{forward.1} parent=0 // pred_fallthru
    _
  // Predicated region
  $region170: #{forward.1} parent=0 // pred_check
    _
  $region171: #{forward.1} parent=0 // pred_check_branch
    %6317 = sbr.rel (0) target = $region173
  $region172: #{forward.1} parent=0 // pred_region
    _
  $region173: #{forward.1} parent=0 // pred_fallthru
    _

</llo_original>
